<compile_context>
chip_gen: v7x
topology: tpu7x:2x2x1
jax: 0.10.0
libtpu: 0.0.40
codegen_flags: <defaults>
</compile_context>

<pallas_src>
import jax
import jax.numpy as jnp
from jax.experimental import pallas as pl
from jax.experimental.pallas import tpu as pltpu

NET_W = 512
ACTION_COUNT = 3          # CarRacing continuous actions: steer, gas, brake
CNN_FEATS = 1280          # efficientnet_b0 feature width before classifier
STEM_C = 32               # efficientnet_b0 stem output channels
STEM_K = 3 * 3 * 3        # C*kh*kw = 27 patch features (c-major, then kh, kw)
STEM_KP = 32              # zero-padded contraction dim (lane friendly)
HEAD_PAD = 128            # lane-dense padding for the fc3 output
MAX_TILE_ROWS = 1024      # spatial rows per grid step


def _round_up(x, m):
    return (x + m - 1) // m * m


def _silu(x):
    # EUP-friendly SiLU: exp + approx reciprocal both use the EUP slot,
    # leaving VALU free under the (mostly idle, K<=32) MXU.
    return x * pl.reciprocal(1.0 + jnp.exp(-x), approx=True)


# ---------------------------------------------------------------------------
# Fused Pallas kernel
# ---------------------------------------------------------------------------

def _make_policy_kernel(spatial, tile_rows):
    """Per (batch, spatial-tile) grid point:
       stem conv (im2col matmul) -> SiLU -> 1x1 head conv -> SiLU ->
       per-sublane pooled-sum accumulation.  At the last spatial tile the
       global-average pool is finished and the fused MLP head
       (relu(fc1) -> relu(fc2) -> tanh(fc3)) writes the lane-padded output."""

    def kernel(p_ref, sw_ref, sb_ref, hw_ref, hb_ref,
               w1_ref, b1_ref, w2_ref, b2_ref, w3_ref, b3_ref,
               o_ref, acc_ref):
        t = pl.program_id(1)

        @pl.when(t == 0)
        def _init():
            acc_ref[...] = jnp.zeros_like(acc_ref)
            o_ref[...] = jnp.zeros_like(o_ref)

        # p: [tile_rows, STEM_KP] bf16 im2col patches for this batch element
        p = p_ref[0]
        y = jnp.dot(p, sw_ref[...], preferred_element_type=jnp.float32)
        y = _silu(y + sb_ref[...])                           # stem SiLU

        h = jnp.dot(y.astype(jnp.bfloat16), hw_ref[...],
                    preferred_element_type=jnp.float32)
        h = _silu(h + hb_ref[...])                           # head SiLU

        if spatial % tile_rows != 0:
            # mask zero-padded spatial rows so they don't pollute the mean
            row_ids = t * tile_rows + jax.lax.broadcasted_iota(
                jnp.int32, (tile_rows, 1), 0)
            h = jnp.where(row_ids < spatial, h, 0.0)

        # per-sublane partial sums (plain VALU adds, co-issue under the MXU);
        # the cross-sublane XLU reduce happens once, in the finalize below
        acc_ref[...] += jnp.sum(
            h.reshape(tile_rows // 8, 8, CNN_FEATS), axis=0)

        @pl.when(t == pl.num_programs(1) - 1)
        def _finalize():
            pooled = jnp.sum(acc_ref[...], axis=0, keepdims=True) * (
                1.0 / float(spatial))                        # [1, 1280] f32
            f = pooled.astype(jnp.bfloat16)
            z = jnp.dot(f, w1_ref[...],
                        preferred_element_type=jnp.float32) + b1_ref[...]
            z = jnp.maximum(z, 0.0)        # relu(bn1(classifier)), bn1=Identity
            z = jnp.dot(z.astype(jnp.bfloat16), w2_ref[...],
                        preferred_element_type=jnp.float32) + b2_ref[...]
            z = jnp.maximum(z, 0.0)        # relu(bn2(fc2)),        bn2=Identity
            z = jnp.dot(z.astype(jnp.bfloat16), w3_ref[...],
                        preferred_element_type=jnp.float32) + b3_ref[...]
            o_ref[...] = jnp.tanh(z)[None, :, :]             # tanh(fc3), padded

    return kernel


# ---------------------------------------------------------------------------
# Wrappers
# ---------------------------------------------------------------------------

def _extract_stem_patches(x, kh=3, kw=3, stride=2, pad=1):
    # x: [B, C, H, W] -> patches [B, Ho*Wo, C*kh*kw].
    # Feature ordering is (c, kh, kw) flattened, matching a PyTorch
    # weight.reshape(O, C*kh*kw).T layout for checkpoint loading.
    patches = jax.lax.conv_general_dilated_patches(
        x, filter_shape=(kh, kw), window_strides=(stride, stride),
        padding=((pad, pad), (pad, pad)))
    b, k, ho, wo = patches.shape                 # [B, C*kh*kw, Ho, Wo]
    patches = patches.reshape(b, k, ho * wo).transpose(0, 2, 1)
    return patches, ho, wo


def fused_policy_call(patches, batch, spatial, tile_rows, params):
    s_pad, kp = patches.shape[1], patches.shape[2]
    n_tiles = s_pad // tile_rows
    kernel = _make_policy_kernel(spatial, tile_rows)
    const = lambda b, t: (0, 0)
    out = pl.pallas_call(
        kernel,
        out_shape=jax.ShapeDtypeStruct((batch, 1, HEAD_PAD), jnp.float32),
        grid_spec=pltpu.PrefetchScalarGridSpec(
            num_scalar_prefetch=0,
            grid=(batch, n_tiles),
            in_specs=[
                pl.BlockSpec((1, tile_rows, kp), lambda b, t: (b, t, 0)),
                pl.BlockSpec((kp, STEM_C), const),
                pl.BlockSpec((1, STEM_C), const),
                pl.BlockSpec((STEM_C, CNN_FEATS), const),
                pl.BlockSpec((1, CNN_FEATS), const),
                pl.BlockSpec((CNN_FEATS, NET_W), const),
                pl.BlockSpec((1, NET_W), const),
                pl.BlockSpec((NET_W, NET_W // 2), const),
                pl.BlockSpec((1, NET_W // 2), const),
                pl.BlockSpec((NET_W // 2, HEAD_PAD), const),
                pl.BlockSpec((1, HEAD_PAD), const),
            ],
            out_specs=pl.BlockSpec((1, 1, HEAD_PAD), lambda b, t: (b, 0, 0)),
            scratch_shapes=[pltpu.VMEM((8, CNN_FEATS), jnp.float32)],
        ),
        compiler_params=pltpu.CompilerParams(
            dimension_semantics=("parallel", "arbitrary"),
            vmem_limit_bytes=48 * 1024 * 1024,
        ),
    )(patches, params["stem_w"], params["stem_b"],
      params["head_w"], params["head_b"],
      params["fc1_w"], params["fc1_b"],
      params["fc2_w"], params["fc2_b"],
      params["fc3_w"], params["fc3_b"])
    return out.reshape(batch, HEAD_PAD)


def policy_forward(params, s):
    """s: [B, 3, H, W] float32 (NCHW) -> actions [B, ACTION_COUNT] in [-1, 1]."""
    batch = s.shape[0]
    patches, ho, wo = _extract_stem_patches(s, 3, 3, 2, 1)
    spatial = ho * wo
    tile_rows = min(MAX_TILE_ROWS, _round_up(spatial, 8))
    s_pad = _round_up(spatial, tile_rows)
    k = patches.shape[2]
    patches = jnp.pad(
        patches, ((0, 0), (0, s_pad - spatial), (0, STEM_KP - k))
    ).astype(jnp.bfloat16)
    acts = fused_policy_call(patches, batch, spatial, tile_rows, params)
    return acts[:, :ACTION_COUNT]


# ---------------------------------------------------------------------------
# Deterministic parameter initialization (synthetic, shapes from __init__)
# ---------------------------------------------------------------------------

def init_params(key):
    ks = jax.random.split(key, 8)

    def rnd(k, shape, scale):
        return (scale * jax.random.normal(k, shape)).astype(jnp.float32)

    stem_w = rnd(ks[0], (STEM_K, STEM_C), 0.10)
    stem_w = jnp.pad(stem_w, ((0, STEM_KP - STEM_K), (0, 0)))
    fc3_w = rnd(ks[6], (NET_W // 2, ACTION_COUNT), 0.03)
    fc3_b = rnd(ks[7], (1, ACTION_COUNT), 0.03)
    return {
        # surrogate backbone (weights bf16, biases f32)
        "stem_w": stem_w.astype(jnp.bfloat16),
        "stem_b": jnp.zeros((1, STEM_C), jnp.float32),
        "head_w": rnd(ks[1], (STEM_C, CNN_FEATS), 0.05).astype(jnp.bfloat16),
        "head_b": jnp.zeros((1, CNN_FEATS), jnp.float32),
        # cnn.classifier = Linear(1280, NET_W)
        "fc1_w": rnd(ks[2], (CNN_FEATS, NET_W), 0.03).astype(jnp.bfloat16),
        "fc1_b": rnd(ks[3], (1, NET_W), 0.03),
        # fc2 = Linear(NET_W, NET_W // 2)
        "fc2_w": rnd(ks[4], (NET_W, NET_W // 2), 0.03).astype(jnp.bfloat16),
        "fc2_b": rnd(ks[5], (1, NET_W // 2), 0.03),
        # fc3 = Linear(NET_W // 2, action_count), zero-padded to lane-dense 128
        "fc3_w": jnp.pad(fc3_w, ((0, 0), (0, HEAD_PAD - ACTION_COUNT))
                         ).astype(jnp.bfloat16),
        "fc3_b": jnp.pad(fc3_b, ((0, 0), (0, HEAD_PAD - ACTION_COUNT))),
    }


if __name__ == "__main__":
    key = jax.random.PRNGKey(0)
    pkey, xkey = jax.random.split(key)
    params = init_params(pkey)

    # small image batch, NCHW like the PyTorch module expects
    s = jax.random.normal(xkey, (2, 3, 32, 32), dtype=jnp.float32)

    out = jax.jit(policy_forward)(params, s)
    out = jax.block_until_ready(out)

    assert out.shape == (2, ACTION_COUNT), out.shape
    assert bool(jnp.all(jnp.isfinite(out)))
    assert bool(jnp.all(jnp.abs(out) <= 1.0))     # tanh output range
    print("KERNEL_OK")
</pallas_src>

<mosaic_0001>
module attributes {stable_mosaic.version = 11 : i64} {
  func.func @kernel(%arg0: i32, %arg1: i32, %arg2: memref<1x256x32xbf16, #tpu.memory_space<vmem>>, %arg3: memref<32x32xbf16, #tpu.memory_space<vmem>>, %arg4: memref<1x32xf32, #tpu.memory_space<vmem>>, %arg5: memref<32x1280xbf16, #tpu.memory_space<vmem>>, %arg6: memref<1x1280xf32, #tpu.memory_space<vmem>>, %arg7: memref<1280x512xbf16, #tpu.memory_space<vmem>>, %arg8: memref<1x512xf32, #tpu.memory_space<vmem>>, %arg9: memref<512x256xbf16, #tpu.memory_space<vmem>>, %arg10: memref<1x256xf32, #tpu.memory_space<vmem>>, %arg11: memref<256x128xbf16, #tpu.memory_space<vmem>>, %arg12: memref<1x128xf32, #tpu.memory_space<vmem>>, %arg13: memref<1x1x128xf32, #tpu.memory_space<vmem>>, %arg14: memref<8x1280xf32, #tpu.memory_space<vmem>>) attributes {dimension_semantics = [#tpu.dimension_semantics<parallel>, #tpu.dimension_semantics<arbitrary>], iteration_bounds = array<i64: 2, 1>, scalar_prefetch = 0 : i64, scratch_operands = 1 : i64, tpu.core_type = #tpu.core_type<tc>, window_params = [{transform_indices = @transform_0, window_bounds = array<i64: 1, 256, 32>}, {pipeline_mode = #tpu.pipeline_mode<synchronous>, transform_indices = @transform_1, window_bounds = array<i64: 32, 32>}, {pipeline_mode = #tpu.pipeline_mode<synchronous>, transform_indices = @transform_2, window_bounds = array<i64: 1, 32>}, {pipeline_mode = #tpu.pipeline_mode<synchronous>, transform_indices = @transform_3, window_bounds = array<i64: 32, 1280>}, {pipeline_mode = #tpu.pipeline_mode<synchronous>, transform_indices = @transform_4, window_bounds = array<i64: 1, 1280>}, {pipeline_mode = #tpu.pipeline_mode<synchronous>, transform_indices = @transform_5, window_bounds = array<i64: 1280, 512>}, {pipeline_mode = #tpu.pipeline_mode<synchronous>, transform_indices = @transform_6, window_bounds = array<i64: 1, 512>}, {pipeline_mode = #tpu.pipeline_mode<synchronous>, transform_indices = @transform_7, window_bounds = array<i64: 512, 256>}, {pipeline_mode = #tpu.pipeline_mode<synchronous>, transform_indices = @transform_8, window_bounds = array<i64: 1, 256>}, {pipeline_mode = #tpu.pipeline_mode<synchronous>, transform_indices = @transform_9, window_bounds = array<i64: 256, 128>}, {pipeline_mode = #tpu.pipeline_mode<synchronous>, transform_indices = @transform_10, window_bounds = array<i64: 1, 128>}, {transform_indices = @transform_11, window_bounds = array<i64: 1, 1, 128>}]} {
    %c0_i32 = arith.constant 0 : i32
    %0 = arith.cmpi eq, %arg1, %c0_i32 : i32
    %1 = arith.extui %0 : i1 to i32
    %c0_i32_0 = arith.constant 0 : i32
    %2 = arith.cmpi ne, %1, %c0_i32_0 : i32
    scf.if %2 {
      %cst_23 = arith.constant 0.000000e+00 : f32
      %38 = vector.broadcast %cst_23 : f32 to vector<8x1280xf32>
      %c0_24 = arith.constant 0 : index
      %c0_25 = arith.constant 0 : index
      %39 = vector.load %arg14[%c0_24, %c0_25] : memref<8x1280xf32, #tpu.memory_space<vmem>>, vector<8x1280xf32>
      tpu.vector_store %arg14[%c0_24, %c0_25], %38 {strides = array<i32>} : memref<8x1280xf32, #tpu.memory_space<vmem>>, vector<8x1280xf32>,
      %cst_26 = arith.constant 0.000000e+00 : f32
      %40 = vector.broadcast %cst_26 : f32 to vector<1x1x128xf32>
      %c0_27 = arith.constant 0 : index
      %c0_28 = arith.constant 0 : index
      %c0_29 = arith.constant 0 : index
      %41 = vector.load %arg13[%c0_27, %c0_28, %c0_29] : memref<1x1x128xf32, #tpu.memory_space<vmem>>, vector<1x1x128xf32>
      tpu.vector_store %arg13[%c0_27, %c0_28, %c0_29], %40 {strides = array<i32>} : memref<1x1x128xf32, #tpu.memory_space<vmem>>, vector<1x1x128xf32>,
    } else {
    }
    %c0 = arith.constant 0 : index
    %c0_1 = arith.constant 0 : index
    %c0_2 = arith.constant 0 : index
    %3 = vector.load %arg2[%c0, %c0_1, %c0_2] : memref<1x256x32xbf16, #tpu.memory_space<vmem>>, vector<1x256x32xbf16>
    %4 = vector.shape_cast %3 : vector<1x256x32xbf16> to vector<256x32xbf16>
    %c0_3 = arith.constant 0 : index
    %c0_4 = arith.constant 0 : index
    %5 = vector.load %arg3[%c0_3, %c0_4] : memref<32x32xbf16, #tpu.memory_space<vmem>>, vector<32x32xbf16>
    %cst = arith.constant dense<0.000000e+00> : vector<256x32xf32>
    %6 = tpu.matmul %4, %5, %cst {dimension_numbers = #tpu.dot_dimension_numbers<[1], [0], [0], [1], [0, 0, 1, 1], [], []>} : vector<256x32xbf16>, vector<32x32xbf16>, vector<256x32xf32> -> vector<256x32xf32>
    %c0_5 = arith.constant 0 : index
    %c0_6 = arith.constant 0 : index
    %7 = vector.load %arg4[%c0_5, %c0_6] : memref<1x32xf32, #tpu.memory_space<vmem>>, vector<1x32xf32>
    %8 = vector.broadcast %7 : vector<1x32xf32> to vector<256x32xf32>
    %9 = arith.addf %6, %8 : vector<256x32xf32>
    %cst_7 = arith.constant 0.000000e+00 : f32
    %10 = vector.broadcast %cst_7 : f32 to vector<256x32xf32>
    %11 = arith.subf %10, %9 : vector<256x32xf32>
    %12 = math.exp %11 : vector<256x32xf32>
    %cst_8 = arith.constant 1.000000e+00 : f32
    %13 = vector.broadcast %cst_8 : f32 to vector<256x32xf32>
    %14 = arith.addf %13, %12 : vector<256x32xf32>
    %15 = tpu.reciprocal %14 {approx = true} : vector<256x32xf32> -> vector<256x32xf32>
    %16 = arith.mulf %9, %15 : vector<256x32xf32>
    %17 = arith.truncf %16 : vector<256x32xf32> to vector<256x32xbf16>
    %c0_9 = arith.constant 0 : index
    %c0_10 = arith.constant 0 : index
    %18 = vector.load %arg5[%c0_9, %c0_10] : memref<32x1280xbf16, #tpu.memory_space<vmem>>, vector<32x1280xbf16>
    %cst_11 = arith.constant dense<0.000000e+00> : vector<256x1280xf32>
    %19 = tpu.matmul %17, %18, %cst_11 {dimension_numbers = #tpu.dot_dimension_numbers<[1], [0], [0], [1], [0, 0, 1, 1], [], []>} : vector<256x32xbf16>, vector<32x1280xbf16>, vector<256x1280xf32> -> vector<256x1280xf32>
    %c0_12 = arith.constant 0 : index
    %c0_13 = arith.constant 0 : index
    %20 = vector.load %arg6[%c0_12, %c0_13] : memref<1x1280xf32, #tpu.memory_space<vmem>>, vector<1x1280xf32>
    %21 = vector.broadcast %20 : vector<1x1280xf32> to vector<256x1280xf32>
    %22 = arith.addf %19, %21 : vector<256x1280xf32>
    %cst_14 = arith.constant 0.000000e+00 : f32
    %23 = vector.broadcast %cst_14 : f32 to vector<256x1280xf32>
    %24 = arith.subf %23, %22 : vector<256x1280xf32>
    %25 = math.exp %24 : vector<256x1280xf32>
    %cst_15 = arith.constant 1.000000e+00 : f32
    %26 = vector.broadcast %cst_15 : f32 to vector<256x1280xf32>
    %27 = arith.addf %26, %25 : vector<256x1280xf32>
    %28 = tpu.reciprocal %27 {approx = true} : vector<256x1280xf32> -> vector<256x1280xf32>
    %29 = arith.mulf %22, %28 : vector<256x1280xf32>
    %c0_16 = arith.constant 0 : index
    %c0_17 = arith.constant 0 : index
    %30 = vector.load %arg14[%c0_16, %c0_17] : memref<8x1280xf32, #tpu.memory_space<vmem>>, vector<8x1280xf32>
    %31 = vector.shape_cast %29 : vector<256x1280xf32> to vector<32x8x1280xf32>
    %cst_18 = arith.constant dense<0.000000e+00> : vector<8x1280xf32>
    %32 = vector.multi_reduction <add>, %31, %cst_18 [0] : vector<32x8x1280xf32> to vector<8x1280xf32>
    %33 = arith.addf %30, %32 : vector<8x1280xf32>
    %c0_19 = arith.constant 0 : index
    %c0_20 = arith.constant 0 : index
    %34 = vector.load %arg14[%c0_19, %c0_20] : memref<8x1280xf32, #tpu.memory_space<vmem>>, vector<8x1280xf32>
    tpu.vector_store %arg14[%c0_19, %c0_20], %33 {strides = array<i32>} : memref<8x1280xf32, #tpu.memory_space<vmem>>, vector<8x1280xf32>,
    %c0_i32_21 = arith.constant 0 : i32
    %35 = arith.cmpi eq, %arg1, %c0_i32_21 : i32
    %36 = arith.extui %35 : i1 to i32
    %c0_i32_22 = arith.constant 0 : i32
    %37 = arith.cmpi ne, %36, %c0_i32_22 : i32
    scf.if %37 {
      %c0_23 = arith.constant 0 : index
      %c0_24 = arith.constant 0 : index
      %38 = vector.load %arg14[%c0_23, %c0_24] : memref<8x1280xf32, #tpu.memory_space<vmem>>, vector<8x1280xf32>
      %cst_25 = arith.constant dense<0.000000e+00> : vector<1280xf32>
      %39 = vector.multi_reduction <add>, %38, %cst_25 [0] : vector<8x1280xf32> to vector<1280xf32>
      %40 = vector.shape_cast %39 : vector<1280xf32> to vector<1x1280xf32>
      %cst_26 = arith.constant 3.906250e-03 : f32
      %41 = vector.broadcast %cst_26 : f32 to vector<1x1280xf32>
      %42 = arith.mulf %40, %41 : vector<1x1280xf32>
      %43 = arith.truncf %42 : vector<1x1280xf32> to vector<1x1280xbf16>
      %c0_27 = arith.constant 0 : index
      %c0_28 = arith.constant 0 : index
      %44 = vector.load %arg7[%c0_27, %c0_28] : memref<1280x512xbf16, #tpu.memory_space<vmem>>, vector<1280x512xbf16>
      %cst_29 = arith.constant dense<0.000000e+00> : vector<1x512xf32>
      %45 = tpu.matmul %43, %44, %cst_29 {dimension_numbers = #tpu.dot_dimension_numbers<[1], [0], [0], [1], [0, 0, 1, 1], [], []>} : vector<1x1280xbf16>, vector<1280x512xbf16>, vector<1x512xf32> -> vector<1x512xf32>
      %c0_30 = arith.constant 0 : index
      %c0_31 = arith.constant 0 : index
      %46 = vector.load %arg8[%c0_30, %c0_31] : memref<1x512xf32, #tpu.memory_space<vmem>>, vector<1x512xf32>
      %47 = arith.addf %45, %46 : vector<1x512xf32>
      %cst_32 = arith.constant 0.000000e+00 : f32
      %48 = vector.broadcast %cst_32 : f32 to vector<1x512xf32>
      %49 = arith.maximumf %47, %48 : vector<1x512xf32>
      %50 = arith.truncf %49 : vector<1x512xf32> to vector<1x512xbf16>
      %c0_33 = arith.constant 0 : index
      %c0_34 = arith.constant 0 : index
      %51 = vector.load %arg9[%c0_33, %c0_34] : memref<512x256xbf16, #tpu.memory_space<vmem>>, vector<512x256xbf16>
      %cst_35 = arith.constant dense<0.000000e+00> : vector<1x256xf32>
      %52 = tpu.matmul %50, %51, %cst_35 {dimension_numbers = #tpu.dot_dimension_numbers<[1], [0], [0], [1], [0, 0, 1, 1], [], []>} : vector<1x512xbf16>, vector<512x256xbf16>, vector<1x256xf32> -> vector<1x256xf32>
      %c0_36 = arith.constant 0 : index
      %c0_37 = arith.constant 0 : index
      %53 = vector.load %arg10[%c0_36, %c0_37] : memref<1x256xf32, #tpu.memory_space<vmem>>, vector<1x256xf32>
      %54 = arith.addf %52, %53 : vector<1x256xf32>
      %cst_38 = arith.constant 0.000000e+00 : f32
      %55 = vector.broadcast %cst_38 : f32 to vector<1x256xf32>
      %56 = arith.maximumf %54, %55 : vector<1x256xf32>
      %57 = arith.truncf %56 : vector<1x256xf32> to vector<1x256xbf16>
      %c0_39 = arith.constant 0 : index
      %c0_40 = arith.constant 0 : index
      %58 = vector.load %arg11[%c0_39, %c0_40] : memref<256x128xbf16, #tpu.memory_space<vmem>>, vector<256x128xbf16>
      %cst_41 = arith.constant dense<0.000000e+00> : vector<1x128xf32>
      %59 = tpu.matmul %57, %58, %cst_41 {dimension_numbers = #tpu.dot_dimension_numbers<[1], [0], [0], [1], [0, 0, 1, 1], [], []>} : vector<1x256xbf16>, vector<256x128xbf16>, vector<1x128xf32> -> vector<1x128xf32>
      %c0_42 = arith.constant 0 : index
      %c0_43 = arith.constant 0 : index
      %60 = vector.load %arg12[%c0_42, %c0_43] : memref<1x128xf32, #tpu.memory_space<vmem>>, vector<1x128xf32>
      %61 = arith.addf %59, %60 : vector<1x128xf32>
      %62 = math.tanh %61 : vector<1x128xf32>
      %63 = vector.shape_cast %62 : vector<1x128xf32> to vector<1x1x128xf32>
      %c0_44 = arith.constant 0 : index
      %c0_45 = arith.constant 0 : index
      %c0_46 = arith.constant 0 : index
      %64 = vector.load %arg13[%c0_44, %c0_45, %c0_46] : memref<1x1x128xf32, #tpu.memory_space<vmem>>, vector<1x1x128xf32>
      tpu.vector_store %arg13[%c0_44, %c0_45, %c0_46], %63 {strides = array<i32>} : memref<1x1x128xf32, #tpu.memory_space<vmem>>, vector<1x1x128xf32>,
    } else {
    }
    return
  }
  func.func @transform_0(%arg0: i32, %arg1: i32) -> (i32, i32, i32) {
    %c0_i32 = arith.constant 0 : i32
    %c0_i32_0 = arith.constant 0 : i32
    return %arg0, %arg1, %c0_i32 : i32, i32, i32
  }
  func.func @transform_1(%arg0: i32, %arg1: i32) -> (i32, i32) {
    %c0_i32 = arith.constant 0 : i32
    %c0_i32_0 = arith.constant 0 : i32
    %c0_i32_1 = arith.constant 0 : i32
    return %c0_i32, %c0_i32_0 : i32, i32
  }
  func.func @transform_2(%arg0: i32, %arg1: i32) -> (i32, i32) {
    %c0_i32 = arith.constant 0 : i32
    %c0_i32_0 = arith.constant 0 : i32
    %c0_i32_1 = arith.constant 0 : i32
    return %c0_i32, %c0_i32_0 : i32, i32
  }
  func.func @transform_3(%arg0: i32, %arg1: i32) -> (i32, i32) {
    %c0_i32 = arith.constant 0 : i32
    %c0_i32_0 = arith.constant 0 : i32
    %c0_i32_1 = arith.constant 0 : i32
    return %c0_i32, %c0_i32_0 : i32, i32
  }
  func.func @transform_4(%arg0: i32, %arg1: i32) -> (i32, i32) {
    %c0_i32 = arith.constant 0 : i32
    %c0_i32_0 = arith.constant 0 : i32
    %c0_i32_1 = arith.constant 0 : i32
    return %c0_i32, %c0_i32_0 : i32, i32
  }
  func.func @transform_5(%arg0: i32, %arg1: i32) -> (i32, i32) {
    %c0_i32 = arith.constant 0 : i32
    %c0_i32_0 = arith.constant 0 : i32
    %c0_i32_1 = arith.constant 0 : i32
    return %c0_i32, %c0_i32_0 : i32, i32
  }
  func.func @transform_6(%arg0: i32, %arg1: i32) -> (i32, i32) {
    %c0_i32 = arith.constant 0 : i32
    %c0_i32_0 = arith.constant 0 : i32
    %c0_i32_1 = arith.constant 0 : i32
    return %c0_i32, %c0_i32_0 : i32, i32
  }
  func.func @transform_7(%arg0: i32, %arg1: i32) -> (i32, i32) {
    %c0_i32 = arith.constant 0 : i32
    %c0_i32_0 = arith.constant 0 : i32
    %c0_i32_1 = arith.constant 0 : i32
    return %c0_i32, %c0_i32_0 : i32, i32
  }
  func.func @transform_8(%arg0: i32, %arg1: i32) -> (i32, i32) {
    %c0_i32 = arith.constant 0 : i32
    %c0_i32_0 = arith.constant 0 : i32
    %c0_i32_1 = arith.constant 0 : i32
    return %c0_i32, %c0_i32_0 : i32, i32
  }
  func.func @transform_9(%arg0: i32, %arg1: i32) -> (i32, i32) {
    %c0_i32 = arith.constant 0 : i32
    %c0_i32_0 = arith.constant 0 : i32
    %c0_i32_1 = arith.constant 0 : i32
    return %c0_i32, %c0_i32_0 : i32, i32
  }
  func.func @transform_10(%arg0: i32, %arg1: i32) -> (i32, i32) {
    %c0_i32 = arith.constant 0 : i32
    %c0_i32_0 = arith.constant 0 : i32
    %c0_i32_1 = arith.constant 0 : i32
    return %c0_i32, %c0_i32_0 : i32, i32
  }
  func.func @transform_11(%arg0: i32, %arg1: i32) -> (i32, i32, i32) {
    %c0_i32 = arith.constant 0 : i32
    %c0_i32_0 = arith.constant 0 : i32
    %c0_i32_1 = arith.constant 0 : i32
    return %arg0, %c0_i32, %c0_i32_0 : i32, i32, i32
  }
}

</mosaic_0001>

<llo_original>
// kernel: policy_forward.1
$region0: #{policy_forward.1}
  #allocation0 [shape = 'u32[]', space=smem, size = 0x4, offset = 0x4, fixed_abs, tag = 'smem constant byte address 0x4 - core index']
  #allocation1 [shape = 'u32[144,128]{1,0:T(1,128)}', space=vmem, size = 0x12000, scoped, tag = 'internal scratch']
  #allocation2 [shape = 'f32[8,1280]{1,0:T(8,128)}', space=vmem, size = 0xa000, scoped, tag = 'scratch operand']
  %s0 = inlined_call_operand.vmem [shape: bf16[2,256,32], index: 0, kind: input, shape index: {}]
  %s1 = inlined_call_operand.vmem [shape: bf16[32,32], index: 1, kind: input, shape index: {}]
  %s2 = inlined_call_operand.vmem [shape: f32[1,32], index: 2, kind: input, shape index: {}]
  %s3 = inlined_call_operand.vmem [shape: bf16[32,1280], index: 3, kind: input, shape index: {}]
  %s4 = inlined_call_operand.vmem [shape: f32[1,1280], index: 4, kind: input, shape index: {}]
  %s5 = inlined_call_operand.vmem [shape: bf16[1280,512], index: 5, kind: input, shape index: {}]
  %s6 = inlined_call_operand.vmem [shape: f32[1,512], index: 6, kind: input, shape index: {}]
  %s7 = inlined_call_operand.vmem [shape: bf16[512,256], index: 7, kind: input, shape index: {}]
  %s8 = inlined_call_operand.vmem [shape: f32[1,256], index: 8, kind: input, shape index: {}]
  %s9 = inlined_call_operand.vmem [shape: bf16[256,128], index: 9, kind: input, shape index: {}]
  %s10 = inlined_call_operand.vmem [shape: f32[1,128], index: 10, kind: input, shape index: {}]
  %s11 = inlined_call_operand.hbm [shape: f32[2,1,128], index: 11, kind: output, shape index: {}]
  %s12 = sld [smem:[#allocation0]]
  $region85: #{policy_forward.1} parent=0
    _
  %s14 = ssub.s32 1, %s12
  %s15 = scalar_select 0, %s14, %s12
  $region1: #{policy_forward.1} parent=0
    #allocation3 [shape = 'u8[1024]{0}', space=vmem, size = 0x400, scoped, tag = 'output window, operand 0']
    #allocation4 [shape = 's32[2]{0}', space=sflag, size = 0x8, scoped, tag = 'scoped memory for policy_forward.1']
    %16 = vsyncpa [#allocation4], 0
    %s17 = scalar_lea.sflag [#allocation4], 1
    %18 = vsyncpa %s17, 0
    loop: start=0, step=1, limit=4
    $region2: #{policy_forward.1} parent=1 // loop_pre_header
      _
    $region3: #{policy_forward.1} parent=1 // loop_header
      %s20 = sphi 0, %s24
      %p21 = scmp.ge.s32.totalorder %s20, 4
      %s27 = sphi 0, %s39
      %s28 = sphi 0, %s35
      %s29 = sphi 0, %s27
      %s30 = sphi 0, %s28
      %s31 = sphi 0, %s29
      %s32 = sphi 0, %s30
      %s44 = sphi 0, %s46
      %s47 = sphi 0, %s44
      %s48 = sphi 0, %s47
      %s64 = sphi 0, %s48
      %s68 = sphi 0, %s68
      %s70 = sphi 0, %s68
      %s71 = sphi 0, %s70
      %s85 = sphi 0, %s71
      %s89 = sphi 0, %s89
      %s91 = sphi 0, %s89
      %s92 = sphi 0, %s91
      %s106 = sphi 0, %s92
      %s110 = sphi 0, %s110
      %s112 = sphi 0, %s110
      %s113 = sphi 0, %s112
      %s127 = sphi 0, %s113
      %s131 = sphi 0, %s131
      %s133 = sphi 0, %s131
      %s134 = sphi 0, %s133
      %s148 = sphi 0, %s134
      %s152 = sphi 0, %s152
      %s154 = sphi 0, %s152
      %s155 = sphi 0, %s154
      %s169 = sphi 0, %s155
      %s173 = sphi 0, %s173
      %s175 = sphi 0, %s173
      %s176 = sphi 0, %s175
      %s190 = sphi 0, %s176
      %s194 = sphi 0, %s194
      %s196 = sphi 0, %s194
      %s197 = sphi 0, %s196
      %s211 = sphi 0, %s197
      %s215 = sphi 0, %s215
      %s217 = sphi 0, %s215
      %s218 = sphi 0, %s217
      %s232 = sphi 0, %s218
      %s236 = sphi 0, %s236
      %s238 = sphi 0, %s236
      %s239 = sphi 0, %s238
      %s253 = sphi 0, %s239
      %s257 = sphi 0, %s257
      %s259 = sphi 0, %s257
      %s260 = sphi 0, %s259
      %s274 = sphi 0, %s260
      %s280 = sphi 0, %s282
      %s283 = sphi 0, %s280
      %s284 = sphi 0, %s283
      %s300 = sphi 0, %s284
    $region4: #{policy_forward.1} parent=1 // loop_header_branch
      %23 = sbr.rel (%p21) target = $region8
    $region5: #{policy_forward.1} parent=1 // loop_body
      %s25 = ssub.s32 %s20, 1
      %s26 = ssub.s32 %s20, 2
      %s33 = sadd.s32 1, %s28
      %p34 = scmp.ge.s32.totalorder %s33, 1
      %s35 = scalar_select %p34, 0, %s33
      %s36 = sadd.s32 1, %s27
      %s37 = scalar_select %p34, %s36, %s27
      %p38 = scmp.ge.s32.totalorder %s37, 2
      %s39 = scalar_select %p38, 0, %s37
      %s40 = ssub.s32 %s27, %s39
      %s41 = ssub.s32 %s28, %s35
      %s42 = sor.u32 %s40, %s41
      %p43 = scmp.eq.s32.totalorder %s42, 0
      %s45 = sadd.s32 %s44, 1
      %s46 = scalar_select %p43, %s44, %s45
      %p49 = pneg %p43
      %p50 = scmp.eq.s32.totalorder %s20, 1
      %p51 = por %p49, %p50
      %p52 = scmp.ne.s32.totalorder %s44, %s47
      %p53 = scmp.eq.s32.totalorder %s20, 0
      %p54 = por %p52, %p53
      %p55 = scmp.ne.s32.totalorder %s44, %s47
      %p56 = scmp.eq.s32.totalorder %s25, 1
      %p57 = por %p55, %p56
      %p58 = scmp.ne.s32.totalorder %s47, %s48
      %p59 = scmp.eq.s32.totalorder %s25, 0
      %p60 = por %p58, %p59
      %p61 = scmp.ne.s32.totalorder %s47, %s48
      %p62 = scmp.eq.s32.totalorder %s26, 1
      %p63 = por %p61, %p62
      %p65 = scmp.ne.s32.totalorder %s48, %s64
      %p66 = scmp.eq.s32.totalorder %s26, 0
      %p67 = por %p65, %p66
      %s69 = sadd.s32 %s68, 1
      %p72 = scmp.eq.s32.totalorder %s20, 1
      %p73 = scmp.ne.s32.totalorder %s68, %s70
      %p74 = scmp.eq.s32.totalorder %s20, 0
      %p75 = por %p73, %p74
      %p76 = scmp.ne.s32.totalorder %s68, %s70
      %p77 = scmp.eq.s32.totalorder %s25, 1
      %p78 = por %p76, %p77
      %p79 = scmp.ne.s32.totalorder %s70, %s71
      %p80 = scmp.eq.s32.totalorder %s25, 0
      %p81 = por %p79, %p80
      %p82 = scmp.ne.s32.totalorder %s70, %s71
      %p83 = scmp.eq.s32.totalorder %s26, 1
      %p84 = por %p82, %p83
      %p86 = scmp.ne.s32.totalorder %s71, %s85
      %p87 = scmp.eq.s32.totalorder %s26, 0
      %p88 = por %p86, %p87
      %s90 = sadd.s32 %s89, 1
      %p93 = scmp.eq.s32.totalorder %s20, 1
      %p94 = scmp.ne.s32.totalorder %s89, %s91
      %p95 = scmp.eq.s32.totalorder %s20, 0
      %p96 = por %p94, %p95
      %p97 = scmp.ne.s32.totalorder %s89, %s91
      %p98 = scmp.eq.s32.totalorder %s25, 1
      %p99 = por %p97, %p98
      %p100 = scmp.ne.s32.totalorder %s91, %s92
      %p101 = scmp.eq.s32.totalorder %s25, 0
      %p102 = por %p100, %p101
      %p103 = scmp.ne.s32.totalorder %s91, %s92
      %p104 = scmp.eq.s32.totalorder %s26, 1
      %p105 = por %p103, %p104
      %p107 = scmp.ne.s32.totalorder %s92, %s106
      %p108 = scmp.eq.s32.totalorder %s26, 0
      %p109 = por %p107, %p108
      %s111 = sadd.s32 %s110, 1
      %p114 = scmp.eq.s32.totalorder %s20, 1
      %p115 = scmp.ne.s32.totalorder %s110, %s112
      %p116 = scmp.eq.s32.totalorder %s20, 0
      %p117 = por %p115, %p116
      %p118 = scmp.ne.s32.totalorder %s110, %s112
      %p119 = scmp.eq.s32.totalorder %s25, 1
      %p120 = por %p118, %p119
      %p121 = scmp.ne.s32.totalorder %s112, %s113
      %p122 = scmp.eq.s32.totalorder %s25, 0
      %p123 = por %p121, %p122
      %p124 = scmp.ne.s32.totalorder %s112, %s113
      %p125 = scmp.eq.s32.totalorder %s26, 1
      %p126 = por %p124, %p125
      %p128 = scmp.ne.s32.totalorder %s113, %s127
      %p129 = scmp.eq.s32.totalorder %s26, 0
      %p130 = por %p128, %p129
      %s132 = sadd.s32 %s131, 1
      %p135 = scmp.eq.s32.totalorder %s20, 1
      %p136 = scmp.ne.s32.totalorder %s131, %s133
      %p137 = scmp.eq.s32.totalorder %s20, 0
      %p138 = por %p136, %p137
      %p139 = scmp.ne.s32.totalorder %s131, %s133
      %p140 = scmp.eq.s32.totalorder %s25, 1
      %p141 = por %p139, %p140
      %p142 = scmp.ne.s32.totalorder %s133, %s134
      %p143 = scmp.eq.s32.totalorder %s25, 0
      %p144 = por %p142, %p143
      %p145 = scmp.ne.s32.totalorder %s133, %s134
      %p146 = scmp.eq.s32.totalorder %s26, 1
      %p147 = por %p145, %p146
      %p149 = scmp.ne.s32.totalorder %s134, %s148
      %p150 = scmp.eq.s32.totalorder %s26, 0
      %p151 = por %p149, %p150
      %s153 = sadd.s32 %s152, 1
      %p156 = scmp.eq.s32.totalorder %s20, 1
      %p157 = scmp.ne.s32.totalorder %s152, %s154
      %p158 = scmp.eq.s32.totalorder %s20, 0
      %p159 = por %p157, %p158
      %p160 = scmp.ne.s32.totalorder %s152, %s154
      %p161 = scmp.eq.s32.totalorder %s25, 1
      %p162 = por %p160, %p161
      %p163 = scmp.ne.s32.totalorder %s154, %s155
      %p164 = scmp.eq.s32.totalorder %s25, 0
      %p165 = por %p163, %p164
      %p166 = scmp.ne.s32.totalorder %s154, %s155
      %p167 = scmp.eq.s32.totalorder %s26, 1
      %p168 = por %p166, %p167
      %p170 = scmp.ne.s32.totalorder %s155, %s169
      %p171 = scmp.eq.s32.totalorder %s26, 0
      %p172 = por %p170, %p171
      %s174 = sadd.s32 %s173, 1
      %p177 = scmp.eq.s32.totalorder %s20, 1
      %p178 = scmp.ne.s32.totalorder %s173, %s175
      %p179 = scmp.eq.s32.totalorder %s20, 0
      %p180 = por %p178, %p179
      %p181 = scmp.ne.s32.totalorder %s173, %s175
      %p182 = scmp.eq.s32.totalorder %s25, 1
      %p183 = por %p181, %p182
      %p184 = scmp.ne.s32.totalorder %s175, %s176
      %p185 = scmp.eq.s32.totalorder %s25, 0
      %p186 = por %p184, %p185
      %p187 = scmp.ne.s32.totalorder %s175, %s176
      %p188 = scmp.eq.s32.totalorder %s26, 1
      %p189 = por %p187, %p188
      %p191 = scmp.ne.s32.totalorder %s176, %s190
      %p192 = scmp.eq.s32.totalorder %s26, 0
      %p193 = por %p191, %p192
      %s195 = sadd.s32 %s194, 1
      %p198 = scmp.eq.s32.totalorder %s20, 1
      %p199 = scmp.ne.s32.totalorder %s194, %s196
      %p200 = scmp.eq.s32.totalorder %s20, 0
      %p201 = por %p199, %p200
      %p202 = scmp.ne.s32.totalorder %s194, %s196
      %p203 = scmp.eq.s32.totalorder %s25, 1
      %p204 = por %p202, %p203
      %p205 = scmp.ne.s32.totalorder %s196, %s197
      %p206 = scmp.eq.s32.totalorder %s25, 0
      %p207 = por %p205, %p206
      %p208 = scmp.ne.s32.totalorder %s196, %s197
      %p209 = scmp.eq.s32.totalorder %s26, 1
      %p210 = por %p208, %p209
      %p212 = scmp.ne.s32.totalorder %s197, %s211
      %p213 = scmp.eq.s32.totalorder %s26, 0
      %p214 = por %p212, %p213
      %s216 = sadd.s32 %s215, 1
      %p219 = scmp.eq.s32.totalorder %s20, 1
      %p220 = scmp.ne.s32.totalorder %s215, %s217
      %p221 = scmp.eq.s32.totalorder %s20, 0
      %p222 = por %p220, %p221
      %p223 = scmp.ne.s32.totalorder %s215, %s217
      %p224 = scmp.eq.s32.totalorder %s25, 1
      %p225 = por %p223, %p224
      %p226 = scmp.ne.s32.totalorder %s217, %s218
      %p227 = scmp.eq.s32.totalorder %s25, 0
      %p228 = por %p226, %p227
      %p229 = scmp.ne.s32.totalorder %s217, %s218
      %p230 = scmp.eq.s32.totalorder %s26, 1
      %p231 = por %p229, %p230
      %p233 = scmp.ne.s32.totalorder %s218, %s232
      %p234 = scmp.eq.s32.totalorder %s26, 0
      %p235 = por %p233, %p234
      %s237 = sadd.s32 %s236, 1
      %p240 = scmp.eq.s32.totalorder %s20, 1
      %p241 = scmp.ne.s32.totalorder %s236, %s238
      %p242 = scmp.eq.s32.totalorder %s20, 0
      %p243 = por %p241, %p242
      %p244 = scmp.ne.s32.totalorder %s236, %s238
      %p245 = scmp.eq.s32.totalorder %s25, 1
      %p246 = por %p244, %p245
      %p247 = scmp.ne.s32.totalorder %s238, %s239
      %p248 = scmp.eq.s32.totalorder %s25, 0
      %p249 = por %p247, %p248
      %p250 = scmp.ne.s32.totalorder %s238, %s239
      %p251 = scmp.eq.s32.totalorder %s26, 1
      %p252 = por %p250, %p251
      %p254 = scmp.ne.s32.totalorder %s239, %s253
      %p255 = scmp.eq.s32.totalorder %s26, 0
      %p256 = por %p254, %p255
      %s258 = sadd.s32 %s257, 1
      %p261 = scmp.eq.s32.totalorder %s20, 1
      %p262 = scmp.ne.s32.totalorder %s257, %s259
      %p263 = scmp.eq.s32.totalorder %s20, 0
      %p264 = por %p262, %p263
      %p265 = scmp.ne.s32.totalorder %s257, %s259
      %p266 = scmp.eq.s32.totalorder %s25, 1
      %p267 = por %p265, %p266
      %p268 = scmp.ne.s32.totalorder %s259, %s260
      %p269 = scmp.eq.s32.totalorder %s25, 0
      %p270 = por %p268, %p269
      %p271 = scmp.ne.s32.totalorder %s259, %s260
      %p272 = scmp.eq.s32.totalorder %s26, 1
      %p273 = por %p271, %p272
      %p275 = scmp.ne.s32.totalorder %s260, %s274
      %p276 = scmp.eq.s32.totalorder %s26, 0
      %p277 = por %p275, %p276
      %s278 = ssub.s32 %s27, %s39
      %p279 = scmp.eq.s32.totalorder %s278, 0
      %s281 = sadd.s32 %s280, 1
      %s282 = scalar_select %p279, %s280, %s281
      %p285 = pneg %p279
      %p286 = scmp.eq.s32.totalorder %s20, 1
      %p287 = por %p285, %p286
      %p288 = scmp.ne.s32.totalorder %s280, %s283
      %p289 = scmp.eq.s32.totalorder %s20, 0
      %p290 = por %p288, %p289
      %p291 = scmp.ne.s32.totalorder %s280, %s283
      %p292 = scmp.eq.s32.totalorder %s25, 1
      %p293 = por %p291, %p292
      %p294 = scmp.ne.s32.totalorder %s283, %s284
      %p295 = scmp.eq.s32.totalorder %s25, 0
      %p296 = por %p294, %p295
      %p297 = scmp.ne.s32.totalorder %s283, %s284
      %p298 = scmp.eq.s32.totalorder %s26, 1
      %p299 = por %p297, %p298
      %p301 = scmp.ne.s32.totalorder %s284, %s300
      %p302 = scmp.eq.s32.totalorder %s26, 0
      %p303 = por %p301, %p302
      %p304 = scmp.le.s32.totalorder 1, %s20
      %p305 = scmp.lt.s32.totalorder %s20, 3
      %p306 = pnand %p304, %p305
      %p307 = pneg %p306
      // Predicated region
      $region9: #{policy_forward.1} parent=5 // pred_check
        _
      $region10: #{policy_forward.1} parent=5 // pred_check_branch
        %309 = sbr.rel (%p306) target = $region12
      $region11: #{policy_forward.1} parent=5 // pred_region
        %s310 = ssub.s32 %s20, 1
        // Predicated region
        $region13: #{policy_forward.1} parent=11 // pred_check
          %p311 = pneg %p81
        $region14: #{policy_forward.1} parent=11 // pred_check_branch
          %313 = sbr.rel (%p311) target = $region16
        $region15: #{policy_forward.1} parent=11 // pred_region
          _
        $region16: #{policy_forward.1} parent=11 // pred_fallthru
          _
        // Predicated region
        $region17: #{policy_forward.1} parent=11 // pred_check
          %p314 = pneg %p102
        $region18: #{policy_forward.1} parent=11 // pred_check_branch
          %316 = sbr.rel (%p314) target = $region20
        $region19: #{policy_forward.1} parent=11 // pred_region
          _
        $region20: #{policy_forward.1} parent=11 // pred_fallthru
          _
        // Predicated region
        $region21: #{policy_forward.1} parent=11 // pred_check
          %p317 = pneg %p123
        $region22: #{policy_forward.1} parent=11 // pred_check_branch
          %319 = sbr.rel (%p317) target = $region24
        $region23: #{policy_forward.1} parent=11 // pred_region
          _
        $region24: #{policy_forward.1} parent=11 // pred_fallthru
          _
        // Predicated region
        $region25: #{policy_forward.1} parent=11 // pred_check
          %p320 = pneg %p144
        $region26: #{policy_forward.1} parent=11 // pred_check_branch
          %322 = sbr.rel (%p320) target = $region28
        $region27: #{policy_forward.1} parent=11 // pred_region
          _
        $region28: #{policy_forward.1} parent=11 // pred_fallthru
          _
        // Predicated region
        $region29: #{policy_forward.1} parent=11 // pred_check
          %p323 = pneg %p165
        $region30: #{policy_forward.1} parent=11 // pred_check_branch
          %325 = sbr.rel (%p323) target = $region32
        $region31: #{policy_forward.1} parent=11 // pred_region
          _
        $region32: #{policy_forward.1} parent=11 // pred_fallthru
          _
        // Predicated region
        $region33: #{policy_forward.1} parent=11 // pred_check
          %p326 = pneg %p186
        $region34: #{policy_forward.1} parent=11 // pred_check_branch
          %328 = sbr.rel (%p326) target = $region36
        $region35: #{policy_forward.1} parent=11 // pred_region
          _
        $region36: #{policy_forward.1} parent=11 // pred_fallthru
          _
        // Predicated region
        $region37: #{policy_forward.1} parent=11 // pred_check
          %p329 = pneg %p207
        $region38: #{policy_forward.1} parent=11 // pred_check_branch
          %331 = sbr.rel (%p329) target = $region40
        $region39: #{policy_forward.1} parent=11 // pred_region
          _
        $region40: #{policy_forward.1} parent=11 // pred_fallthru
          _
        // Predicated region
        $region41: #{policy_forward.1} parent=11 // pred_check
          %p332 = pneg %p228
        $region42: #{policy_forward.1} parent=11 // pred_check_branch
          %334 = sbr.rel (%p332) target = $region44
        $region43: #{policy_forward.1} parent=11 // pred_region
          _
        $region44: #{policy_forward.1} parent=11 // pred_fallthru
          _
        // Predicated region
        $region45: #{policy_forward.1} parent=11 // pred_check
          %p335 = pneg %p249
        $region46: #{policy_forward.1} parent=11 // pred_check_branch
          %337 = sbr.rel (%p335) target = $region48
        $region47: #{policy_forward.1} parent=11 // pred_region
          _
        $region48: #{policy_forward.1} parent=11 // pred_fallthru
          _
        // Predicated region
        $region49: #{policy_forward.1} parent=11 // pred_check
          %p338 = pneg %p270
        $region50: #{policy_forward.1} parent=11 // pred_check_branch
          %340 = sbr.rel (%p338) target = $region52
        $region51: #{policy_forward.1} parent=11 // pred_region
          _
        $region52: #{policy_forward.1} parent=11 // pred_fallthru
          _
      $region12: #{policy_forward.1} parent=5 // pred_fallthru
        _
      %p341 = scmp.lt.s32.totalorder %s20, 2
      // Predicated region
      $region53: #{policy_forward.1} parent=5 // pred_check
        %p342 = pneg %p341
      $region54: #{policy_forward.1} parent=5 // pred_check_branch
        %344 = sbr.rel (%p342) target = $region56
      $region55: #{policy_forward.1} parent=5 // pred_region
        // Predicated region
        $region57: #{policy_forward.1} parent=55 // pred_check
          %p345 = pneg %p54
        $region58: #{policy_forward.1} parent=55 // pred_check_branch
          %347 = sbr.rel (%p345) target = $region60
        $region59: #{policy_forward.1} parent=55 // pred_region
          %s348 = smul.u32 32, %s28
          %p349 = scmp.lt.s32.totalorder %s27, 1
          %s350 = scalar_select %p349, %s27, 1
          %p351 = scmp.lt.s32.totalorder %s348, 31
          %s352 = scalar_select %p351, %s348, 31
          %s353 = smul.addr %s350, 32
          %s354 = sadd.s32 %s352, %s353
          %s355 = smul.addr %s354, 4
          %s356 = scalar_lea.vmem %s0, %s355
          %s357 = smul.u32 32, %s28
        $region60: #{policy_forward.1} parent=55 // pred_fallthru
          _
      $region56: #{policy_forward.1} parent=5 // pred_fallthru
        _
      %p358 = scmp.le.s32.totalorder 1, %s20
      %p359 = scmp.lt.s32.totalorder %s20, 3
      %p360 = pnand %p358, %p359
      %p361 = pneg %p360
      // Predicated region
      $region61: #{policy_forward.1} parent=5 // pred_check
        _
      $region62: #{policy_forward.1} parent=5 // pred_check_branch
        %363 = sbr.rel (%p360) target = $region64
      $region63: #{policy_forward.1} parent=5 // pred_region
        %s364 = ssub.s32 %s20, 1
        %s365 = smul.u32 32, %s30
        %p366 = scmp.lt.s32.totalorder %s29, 1
        %s367 = scalar_select %p366, %s29, 1
        %p368 = scmp.lt.s32.totalorder %s365, 31
        %s369 = scalar_select %p368, %s365, 31
        %s370 = smul.addr %s367, 32
        %s371 = sadd.s32 %s369, %s370
        %s372 = smul.addr %s371, 4
        %s373 = scalar_lea.vmem %s0, %s372
        %p374 = pneg %p60
        %p375 = pneg %p57
        %p376 = pneg %p81
        %p377 = pneg %p78
        %p378 = pneg %p102
        %p379 = pneg %p99
        %p380 = pneg %p123
        %p381 = pneg %p120
        %p382 = pneg %p144
        %p383 = pneg %p141
        %p384 = pneg %p165
        %p385 = pneg %p162
        %p386 = pneg %p186
        %p387 = pneg %p183
        %p388 = pneg %p207
        %p389 = pneg %p204
        %p390 = pneg %p228
        %p391 = pneg %p225
        %p392 = pneg %p249
        %p393 = pneg %p246
        %p394 = pneg %p270
        %p395 = pneg %p267
        %p396 = pneg %p296
        %p397 = pneg %p293
        %s398 = sand.u32 %s283, 1
        %s399 = scalar_lea.sflag [#allocation4], %s398
        %s400 = sand.u32 %s283, 1
        %s401 = scalar_lea.vmem [#allocation3], %s400
        %s402 = smul.u32 32, %s30
        %p403 = scmp.lt.s32.totalorder %s29, 1
        %s404 = scalar_select %p403, %s29, 1
        %p405 = scmp.lt.s32.totalorder %s402, 31
        %s406 = scalar_select %p405, %s402, 31
        %s407 = smul.addr %s404, 32
        %s408 = sadd.s32 %s406, %s407
        %s409 = smul.addr %s408, 4
        %s410 = scalar_lea.vmem %s0, %s409
        %s411 = smul.u32 32, %s30
        %p413 = scmp.eq.s32.totalorder %s30, 0
        // Predicated region
        $region65: #{policy_forward.1} parent=63 // pred_check
          %p414 = pneg %p413
        $region66: #{policy_forward.1} parent=63 // pred_check_branch
          %416 = sbr.rel (%p414) target = $region68
        $region67: #{policy_forward.1} parent=63 // pred_region
          %417 = vst [vmem:[#allocation2] sm:$0xff] 0.0
          %418 = vst [vmem:[#allocation2 + $0x8] sm:$0xff] 0.0
          %419 = vst [vmem:[#allocation2 + $0x10] sm:$0xff] 0.0
          %420 = vst [vmem:[#allocation2 + $0x18] sm:$0xff] 0.0
          %421 = vst [vmem:[#allocation2 + $0x20] sm:$0xff] 0.0
          %422 = vst [vmem:[#allocation2 + $0x28] sm:$0xff] 0.0
          %423 = vst [vmem:[#allocation2 + $0x30] sm:$0xff] 0.0
          %424 = vst [vmem:[#allocation2 + $0x38] sm:$0xff] 0.0
          %425 = vst [vmem:[#allocation2 + $0x40] sm:$0xff] 0.0
          %426 = vst [vmem:[#allocation2 + $0x48] sm:$0xff] 0.0
          %427 = vst [vmem:[%s401] sm:$0x1] 0.0
        $region68: #{policy_forward.1} parent=63 // pred_fallthru
          _
        %v428 = vld [vmem:[%s410] sm:$0xf]
        %v429 = vld [vmem:[%s410 + $0x4] sm:$0xf]
        %v430 = vld [vmem:[%s410 + $0x8] sm:$0xf]
        %v431 = vld [vmem:[%s410 + $0xc] sm:$0xf]
        %v432 = vld [vmem:[%s410 + $0x10] sm:$0xf]
        %v433 = vld [vmem:[%s410 + $0x14] sm:$0xf]
        %v434 = vld [vmem:[%s410 + $0x18] sm:$0xf]
        %v435 = vld [vmem:[%s410 + $0x1c] sm:$0xf]
        %v436 = vld [vmem:[%s410 + $0x20] sm:$0xf]
        %v437 = vld [vmem:[%s410 + $0x24] sm:$0xf]
        %v438 = vld [vmem:[%s410 + $0x28] sm:$0xf]
        %v439 = vld [vmem:[%s410 + $0x2c] sm:$0xf]
        %v440 = vld [vmem:[%s410 + $0x30] sm:$0xf]
        %v441 = vld [vmem:[%s410 + $0x34] sm:$0xf]
        %v442 = vld [vmem:[%s410 + $0x38] sm:$0xf]
        %v443 = vld [vmem:[%s410 + $0x3c] sm:$0xf]
        %v444 = vld [vmem:[%s410 + $0x40] sm:$0xf]
        %v445 = vld [vmem:[%s410 + $0x44] sm:$0xf]
        %v446 = vld [vmem:[%s410 + $0x48] sm:$0xf]
        %v447 = vld [vmem:[%s410 + $0x4c] sm:$0xf]
        %v448 = vld [vmem:[%s410 + $0x50] sm:$0xf]
        %v449 = vld [vmem:[%s410 + $0x54] sm:$0xf]
        %v450 = vld [vmem:[%s410 + $0x58] sm:$0xf]
        %v451 = vld [vmem:[%s410 + $0x5c] sm:$0xf]
        %v452 = vld [vmem:[%s410 + $0x60] sm:$0xf]
        %v453 = vld [vmem:[%s410 + $0x64] sm:$0xf]
        %v454 = vld [vmem:[%s410 + $0x68] sm:$0xf]
        %v455 = vld [vmem:[%s410 + $0x6c] sm:$0xf]
        %v456 = vld [vmem:[%s410 + $0x70] sm:$0xf]
        %v457 = vld [vmem:[%s410 + $0x74] sm:$0xf]
        %v458 = vld [vmem:[%s410 + $0x78] sm:$0xf]
        %v459 = vld [vmem:[%s410 + $0x7c] sm:$0xf]
        %v460 = vld [vmem:[%s1] sm:$0xf]
        %v461 = vld [vmem:[%s1 + $0x4] sm:$0xf]
        %v462 = vld [vmem:[%s1 + $0x8] sm:$0xf]
        %v463 = vld [vmem:[%s1 + $0xc] sm:$0xf]
        %v464 = vld [vmem:[%s2] sm:$0x1]
        %v466 = vlaneseq
        %v467 = vshrl.u32 %v466, 7
        %v468 = vsub.s32 0, %v467
        %v469 = vrot.slane %v464, %v468
        %v503 = vunpack.c.l.b16 %v428
        %v504 = vunpack.c.l.b16 %v429
        %v505 = vunpack.c.l.b16 %v430
        %v506 = vunpack.c.l.b16 %v431
        %v507 = vunpack.c.l.b16 %v432
        %v508 = vunpack.c.l.b16 %v433
        %v509 = vunpack.c.l.b16 %v434
        %v510 = vunpack.c.l.b16 %v435
        %v511 = vunpack.c.l.b16 %v436
        %v512 = vunpack.c.l.b16 %v437
        %v513 = vunpack.c.l.b16 %v438
        %v514 = vunpack.c.l.b16 %v439
        %v515 = vunpack.c.l.b16 %v440
        %v516 = vunpack.c.l.b16 %v441
        %v517 = vunpack.c.l.b16 %v442
        %v518 = vunpack.c.l.b16 %v443
        %v519 = vunpack.c.l.b16 %v444
        %v520 = vunpack.c.l.b16 %v445
        %v521 = vunpack.c.l.b16 %v446
        %v522 = vunpack.c.l.b16 %v447
        %v523 = vunpack.c.l.b16 %v448
        %v524 = vunpack.c.l.b16 %v449
        %v525 = vunpack.c.l.b16 %v450
        %v526 = vunpack.c.l.b16 %v451
        %v527 = vunpack.c.l.b16 %v452
        %v528 = vunpack.c.l.b16 %v453
        %v529 = vunpack.c.l.b16 %v454
        %v530 = vunpack.c.l.b16 %v455
        %v531 = vunpack.c.l.b16 %v456
        %v532 = vunpack.c.l.b16 %v457
        %v533 = vunpack.c.l.b16 %v458
        %v534 = vunpack.c.l.b16 %v459
        %v535 = vpack.c.b16 %v504, %v503
        %v536 = vpack.c.b16 %v506, %v505
        %v537 = vpack.c.b16 %v508, %v507
        %v538 = vpack.c.b16 %v510, %v509
        %v539 = vpack.c.b16 %v512, %v511
        %v540 = vpack.c.b16 %v514, %v513
        %v541 = vpack.c.b16 %v516, %v515
        %v542 = vpack.c.b16 %v518, %v517
        %v543 = vpack.c.b16 %v520, %v519
        %v544 = vpack.c.b16 %v522, %v521
        %v545 = vpack.c.b16 %v524, %v523
        %v546 = vpack.c.b16 %v526, %v525
        %v547 = vpack.c.b16 %v528, %v527
        %v548 = vpack.c.b16 %v530, %v529
        %v549 = vpack.c.b16 %v532, %v531
        %v550 = vpack.c.b16 %v534, %v533
        %v555 = vunpack.c.l.b16 %v460
        %v556 = vunpack.c.l.b16 %v461
        %v557 = vunpack.c.l.b16 %v462
        %v558 = vunpack.c.l.b16 %v463
        %v559 = vpack.c.b16 %v556, %v555
        %v560 = vpack.c.b16 %v558, %v557
        %vm563 = vcmask 261120
        %v565 = vsel %vm563, %v535, 0
        %v568 = vsel %vm563, %v536, 0
        %v571 = vsel %vm563, %v537, 0
        %v574 = vsel %vm563, %v538, 0
        %v577 = vsel %vm563, %v539, 0
        %v580 = vsel %vm563, %v540, 0
        %v583 = vsel %vm563, %v541, 0
        %v586 = vsel %vm563, %v542, 0
        %v589 = vsel %vm563, %v543, 0
        %v592 = vsel %vm563, %v544, 0
        %v595 = vsel %vm563, %v545, 0
        %v598 = vsel %vm563, %v546, 0
        %v601 = vsel %vm563, %v547, 0
        %v604 = vsel %vm563, %v548, 0
        %v607 = vsel %vm563, %v549, 0
        %v610 = vsel %vm563, %v550, 0
        %612 = vmatprep.subr.bf16.mxu0 0
        %613 = vmatpush1.bf16.msra.mxu0 %v559
        %614 = vmatprep.subr.bf16.mxu0 0
        %615 = vmatpush1.bf16.msra.mxu0 %v560
        %616 = vmatprep.subr.bf16.mxu0 0
        %617 = vmatpush1.bf16.msra.mxu0 0
        %618 = vmatprep.subr.bf16.mxu0 0
        %619 = vmatpush1.bf16.msra.mxu0 0
        %620 = vmatprep.subr.bf16.mxu0 0
        %621 = vmatpush1.bf16.msra.mxu0 0
        %622 = vmatprep.subr.bf16.mxu0 0
        %623 = vmatpush1.bf16.msra.mxu0 0
        %624 = vmatprep.subr.bf16.mxu0 0
        %625 = vmatpush1.bf16.msra.mxu0 0
        %626 = vmatprep.subr.bf16.mxu0 0
        %627 = vmatpush1.bf16.msra.mxu0 0
        %628 = vmatprep.subr.bf16.mxu0 0
        %629 = vmatpush1.bf16.msra.mxu0 0
        %630 = vmatprep.subr.bf16.mxu0 0
        %631 = vmatpush1.bf16.msra.mxu0 0
        %632 = vmatprep.subr.bf16.mxu0 0
        %633 = vmatpush1.bf16.msra.mxu0 0
        %634 = vmatprep.subr.bf16.mxu0 0
        %635 = vmatpush1.bf16.msra.mxu0 0
        %636 = vmatprep.subr.bf16.mxu0 0
        %637 = vmatpush1.bf16.msra.mxu0 0
        %638 = vmatprep.subr.bf16.mxu0 0
        %639 = vmatpush1.bf16.msra.mxu0 0
        %640 = vmatprep.subr.bf16.mxu0 0
        %641 = vmatpush1.bf16.msra.mxu0 0
        %642 = vmatprep.subr.bf16.mxu0 0
        %643 = vmatpush1.bf16.msra.mxu0 0
        %644 = vmatprep.mubr.bf16.mxu0 0
        %645 = vmatmul.mubr.bf16.gmra.mrb[0].mxu0 %v565
        %v646 = vpop.f32.mrb[0].mxu0
        %v647 = vadd.f32 %v469, %v646
        %v648 = vpop.f32.mrb[0].mxu0
        %v649 = vpop.f32.mrb[0].mxu0
        %v650 = vadd.f32 %v469, %v649
        %v651 = vpop.f32.mrb[0].mxu0
        %652 = vmatprep.mubr.bf16.mxu0 0
        %653 = vmatmul.mubr.bf16.gmra.mrb[0].mxu0 %v568
        %v654 = vpop.f32.mrb[0].mxu0
        %v655 = vadd.f32 %v469, %v654
        %v656 = vpop.f32.mrb[0].mxu0
        %v657 = vpop.f32.mrb[0].mxu0
        %v658 = vadd.f32 %v469, %v657
        %v659 = vpop.f32.mrb[0].mxu0
        %660 = vmatprep.mubr.bf16.mxu0 0
        %661 = vmatmul.mubr.bf16.gmra.mrb[0].mxu0 %v571
        %v662 = vpop.f32.mrb[0].mxu0
        %v663 = vadd.f32 %v469, %v662
        %v664 = vpop.f32.mrb[0].mxu0
        %v665 = vpop.f32.mrb[0].mxu0
        %v666 = vadd.f32 %v469, %v665
        %v667 = vpop.f32.mrb[0].mxu0
        %668 = vmatprep.mubr.bf16.mxu0 0
        %669 = vmatmul.mubr.bf16.gmra.mrb[0].mxu0 %v574
        %v670 = vpop.f32.mrb[0].mxu0
        %v671 = vadd.f32 %v469, %v670
        %v672 = vpop.f32.mrb[0].mxu0
        %v673 = vpop.f32.mrb[0].mxu0
        %v674 = vadd.f32 %v469, %v673
        %v675 = vpop.f32.mrb[0].mxu0
        %676 = vmatprep.mubr.bf16.mxu0 0
        %677 = vmatmul.mubr.bf16.gmra.mrb[0].mxu0 %v577
        %v678 = vpop.f32.mrb[0].mxu0
        %v679 = vadd.f32 %v469, %v678
        %v680 = vpop.f32.mrb[0].mxu0
        %v681 = vpop.f32.mrb[0].mxu0
        %v682 = vadd.f32 %v469, %v681
        %v683 = vpop.f32.mrb[0].mxu0
        %684 = vmatprep.mubr.bf16.mxu0 0
        %685 = vmatmul.mubr.bf16.gmra.mrb[0].mxu0 %v580
        %v686 = vpop.f32.mrb[0].mxu0
        %v687 = vadd.f32 %v469, %v686
        %v688 = vpop.f32.mrb[0].mxu0
        %v689 = vpop.f32.mrb[0].mxu0
        %v690 = vadd.f32 %v469, %v689
        %v691 = vpop.f32.mrb[0].mxu0
        %692 = vmatprep.mubr.bf16.mxu0 0
        %693 = vmatmul.mubr.bf16.gmra.mrb[0].mxu0 %v583
        %v694 = vpop.f32.mrb[0].mxu0
        %v695 = vadd.f32 %v469, %v694
        %v696 = vpop.f32.mrb[0].mxu0
        %v697 = vpop.f32.mrb[0].mxu0
        %v698 = vadd.f32 %v469, %v697
        %v699 = vpop.f32.mrb[0].mxu0
        %700 = vmatprep.mubr.bf16.mxu0 0
        %701 = vmatmul.mubr.bf16.gmra.mrb[0].mxu0 %v586
        %v702 = vpop.f32.mrb[0].mxu0
        %v703 = vadd.f32 %v469, %v702
        %v704 = vpop.f32.mrb[0].mxu0
        %v705 = vpop.f32.mrb[0].mxu0
        %v706 = vadd.f32 %v469, %v705
        %v707 = vpop.f32.mrb[0].mxu0
        %708 = vmatprep.mubr.bf16.mxu0 0
        %709 = vmatmul.mubr.bf16.gmra.mrb[0].mxu0 %v589
        %v710 = vpop.f32.mrb[0].mxu0
        %v711 = vadd.f32 %v469, %v710
        %v712 = vpop.f32.mrb[0].mxu0
        %v713 = vpop.f32.mrb[0].mxu0
        %v714 = vadd.f32 %v469, %v713
        %v715 = vpop.f32.mrb[0].mxu0
        %716 = vmatprep.mubr.bf16.mxu0 0
        %717 = vmatmul.mubr.bf16.gmra.mrb[0].mxu0 %v592
        %v718 = vpop.f32.mrb[0].mxu0
        %v719 = vadd.f32 %v469, %v718
        %v720 = vpop.f32.mrb[0].mxu0
        %v721 = vpop.f32.mrb[0].mxu0
        %v722 = vadd.f32 %v469, %v721
        %v723 = vpop.f32.mrb[0].mxu0
        %724 = vmatprep.mubr.bf16.mxu0 0
        %725 = vmatmul.mubr.bf16.gmra.mrb[0].mxu0 %v595
        %v726 = vpop.f32.mrb[0].mxu0
        %v727 = vadd.f32 %v469, %v726
        %v728 = vpop.f32.mrb[0].mxu0
        %v729 = vpop.f32.mrb[0].mxu0
        %v730 = vadd.f32 %v469, %v729
        %v731 = vpop.f32.mrb[0].mxu0
        %732 = vmatprep.mubr.bf16.mxu0 0
        %733 = vmatmul.mubr.bf16.gmra.mrb[0].mxu0 %v598
        %v734 = vpop.f32.mrb[0].mxu0
        %v735 = vadd.f32 %v469, %v734
        %v736 = vpop.f32.mrb[0].mxu0
        %v737 = vpop.f32.mrb[0].mxu0
        %v738 = vadd.f32 %v469, %v737
        %v739 = vpop.f32.mrb[0].mxu0
        %740 = vmatprep.mubr.bf16.mxu0 0
        %741 = vmatmul.mubr.bf16.gmra.mrb[0].mxu0 %v601
        %v742 = vpop.f32.mrb[0].mxu0
        %v743 = vadd.f32 %v469, %v742
        %v744 = vpop.f32.mrb[0].mxu0
        %v745 = vpop.f32.mrb[0].mxu0
        %v746 = vadd.f32 %v469, %v745
        %v747 = vpop.f32.mrb[0].mxu0
        %748 = vmatprep.mubr.bf16.mxu0 0
        %749 = vmatmul.mubr.bf16.gmra.mrb[0].mxu0 %v604
        %v750 = vpop.f32.mrb[0].mxu0
        %v751 = vadd.f32 %v469, %v750
        %v752 = vpop.f32.mrb[0].mxu0
        %v753 = vpop.f32.mrb[0].mxu0
        %v754 = vadd.f32 %v469, %v753
        %v755 = vpop.f32.mrb[0].mxu0
        %756 = vmatprep.mubr.bf16.mxu0 0
        %757 = vmatmul.mubr.bf16.gmra.mrb[0].mxu0 %v607
        %v758 = vpop.f32.mrb[0].mxu0
        %v759 = vadd.f32 %v469, %v758
        %v760 = vpop.f32.mrb[0].mxu0
        %v761 = vpop.f32.mrb[0].mxu0
        %v762 = vadd.f32 %v469, %v761
        %v763 = vpop.f32.mrb[0].mxu0
        %764 = vmatprep.mubr.bf16.mxu0 0
        %765 = vmatmul.mubr.bf16.gmra.mrb[0].mxu0 %v610
        %v766 = vpop.f32.mrb[0].mxu0
        %v767 = vadd.f32 %v469, %v766
        %v768 = vpop.f32.mrb[0].mxu0
        %v769 = vpop.f32.mrb[0].mxu0
        %v770 = vadd.f32 %v469, %v769
        %v771 = vpop.f32.mrb[0].mxu0
        %772 = vdwg.mxu0
        %v773 = vsub.f32 0.0, %v647
        %v774 = vsub.f32 0.0, %v650
        %v775 = vsub.f32 0.0, %v655
        %v776 = vsub.f32 0.0, %v658
        %v777 = vsub.f32 0.0, %v663
        %v778 = vsub.f32 0.0, %v666
        %v779 = vsub.f32 0.0, %v671
        %v780 = vsub.f32 0.0, %v674
        %v781 = vsub.f32 0.0, %v679
        %v782 = vsub.f32 0.0, %v682
        %v783 = vsub.f32 0.0, %v687
        %v784 = vsub.f32 0.0, %v690
        %v785 = vsub.f32 0.0, %v695
        %v786 = vsub.f32 0.0, %v698
        %v787 = vsub.f32 0.0, %v703
        %v788 = vsub.f32 0.0, %v706
        %v789 = vsub.f32 0.0, %v711
        %v790 = vsub.f32 0.0, %v714
        %v791 = vsub.f32 0.0, %v719
        %v792 = vsub.f32 0.0, %v722
        %v793 = vsub.f32 0.0, %v727
        %v794 = vsub.f32 0.0, %v730
        %v795 = vsub.f32 0.0, %v735
        %v796 = vsub.f32 0.0, %v738
        %v797 = vsub.f32 0.0, %v743
        %v798 = vsub.f32 0.0, %v746
        %v799 = vsub.f32 0.0, %v751
        %v800 = vsub.f32 0.0, %v754
        %v801 = vsub.f32 0.0, %v759
        %v802 = vsub.f32 0.0, %v762
        %v803 = vsub.f32 0.0, %v767
        %v804 = vsub.f32 0.0, %v770
        %v805 = vmul.f32 %v773, 1.442695
        %v806 = vpow.pop %v805
        %v807 = vmul.f32 %v774, 1.442695
        %v808 = vpow.pop %v807
        %v809 = vmul.f32 %v775, 1.442695
        %v810 = vpow.pop %v809
        %v811 = vmul.f32 %v776, 1.442695
        %v812 = vpow.pop %v811
        %v813 = vmul.f32 %v777, 1.442695
        %v814 = vpow.pop %v813
        %v815 = vmul.f32 %v778, 1.442695
        %v816 = vpow.pop %v815
        %v817 = vmul.f32 %v779, 1.442695
        %v818 = vpow.pop %v817
        %v819 = vmul.f32 %v780, 1.442695
        %v820 = vpow.pop %v819
        %v821 = vmul.f32 %v781, 1.442695
        %v822 = vpow.pop %v821
        %v823 = vmul.f32 %v782, 1.442695
        %v824 = vpow.pop %v823
        %v825 = vmul.f32 %v783, 1.442695
        %v826 = vpow.pop %v825
        %v827 = vmul.f32 %v784, 1.442695
        %v828 = vpow.pop %v827
        %v829 = vmul.f32 %v785, 1.442695
        %v830 = vpow.pop %v829
        %v831 = vmul.f32 %v786, 1.442695
        %v832 = vpow.pop %v831
        %v833 = vmul.f32 %v787, 1.442695
        %v834 = vpow.pop %v833
        %v835 = vmul.f32 %v788, 1.442695
        %v836 = vpow.pop %v835
        %v837 = vmul.f32 %v789, 1.442695
        %v838 = vpow.pop %v837
        %v839 = vmul.f32 %v790, 1.442695
        %v840 = vpow.pop %v839
        %v841 = vmul.f32 %v791, 1.442695
        %v842 = vpow.pop %v841
        %v843 = vmul.f32 %v792, 1.442695
        %v844 = vpow.pop %v843
        %v845 = vmul.f32 %v793, 1.442695
        %v846 = vpow.pop %v845
        %v847 = vmul.f32 %v794, 1.442695
        %v848 = vpow.pop %v847
        %v849 = vmul.f32 %v795, 1.442695
        %v850 = vpow.pop %v849
        %v851 = vmul.f32 %v796, 1.442695
        %v852 = vpow.pop %v851
        %v853 = vmul.f32 %v797, 1.442695
        %v854 = vpow.pop %v853
        %v855 = vmul.f32 %v798, 1.442695
        %v856 = vpow.pop %v855
        %v857 = vmul.f32 %v799, 1.442695
        %v858 = vpow.pop %v857
        %v859 = vmul.f32 %v800, 1.442695
        %v860 = vpow.pop %v859
        %v861 = vmul.f32 %v801, 1.442695
        %v862 = vpow.pop %v861
        %v863 = vmul.f32 %v802, 1.442695
        %v864 = vpow.pop %v863
        %v865 = vmul.f32 %v803, 1.442695
        %v866 = vpow.pop %v865
        %v867 = vmul.f32 %v804, 1.442695
        %v868 = vpow.pop %v867
        %v869 = vadd.f32 %v806, 1.0
        %v870 = vadd.f32 %v808, 1.0
        %v871 = vadd.f32 %v810, 1.0
        %v872 = vadd.f32 %v812, 1.0
        %v873 = vadd.f32 %v814, 1.0
        %v874 = vadd.f32 %v816, 1.0
        %v875 = vadd.f32 %v818, 1.0
        %v876 = vadd.f32 %v820, 1.0
        %v877 = vadd.f32 %v822, 1.0
        %v878 = vadd.f32 %v824, 1.0
        %v879 = vadd.f32 %v826, 1.0
        %v880 = vadd.f32 %v828, 1.0
        %v881 = vadd.f32 %v830, 1.0
        %v882 = vadd.f32 %v832, 1.0
        %v883 = vadd.f32 %v834, 1.0
        %v884 = vadd.f32 %v836, 1.0
        %v885 = vadd.f32 %v838, 1.0
        %v886 = vadd.f32 %v840, 1.0
        %v887 = vadd.f32 %v842, 1.0
        %v888 = vadd.f32 %v844, 1.0
        %v889 = vadd.f32 %v846, 1.0
        %v890 = vadd.f32 %v848, 1.0
        %v891 = vadd.f32 %v850, 1.0
        %v892 = vadd.f32 %v852, 1.0
        %v893 = vadd.f32 %v854, 1.0
        %v894 = vadd.f32 %v856, 1.0
        %v895 = vadd.f32 %v858, 1.0
        %v896 = vadd.f32 %v860, 1.0
        %v897 = vadd.f32 %v862, 1.0
        %v898 = vadd.f32 %v864, 1.0
        %v899 = vadd.f32 %v866, 1.0
        %v900 = vadd.f32 %v868, 1.0
        %v901 = vrcp.pop %v869
        %v902 = vrcp.pop %v870
        %v903 = vrcp.pop %v871
        %v904 = vrcp.pop %v872
        %v905 = vrcp.pop %v873
        %v906 = vrcp.pop %v874
        %v907 = vrcp.pop %v875
        %v908 = vrcp.pop %v876
        %v909 = vrcp.pop %v877
        %v910 = vrcp.pop %v878
        %v911 = vrcp.pop %v879
        %v912 = vrcp.pop %v880
        %v913 = vrcp.pop %v881
        %v914 = vrcp.pop %v882
        %v915 = vrcp.pop %v883
        %v916 = vrcp.pop %v884
        %v917 = vrcp.pop %v885
        %v918 = vrcp.pop %v886
        %v919 = vrcp.pop %v887
        %v920 = vrcp.pop %v888
        %v921 = vrcp.pop %v889
        %v922 = vrcp.pop %v890
        %v923 = vrcp.pop %v891
        %v924 = vrcp.pop %v892
        %v925 = vrcp.pop %v893
        %v926 = vrcp.pop %v894
        %v927 = vrcp.pop %v895
        %v928 = vrcp.pop %v896
        %v929 = vrcp.pop %v897
        %v930 = vrcp.pop %v898
        %v931 = vrcp.pop %v899
        %v932 = vrcp.pop %v900
        %v933 = vmul.f32 %v647, %v901
        %v934 = vmul.f32 %v650, %v902
        %v935 = vmul.f32 %v655, %v903
        %v936 = vmul.f32 %v658, %v904
        %v937 = vmul.f32 %v663, %v905
        %v938 = vmul.f32 %v666, %v906
        %v939 = vmul.f32 %v671, %v907
        %v940 = vmul.f32 %v674, %v908
        %v941 = vmul.f32 %v679, %v909
        %v942 = vmul.f32 %v682, %v910
        %v943 = vmul.f32 %v687, %v911
        %v944 = vmul.f32 %v690, %v912
        %v945 = vmul.f32 %v695, %v913
        %v946 = vmul.f32 %v698, %v914
        %v947 = vmul.f32 %v703, %v915
        %v948 = vmul.f32 %v706, %v916
        %v949 = vmul.f32 %v711, %v917
        %v950 = vmul.f32 %v714, %v918
        %v951 = vmul.f32 %v719, %v919
        %v952 = vmul.f32 %v722, %v920
        %v953 = vmul.f32 %v727, %v921
        %v954 = vmul.f32 %v730, %v922
        %v955 = vmul.f32 %v735, %v923
        %v956 = vmul.f32 %v738, %v924
        %v957 = vmul.f32 %v743, %v925
        %v958 = vmul.f32 %v746, %v926
        %v959 = vmul.f32 %v751, %v927
        %v960 = vmul.f32 %v754, %v928
        %v961 = vmul.f32 %v759, %v929
        %v962 = vmul.f32 %v762, %v930
        %v963 = vmul.f32 %v767, %v931
        %v964 = vmul.f32 %v770, %v932
        %v965 = vpack.c.bf16 %v934, %v933
        %v966 = vpack.c.bf16 %v936, %v935
        %v967 = vpack.c.bf16 %v938, %v937
        %v968 = vpack.c.bf16 %v940, %v939
        %v969 = vpack.c.bf16 %v942, %v941
        %v970 = vpack.c.bf16 %v944, %v943
        %v971 = vpack.c.bf16 %v946, %v945
        %v972 = vpack.c.bf16 %v948, %v947
        %v973 = vpack.c.bf16 %v950, %v949
        %v974 = vpack.c.bf16 %v952, %v951
        %v975 = vpack.c.bf16 %v954, %v953
        %v976 = vpack.c.bf16 %v956, %v955
        %v977 = vpack.c.bf16 %v958, %v957
        %v978 = vpack.c.bf16 %v960, %v959
        %v979 = vpack.c.bf16 %v962, %v961
        %v980 = vpack.c.bf16 %v964, %v963
        %v981 = vld [vmem:[%s3] sm:$0xff]
        %v982 = vld [vmem:[%s3 + $0x8] sm:$0xff]
        %v983 = vld [vmem:[%s3 + $0x10] sm:$0xff]
        %v984 = vld [vmem:[%s3 + $0x18] sm:$0xff]
        %v985 = vld [vmem:[%s3 + $0x20] sm:$0xff]
        %v986 = vld [vmem:[%s3 + $0x28] sm:$0xff]
        %v987 = vld [vmem:[%s3 + $0x30] sm:$0xff]
        %v988 = vld [vmem:[%s3 + $0x38] sm:$0xff]
        %v989 = vld [vmem:[%s3 + $0x40] sm:$0xff]
        %v990 = vld [vmem:[%s3 + $0x48] sm:$0xff]
        %v991 = vld [vmem:[%s3 + $0x50] sm:$0xff]
        %v992 = vld [vmem:[%s3 + $0x58] sm:$0xff]
        %v993 = vld [vmem:[%s3 + $0x60] sm:$0xff]
        %v994 = vld [vmem:[%s3 + $0x68] sm:$0xff]
        %v995 = vld [vmem:[%s3 + $0x70] sm:$0xff]
        %v996 = vld [vmem:[%s3 + $0x78] sm:$0xff]
        %v997 = vld [vmem:[%s3 + $0x80] sm:$0xff]
        %v998 = vld [vmem:[%s3 + $0x88] sm:$0xff]
        %v999 = vld [vmem:[%s3 + $0x90] sm:$0xff]
        %v1000 = vld [vmem:[%s3 + $0x98] sm:$0xff]
        %v1001 = vld [vmem:[%s4] sm:$0xff]
        %v1002 = vld [vmem:[%s4 + $0x8] sm:$0x3]
        %v1005 = vlaneseq
        %v1006 = vshrl.u32 %v1005, 7
        %v1007 = vsub.s32 0, %v1006
        %v1008 = vrot.slane %v1001, %v1007
        %v1009 = vlaneseq
        %v1010 = vshrl.u32 %v1009, 7
        %v1011 = vsub.s32 1, %v1010
        %v1012 = vrot.slane %v1001, %v1011
        %v1013 = vlaneseq
        %v1014 = vshrl.u32 %v1013, 7
        %v1015 = vsub.s32 2, %v1014
        %v1016 = vrot.slane %v1001, %v1015
        %v1017 = vlaneseq
        %v1018 = vshrl.u32 %v1017, 7
        %v1019 = vsub.s32 3, %v1018
        %v1020 = vrot.slane %v1001, %v1019
        %v1021 = vlaneseq
        %v1022 = vshrl.u32 %v1021, 7
        %v1023 = vsub.s32 4, %v1022
        %v1024 = vrot.slane %v1001, %v1023
        %v1025 = vlaneseq
        %v1026 = vshrl.u32 %v1025, 7
        %v1027 = vsub.s32 5, %v1026
        %v1028 = vrot.slane %v1001, %v1027
        %v1029 = vlaneseq
        %v1030 = vshrl.u32 %v1029, 7
        %v1031 = vsub.s32 6, %v1030
        %v1032 = vrot.slane %v1001, %v1031
        %v1033 = vlaneseq
        %v1034 = vshrl.u32 %v1033, 7
        %v1035 = vsub.s32 7, %v1034
        %v1036 = vrot.slane %v1001, %v1035
        %v1037 = vlaneseq
        %v1038 = vshrl.u32 %v1037, 7
        %v1039 = vsub.s32 0, %v1038
        %v1040 = vrot.slane %v1002, %v1039
        %v1041 = vlaneseq
        %v1042 = vshrl.u32 %v1041, 7
        %v1043 = vsub.s32 1, %v1042
        %v1044 = vrot.slane %v1002, %v1043
        %v1075 = vunpack.c.l.b16 %v981
        %v1076 = vunpack.c.h.b16 %v981
        %v1077 = vunpack.c.l.b16 %v982
        %v1078 = vunpack.c.h.b16 %v982
        %v1079 = vunpack.c.l.b16 %v983
        %v1080 = vunpack.c.h.b16 %v983
        %v1081 = vunpack.c.l.b16 %v984
        %v1082 = vunpack.c.h.b16 %v984
        %v1083 = vunpack.c.l.b16 %v985
        %v1084 = vunpack.c.h.b16 %v985
        %v1085 = vunpack.c.l.b16 %v986
        %v1086 = vunpack.c.h.b16 %v986
        %v1087 = vunpack.c.l.b16 %v987
        %v1088 = vunpack.c.h.b16 %v987
        %v1089 = vunpack.c.l.b16 %v988
        %v1090 = vunpack.c.h.b16 %v988
        %v1091 = vunpack.c.l.b16 %v989
        %v1092 = vunpack.c.h.b16 %v989
        %v1093 = vunpack.c.l.b16 %v990
        %v1094 = vunpack.c.h.b16 %v990
        %v1095 = vunpack.c.l.b16 %v991
        %v1096 = vunpack.c.h.b16 %v991
        %v1097 = vunpack.c.l.b16 %v992
        %v1098 = vunpack.c.h.b16 %v992
        %v1099 = vunpack.c.l.b16 %v993
        %v1100 = vunpack.c.h.b16 %v993
        %v1101 = vunpack.c.l.b16 %v994
        %v1102 = vunpack.c.h.b16 %v994
        %v1103 = vunpack.c.l.b16 %v995
        %v1104 = vunpack.c.h.b16 %v995
        %v1105 = vunpack.c.l.b16 %v996
        %v1106 = vunpack.c.h.b16 %v996
        %v1107 = vunpack.c.l.b16 %v997
        %v1108 = vunpack.c.h.b16 %v997
        %v1109 = vunpack.c.l.b16 %v998
        %v1110 = vunpack.c.h.b16 %v998
        %v1111 = vunpack.c.l.b16 %v999
        %v1112 = vunpack.c.h.b16 %v999
        %v1113 = vunpack.c.l.b16 %v1000
        %v1114 = vunpack.c.h.b16 %v1000
        %v1115 = vpack.c.b16 %v1085, %v1075
        %v1116 = vpack.c.b16 %v1086, %v1076
        %v1117 = vpack.c.b16 %v1087, %v1077
        %v1118 = vpack.c.b16 %v1088, %v1078
        %v1119 = vpack.c.b16 %v1089, %v1079
        %v1120 = vpack.c.b16 %v1090, %v1080
        %v1121 = vpack.c.b16 %v1091, %v1081
        %v1122 = vpack.c.b16 %v1092, %v1082
        %v1123 = vpack.c.b16 %v1093, %v1083
        %v1124 = vpack.c.b16 %v1094, %v1084
        %v1125 = vpack.c.b16 %v1105, %v1095
        %v1126 = vpack.c.b16 %v1106, %v1096
        %v1127 = vpack.c.b16 %v1107, %v1097
        %v1128 = vpack.c.b16 %v1108, %v1098
        %v1129 = vpack.c.b16 %v1109, %v1099
        %v1130 = vpack.c.b16 %v1110, %v1100
        %v1131 = vpack.c.b16 %v1111, %v1101
        %v1132 = vpack.c.b16 %v1112, %v1102
        %v1133 = vpack.c.b16 %v1113, %v1103
        %v1134 = vpack.c.b16 %v1114, %v1104
        %v1156 = vsel %vm563, %v965, 0
        %v1159 = vsel %vm563, %v966, 0
        %v1162 = vsel %vm563, %v967, 0
        %v1165 = vsel %vm563, %v968, 0
        %v1168 = vsel %vm563, %v969, 0
        %v1171 = vsel %vm563, %v970, 0
        %v1174 = vsel %vm563, %v971, 0
        %v1177 = vsel %vm563, %v972, 0
        %v1180 = vsel %vm563, %v973, 0
        %v1183 = vsel %vm563, %v974, 0
        %v1186 = vsel %vm563, %v975, 0
        %v1189 = vsel %vm563, %v976, 0
        %v1192 = vsel %vm563, %v977, 0
        %v1195 = vsel %vm563, %v978, 0
        %v1198 = vsel %vm563, %v979, 0
        %v1201 = vsel %vm563, %v980, 0
        %1203 = vmatprep.subr.bf16.mxu0 %v1116
        %1204 = vmatpush1.bf16.msra.mxu0 %v1115
        %1205 = vmatprep.subr.bf16.mxu0 %v1126
        %1206 = vmatpush1.bf16.msra.mxu0 %v1125
        %1207 = vmatprep.subr.bf16.mxu0 0
        %1208 = vmatpush1.bf16.msra.mxu0 0
        %1209 = vmatprep.subr.bf16.mxu0 0
        %1210 = vmatpush1.bf16.msra.mxu0 0
        %1211 = vmatprep.subr.bf16.mxu0 0
        %1212 = vmatpush1.bf16.msra.mxu0 0
        %1213 = vmatprep.subr.bf16.mxu0 0
        %1214 = vmatpush1.bf16.msra.mxu0 0
        %1215 = vmatprep.subr.bf16.mxu0 0
        %1216 = vmatpush1.bf16.msra.mxu0 0
        %1217 = vmatprep.subr.bf16.mxu0 0
        %1218 = vmatpush1.bf16.msra.mxu0 0
        %1219 = vmatprep.subr.bf16.mxu0 0
        %1220 = vmatpush1.bf16.msra.mxu0 0
        %1221 = vmatprep.subr.bf16.mxu0 0
        %1222 = vmatpush1.bf16.msra.mxu0 0
        %1223 = vmatprep.subr.bf16.mxu0 0
        %1224 = vmatpush1.bf16.msra.mxu0 0
        %1225 = vmatprep.subr.bf16.mxu0 0
        %1226 = vmatpush1.bf16.msra.mxu0 0
        %1227 = vmatprep.subr.bf16.mxu0 0
        %1228 = vmatpush1.bf16.msra.mxu0 0
        %1229 = vmatprep.subr.bf16.mxu0 0
        %1230 = vmatpush1.bf16.msra.mxu0 0
        %1231 = vmatprep.subr.bf16.mxu0 0
        %1232 = vmatpush1.bf16.msra.mxu0 0
        %1233 = vmatprep.subr.bf16.mxu0 0
        %1234 = vmatpush1.bf16.msra.mxu0 0
        %1235 = vmatprep.mubr.bf16.mxu0 0
        %1236 = vmatmul.mubr.bf16.gmra.mrb[0].mxu0 %v1156
        %v1237 = vpop.f32.mrb[0].mxu0
        %v1238 = vadd.f32 %v1008, %v1237
        %v1239 = vpop.f32.mrb[0].mxu0
        %v1240 = vadd.f32 %v1012, %v1239
        %v1241 = vpop.f32.mrb[0].mxu0
        %v1242 = vadd.f32 %v1008, %v1241
        %v1243 = vpop.f32.mrb[0].mxu0
        %v1244 = vadd.f32 %v1012, %v1243
        %1245 = vmatprep.mubr.bf16.mxu0 0
        %1246 = vmatmul.mubr.bf16.gmra.mrb[0].mxu0 %v1159
        %v1247 = vpop.f32.mrb[0].mxu0
        %v1248 = vadd.f32 %v1008, %v1247
        %v1249 = vpop.f32.mrb[0].mxu0
        %v1250 = vadd.f32 %v1012, %v1249
        %v1251 = vpop.f32.mrb[0].mxu0
        %v1252 = vadd.f32 %v1008, %v1251
        %v1253 = vpop.f32.mrb[0].mxu0
        %v1254 = vadd.f32 %v1012, %v1253
        %1255 = vmatprep.mubr.bf16.mxu0 0
        %1256 = vmatmul.mubr.bf16.gmra.mrb[0].mxu0 %v1162
        %v1257 = vpop.f32.mrb[0].mxu0
        %v1258 = vadd.f32 %v1008, %v1257
        %v1259 = vpop.f32.mrb[0].mxu0
        %v1260 = vadd.f32 %v1012, %v1259
        %v1261 = vpop.f32.mrb[0].mxu0
        %v1262 = vadd.f32 %v1008, %v1261
        %v1263 = vpop.f32.mrb[0].mxu0
        %v1264 = vadd.f32 %v1012, %v1263
        %1265 = vmatprep.mubr.bf16.mxu0 0
        %1266 = vmatmul.mubr.bf16.gmra.mrb[0].mxu0 %v1165
        %v1267 = vpop.f32.mrb[0].mxu0
        %v1268 = vadd.f32 %v1008, %v1267
        %v1269 = vpop.f32.mrb[0].mxu0
        %v1270 = vadd.f32 %v1012, %v1269
        %v1271 = vpop.f32.mrb[0].mxu0
        %v1272 = vadd.f32 %v1008, %v1271
        %v1273 = vpop.f32.mrb[0].mxu0
        %v1274 = vadd.f32 %v1012, %v1273
        %1275 = vmatprep.mubr.bf16.mxu0 0
        %1276 = vmatmul.mubr.bf16.gmra.mrb[0].mxu0 %v1168
        %v1277 = vpop.f32.mrb[0].mxu0
        %v1278 = vadd.f32 %v1008, %v1277
        %v1279 = vpop.f32.mrb[0].mxu0
        %v1280 = vadd.f32 %v1012, %v1279
        %v1281 = vpop.f32.mrb[0].mxu0
        %v1282 = vadd.f32 %v1008, %v1281
        %v1283 = vpop.f32.mrb[0].mxu0
        %v1284 = vadd.f32 %v1012, %v1283
        %1285 = vmatprep.mubr.bf16.mxu0 0
        %1286 = vmatmul.mubr.bf16.gmra.mrb[0].mxu0 %v1171
        %v1287 = vpop.f32.mrb[0].mxu0
        %v1288 = vadd.f32 %v1008, %v1287
        %v1289 = vpop.f32.mrb[0].mxu0
        %v1290 = vadd.f32 %v1012, %v1289
        %v1291 = vpop.f32.mrb[0].mxu0
        %v1292 = vadd.f32 %v1008, %v1291
        %v1293 = vpop.f32.mrb[0].mxu0
        %v1294 = vadd.f32 %v1012, %v1293
        %1295 = vmatprep.mubr.bf16.mxu0 0
        %1296 = vmatmul.mubr.bf16.gmra.mrb[0].mxu0 %v1174
        %v1297 = vpop.f32.mrb[0].mxu0
        %v1298 = vadd.f32 %v1008, %v1297
        %v1299 = vpop.f32.mrb[0].mxu0
        %v1300 = vadd.f32 %v1012, %v1299
        %v1301 = vpop.f32.mrb[0].mxu0
        %v1302 = vadd.f32 %v1008, %v1301
        %v1303 = vpop.f32.mrb[0].mxu0
        %v1304 = vadd.f32 %v1012, %v1303
        %1305 = vmatprep.mubr.bf16.mxu0 0
        %1306 = vmatmul.mubr.bf16.gmra.mrb[0].mxu0 %v1177
        %v1307 = vpop.f32.mrb[0].mxu0
        %v1308 = vadd.f32 %v1008, %v1307
        %v1309 = vpop.f32.mrb[0].mxu0
        %v1310 = vadd.f32 %v1012, %v1309
        %v1311 = vpop.f32.mrb[0].mxu0
        %v1312 = vadd.f32 %v1008, %v1311
        %v1313 = vpop.f32.mrb[0].mxu0
        %v1314 = vadd.f32 %v1012, %v1313
        %1315 = vmatprep.mubr.bf16.mxu0 0
        %1316 = vmatmul.mubr.bf16.gmra.mrb[0].mxu0 %v1180
        %v1317 = vpop.f32.mrb[0].mxu0
        %v1318 = vadd.f32 %v1008, %v1317
        %v1319 = vpop.f32.mrb[0].mxu0
        %v1320 = vadd.f32 %v1012, %v1319
        %v1321 = vpop.f32.mrb[0].mxu0
        %v1322 = vadd.f32 %v1008, %v1321
        %v1323 = vpop.f32.mrb[0].mxu0
        %v1324 = vadd.f32 %v1012, %v1323
        %1325 = vmatprep.mubr.bf16.mxu0 0
        %1326 = vmatmul.mubr.bf16.gmra.mrb[0].mxu0 %v1183
        %v1327 = vpop.f32.mrb[0].mxu0
        %v1328 = vadd.f32 %v1008, %v1327
        %v1329 = vpop.f32.mrb[0].mxu0
        %v1330 = vadd.f32 %v1012, %v1329
        %v1331 = vpop.f32.mrb[0].mxu0
        %v1332 = vadd.f32 %v1008, %v1331
        %v1333 = vpop.f32.mrb[0].mxu0
        %v1334 = vadd.f32 %v1012, %v1333
        %1335 = vmatprep.mubr.bf16.mxu0 0
        %1336 = vmatmul.mubr.bf16.gmra.mrb[0].mxu0 %v1186
        %v1337 = vpop.f32.mrb[0].mxu0
        %v1338 = vadd.f32 %v1008, %v1337
        %v1339 = vpop.f32.mrb[0].mxu0
        %v1340 = vadd.f32 %v1012, %v1339
        %v1341 = vpop.f32.mrb[0].mxu0
        %v1342 = vadd.f32 %v1008, %v1341
        %v1343 = vpop.f32.mrb[0].mxu0
        %v1344 = vadd.f32 %v1012, %v1343
        %1345 = vmatprep.mubr.bf16.mxu0 0
        %1346 = vmatmul.mubr.bf16.gmra.mrb[0].mxu0 %v1189
        %v1347 = vpop.f32.mrb[0].mxu0
        %v1348 = vadd.f32 %v1008, %v1347
        %v1349 = vpop.f32.mrb[0].mxu0
        %v1350 = vadd.f32 %v1012, %v1349
        %v1351 = vpop.f32.mrb[0].mxu0
        %v1352 = vadd.f32 %v1008, %v1351
        %v1353 = vpop.f32.mrb[0].mxu0
        %v1354 = vadd.f32 %v1012, %v1353
        %1355 = vmatprep.mubr.bf16.mxu0 0
        %1356 = vmatmul.mubr.bf16.gmra.mrb[0].mxu0 %v1192
        %v1357 = vpop.f32.mrb[0].mxu0
        %v1358 = vadd.f32 %v1008, %v1357
        %v1359 = vpop.f32.mrb[0].mxu0
        %v1360 = vadd.f32 %v1012, %v1359
        %v1361 = vpop.f32.mrb[0].mxu0
        %v1362 = vadd.f32 %v1008, %v1361
        %v1363 = vpop.f32.mrb[0].mxu0
        %v1364 = vadd.f32 %v1012, %v1363
        %1365 = vmatprep.mubr.bf16.mxu0 0
        %1366 = vmatmul.mubr.bf16.gmra.mrb[0].mxu0 %v1195
        %v1367 = vpop.f32.mrb[0].mxu0
        %v1368 = vadd.f32 %v1008, %v1367
        %v1369 = vpop.f32.mrb[0].mxu0
        %v1370 = vadd.f32 %v1012, %v1369
        %v1371 = vpop.f32.mrb[0].mxu0
        %v1372 = vadd.f32 %v1008, %v1371
        %v1373 = vpop.f32.mrb[0].mxu0
        %v1374 = vadd.f32 %v1012, %v1373
        %1375 = vmatprep.mubr.bf16.mxu0 0
        %1376 = vmatmul.mubr.bf16.gmra.mrb[0].mxu0 %v1198
        %v1377 = vpop.f32.mrb[0].mxu0
        %v1378 = vadd.f32 %v1008, %v1377
        %v1379 = vpop.f32.mrb[0].mxu0
        %v1380 = vadd.f32 %v1012, %v1379
        %v1381 = vpop.f32.mrb[0].mxu0
        %v1382 = vadd.f32 %v1008, %v1381
        %v1383 = vpop.f32.mrb[0].mxu0
        %v1384 = vadd.f32 %v1012, %v1383
        %1385 = vmatprep.mubr.bf16.mxu0 0
        %1386 = vmatmul.mubr.bf16.gmra.mrb[0].mxu0 %v1201
        %v1387 = vpop.f32.mrb[0].mxu0
        %v1388 = vadd.f32 %v1008, %v1387
        %v1389 = vpop.f32.mrb[0].mxu0
        %v1390 = vadd.f32 %v1012, %v1389
        %v1391 = vpop.f32.mrb[0].mxu0
        %v1392 = vadd.f32 %v1008, %v1391
        %v1393 = vpop.f32.mrb[0].mxu0
        %v1394 = vadd.f32 %v1012, %v1393
        %1395 = vdwg.mxu0
        %1396 = vmatprep.subr.bf16.mxu0 %v1118
        %1397 = vmatpush1.bf16.msra.mxu0 %v1117
        %1398 = vmatprep.subr.bf16.mxu0 %v1128
        %1399 = vmatpush1.bf16.msra.mxu0 %v1127
        %1400 = vmatprep.subr.bf16.mxu0 0
        %1401 = vmatpush1.bf16.msra.mxu0 0
        %1402 = vmatprep.subr.bf16.mxu0 0
        %1403 = vmatpush1.bf16.msra.mxu0 0
        %1404 = vmatprep.subr.bf16.mxu0 0
        %1405 = vmatpush1.bf16.msra.mxu0 0
        %1406 = vmatprep.subr.bf16.mxu0 0
        %1407 = vmatpush1.bf16.msra.mxu0 0
        %1408 = vmatprep.subr.bf16.mxu0 0
        %1409 = vmatpush1.bf16.msra.mxu0 0
        %1410 = vmatprep.subr.bf16.mxu0 0
        %1411 = vmatpush1.bf16.msra.mxu0 0
        %1412 = vmatprep.subr.bf16.mxu0 0
        %1413 = vmatpush1.bf16.msra.mxu0 0
        %1414 = vmatprep.subr.bf16.mxu0 0
        %1415 = vmatpush1.bf16.msra.mxu0 0
        %1416 = vmatprep.subr.bf16.mxu0 0
        %1417 = vmatpush1.bf16.msra.mxu0 0
        %1418 = vmatprep.subr.bf16.mxu0 0
        %1419 = vmatpush1.bf16.msra.mxu0 0
        %1420 = vmatprep.subr.bf16.mxu0 0
        %1421 = vmatpush1.bf16.msra.mxu0 0
        %1422 = vmatprep.subr.bf16.mxu0 0
        %1423 = vmatpush1.bf16.msra.mxu0 0
        %1424 = vmatprep.subr.bf16.mxu0 0
        %1425 = vmatpush1.bf16.msra.mxu0 0
        %1426 = vmatprep.subr.bf16.mxu0 0
        %1427 = vmatpush1.bf16.msra.mxu0 0
        %1428 = vmatprep.mubr.bf16.mxu0 0
        %1429 = vmatmul.mubr.bf16.gmra.mrb[0].mxu0 %v1156
        %v1430 = vpop.f32.mrb[0].mxu0
        %v1431 = vadd.f32 %v1016, %v1430
        %v1432 = vpop.f32.mrb[0].mxu0
        %v1433 = vadd.f32 %v1020, %v1432
        %v1434 = vpop.f32.mrb[0].mxu0
        %v1435 = vadd.f32 %v1016, %v1434
        %v1436 = vpop.f32.mrb[0].mxu0
        %v1437 = vadd.f32 %v1020, %v1436
        %1438 = vmatprep.mubr.bf16.mxu0 0
        %1439 = vmatmul.mubr.bf16.gmra.mrb[0].mxu0 %v1159
        %v1440 = vpop.f32.mrb[0].mxu0
        %v1441 = vadd.f32 %v1016, %v1440
        %v1442 = vpop.f32.mrb[0].mxu0
        %v1443 = vadd.f32 %v1020, %v1442
        %v1444 = vpop.f32.mrb[0].mxu0
        %v1445 = vadd.f32 %v1016, %v1444
        %v1446 = vpop.f32.mrb[0].mxu0
        %v1447 = vadd.f32 %v1020, %v1446
        %1448 = vmatprep.mubr.bf16.mxu0 0
        %1449 = vmatmul.mubr.bf16.gmra.mrb[0].mxu0 %v1162
        %v1450 = vpop.f32.mrb[0].mxu0
        %v1451 = vadd.f32 %v1016, %v1450
        %v1452 = vpop.f32.mrb[0].mxu0
        %v1453 = vadd.f32 %v1020, %v1452
        %v1454 = vpop.f32.mrb[0].mxu0
        %v1455 = vadd.f32 %v1016, %v1454
        %v1456 = vpop.f32.mrb[0].mxu0
        %v1457 = vadd.f32 %v1020, %v1456
        %1458 = vmatprep.mubr.bf16.mxu0 0
        %1459 = vmatmul.mubr.bf16.gmra.mrb[0].mxu0 %v1165
        %v1460 = vpop.f32.mrb[0].mxu0
        %v1461 = vadd.f32 %v1016, %v1460
        %v1462 = vpop.f32.mrb[0].mxu0
        %v1463 = vadd.f32 %v1020, %v1462
        %v1464 = vpop.f32.mrb[0].mxu0
        %v1465 = vadd.f32 %v1016, %v1464
        %v1466 = vpop.f32.mrb[0].mxu0
        %v1467 = vadd.f32 %v1020, %v1466
        %1468 = vmatprep.mubr.bf16.mxu0 0
        %1469 = vmatmul.mubr.bf16.gmra.mrb[0].mxu0 %v1168
        %v1470 = vpop.f32.mrb[0].mxu0
        %v1471 = vadd.f32 %v1016, %v1470
        %v1472 = vpop.f32.mrb[0].mxu0
        %v1473 = vadd.f32 %v1020, %v1472
        %v1474 = vpop.f32.mrb[0].mxu0
        %v1475 = vadd.f32 %v1016, %v1474
        %v1476 = vpop.f32.mrb[0].mxu0
        %v1477 = vadd.f32 %v1020, %v1476
        %1478 = vmatprep.mubr.bf16.mxu0 0
        %1479 = vmatmul.mubr.bf16.gmra.mrb[0].mxu0 %v1171
        %v1480 = vpop.f32.mrb[0].mxu0
        %v1481 = vadd.f32 %v1016, %v1480
        %v1482 = vpop.f32.mrb[0].mxu0
        %v1483 = vadd.f32 %v1020, %v1482
        %v1484 = vpop.f32.mrb[0].mxu0
        %v1485 = vadd.f32 %v1016, %v1484
        %v1486 = vpop.f32.mrb[0].mxu0
        %v1487 = vadd.f32 %v1020, %v1486
        %1488 = vmatprep.mubr.bf16.mxu0 0
        %1489 = vmatmul.mubr.bf16.gmra.mrb[0].mxu0 %v1174
        %v1490 = vpop.f32.mrb[0].mxu0
        %v1491 = vadd.f32 %v1016, %v1490
        %v1492 = vpop.f32.mrb[0].mxu0
        %v1493 = vadd.f32 %v1020, %v1492
        %v1494 = vpop.f32.mrb[0].mxu0
        %v1495 = vadd.f32 %v1016, %v1494
        %v1496 = vpop.f32.mrb[0].mxu0
        %v1497 = vadd.f32 %v1020, %v1496
        %1498 = vmatprep.mubr.bf16.mxu0 0
        %1499 = vmatmul.mubr.bf16.gmra.mrb[0].mxu0 %v1177
        %v1500 = vpop.f32.mrb[0].mxu0
        %v1501 = vadd.f32 %v1016, %v1500
        %v1502 = vpop.f32.mrb[0].mxu0
        %v1503 = vadd.f32 %v1020, %v1502
        %v1504 = vpop.f32.mrb[0].mxu0
        %v1505 = vadd.f32 %v1016, %v1504
        %v1506 = vpop.f32.mrb[0].mxu0
        %v1507 = vadd.f32 %v1020, %v1506
        %1508 = vmatprep.mubr.bf16.mxu0 0
        %1509 = vmatmul.mubr.bf16.gmra.mrb[0].mxu0 %v1180
        %v1510 = vpop.f32.mrb[0].mxu0
        %v1511 = vadd.f32 %v1016, %v1510
        %v1512 = vpop.f32.mrb[0].mxu0
        %v1513 = vadd.f32 %v1020, %v1512
        %v1514 = vpop.f32.mrb[0].mxu0
        %v1515 = vadd.f32 %v1016, %v1514
        %v1516 = vpop.f32.mrb[0].mxu0
        %v1517 = vadd.f32 %v1020, %v1516
        %1518 = vmatprep.mubr.bf16.mxu0 0
        %1519 = vmatmul.mubr.bf16.gmra.mrb[0].mxu0 %v1183
        %v1520 = vpop.f32.mrb[0].mxu0
        %v1521 = vadd.f32 %v1016, %v1520
        %v1522 = vpop.f32.mrb[0].mxu0
        %v1523 = vadd.f32 %v1020, %v1522
        %v1524 = vpop.f32.mrb[0].mxu0
        %v1525 = vadd.f32 %v1016, %v1524
        %v1526 = vpop.f32.mrb[0].mxu0
        %v1527 = vadd.f32 %v1020, %v1526
        %1528 = vmatprep.mubr.bf16.mxu0 0
        %1529 = vmatmul.mubr.bf16.gmra.mrb[0].mxu0 %v1186
        %v1530 = vpop.f32.mrb[0].mxu0
        %v1531 = vadd.f32 %v1016, %v1530
        %v1532 = vpop.f32.mrb[0].mxu0
        %v1533 = vadd.f32 %v1020, %v1532
        %v1534 = vpop.f32.mrb[0].mxu0
        %v1535 = vadd.f32 %v1016, %v1534
        %v1536 = vpop.f32.mrb[0].mxu0
        %v1537 = vadd.f32 %v1020, %v1536
        %1538 = vmatprep.mubr.bf16.mxu0 0
        %1539 = vmatmul.mubr.bf16.gmra.mrb[0].mxu0 %v1189
        %v1540 = vpop.f32.mrb[0].mxu0
        %v1541 = vadd.f32 %v1016, %v1540
        %v1542 = vpop.f32.mrb[0].mxu0
        %v1543 = vadd.f32 %v1020, %v1542
        %v1544 = vpop.f32.mrb[0].mxu0
        %v1545 = vadd.f32 %v1016, %v1544
        %v1546 = vpop.f32.mrb[0].mxu0
        %v1547 = vadd.f32 %v1020, %v1546
        %1548 = vmatprep.mubr.bf16.mxu0 0
        %1549 = vmatmul.mubr.bf16.gmra.mrb[0].mxu0 %v1192
        %v1550 = vpop.f32.mrb[0].mxu0
        %v1551 = vadd.f32 %v1016, %v1550
        %v1552 = vpop.f32.mrb[0].mxu0
        %v1553 = vadd.f32 %v1020, %v1552
        %v1554 = vpop.f32.mrb[0].mxu0
        %v1555 = vadd.f32 %v1016, %v1554
        %v1556 = vpop.f32.mrb[0].mxu0
        %v1557 = vadd.f32 %v1020, %v1556
        %1558 = vmatprep.mubr.bf16.mxu0 0
        %1559 = vmatmul.mubr.bf16.gmra.mrb[0].mxu0 %v1195
        %v1560 = vpop.f32.mrb[0].mxu0
        %v1561 = vadd.f32 %v1016, %v1560
        %v1562 = vpop.f32.mrb[0].mxu0
        %v1563 = vadd.f32 %v1020, %v1562
        %v1564 = vpop.f32.mrb[0].mxu0
        %v1565 = vadd.f32 %v1016, %v1564
        %v1566 = vpop.f32.mrb[0].mxu0
        %v1567 = vadd.f32 %v1020, %v1566
        %1568 = vmatprep.mubr.bf16.mxu0 0
        %1569 = vmatmul.mubr.bf16.gmra.mrb[0].mxu0 %v1198
        %v1570 = vpop.f32.mrb[0].mxu0
        %v1571 = vadd.f32 %v1016, %v1570
        %v1572 = vpop.f32.mrb[0].mxu0
        %v1573 = vadd.f32 %v1020, %v1572
        %v1574 = vpop.f32.mrb[0].mxu0
        %v1575 = vadd.f32 %v1016, %v1574
        %v1576 = vpop.f32.mrb[0].mxu0
        %v1577 = vadd.f32 %v1020, %v1576
        %1578 = vmatprep.mubr.bf16.mxu0 0
        %1579 = vmatmul.mubr.bf16.gmra.mrb[0].mxu0 %v1201
        %v1580 = vpop.f32.mrb[0].mxu0
        %v1581 = vadd.f32 %v1016, %v1580
        %v1582 = vpop.f32.mrb[0].mxu0
        %v1583 = vadd.f32 %v1020, %v1582
        %v1584 = vpop.f32.mrb[0].mxu0
        %v1585 = vadd.f32 %v1016, %v1584
        %v1586 = vpop.f32.mrb[0].mxu0
        %v1587 = vadd.f32 %v1020, %v1586
        %1588 = vdwg.mxu0
        %1589 = vmatprep.subr.bf16.mxu0 %v1120
        %1590 = vmatpush1.bf16.msra.mxu0 %v1119
        %1591 = vmatprep.subr.bf16.mxu0 %v1130
        %1592 = vmatpush1.bf16.msra.mxu0 %v1129
        %1593 = vmatprep.subr.bf16.mxu0 0
        %1594 = vmatpush1.bf16.msra.mxu0 0
        %1595 = vmatprep.subr.bf16.mxu0 0
        %1596 = vmatpush1.bf16.msra.mxu0 0
        %1597 = vmatprep.subr.bf16.mxu0 0
        %1598 = vmatpush1.bf16.msra.mxu0 0
        %1599 = vmatprep.subr.bf16.mxu0 0
        %1600 = vmatpush1.bf16.msra.mxu0 0
        %1601 = vmatprep.subr.bf16.mxu0 0
        %1602 = vmatpush1.bf16.msra.mxu0 0
        %1603 = vmatprep.subr.bf16.mxu0 0
        %1604 = vmatpush1.bf16.msra.mxu0 0
        %1605 = vmatprep.subr.bf16.mxu0 0
        %1606 = vmatpush1.bf16.msra.mxu0 0
        %1607 = vmatprep.subr.bf16.mxu0 0
        %1608 = vmatpush1.bf16.msra.mxu0 0
        %1609 = vmatprep.subr.bf16.mxu0 0
        %1610 = vmatpush1.bf16.msra.mxu0 0
        %1611 = vmatprep.subr.bf16.mxu0 0
        %1612 = vmatpush1.bf16.msra.mxu0 0
        %1613 = vmatprep.subr.bf16.mxu0 0
        %1614 = vmatpush1.bf16.msra.mxu0 0
        %1615 = vmatprep.subr.bf16.mxu0 0
        %1616 = vmatpush1.bf16.msra.mxu0 0
        %1617 = vmatprep.subr.bf16.mxu0 0
        %1618 = vmatpush1.bf16.msra.mxu0 0
        %1619 = vmatprep.subr.bf16.mxu0 0
        %1620 = vmatpush1.bf16.msra.mxu0 0
        %1621 = vmatprep.mubr.bf16.mxu0 0
        %1622 = vmatmul.mubr.bf16.gmra.mrb[0].mxu0 %v1156
        %v1623 = vpop.f32.mrb[0].mxu0
        %v1624 = vadd.f32 %v1024, %v1623
        %v1625 = vpop.f32.mrb[0].mxu0
        %v1626 = vadd.f32 %v1028, %v1625
        %v1627 = vpop.f32.mrb[0].mxu0
        %v1628 = vadd.f32 %v1024, %v1627
        %v1629 = vpop.f32.mrb[0].mxu0
        %v1630 = vadd.f32 %v1028, %v1629
        %1631 = vmatprep.mubr.bf16.mxu0 0
        %1632 = vmatmul.mubr.bf16.gmra.mrb[0].mxu0 %v1159
        %v1633 = vpop.f32.mrb[0].mxu0
        %v1634 = vadd.f32 %v1024, %v1633
        %v1635 = vpop.f32.mrb[0].mxu0
        %v1636 = vadd.f32 %v1028, %v1635
        %v1637 = vpop.f32.mrb[0].mxu0
        %v1638 = vadd.f32 %v1024, %v1637
        %v1639 = vpop.f32.mrb[0].mxu0
        %v1640 = vadd.f32 %v1028, %v1639
        %1641 = vmatprep.mubr.bf16.mxu0 0
        %1642 = vmatmul.mubr.bf16.gmra.mrb[0].mxu0 %v1162
        %v1643 = vpop.f32.mrb[0].mxu0
        %v1644 = vadd.f32 %v1024, %v1643
        %v1645 = vpop.f32.mrb[0].mxu0
        %v1646 = vadd.f32 %v1028, %v1645
        %v1647 = vpop.f32.mrb[0].mxu0
        %v1648 = vadd.f32 %v1024, %v1647
        %v1649 = vpop.f32.mrb[0].mxu0
        %v1650 = vadd.f32 %v1028, %v1649
        %1651 = vmatprep.mubr.bf16.mxu0 0
        %1652 = vmatmul.mubr.bf16.gmra.mrb[0].mxu0 %v1165
        %v1653 = vpop.f32.mrb[0].mxu0
        %v1654 = vadd.f32 %v1024, %v1653
        %v1655 = vpop.f32.mrb[0].mxu0
        %v1656 = vadd.f32 %v1028, %v1655
        %v1657 = vpop.f32.mrb[0].mxu0
        %v1658 = vadd.f32 %v1024, %v1657
        %v1659 = vpop.f32.mrb[0].mxu0
        %v1660 = vadd.f32 %v1028, %v1659
        %1661 = vmatprep.mubr.bf16.mxu0 0
        %1662 = vmatmul.mubr.bf16.gmra.mrb[0].mxu0 %v1168
        %v1663 = vpop.f32.mrb[0].mxu0
        %v1664 = vadd.f32 %v1024, %v1663
        %v1665 = vpop.f32.mrb[0].mxu0
        %v1666 = vadd.f32 %v1028, %v1665
        %v1667 = vpop.f32.mrb[0].mxu0
        %v1668 = vadd.f32 %v1024, %v1667
        %v1669 = vpop.f32.mrb[0].mxu0
        %v1670 = vadd.f32 %v1028, %v1669
        %1671 = vmatprep.mubr.bf16.mxu0 0
        %1672 = vmatmul.mubr.bf16.gmra.mrb[0].mxu0 %v1171
        %v1673 = vpop.f32.mrb[0].mxu0
        %v1674 = vadd.f32 %v1024, %v1673
        %v1675 = vpop.f32.mrb[0].mxu0
        %v1676 = vadd.f32 %v1028, %v1675
        %v1677 = vpop.f32.mrb[0].mxu0
        %v1678 = vadd.f32 %v1024, %v1677
        %v1679 = vpop.f32.mrb[0].mxu0
        %v1680 = vadd.f32 %v1028, %v1679
        %1681 = vmatprep.mubr.bf16.mxu0 0
        %1682 = vmatmul.mubr.bf16.gmra.mrb[0].mxu0 %v1174
        %v1683 = vpop.f32.mrb[0].mxu0
        %v1684 = vadd.f32 %v1024, %v1683
        %v1685 = vpop.f32.mrb[0].mxu0
        %v1686 = vadd.f32 %v1028, %v1685
        %v1687 = vpop.f32.mrb[0].mxu0
        %v1688 = vadd.f32 %v1024, %v1687
        %v1689 = vpop.f32.mrb[0].mxu0
        %v1690 = vadd.f32 %v1028, %v1689
        %1691 = vmatprep.mubr.bf16.mxu0 0
        %1692 = vmatmul.mubr.bf16.gmra.mrb[0].mxu0 %v1177
        %v1693 = vpop.f32.mrb[0].mxu0
        %v1694 = vadd.f32 %v1024, %v1693
        %v1695 = vpop.f32.mrb[0].mxu0
        %v1696 = vadd.f32 %v1028, %v1695
        %v1697 = vpop.f32.mrb[0].mxu0
        %v1698 = vadd.f32 %v1024, %v1697
        %v1699 = vpop.f32.mrb[0].mxu0
        %v1700 = vadd.f32 %v1028, %v1699
        %1701 = vmatprep.mubr.bf16.mxu0 0
        %1702 = vmatmul.mubr.bf16.gmra.mrb[0].mxu0 %v1180
        %v1703 = vpop.f32.mrb[0].mxu0
        %v1704 = vadd.f32 %v1024, %v1703
        %v1705 = vpop.f32.mrb[0].mxu0
        %v1706 = vadd.f32 %v1028, %v1705
        %v1707 = vpop.f32.mrb[0].mxu0
        %v1708 = vadd.f32 %v1024, %v1707
        %v1709 = vpop.f32.mrb[0].mxu0
        %v1710 = vadd.f32 %v1028, %v1709
        %1711 = vmatprep.mubr.bf16.mxu0 0
        %1712 = vmatmul.mubr.bf16.gmra.mrb[0].mxu0 %v1183
        %v1713 = vpop.f32.mrb[0].mxu0
        %v1714 = vadd.f32 %v1024, %v1713
        %v1715 = vpop.f32.mrb[0].mxu0
        %v1716 = vadd.f32 %v1028, %v1715
        %v1717 = vpop.f32.mrb[0].mxu0
        %v1718 = vadd.f32 %v1024, %v1717
        %v1719 = vpop.f32.mrb[0].mxu0
        %v1720 = vadd.f32 %v1028, %v1719
        %1721 = vmatprep.mubr.bf16.mxu0 0
        %1722 = vmatmul.mubr.bf16.gmra.mrb[0].mxu0 %v1186
        %v1723 = vpop.f32.mrb[0].mxu0
        %v1724 = vadd.f32 %v1024, %v1723
        %v1725 = vpop.f32.mrb[0].mxu0
        %v1726 = vadd.f32 %v1028, %v1725
        %v1727 = vpop.f32.mrb[0].mxu0
        %v1728 = vadd.f32 %v1024, %v1727
        %v1729 = vpop.f32.mrb[0].mxu0
        %v1730 = vadd.f32 %v1028, %v1729
        %1731 = vmatprep.mubr.bf16.mxu0 0
        %1732 = vmatmul.mubr.bf16.gmra.mrb[0].mxu0 %v1189
        %v1733 = vpop.f32.mrb[0].mxu0
        %v1734 = vadd.f32 %v1024, %v1733
        %v1735 = vpop.f32.mrb[0].mxu0
        %v1736 = vadd.f32 %v1028, %v1735
        %v1737 = vpop.f32.mrb[0].mxu0
        %v1738 = vadd.f32 %v1024, %v1737
        %v1739 = vpop.f32.mrb[0].mxu0
        %v1740 = vadd.f32 %v1028, %v1739
        %1741 = vmatprep.mubr.bf16.mxu0 0
        %1742 = vmatmul.mubr.bf16.gmra.mrb[0].mxu0 %v1192
        %v1743 = vpop.f32.mrb[0].mxu0
        %v1744 = vadd.f32 %v1024, %v1743
        %v1745 = vpop.f32.mrb[0].mxu0
        %v1746 = vadd.f32 %v1028, %v1745
        %v1747 = vpop.f32.mrb[0].mxu0
        %v1748 = vadd.f32 %v1024, %v1747
        %v1749 = vpop.f32.mrb[0].mxu0
        %v1750 = vadd.f32 %v1028, %v1749
        %1751 = vmatprep.mubr.bf16.mxu0 0
        %1752 = vmatmul.mubr.bf16.gmra.mrb[0].mxu0 %v1195
        %v1753 = vpop.f32.mrb[0].mxu0
        %v1754 = vadd.f32 %v1024, %v1753
        %v1755 = vpop.f32.mrb[0].mxu0
        %v1756 = vadd.f32 %v1028, %v1755
        %v1757 = vpop.f32.mrb[0].mxu0
        %v1758 = vadd.f32 %v1024, %v1757
        %v1759 = vpop.f32.mrb[0].mxu0
        %v1760 = vadd.f32 %v1028, %v1759
        %1761 = vmatprep.mubr.bf16.mxu0 0
        %1762 = vmatmul.mubr.bf16.gmra.mrb[0].mxu0 %v1198
        %v1763 = vpop.f32.mrb[0].mxu0
        %v1764 = vadd.f32 %v1024, %v1763
        %v1765 = vpop.f32.mrb[0].mxu0
        %v1766 = vadd.f32 %v1028, %v1765
        %v1767 = vpop.f32.mrb[0].mxu0
        %v1768 = vadd.f32 %v1024, %v1767
        %v1769 = vpop.f32.mrb[0].mxu0
        %v1770 = vadd.f32 %v1028, %v1769
        %1771 = vmatprep.mubr.bf16.mxu0 0
        %1772 = vmatmul.mubr.bf16.gmra.mrb[0].mxu0 %v1201
        %v1773 = vpop.f32.mrb[0].mxu0
        %v1774 = vadd.f32 %v1024, %v1773
        %v1775 = vpop.f32.mrb[0].mxu0
        %v1776 = vadd.f32 %v1028, %v1775
        %v1777 = vpop.f32.mrb[0].mxu0
        %v1778 = vadd.f32 %v1024, %v1777
        %v1779 = vpop.f32.mrb[0].mxu0
        %v1780 = vadd.f32 %v1028, %v1779
        %1781 = vdwg.mxu0
        %1782 = vmatprep.subr.bf16.mxu0 %v1122
        %1783 = vmatpush1.bf16.msra.mxu0 %v1121
        %1784 = vmatprep.subr.bf16.mxu0 %v1132
        %1785 = vmatpush1.bf16.msra.mxu0 %v1131
        %1786 = vmatprep.subr.bf16.mxu0 0
        %1787 = vmatpush1.bf16.msra.mxu0 0
        %1788 = vmatprep.subr.bf16.mxu0 0
        %1789 = vmatpush1.bf16.msra.mxu0 0
        %1790 = vmatprep.subr.bf16.mxu0 0
        %1791 = vmatpush1.bf16.msra.mxu0 0
        %1792 = vmatprep.subr.bf16.mxu0 0
        %1793 = vmatpush1.bf16.msra.mxu0 0
        %1794 = vmatprep.subr.bf16.mxu0 0
        %1795 = vmatpush1.bf16.msra.mxu0 0
        %1796 = vmatprep.subr.bf16.mxu0 0
        %1797 = vmatpush1.bf16.msra.mxu0 0
        %1798 = vmatprep.subr.bf16.mxu0 0
        %1799 = vmatpush1.bf16.msra.mxu0 0
        %1800 = vmatprep.subr.bf16.mxu0 0
        %1801 = vmatpush1.bf16.msra.mxu0 0
        %1802 = vmatprep.subr.bf16.mxu0 0
        %1803 = vmatpush1.bf16.msra.mxu0 0
        %1804 = vmatprep.subr.bf16.mxu0 0
        %1805 = vmatpush1.bf16.msra.mxu0 0
        %1806 = vmatprep.subr.bf16.mxu0 0
        %1807 = vmatpush1.bf16.msra.mxu0 0
        %1808 = vmatprep.subr.bf16.mxu0 0
        %1809 = vmatpush1.bf16.msra.mxu0 0
        %1810 = vmatprep.subr.bf16.mxu0 0
        %1811 = vmatpush1.bf16.msra.mxu0 0
        %1812 = vmatprep.subr.bf16.mxu0 0
        %1813 = vmatpush1.bf16.msra.mxu0 0
        %1814 = vmatprep.mubr.bf16.mxu0 0
        %1815 = vmatmul.mubr.bf16.gmra.mrb[0].mxu0 %v1156
        %v1816 = vpop.f32.mrb[0].mxu0
        %v1817 = vadd.f32 %v1032, %v1816
        %v1818 = vpop.f32.mrb[0].mxu0
        %v1819 = vadd.f32 %v1036, %v1818
        %v1820 = vpop.f32.mrb[0].mxu0
        %v1821 = vadd.f32 %v1032, %v1820
        %v1822 = vpop.f32.mrb[0].mxu0
        %v1823 = vadd.f32 %v1036, %v1822
        %1824 = vmatprep.mubr.bf16.mxu0 0
        %1825 = vmatmul.mubr.bf16.gmra.mrb[0].mxu0 %v1159
        %v1826 = vpop.f32.mrb[0].mxu0
        %v1827 = vadd.f32 %v1032, %v1826
        %v1828 = vpop.f32.mrb[0].mxu0
        %v1829 = vadd.f32 %v1036, %v1828
        %v1830 = vpop.f32.mrb[0].mxu0
        %v1831 = vadd.f32 %v1032, %v1830
        %v1832 = vpop.f32.mrb[0].mxu0
        %v1833 = vadd.f32 %v1036, %v1832
        %1834 = vmatprep.mubr.bf16.mxu0 0
        %1835 = vmatmul.mubr.bf16.gmra.mrb[0].mxu0 %v1162
        %v1836 = vpop.f32.mrb[0].mxu0
        %v1837 = vadd.f32 %v1032, %v1836
        %v1838 = vpop.f32.mrb[0].mxu0
        %v1839 = vadd.f32 %v1036, %v1838
        %v1840 = vpop.f32.mrb[0].mxu0
        %v1841 = vadd.f32 %v1032, %v1840
        %v1842 = vpop.f32.mrb[0].mxu0
        %v1843 = vadd.f32 %v1036, %v1842
        %1844 = vmatprep.mubr.bf16.mxu0 0
        %1845 = vmatmul.mubr.bf16.gmra.mrb[0].mxu0 %v1165
        %v1846 = vpop.f32.mrb[0].mxu0
        %v1847 = vadd.f32 %v1032, %v1846
        %v1848 = vpop.f32.mrb[0].mxu0
        %v1849 = vadd.f32 %v1036, %v1848
        %v1850 = vpop.f32.mrb[0].mxu0
        %v1851 = vadd.f32 %v1032, %v1850
        %v1852 = vpop.f32.mrb[0].mxu0
        %v1853 = vadd.f32 %v1036, %v1852
        %1854 = vmatprep.mubr.bf16.mxu0 0
        %1855 = vmatmul.mubr.bf16.gmra.mrb[0].mxu0 %v1168
        %v1856 = vpop.f32.mrb[0].mxu0
        %v1857 = vadd.f32 %v1032, %v1856
        %v1858 = vpop.f32.mrb[0].mxu0
        %v1859 = vadd.f32 %v1036, %v1858
        %v1860 = vpop.f32.mrb[0].mxu0
        %v1861 = vadd.f32 %v1032, %v1860
        %v1862 = vpop.f32.mrb[0].mxu0
        %v1863 = vadd.f32 %v1036, %v1862
        %1864 = vmatprep.mubr.bf16.mxu0 0
        %1865 = vmatmul.mubr.bf16.gmra.mrb[0].mxu0 %v1171
        %v1866 = vpop.f32.mrb[0].mxu0
        %v1867 = vadd.f32 %v1032, %v1866
        %v1868 = vpop.f32.mrb[0].mxu0
        %v1869 = vadd.f32 %v1036, %v1868
        %v1870 = vpop.f32.mrb[0].mxu0
        %v1871 = vadd.f32 %v1032, %v1870
        %v1872 = vpop.f32.mrb[0].mxu0
        %v1873 = vadd.f32 %v1036, %v1872
        %1874 = vmatprep.mubr.bf16.mxu0 0
        %1875 = vmatmul.mubr.bf16.gmra.mrb[0].mxu0 %v1174
        %v1876 = vpop.f32.mrb[0].mxu0
        %v1877 = vadd.f32 %v1032, %v1876
        %v1878 = vpop.f32.mrb[0].mxu0
        %v1879 = vadd.f32 %v1036, %v1878
        %v1880 = vpop.f32.mrb[0].mxu0
        %v1881 = vadd.f32 %v1032, %v1880
        %v1882 = vpop.f32.mrb[0].mxu0
        %v1883 = vadd.f32 %v1036, %v1882
        %1884 = vmatprep.mubr.bf16.mxu0 0
        %1885 = vmatmul.mubr.bf16.gmra.mrb[0].mxu0 %v1177
        %v1886 = vpop.f32.mrb[0].mxu0
        %v1887 = vadd.f32 %v1032, %v1886
        %v1888 = vpop.f32.mrb[0].mxu0
        %v1889 = vadd.f32 %v1036, %v1888
        %v1890 = vpop.f32.mrb[0].mxu0
        %v1891 = vadd.f32 %v1032, %v1890
        %v1892 = vpop.f32.mrb[0].mxu0
        %v1893 = vadd.f32 %v1036, %v1892
        %1894 = vmatprep.mubr.bf16.mxu0 0
        %1895 = vmatmul.mubr.bf16.gmra.mrb[0].mxu0 %v1180
        %v1896 = vpop.f32.mrb[0].mxu0
        %v1897 = vadd.f32 %v1032, %v1896
        %v1898 = vpop.f32.mrb[0].mxu0
        %v1899 = vadd.f32 %v1036, %v1898
        %v1900 = vpop.f32.mrb[0].mxu0
        %v1901 = vadd.f32 %v1032, %v1900
        %v1902 = vpop.f32.mrb[0].mxu0
        %v1903 = vadd.f32 %v1036, %v1902
        %1904 = vmatprep.mubr.bf16.mxu0 0
        %1905 = vmatmul.mubr.bf16.gmra.mrb[0].mxu0 %v1183
        %v1906 = vpop.f32.mrb[0].mxu0
        %v1907 = vadd.f32 %v1032, %v1906
        %v1908 = vpop.f32.mrb[0].mxu0
        %v1909 = vadd.f32 %v1036, %v1908
        %v1910 = vpop.f32.mrb[0].mxu0
        %v1911 = vadd.f32 %v1032, %v1910
        %v1912 = vpop.f32.mrb[0].mxu0
        %v1913 = vadd.f32 %v1036, %v1912
        %1914 = vmatprep.mubr.bf16.mxu0 0
        %1915 = vmatmul.mubr.bf16.gmra.mrb[0].mxu0 %v1186
        %v1916 = vpop.f32.mrb[0].mxu0
        %v1917 = vadd.f32 %v1032, %v1916
        %v1918 = vpop.f32.mrb[0].mxu0
        %v1919 = vadd.f32 %v1036, %v1918
        %v1920 = vpop.f32.mrb[0].mxu0
        %v1921 = vadd.f32 %v1032, %v1920
        %v1922 = vpop.f32.mrb[0].mxu0
        %v1923 = vadd.f32 %v1036, %v1922
        %1924 = vmatprep.mubr.bf16.mxu0 0
        %1925 = vmatmul.mubr.bf16.gmra.mrb[0].mxu0 %v1189
        %v1926 = vpop.f32.mrb[0].mxu0
        %v1927 = vadd.f32 %v1032, %v1926
        %v1928 = vpop.f32.mrb[0].mxu0
        %v1929 = vadd.f32 %v1036, %v1928
        %v1930 = vpop.f32.mrb[0].mxu0
        %v1931 = vadd.f32 %v1032, %v1930
        %v1932 = vpop.f32.mrb[0].mxu0
        %v1933 = vadd.f32 %v1036, %v1932
        %1934 = vmatprep.mubr.bf16.mxu0 0
        %1935 = vmatmul.mubr.bf16.gmra.mrb[0].mxu0 %v1192
        %v1936 = vpop.f32.mrb[0].mxu0
        %v1937 = vadd.f32 %v1032, %v1936
        %v1938 = vpop.f32.mrb[0].mxu0
        %v1939 = vadd.f32 %v1036, %v1938
        %v1940 = vpop.f32.mrb[0].mxu0
        %v1941 = vadd.f32 %v1032, %v1940
        %v1942 = vpop.f32.mrb[0].mxu0
        %v1943 = vadd.f32 %v1036, %v1942
        %1944 = vmatprep.mubr.bf16.mxu0 0
        %1945 = vmatmul.mubr.bf16.gmra.mrb[0].mxu0 %v1195
        %v1946 = vpop.f32.mrb[0].mxu0
        %v1947 = vadd.f32 %v1032, %v1946
        %v1948 = vpop.f32.mrb[0].mxu0
        %v1949 = vadd.f32 %v1036, %v1948
        %v1950 = vpop.f32.mrb[0].mxu0
        %v1951 = vadd.f32 %v1032, %v1950
        %v1952 = vpop.f32.mrb[0].mxu0
        %v1953 = vadd.f32 %v1036, %v1952
        %1954 = vmatprep.mubr.bf16.mxu0 0
        %1955 = vmatmul.mubr.bf16.gmra.mrb[0].mxu0 %v1198
        %v1956 = vpop.f32.mrb[0].mxu0
        %v1957 = vadd.f32 %v1032, %v1956
        %v1958 = vpop.f32.mrb[0].mxu0
        %v1959 = vadd.f32 %v1036, %v1958
        %v1960 = vpop.f32.mrb[0].mxu0
        %v1961 = vadd.f32 %v1032, %v1960
        %v1962 = vpop.f32.mrb[0].mxu0
        %v1963 = vadd.f32 %v1036, %v1962
        %1964 = vmatprep.mubr.bf16.mxu0 0
        %1965 = vmatmul.mubr.bf16.gmra.mrb[0].mxu0 %v1201
        %v1966 = vpop.f32.mrb[0].mxu0
        %v1967 = vadd.f32 %v1032, %v1966
        %v1968 = vpop.f32.mrb[0].mxu0
        %v1969 = vadd.f32 %v1036, %v1968
        %v1970 = vpop.f32.mrb[0].mxu0
        %v1971 = vadd.f32 %v1032, %v1970
        %v1972 = vpop.f32.mrb[0].mxu0
        %v1973 = vadd.f32 %v1036, %v1972
        %1974 = vdwg.mxu0
        %1975 = vmatprep.subr.bf16.mxu0 %v1124
        %1976 = vmatpush1.bf16.msra.mxu0 %v1123
        %1977 = vmatprep.subr.bf16.mxu0 %v1134
        %1978 = vmatpush1.bf16.msra.mxu0 %v1133
        %1979 = vmatprep.subr.bf16.mxu0 0
        %1980 = vmatpush1.bf16.msra.mxu0 0
        %1981 = vmatprep.subr.bf16.mxu0 0
        %1982 = vmatpush1.bf16.msra.mxu0 0
        %1983 = vmatprep.subr.bf16.mxu0 0
        %1984 = vmatpush1.bf16.msra.mxu0 0
        %1985 = vmatprep.subr.bf16.mxu0 0
        %1986 = vmatpush1.bf16.msra.mxu0 0
        %1987 = vmatprep.subr.bf16.mxu0 0
        %1988 = vmatpush1.bf16.msra.mxu0 0
        %1989 = vmatprep.subr.bf16.mxu0 0
        %1990 = vmatpush1.bf16.msra.mxu0 0
        %1991 = vmatprep.subr.bf16.mxu0 0
        %1992 = vmatpush1.bf16.msra.mxu0 0
        %1993 = vmatprep.subr.bf16.mxu0 0
        %1994 = vmatpush1.bf16.msra.mxu0 0
        %1995 = vmatprep.subr.bf16.mxu0 0
        %1996 = vmatpush1.bf16.msra.mxu0 0
        %1997 = vmatprep.subr.bf16.mxu0 0
        %1998 = vmatpush1.bf16.msra.mxu0 0
        %1999 = vmatprep.subr.bf16.mxu0 0
        %2000 = vmatpush1.bf16.msra.mxu0 0
        %2001 = vmatprep.subr.bf16.mxu0 0
        %2002 = vmatpush1.bf16.msra.mxu0 0
        %2003 = vmatprep.subr.bf16.mxu0 0
        %2004 = vmatpush1.bf16.msra.mxu0 0
        %2005 = vmatprep.subr.bf16.mxu0 0
        %2006 = vmatpush1.bf16.msra.mxu0 0
        %2007 = vmatprep.mubr.bf16.mxu0 0
        %2008 = vmatmul.mubr.bf16.gmra.mrb[0].mxu0 %v1156
        %v2009 = vpop.f32.mrb[0].mxu0
        %v2010 = vadd.f32 %v1040, %v2009
        %v2011 = vpop.f32.mrb[0].mxu0
        %v2012 = vadd.f32 %v1044, %v2011
        %v2013 = vpop.f32.mrb[0].mxu0
        %v2014 = vadd.f32 %v1040, %v2013
        %v2015 = vpop.f32.mrb[0].mxu0
        %v2016 = vadd.f32 %v1044, %v2015
        %2017 = vmatprep.mubr.bf16.mxu0 0
        %2018 = vmatmul.mubr.bf16.gmra.mrb[0].mxu0 %v1159
        %v2019 = vpop.f32.mrb[0].mxu0
        %v2020 = vadd.f32 %v1040, %v2019
        %v2021 = vpop.f32.mrb[0].mxu0
        %v2022 = vadd.f32 %v1044, %v2021
        %v2023 = vpop.f32.mrb[0].mxu0
        %v2024 = vadd.f32 %v1040, %v2023
        %v2025 = vpop.f32.mrb[0].mxu0
        %v2026 = vadd.f32 %v1044, %v2025
        %2027 = vmatprep.mubr.bf16.mxu0 0
        %2028 = vmatmul.mubr.bf16.gmra.mrb[0].mxu0 %v1162
        %v2029 = vpop.f32.mrb[0].mxu0
        %v2030 = vadd.f32 %v1040, %v2029
        %v2031 = vpop.f32.mrb[0].mxu0
        %v2032 = vadd.f32 %v1044, %v2031
        %v2033 = vpop.f32.mrb[0].mxu0
        %v2034 = vadd.f32 %v1040, %v2033
        %v2035 = vpop.f32.mrb[0].mxu0
        %v2036 = vadd.f32 %v1044, %v2035
        %2037 = vmatprep.mubr.bf16.mxu0 0
        %2038 = vmatmul.mubr.bf16.gmra.mrb[0].mxu0 %v1165
        %v2039 = vpop.f32.mrb[0].mxu0
        %v2040 = vadd.f32 %v1040, %v2039
        %v2041 = vpop.f32.mrb[0].mxu0
        %v2042 = vadd.f32 %v1044, %v2041
        %v2043 = vpop.f32.mrb[0].mxu0
        %v2044 = vadd.f32 %v1040, %v2043
        %v2045 = vpop.f32.mrb[0].mxu0
        %v2046 = vadd.f32 %v1044, %v2045
        %2047 = vmatprep.mubr.bf16.mxu0 0
        %2048 = vmatmul.mubr.bf16.gmra.mrb[0].mxu0 %v1168
        %v2049 = vpop.f32.mrb[0].mxu0
        %v2050 = vadd.f32 %v1040, %v2049
        %v2051 = vpop.f32.mrb[0].mxu0
        %v2052 = vadd.f32 %v1044, %v2051
        %v2053 = vpop.f32.mrb[0].mxu0
        %v2054 = vadd.f32 %v1040, %v2053
        %v2055 = vpop.f32.mrb[0].mxu0
        %v2056 = vadd.f32 %v1044, %v2055
        %2057 = vmatprep.mubr.bf16.mxu0 0
        %2058 = vmatmul.mubr.bf16.gmra.mrb[0].mxu0 %v1171
        %v2059 = vpop.f32.mrb[0].mxu0
        %v2060 = vadd.f32 %v1040, %v2059
        %v2061 = vpop.f32.mrb[0].mxu0
        %v2062 = vadd.f32 %v1044, %v2061
        %v2063 = vpop.f32.mrb[0].mxu0
        %v2064 = vadd.f32 %v1040, %v2063
        %v2065 = vpop.f32.mrb[0].mxu0
        %v2066 = vadd.f32 %v1044, %v2065
        %2067 = vmatprep.mubr.bf16.mxu0 0
        %2068 = vmatmul.mubr.bf16.gmra.mrb[0].mxu0 %v1174
        %v2069 = vpop.f32.mrb[0].mxu0
        %v2070 = vadd.f32 %v1040, %v2069
        %v2071 = vpop.f32.mrb[0].mxu0
        %v2072 = vadd.f32 %v1044, %v2071
        %v2073 = vpop.f32.mrb[0].mxu0
        %v2074 = vadd.f32 %v1040, %v2073
        %v2075 = vpop.f32.mrb[0].mxu0
        %v2076 = vadd.f32 %v1044, %v2075
        %2077 = vmatprep.mubr.bf16.mxu0 0
        %2078 = vmatmul.mubr.bf16.gmra.mrb[0].mxu0 %v1177
        %v2079 = vpop.f32.mrb[0].mxu0
        %v2080 = vadd.f32 %v1040, %v2079
        %v2081 = vpop.f32.mrb[0].mxu0
        %v2082 = vadd.f32 %v1044, %v2081
        %v2083 = vpop.f32.mrb[0].mxu0
        %v2084 = vadd.f32 %v1040, %v2083
        %v2085 = vpop.f32.mrb[0].mxu0
        %v2086 = vadd.f32 %v1044, %v2085
        %2087 = vmatprep.mubr.bf16.mxu0 0
        %2088 = vmatmul.mubr.bf16.gmra.mrb[0].mxu0 %v1180
        %v2089 = vpop.f32.mrb[0].mxu0
        %v2090 = vadd.f32 %v1040, %v2089
        %v2091 = vpop.f32.mrb[0].mxu0
        %v2092 = vadd.f32 %v1044, %v2091
        %v2093 = vpop.f32.mrb[0].mxu0
        %v2094 = vadd.f32 %v1040, %v2093
        %v2095 = vpop.f32.mrb[0].mxu0
        %v2096 = vadd.f32 %v1044, %v2095
        %2097 = vmatprep.mubr.bf16.mxu0 0
        %2098 = vmatmul.mubr.bf16.gmra.mrb[0].mxu0 %v1183
        %v2099 = vpop.f32.mrb[0].mxu0
        %v2100 = vadd.f32 %v1040, %v2099
        %v2101 = vpop.f32.mrb[0].mxu0
        %v2102 = vadd.f32 %v1044, %v2101
        %v2103 = vpop.f32.mrb[0].mxu0
        %v2104 = vadd.f32 %v1040, %v2103
        %v2105 = vpop.f32.mrb[0].mxu0
        %v2106 = vadd.f32 %v1044, %v2105
        %2107 = vmatprep.mubr.bf16.mxu0 0
        %2108 = vmatmul.mubr.bf16.gmra.mrb[0].mxu0 %v1186
        %v2109 = vpop.f32.mrb[0].mxu0
        %v2110 = vadd.f32 %v1040, %v2109
        %v2111 = vpop.f32.mrb[0].mxu0
        %v2112 = vadd.f32 %v1044, %v2111
        %v2113 = vpop.f32.mrb[0].mxu0
        %v2114 = vadd.f32 %v1040, %v2113
        %v2115 = vpop.f32.mrb[0].mxu0
        %v2116 = vadd.f32 %v1044, %v2115
        %2117 = vmatprep.mubr.bf16.mxu0 0
        %2118 = vmatmul.mubr.bf16.gmra.mrb[0].mxu0 %v1189
        %v2119 = vpop.f32.mrb[0].mxu0
        %v2120 = vadd.f32 %v1040, %v2119
        %v2121 = vpop.f32.mrb[0].mxu0
        %v2122 = vadd.f32 %v1044, %v2121
        %v2123 = vpop.f32.mrb[0].mxu0
        %v2124 = vadd.f32 %v1040, %v2123
        %v2125 = vpop.f32.mrb[0].mxu0
        %v2126 = vadd.f32 %v1044, %v2125
        %2127 = vmatprep.mubr.bf16.mxu0 0
        %2128 = vmatmul.mubr.bf16.gmra.mrb[0].mxu0 %v1192
        %v2129 = vpop.f32.mrb[0].mxu0
        %v2130 = vadd.f32 %v1040, %v2129
        %v2131 = vpop.f32.mrb[0].mxu0
        %v2132 = vadd.f32 %v1044, %v2131
        %v2133 = vpop.f32.mrb[0].mxu0
        %v2134 = vadd.f32 %v1040, %v2133
        %v2135 = vpop.f32.mrb[0].mxu0
        %v2136 = vadd.f32 %v1044, %v2135
        %2137 = vmatprep.mubr.bf16.mxu0 0
        %2138 = vmatmul.mubr.bf16.gmra.mrb[0].mxu0 %v1195
        %v2139 = vpop.f32.mrb[0].mxu0
        %v2140 = vadd.f32 %v1040, %v2139
        %v2141 = vpop.f32.mrb[0].mxu0
        %v2142 = vadd.f32 %v1044, %v2141
        %v2143 = vpop.f32.mrb[0].mxu0
        %v2144 = vadd.f32 %v1040, %v2143
        %v2145 = vpop.f32.mrb[0].mxu0
        %v2146 = vadd.f32 %v1044, %v2145
        %2147 = vmatprep.mubr.bf16.mxu0 0
        %2148 = vmatmul.mubr.bf16.gmra.mrb[0].mxu0 %v1198
        %v2149 = vpop.f32.mrb[0].mxu0
        %v2150 = vadd.f32 %v1040, %v2149
        %v2151 = vpop.f32.mrb[0].mxu0
        %v2152 = vadd.f32 %v1044, %v2151
        %v2153 = vpop.f32.mrb[0].mxu0
        %v2154 = vadd.f32 %v1040, %v2153
        %v2155 = vpop.f32.mrb[0].mxu0
        %v2156 = vadd.f32 %v1044, %v2155
        %2157 = vmatprep.mubr.bf16.mxu0 0
        %2158 = vmatmul.mubr.bf16.gmra.mrb[0].mxu0 %v1201
        %v2159 = vpop.f32.mrb[0].mxu0
        %v2160 = vadd.f32 %v1040, %v2159
        %v2161 = vpop.f32.mrb[0].mxu0
        %v2162 = vadd.f32 %v1044, %v2161
        %v2163 = vpop.f32.mrb[0].mxu0
        %v2164 = vadd.f32 %v1040, %v2163
        %v2165 = vpop.f32.mrb[0].mxu0
        %v2166 = vadd.f32 %v1044, %v2165
        %2167 = vdwg.mxu0
        %v2168 = vsub.f32 0.0, %v1238
        %v2169 = vsub.f32 0.0, %v1240
        %v2170 = vsub.f32 0.0, %v1431
        %v2171 = vsub.f32 0.0, %v1433
        %v2172 = vsub.f32 0.0, %v1624
        %v2173 = vsub.f32 0.0, %v1626
        %v2174 = vsub.f32 0.0, %v1817
        %v2175 = vsub.f32 0.0, %v1819
        %v2176 = vsub.f32 0.0, %v2010
        %v2177 = vsub.f32 0.0, %v2012
        %v2178 = vsub.f32 0.0, %v1242
        %v2179 = vsub.f32 0.0, %v1244
        %v2180 = vsub.f32 0.0, %v1435
        %v2181 = vsub.f32 0.0, %v1437
        %v2182 = vsub.f32 0.0, %v1628
        %v2183 = vsub.f32 0.0, %v1630
        %v2184 = vsub.f32 0.0, %v1821
        %v2185 = vsub.f32 0.0, %v1823
        %v2186 = vsub.f32 0.0, %v2014
        %v2187 = vsub.f32 0.0, %v2016
        %v2188 = vsub.f32 0.0, %v1248
        %v2189 = vsub.f32 0.0, %v1250
        %v2190 = vsub.f32 0.0, %v1441
        %v2191 = vsub.f32 0.0, %v1443
        %v2192 = vsub.f32 0.0, %v1634
        %v2193 = vsub.f32 0.0, %v1636
        %v2194 = vsub.f32 0.0, %v1827
        %v2195 = vsub.f32 0.0, %v1829
        %v2196 = vsub.f32 0.0, %v2020
        %v2197 = vsub.f32 0.0, %v2022
        %v2198 = vsub.f32 0.0, %v1252
        %v2199 = vsub.f32 0.0, %v1254
        %v2200 = vsub.f32 0.0, %v1445
        %v2201 = vsub.f32 0.0, %v1447
        %v2202 = vsub.f32 0.0, %v1638
        %v2203 = vsub.f32 0.0, %v1640
        %v2204 = vsub.f32 0.0, %v1831
        %v2205 = vsub.f32 0.0, %v1833
        %v2206 = vsub.f32 0.0, %v2024
        %v2207 = vsub.f32 0.0, %v2026
        %v2208 = vsub.f32 0.0, %v1258
        %v2209 = vsub.f32 0.0, %v1260
        %v2210 = vsub.f32 0.0, %v1451
        %v2211 = vsub.f32 0.0, %v1453
        %v2212 = vsub.f32 0.0, %v1644
        %v2213 = vsub.f32 0.0, %v1646
        %v2214 = vsub.f32 0.0, %v1837
        %v2215 = vsub.f32 0.0, %v1839
        %v2216 = vsub.f32 0.0, %v2030
        %v2217 = vsub.f32 0.0, %v2032
        %v2218 = vsub.f32 0.0, %v1262
        %v2219 = vsub.f32 0.0, %v1264
        %v2220 = vsub.f32 0.0, %v1455
        %v2221 = vsub.f32 0.0, %v1457
        %v2222 = vsub.f32 0.0, %v1648
        %v2223 = vsub.f32 0.0, %v1650
        %v2224 = vsub.f32 0.0, %v1841
        %v2225 = vsub.f32 0.0, %v1843
        %v2226 = vsub.f32 0.0, %v2034
        %v2227 = vsub.f32 0.0, %v2036
        %v2228 = vsub.f32 0.0, %v1268
        %v2229 = vsub.f32 0.0, %v1270
        %v2230 = vsub.f32 0.0, %v1461
        %v2231 = vsub.f32 0.0, %v1463
        %v2232 = vsub.f32 0.0, %v1654
        %v2233 = vsub.f32 0.0, %v1656
        %v2234 = vsub.f32 0.0, %v1847
        %v2235 = vsub.f32 0.0, %v1849
        %v2236 = vsub.f32 0.0, %v2040
        %v2237 = vsub.f32 0.0, %v2042
        %v2238 = vsub.f32 0.0, %v1272
        %v2239 = vsub.f32 0.0, %v1274
        %v2240 = vsub.f32 0.0, %v1465
        %v2241 = vsub.f32 0.0, %v1467
        %v2242 = vsub.f32 0.0, %v1658
        %v2243 = vsub.f32 0.0, %v1660
        %v2244 = vsub.f32 0.0, %v1851
        %v2245 = vsub.f32 0.0, %v1853
        %v2246 = vsub.f32 0.0, %v2044
        %v2247 = vsub.f32 0.0, %v2046
        %v2248 = vsub.f32 0.0, %v1278
        %v2249 = vsub.f32 0.0, %v1280
        %v2250 = vsub.f32 0.0, %v1471
        %v2251 = vsub.f32 0.0, %v1473
        %v2252 = vsub.f32 0.0, %v1664
        %v2253 = vsub.f32 0.0, %v1666
        %v2254 = vsub.f32 0.0, %v1857
        %v2255 = vsub.f32 0.0, %v1859
        %v2256 = vsub.f32 0.0, %v2050
        %v2257 = vsub.f32 0.0, %v2052
        %v2258 = vsub.f32 0.0, %v1282
        %v2259 = vsub.f32 0.0, %v1284
        %v2260 = vsub.f32 0.0, %v1475
        %v2261 = vsub.f32 0.0, %v1477
        %v2262 = vsub.f32 0.0, %v1668
        %v2263 = vsub.f32 0.0, %v1670
        %v2264 = vsub.f32 0.0, %v1861
        %v2265 = vsub.f32 0.0, %v1863
        %v2266 = vsub.f32 0.0, %v2054
        %v2267 = vsub.f32 0.0, %v2056
        %v2268 = vsub.f32 0.0, %v1288
        %v2269 = vsub.f32 0.0, %v1290
        %v2270 = vsub.f32 0.0, %v1481
        %v2271 = vsub.f32 0.0, %v1483
        %v2272 = vsub.f32 0.0, %v1674
        %v2273 = vsub.f32 0.0, %v1676
        %v2274 = vsub.f32 0.0, %v1867
        %v2275 = vsub.f32 0.0, %v1869
        %v2276 = vsub.f32 0.0, %v2060
        %v2277 = vsub.f32 0.0, %v2062
        %v2278 = vsub.f32 0.0, %v1292
        %v2279 = vsub.f32 0.0, %v1294
        %v2280 = vsub.f32 0.0, %v1485
        %v2281 = vsub.f32 0.0, %v1487
        %v2282 = vsub.f32 0.0, %v1678
        %v2283 = vsub.f32 0.0, %v1680
        %v2284 = vsub.f32 0.0, %v1871
        %v2285 = vsub.f32 0.0, %v1873
        %v2286 = vsub.f32 0.0, %v2064
        %v2287 = vsub.f32 0.0, %v2066
        %v2288 = vsub.f32 0.0, %v1298
        %v2289 = vsub.f32 0.0, %v1300
        %v2290 = vsub.f32 0.0, %v1491
        %v2291 = vsub.f32 0.0, %v1493
        %v2292 = vsub.f32 0.0, %v1684
        %v2293 = vsub.f32 0.0, %v1686
        %v2294 = vsub.f32 0.0, %v1877
        %v2295 = vsub.f32 0.0, %v1879
        %v2296 = vsub.f32 0.0, %v2070
        %v2297 = vsub.f32 0.0, %v2072
        %v2298 = vsub.f32 0.0, %v1302
        %v2299 = vsub.f32 0.0, %v1304
        %v2300 = vsub.f32 0.0, %v1495
        %v2301 = vsub.f32 0.0, %v1497
        %v2302 = vsub.f32 0.0, %v1688
        %v2303 = vsub.f32 0.0, %v1690
        %v2304 = vsub.f32 0.0, %v1881
        %v2305 = vsub.f32 0.0, %v1883
        %v2306 = vsub.f32 0.0, %v2074
        %v2307 = vsub.f32 0.0, %v2076
        %v2308 = vsub.f32 0.0, %v1308
        %v2309 = vsub.f32 0.0, %v1310
        %v2310 = vsub.f32 0.0, %v1501
        %v2311 = vsub.f32 0.0, %v1503
        %v2312 = vsub.f32 0.0, %v1694
        %v2313 = vsub.f32 0.0, %v1696
        %v2314 = vsub.f32 0.0, %v1887
        %v2315 = vsub.f32 0.0, %v1889
        %v2316 = vsub.f32 0.0, %v2080
        %v2317 = vsub.f32 0.0, %v2082
        %v2318 = vsub.f32 0.0, %v1312
        %v2319 = vsub.f32 0.0, %v1314
        %v2320 = vsub.f32 0.0, %v1505
        %v2321 = vsub.f32 0.0, %v1507
        %v2322 = vsub.f32 0.0, %v1698
        %v2323 = vsub.f32 0.0, %v1700
        %v2324 = vsub.f32 0.0, %v1891
        %v2325 = vsub.f32 0.0, %v1893
        %v2326 = vsub.f32 0.0, %v2084
        %v2327 = vsub.f32 0.0, %v2086
        %v2328 = vsub.f32 0.0, %v1318
        %v2329 = vsub.f32 0.0, %v1320
        %v2330 = vsub.f32 0.0, %v1511
        %v2331 = vsub.f32 0.0, %v1513
        %v2332 = vsub.f32 0.0, %v1704
        %v2333 = vsub.f32 0.0, %v1706
        %v2334 = vsub.f32 0.0, %v1897
        %v2335 = vsub.f32 0.0, %v1899
        %v2336 = vsub.f32 0.0, %v2090
        %v2337 = vsub.f32 0.0, %v2092
        %v2338 = vsub.f32 0.0, %v1322
        %v2339 = vsub.f32 0.0, %v1324
        %v2340 = vsub.f32 0.0, %v1515
        %v2341 = vsub.f32 0.0, %v1517
        %v2342 = vsub.f32 0.0, %v1708
        %v2343 = vsub.f32 0.0, %v1710
        %v2344 = vsub.f32 0.0, %v1901
        %v2345 = vsub.f32 0.0, %v1903
        %v2346 = vsub.f32 0.0, %v2094
        %v2347 = vsub.f32 0.0, %v2096
        %v2348 = vsub.f32 0.0, %v1328
        %v2349 = vsub.f32 0.0, %v1330
        %v2350 = vsub.f32 0.0, %v1521
        %v2351 = vsub.f32 0.0, %v1523
        %v2352 = vsub.f32 0.0, %v1714
        %v2353 = vsub.f32 0.0, %v1716
        %v2354 = vsub.f32 0.0, %v1907
        %v2355 = vsub.f32 0.0, %v1909
        %v2356 = vsub.f32 0.0, %v2100
        %v2357 = vsub.f32 0.0, %v2102
        %v2358 = vsub.f32 0.0, %v1332
        %v2359 = vsub.f32 0.0, %v1334
        %v2360 = vsub.f32 0.0, %v1525
        %v2361 = vsub.f32 0.0, %v1527
        %v2362 = vsub.f32 0.0, %v1718
        %v2363 = vsub.f32 0.0, %v1720
        %v2364 = vsub.f32 0.0, %v1911
        %v2365 = vsub.f32 0.0, %v1913
        %v2366 = vsub.f32 0.0, %v2104
        %v2367 = vsub.f32 0.0, %v2106
        %v2368 = vsub.f32 0.0, %v1338
        %v2369 = vsub.f32 0.0, %v1340
        %v2370 = vsub.f32 0.0, %v1531
        %v2371 = vsub.f32 0.0, %v1533
        %v2372 = vsub.f32 0.0, %v1724
        %v2373 = vsub.f32 0.0, %v1726
        %v2374 = vsub.f32 0.0, %v1917
        %v2375 = vsub.f32 0.0, %v1919
        %v2376 = vsub.f32 0.0, %v2110
        %v2377 = vsub.f32 0.0, %v2112
        %v2378 = vsub.f32 0.0, %v1342
        %v2379 = vsub.f32 0.0, %v1344
        %v2380 = vsub.f32 0.0, %v1535
        %v2381 = vsub.f32 0.0, %v1537
        %v2382 = vsub.f32 0.0, %v1728
        %v2383 = vsub.f32 0.0, %v1730
        %v2384 = vsub.f32 0.0, %v1921
        %v2385 = vsub.f32 0.0, %v1923
        %v2386 = vsub.f32 0.0, %v2114
        %v2387 = vsub.f32 0.0, %v2116
        %v2388 = vsub.f32 0.0, %v1348
        %v2389 = vsub.f32 0.0, %v1350
        %v2390 = vsub.f32 0.0, %v1541
        %v2391 = vsub.f32 0.0, %v1543
        %v2392 = vsub.f32 0.0, %v1734
        %v2393 = vsub.f32 0.0, %v1736
        %v2394 = vsub.f32 0.0, %v1927
        %v2395 = vsub.f32 0.0, %v1929
        %v2396 = vsub.f32 0.0, %v2120
        %v2397 = vsub.f32 0.0, %v2122
        %v2398 = vsub.f32 0.0, %v1352
        %v2399 = vsub.f32 0.0, %v1354
        %v2400 = vsub.f32 0.0, %v1545
        %v2401 = vsub.f32 0.0, %v1547
        %v2402 = vsub.f32 0.0, %v1738
        %v2403 = vsub.f32 0.0, %v1740
        %v2404 = vsub.f32 0.0, %v1931
        %v2405 = vsub.f32 0.0, %v1933
        %v2406 = vsub.f32 0.0, %v2124
        %v2407 = vsub.f32 0.0, %v2126
        %v2408 = vsub.f32 0.0, %v1358
        %v2409 = vsub.f32 0.0, %v1360
        %v2410 = vsub.f32 0.0, %v1551
        %v2411 = vsub.f32 0.0, %v1553
        %v2412 = vsub.f32 0.0, %v1744
        %v2413 = vsub.f32 0.0, %v1746
        %v2414 = vsub.f32 0.0, %v1937
        %v2415 = vsub.f32 0.0, %v1939
        %v2416 = vsub.f32 0.0, %v2130
        %v2417 = vsub.f32 0.0, %v2132
        %v2418 = vsub.f32 0.0, %v1362
        %v2419 = vsub.f32 0.0, %v1364
        %v2420 = vsub.f32 0.0, %v1555
        %v2421 = vsub.f32 0.0, %v1557
        %v2422 = vsub.f32 0.0, %v1748
        %v2423 = vsub.f32 0.0, %v1750
        %v2424 = vsub.f32 0.0, %v1941
        %v2425 = vsub.f32 0.0, %v1943
        %v2426 = vsub.f32 0.0, %v2134
        %v2427 = vsub.f32 0.0, %v2136
        %v2428 = vsub.f32 0.0, %v1368
        %v2429 = vsub.f32 0.0, %v1370
        %v2430 = vsub.f32 0.0, %v1561
        %v2431 = vsub.f32 0.0, %v1563
        %v2432 = vsub.f32 0.0, %v1754
        %v2433 = vsub.f32 0.0, %v1756
        %v2434 = vsub.f32 0.0, %v1947
        %v2435 = vsub.f32 0.0, %v1949
        %v2436 = vsub.f32 0.0, %v2140
        %v2437 = vsub.f32 0.0, %v2142
        %v2438 = vsub.f32 0.0, %v1372
        %v2439 = vsub.f32 0.0, %v1374
        %v2440 = vsub.f32 0.0, %v1565
        %v2441 = vsub.f32 0.0, %v1567
        %v2442 = vsub.f32 0.0, %v1758
        %v2443 = vsub.f32 0.0, %v1760
        %v2444 = vsub.f32 0.0, %v1951
        %v2445 = vsub.f32 0.0, %v1953
        %v2446 = vsub.f32 0.0, %v2144
        %v2447 = vsub.f32 0.0, %v2146
        %v2448 = vsub.f32 0.0, %v1378
        %v2449 = vsub.f32 0.0, %v1380
        %v2450 = vsub.f32 0.0, %v1571
        %v2451 = vsub.f32 0.0, %v1573
        %v2452 = vsub.f32 0.0, %v1764
        %v2453 = vsub.f32 0.0, %v1766
        %v2454 = vsub.f32 0.0, %v1957
        %v2455 = vsub.f32 0.0, %v1959
        %v2456 = vsub.f32 0.0, %v2150
        %v2457 = vsub.f32 0.0, %v2152
        %v2458 = vsub.f32 0.0, %v1382
        %v2459 = vsub.f32 0.0, %v1384
        %v2460 = vsub.f32 0.0, %v1575
        %v2461 = vsub.f32 0.0, %v1577
        %v2462 = vsub.f32 0.0, %v1768
        %v2463 = vsub.f32 0.0, %v1770
        %v2464 = vsub.f32 0.0, %v1961
        %v2465 = vsub.f32 0.0, %v1963
        %v2466 = vsub.f32 0.0, %v2154
        %v2467 = vsub.f32 0.0, %v2156
        %v2468 = vsub.f32 0.0, %v1388
        %v2469 = vsub.f32 0.0, %v1390
        %v2470 = vsub.f32 0.0, %v1581
        %v2471 = vsub.f32 0.0, %v1583
        %v2472 = vsub.f32 0.0, %v1774
        %v2473 = vsub.f32 0.0, %v1776
        %v2474 = vsub.f32 0.0, %v1967
        %v2475 = vsub.f32 0.0, %v1969
        %v2476 = vsub.f32 0.0, %v2160
        %v2477 = vsub.f32 0.0, %v2162
        %v2478 = vsub.f32 0.0, %v1392
        %v2479 = vsub.f32 0.0, %v1394
        %v2480 = vsub.f32 0.0, %v1585
        %v2481 = vsub.f32 0.0, %v1587
        %v2482 = vsub.f32 0.0, %v1778
        %v2483 = vsub.f32 0.0, %v1780
        %v2484 = vsub.f32 0.0, %v1971
        %v2485 = vsub.f32 0.0, %v1973
        %v2486 = vsub.f32 0.0, %v2164
        %v2487 = vsub.f32 0.0, %v2166
        %v2488 = vmul.f32 %v2168, 1.442695
        %v2489 = vpow.pop %v2488
        %v2490 = vmul.f32 %v2169, 1.442695
        %v2491 = vpow.pop %v2490
        %v2492 = vmul.f32 %v2170, 1.442695
        %v2493 = vpow.pop %v2492
        %v2494 = vmul.f32 %v2171, 1.442695
        %v2495 = vpow.pop %v2494
        %v2496 = vmul.f32 %v2172, 1.442695
        %v2497 = vpow.pop %v2496
        %v2498 = vmul.f32 %v2173, 1.442695
        %v2499 = vpow.pop %v2498
        %v2500 = vmul.f32 %v2174, 1.442695
        %v2501 = vpow.pop %v2500
        %v2502 = vmul.f32 %v2175, 1.442695
        %v2503 = vpow.pop %v2502
        %v2504 = vmul.f32 %v2176, 1.442695
        %v2505 = vpow.pop %v2504
        %v2506 = vmul.f32 %v2177, 1.442695
        %v2507 = vpow.pop %v2506
        %v2508 = vmul.f32 %v2178, 1.442695
        %v2509 = vpow.pop %v2508
        %v2510 = vmul.f32 %v2179, 1.442695
        %v2511 = vpow.pop %v2510
        %v2512 = vmul.f32 %v2180, 1.442695
        %v2513 = vpow.pop %v2512
        %v2514 = vmul.f32 %v2181, 1.442695
        %v2515 = vpow.pop %v2514
        %v2516 = vmul.f32 %v2182, 1.442695
        %v2517 = vpow.pop %v2516
        %v2518 = vmul.f32 %v2183, 1.442695
        %v2519 = vpow.pop %v2518
        %v2520 = vmul.f32 %v2184, 1.442695
        %v2521 = vpow.pop %v2520
        %v2522 = vmul.f32 %v2185, 1.442695
        %v2523 = vpow.pop %v2522
        %v2524 = vmul.f32 %v2186, 1.442695
        %v2525 = vpow.pop %v2524
        %v2526 = vmul.f32 %v2187, 1.442695
        %v2527 = vpow.pop %v2526
        %v2528 = vmul.f32 %v2188, 1.442695
        %v2529 = vpow.pop %v2528
        %v2530 = vmul.f32 %v2189, 1.442695
        %v2531 = vpow.pop %v2530
        %v2532 = vmul.f32 %v2190, 1.442695
        %v2533 = vpow.pop %v2532
        %v2534 = vmul.f32 %v2191, 1.442695
        %v2535 = vpow.pop %v2534
        %v2536 = vmul.f32 %v2192, 1.442695
        %v2537 = vpow.pop %v2536
        %v2538 = vmul.f32 %v2193, 1.442695
        %v2539 = vpow.pop %v2538
        %v2540 = vmul.f32 %v2194, 1.442695
        %v2541 = vpow.pop %v2540
        %v2542 = vmul.f32 %v2195, 1.442695
        %v2543 = vpow.pop %v2542
        %v2544 = vmul.f32 %v2196, 1.442695
        %v2545 = vpow.pop %v2544
        %v2546 = vmul.f32 %v2197, 1.442695
        %v2547 = vpow.pop %v2546
        %v2548 = vmul.f32 %v2198, 1.442695
        %v2549 = vpow.pop %v2548
        %v2550 = vmul.f32 %v2199, 1.442695
        %v2551 = vpow.pop %v2550
        %v2552 = vmul.f32 %v2200, 1.442695
        %v2553 = vpow.pop %v2552
        %v2554 = vmul.f32 %v2201, 1.442695
        %v2555 = vpow.pop %v2554
        %v2556 = vmul.f32 %v2202, 1.442695
        %v2557 = vpow.pop %v2556
        %v2558 = vmul.f32 %v2203, 1.442695
        %v2559 = vpow.pop %v2558
        %v2560 = vmul.f32 %v2204, 1.442695
        %v2561 = vpow.pop %v2560
        %v2562 = vmul.f32 %v2205, 1.442695
        %v2563 = vpow.pop %v2562
        %v2564 = vmul.f32 %v2206, 1.442695
        %v2565 = vpow.pop %v2564
        %v2566 = vmul.f32 %v2207, 1.442695
        %v2567 = vpow.pop %v2566
        %v2568 = vmul.f32 %v2208, 1.442695
        %v2569 = vpow.pop %v2568
        %v2570 = vmul.f32 %v2209, 1.442695
        %v2571 = vpow.pop %v2570
        %v2572 = vmul.f32 %v2210, 1.442695
        %v2573 = vpow.pop %v2572
        %v2574 = vmul.f32 %v2211, 1.442695
        %v2575 = vpow.pop %v2574
        %v2576 = vmul.f32 %v2212, 1.442695
        %v2577 = vpow.pop %v2576
        %v2578 = vmul.f32 %v2213, 1.442695
        %v2579 = vpow.pop %v2578
        %v2580 = vmul.f32 %v2214, 1.442695
        %v2581 = vpow.pop %v2580
        %v2582 = vmul.f32 %v2215, 1.442695
        %v2583 = vpow.pop %v2582
        %v2584 = vmul.f32 %v2216, 1.442695
        %v2585 = vpow.pop %v2584
        %v2586 = vmul.f32 %v2217, 1.442695
        %v2587 = vpow.pop %v2586
        %v2588 = vmul.f32 %v2218, 1.442695
        %v2589 = vpow.pop %v2588
        %v2590 = vmul.f32 %v2219, 1.442695
        %v2591 = vpow.pop %v2590
        %v2592 = vmul.f32 %v2220, 1.442695
        %v2593 = vpow.pop %v2592
        %v2594 = vmul.f32 %v2221, 1.442695
        %v2595 = vpow.pop %v2594
        %v2596 = vmul.f32 %v2222, 1.442695
        %v2597 = vpow.pop %v2596
        %v2598 = vmul.f32 %v2223, 1.442695
        %v2599 = vpow.pop %v2598
        %v2600 = vmul.f32 %v2224, 1.442695
        %v2601 = vpow.pop %v2600
        %v2602 = vmul.f32 %v2225, 1.442695
        %v2603 = vpow.pop %v2602
        %v2604 = vmul.f32 %v2226, 1.442695
        %v2605 = vpow.pop %v2604
        %v2606 = vmul.f32 %v2227, 1.442695
        %v2607 = vpow.pop %v2606
        %v2608 = vmul.f32 %v2228, 1.442695
        %v2609 = vpow.pop %v2608
        %v2610 = vmul.f32 %v2229, 1.442695
        %v2611 = vpow.pop %v2610
        %v2612 = vmul.f32 %v2230, 1.442695
        %v2613 = vpow.pop %v2612
        %v2614 = vmul.f32 %v2231, 1.442695
        %v2615 = vpow.pop %v2614
        %v2616 = vmul.f32 %v2232, 1.442695
        %v2617 = vpow.pop %v2616
        %v2618 = vmul.f32 %v2233, 1.442695
        %v2619 = vpow.pop %v2618
        %v2620 = vmul.f32 %v2234, 1.442695
        %v2621 = vpow.pop %v2620
        %v2622 = vmul.f32 %v2235, 1.442695
        %v2623 = vpow.pop %v2622
        %v2624 = vmul.f32 %v2236, 1.442695
        %v2625 = vpow.pop %v2624
        %v2626 = vmul.f32 %v2237, 1.442695
        %v2627 = vpow.pop %v2626
        %v2628 = vmul.f32 %v2238, 1.442695
        %v2629 = vpow.pop %v2628
        %v2630 = vmul.f32 %v2239, 1.442695
        %v2631 = vpow.pop %v2630
        %v2632 = vmul.f32 %v2240, 1.442695
        %v2633 = vpow.pop %v2632
        %v2634 = vmul.f32 %v2241, 1.442695
        %v2635 = vpow.pop %v2634
        %v2636 = vmul.f32 %v2242, 1.442695
        %v2637 = vpow.pop %v2636
        %v2638 = vmul.f32 %v2243, 1.442695
        %v2639 = vpow.pop %v2638
        %v2640 = vmul.f32 %v2244, 1.442695
        %v2641 = vpow.pop %v2640
        %v2642 = vmul.f32 %v2245, 1.442695
        %v2643 = vpow.pop %v2642
        %v2644 = vmul.f32 %v2246, 1.442695
        %v2645 = vpow.pop %v2644
        %v2646 = vmul.f32 %v2247, 1.442695
        %v2647 = vpow.pop %v2646
        %v2648 = vmul.f32 %v2248, 1.442695
        %v2649 = vpow.pop %v2648
        %v2650 = vmul.f32 %v2249, 1.442695
        %v2651 = vpow.pop %v2650
        %v2652 = vmul.f32 %v2250, 1.442695
        %v2653 = vpow.pop %v2652
        %v2654 = vmul.f32 %v2251, 1.442695
        %v2655 = vpow.pop %v2654
        %v2656 = vmul.f32 %v2252, 1.442695
        %v2657 = vpow.pop %v2656
        %v2658 = vmul.f32 %v2253, 1.442695
        %v2659 = vpow.pop %v2658
        %v2660 = vmul.f32 %v2254, 1.442695
        %v2661 = vpow.pop %v2660
        %v2662 = vmul.f32 %v2255, 1.442695
        %v2663 = vpow.pop %v2662
        %v2664 = vmul.f32 %v2256, 1.442695
        %v2665 = vpow.pop %v2664
        %v2666 = vmul.f32 %v2257, 1.442695
        %v2667 = vpow.pop %v2666
        %v2668 = vmul.f32 %v2258, 1.442695
        %v2669 = vpow.pop %v2668
        %v2670 = vmul.f32 %v2259, 1.442695
        %v2671 = vpow.pop %v2670
        %v2672 = vmul.f32 %v2260, 1.442695
        %v2673 = vpow.pop %v2672
        %v2674 = vmul.f32 %v2261, 1.442695
        %v2675 = vpow.pop %v2674
        %v2676 = vmul.f32 %v2262, 1.442695
        %v2677 = vpow.pop %v2676
        %v2678 = vmul.f32 %v2263, 1.442695
        %v2679 = vpow.pop %v2678
        %v2680 = vmul.f32 %v2264, 1.442695
        %v2681 = vpow.pop %v2680
        %v2682 = vmul.f32 %v2265, 1.442695
        %v2683 = vpow.pop %v2682
        %v2684 = vmul.f32 %v2266, 1.442695
        %v2685 = vpow.pop %v2684
        %v2686 = vmul.f32 %v2267, 1.442695
        %v2687 = vpow.pop %v2686
        %v2688 = vmul.f32 %v2268, 1.442695
        %v2689 = vpow.pop %v2688
        %v2690 = vmul.f32 %v2269, 1.442695
        %v2691 = vpow.pop %v2690
        %v2692 = vmul.f32 %v2270, 1.442695
        %v2693 = vpow.pop %v2692
        %v2694 = vmul.f32 %v2271, 1.442695
        %v2695 = vpow.pop %v2694
        %v2696 = vmul.f32 %v2272, 1.442695
        %v2697 = vpow.pop %v2696
        %v2698 = vmul.f32 %v2273, 1.442695
        %v2699 = vpow.pop %v2698
        %v2700 = vmul.f32 %v2274, 1.442695
        %v2701 = vpow.pop %v2700
        %v2702 = vmul.f32 %v2275, 1.442695
        %v2703 = vpow.pop %v2702
        %v2704 = vmul.f32 %v2276, 1.442695
        %v2705 = vpow.pop %v2704
        %v2706 = vmul.f32 %v2277, 1.442695
        %v2707 = vpow.pop %v2706
        %v2708 = vmul.f32 %v2278, 1.442695
        %v2709 = vpow.pop %v2708
        %v2710 = vmul.f32 %v2279, 1.442695
        %v2711 = vpow.pop %v2710
        %v2712 = vmul.f32 %v2280, 1.442695
        %v2713 = vpow.pop %v2712
        %v2714 = vmul.f32 %v2281, 1.442695
        %v2715 = vpow.pop %v2714
        %v2716 = vmul.f32 %v2282, 1.442695
        %v2717 = vpow.pop %v2716
        %v2718 = vmul.f32 %v2283, 1.442695
        %v2719 = vpow.pop %v2718
        %v2720 = vmul.f32 %v2284, 1.442695
        %v2721 = vpow.pop %v2720
        %v2722 = vmul.f32 %v2285, 1.442695
        %v2723 = vpow.pop %v2722
        %v2724 = vmul.f32 %v2286, 1.442695
        %v2725 = vpow.pop %v2724
        %v2726 = vmul.f32 %v2287, 1.442695
        %v2727 = vpow.pop %v2726
        %v2728 = vmul.f32 %v2288, 1.442695
        %v2729 = vpow.pop %v2728
        %v2730 = vmul.f32 %v2289, 1.442695
        %v2731 = vpow.pop %v2730
        %v2732 = vmul.f32 %v2290, 1.442695
        %v2733 = vpow.pop %v2732
        %v2734 = vmul.f32 %v2291, 1.442695
        %v2735 = vpow.pop %v2734
        %v2736 = vmul.f32 %v2292, 1.442695
        %v2737 = vpow.pop %v2736
        %v2738 = vmul.f32 %v2293, 1.442695
        %v2739 = vpow.pop %v2738
        %v2740 = vmul.f32 %v2294, 1.442695
        %v2741 = vpow.pop %v2740
        %v2742 = vmul.f32 %v2295, 1.442695
        %v2743 = vpow.pop %v2742
        %v2744 = vmul.f32 %v2296, 1.442695
        %v2745 = vpow.pop %v2744
        %v2746 = vmul.f32 %v2297, 1.442695
        %v2747 = vpow.pop %v2746
        %v2748 = vmul.f32 %v2298, 1.442695
        %v2749 = vpow.pop %v2748
        %v2750 = vmul.f32 %v2299, 1.442695
        %v2751 = vpow.pop %v2750
        %v2752 = vmul.f32 %v2300, 1.442695
        %v2753 = vpow.pop %v2752
        %v2754 = vmul.f32 %v2301, 1.442695
        %v2755 = vpow.pop %v2754
        %v2756 = vmul.f32 %v2302, 1.442695
        %v2757 = vpow.pop %v2756
        %v2758 = vmul.f32 %v2303, 1.442695
        %v2759 = vpow.pop %v2758
        %v2760 = vmul.f32 %v2304, 1.442695
        %v2761 = vpow.pop %v2760
        %v2762 = vmul.f32 %v2305, 1.442695
        %v2763 = vpow.pop %v2762
        %v2764 = vmul.f32 %v2306, 1.442695
        %v2765 = vpow.pop %v2764
        %v2766 = vmul.f32 %v2307, 1.442695
        %v2767 = vpow.pop %v2766
        %v2768 = vmul.f32 %v2308, 1.442695
        %v2769 = vpow.pop %v2768
        %v2770 = vmul.f32 %v2309, 1.442695
        %v2771 = vpow.pop %v2770
        %v2772 = vmul.f32 %v2310, 1.442695
        %v2773 = vpow.pop %v2772
        %v2774 = vmul.f32 %v2311, 1.442695
        %v2775 = vpow.pop %v2774
        %v2776 = vmul.f32 %v2312, 1.442695
        %v2777 = vpow.pop %v2776
        %v2778 = vmul.f32 %v2313, 1.442695
        %v2779 = vpow.pop %v2778
        %v2780 = vmul.f32 %v2314, 1.442695
        %v2781 = vpow.pop %v2780
        %v2782 = vmul.f32 %v2315, 1.442695
        %v2783 = vpow.pop %v2782
        %v2784 = vmul.f32 %v2316, 1.442695
        %v2785 = vpow.pop %v2784
        %v2786 = vmul.f32 %v2317, 1.442695
        %v2787 = vpow.pop %v2786
        %v2788 = vmul.f32 %v2318, 1.442695
        %v2789 = vpow.pop %v2788
        %v2790 = vmul.f32 %v2319, 1.442695
        %v2791 = vpow.pop %v2790
        %v2792 = vmul.f32 %v2320, 1.442695
        %v2793 = vpow.pop %v2792
        %v2794 = vmul.f32 %v2321, 1.442695
        %v2795 = vpow.pop %v2794
        %v2796 = vmul.f32 %v2322, 1.442695
        %v2797 = vpow.pop %v2796
        %v2798 = vmul.f32 %v2323, 1.442695
        %v2799 = vpow.pop %v2798
        %v2800 = vmul.f32 %v2324, 1.442695
        %v2801 = vpow.pop %v2800
        %v2802 = vmul.f32 %v2325, 1.442695
        %v2803 = vpow.pop %v2802
        %v2804 = vmul.f32 %v2326, 1.442695
        %v2805 = vpow.pop %v2804
        %v2806 = vmul.f32 %v2327, 1.442695
        %v2807 = vpow.pop %v2806
        %v2808 = vmul.f32 %v2328, 1.442695
        %v2809 = vpow.pop %v2808
        %v2810 = vmul.f32 %v2329, 1.442695
        %v2811 = vpow.pop %v2810
        %v2812 = vmul.f32 %v2330, 1.442695
        %v2813 = vpow.pop %v2812
        %v2814 = vmul.f32 %v2331, 1.442695
        %v2815 = vpow.pop %v2814
        %v2816 = vmul.f32 %v2332, 1.442695
        %v2817 = vpow.pop %v2816
        %v2818 = vmul.f32 %v2333, 1.442695
        %v2819 = vpow.pop %v2818
        %v2820 = vmul.f32 %v2334, 1.442695
        %v2821 = vpow.pop %v2820
        %v2822 = vmul.f32 %v2335, 1.442695
        %v2823 = vpow.pop %v2822
        %v2824 = vmul.f32 %v2336, 1.442695
        %v2825 = vpow.pop %v2824
        %v2826 = vmul.f32 %v2337, 1.442695
        %v2827 = vpow.pop %v2826
        %v2828 = vmul.f32 %v2338, 1.442695
        %v2829 = vpow.pop %v2828
        %v2830 = vmul.f32 %v2339, 1.442695
        %v2831 = vpow.pop %v2830
        %v2832 = vmul.f32 %v2340, 1.442695
        %v2833 = vpow.pop %v2832
        %v2834 = vmul.f32 %v2341, 1.442695
        %v2835 = vpow.pop %v2834
        %v2836 = vmul.f32 %v2342, 1.442695
        %v2837 = vpow.pop %v2836
        %v2838 = vmul.f32 %v2343, 1.442695
        %v2839 = vpow.pop %v2838
        %v2840 = vmul.f32 %v2344, 1.442695
        %v2841 = vpow.pop %v2840
        %v2842 = vmul.f32 %v2345, 1.442695
        %v2843 = vpow.pop %v2842
        %v2844 = vmul.f32 %v2346, 1.442695
        %v2845 = vpow.pop %v2844
        %v2846 = vmul.f32 %v2347, 1.442695
        %v2847 = vpow.pop %v2846
        %v2848 = vmul.f32 %v2348, 1.442695
        %v2849 = vpow.pop %v2848
        %v2850 = vmul.f32 %v2349, 1.442695
        %v2851 = vpow.pop %v2850
        %v2852 = vmul.f32 %v2350, 1.442695
        %v2853 = vpow.pop %v2852
        %v2854 = vmul.f32 %v2351, 1.442695
        %v2855 = vpow.pop %v2854
        %v2856 = vmul.f32 %v2352, 1.442695
        %v2857 = vpow.pop %v2856
        %v2858 = vmul.f32 %v2353, 1.442695
        %v2859 = vpow.pop %v2858
        %v2860 = vmul.f32 %v2354, 1.442695
        %v2861 = vpow.pop %v2860
        %v2862 = vmul.f32 %v2355, 1.442695
        %v2863 = vpow.pop %v2862
        %v2864 = vmul.f32 %v2356, 1.442695
        %v2865 = vpow.pop %v2864
        %v2866 = vmul.f32 %v2357, 1.442695
        %v2867 = vpow.pop %v2866
        %v2868 = vmul.f32 %v2358, 1.442695
        %v2869 = vpow.pop %v2868
        %v2870 = vmul.f32 %v2359, 1.442695
        %v2871 = vpow.pop %v2870
        %v2872 = vmul.f32 %v2360, 1.442695
        %v2873 = vpow.pop %v2872
        %v2874 = vmul.f32 %v2361, 1.442695
        %v2875 = vpow.pop %v2874
        %v2876 = vmul.f32 %v2362, 1.442695
        %v2877 = vpow.pop %v2876
        %v2878 = vmul.f32 %v2363, 1.442695
        %v2879 = vpow.pop %v2878
        %v2880 = vmul.f32 %v2364, 1.442695
        %v2881 = vpow.pop %v2880
        %v2882 = vmul.f32 %v2365, 1.442695
        %v2883 = vpow.pop %v2882
        %v2884 = vmul.f32 %v2366, 1.442695
        %v2885 = vpow.pop %v2884
        %v2886 = vmul.f32 %v2367, 1.442695
        %v2887 = vpow.pop %v2886
        %v2888 = vmul.f32 %v2368, 1.442695
        %v2889 = vpow.pop %v2888
        %v2890 = vmul.f32 %v2369, 1.442695
        %v2891 = vpow.pop %v2890
        %v2892 = vmul.f32 %v2370, 1.442695
        %v2893 = vpow.pop %v2892
        %v2894 = vmul.f32 %v2371, 1.442695
        %v2895 = vpow.pop %v2894
        %v2896 = vmul.f32 %v2372, 1.442695
        %v2897 = vpow.pop %v2896
        %v2898 = vmul.f32 %v2373, 1.442695
        %v2899 = vpow.pop %v2898
        %v2900 = vmul.f32 %v2374, 1.442695
        %v2901 = vpow.pop %v2900
        %v2902 = vmul.f32 %v2375, 1.442695
        %v2903 = vpow.pop %v2902
        %v2904 = vmul.f32 %v2376, 1.442695
        %v2905 = vpow.pop %v2904
        %v2906 = vmul.f32 %v2377, 1.442695
        %v2907 = vpow.pop %v2906
        %v2908 = vmul.f32 %v2378, 1.442695
        %v2909 = vpow.pop %v2908
        %v2910 = vmul.f32 %v2379, 1.442695
        %v2911 = vpow.pop %v2910
        %v2912 = vmul.f32 %v2380, 1.442695
        %v2913 = vpow.pop %v2912
        %v2914 = vmul.f32 %v2381, 1.442695
        %v2915 = vpow.pop %v2914
        %v2916 = vmul.f32 %v2382, 1.442695
        %v2917 = vpow.pop %v2916
        %v2918 = vmul.f32 %v2383, 1.442695
        %v2919 = vpow.pop %v2918
        %v2920 = vmul.f32 %v2384, 1.442695
        %v2921 = vpow.pop %v2920
        %v2922 = vmul.f32 %v2385, 1.442695
        %v2923 = vpow.pop %v2922
        %v2924 = vmul.f32 %v2386, 1.442695
        %v2925 = vpow.pop %v2924
        %v2926 = vmul.f32 %v2387, 1.442695
        %v2927 = vpow.pop %v2926
        %v2928 = vmul.f32 %v2388, 1.442695
        %v2929 = vpow.pop %v2928
        %v2930 = vmul.f32 %v2389, 1.442695
        %v2931 = vpow.pop %v2930
        %v2932 = vmul.f32 %v2390, 1.442695
        %v2933 = vpow.pop %v2932
        %v2934 = vmul.f32 %v2391, 1.442695
        %v2935 = vpow.pop %v2934
        %v2936 = vmul.f32 %v2392, 1.442695
        %v2937 = vpow.pop %v2936
        %v2938 = vmul.f32 %v2393, 1.442695
        %v2939 = vpow.pop %v2938
        %v2940 = vmul.f32 %v2394, 1.442695
        %v2941 = vpow.pop %v2940
        %v2942 = vmul.f32 %v2395, 1.442695
        %v2943 = vpow.pop %v2942
        %v2944 = vmul.f32 %v2396, 1.442695
        %v2945 = vpow.pop %v2944
        %v2946 = vmul.f32 %v2397, 1.442695
        %v2947 = vpow.pop %v2946
        %v2948 = vmul.f32 %v2398, 1.442695
        %v2949 = vpow.pop %v2948
        %v2950 = vmul.f32 %v2399, 1.442695
        %v2951 = vpow.pop %v2950
        %v2952 = vmul.f32 %v2400, 1.442695
        %v2953 = vpow.pop %v2952
        %v2954 = vmul.f32 %v2401, 1.442695
        %v2955 = vpow.pop %v2954
        %v2956 = vmul.f32 %v2402, 1.442695
        %v2957 = vpow.pop %v2956
        %v2958 = vmul.f32 %v2403, 1.442695
        %v2959 = vpow.pop %v2958
        %v2960 = vmul.f32 %v2404, 1.442695
        %v2961 = vpow.pop %v2960
        %v2962 = vmul.f32 %v2405, 1.442695
        %v2963 = vpow.pop %v2962
        %v2964 = vmul.f32 %v2406, 1.442695
        %v2965 = vpow.pop %v2964
        %v2966 = vmul.f32 %v2407, 1.442695
        %v2967 = vpow.pop %v2966
        %v2968 = vmul.f32 %v2408, 1.442695
        %v2969 = vpow.pop %v2968
        %v2970 = vmul.f32 %v2409, 1.442695
        %v2971 = vpow.pop %v2970
        %v2972 = vmul.f32 %v2410, 1.442695
        %v2973 = vpow.pop %v2972
        %v2974 = vmul.f32 %v2411, 1.442695
        %v2975 = vpow.pop %v2974
        %v2976 = vmul.f32 %v2412, 1.442695
        %v2977 = vpow.pop %v2976
        %v2978 = vmul.f32 %v2413, 1.442695
        %v2979 = vpow.pop %v2978
        %v2980 = vmul.f32 %v2414, 1.442695
        %v2981 = vpow.pop %v2980
        %v2982 = vmul.f32 %v2415, 1.442695
        %v2983 = vpow.pop %v2982
        %v2984 = vmul.f32 %v2416, 1.442695
        %v2985 = vpow.pop %v2984
        %v2986 = vmul.f32 %v2417, 1.442695
        %v2987 = vpow.pop %v2986
        %v2988 = vmul.f32 %v2418, 1.442695
        %v2989 = vpow.pop %v2988
        %v2990 = vmul.f32 %v2419, 1.442695
        %v2991 = vpow.pop %v2990
        %v2992 = vmul.f32 %v2420, 1.442695
        %v2993 = vpow.pop %v2992
        %v2994 = vmul.f32 %v2421, 1.442695
        %v2995 = vpow.pop %v2994
        %v2996 = vmul.f32 %v2422, 1.442695
        %v2997 = vpow.pop %v2996
        %v2998 = vmul.f32 %v2423, 1.442695
        %v2999 = vpow.pop %v2998
        %v3000 = vmul.f32 %v2424, 1.442695
        %v3001 = vpow.pop %v3000
        %v3002 = vmul.f32 %v2425, 1.442695
        %v3003 = vpow.pop %v3002
        %v3004 = vmul.f32 %v2426, 1.442695
        %v3005 = vpow.pop %v3004
        %v3006 = vmul.f32 %v2427, 1.442695
        %v3007 = vpow.pop %v3006
        %v3008 = vmul.f32 %v2428, 1.442695
        %v3009 = vpow.pop %v3008
        %v3010 = vmul.f32 %v2429, 1.442695
        %v3011 = vpow.pop %v3010
        %v3012 = vmul.f32 %v2430, 1.442695
        %v3013 = vpow.pop %v3012
        %v3014 = vmul.f32 %v2431, 1.442695
        %v3015 = vpow.pop %v3014
        %v3016 = vmul.f32 %v2432, 1.442695
        %v3017 = vpow.pop %v3016
        %v3018 = vmul.f32 %v2433, 1.442695
        %v3019 = vpow.pop %v3018
        %v3020 = vmul.f32 %v2434, 1.442695
        %v3021 = vpow.pop %v3020
        %v3022 = vmul.f32 %v2435, 1.442695
        %v3023 = vpow.pop %v3022
        %v3024 = vmul.f32 %v2436, 1.442695
        %v3025 = vpow.pop %v3024
        %v3026 = vmul.f32 %v2437, 1.442695
        %v3027 = vpow.pop %v3026
        %v3028 = vmul.f32 %v2438, 1.442695
        %v3029 = vpow.pop %v3028
        %v3030 = vmul.f32 %v2439, 1.442695
        %v3031 = vpow.pop %v3030
        %v3032 = vmul.f32 %v2440, 1.442695
        %v3033 = vpow.pop %v3032
        %v3034 = vmul.f32 %v2441, 1.442695
        %v3035 = vpow.pop %v3034
        %v3036 = vmul.f32 %v2442, 1.442695
        %v3037 = vpow.pop %v3036
        %v3038 = vmul.f32 %v2443, 1.442695
        %v3039 = vpow.pop %v3038
        %v3040 = vmul.f32 %v2444, 1.442695
        %v3041 = vpow.pop %v3040
        %v3042 = vmul.f32 %v2445, 1.442695
        %v3043 = vpow.pop %v3042
        %v3044 = vmul.f32 %v2446, 1.442695
        %v3045 = vpow.pop %v3044
        %v3046 = vmul.f32 %v2447, 1.442695
        %v3047 = vpow.pop %v3046
        %v3048 = vmul.f32 %v2448, 1.442695
        %v3049 = vpow.pop %v3048
        %v3050 = vmul.f32 %v2449, 1.442695
        %v3051 = vpow.pop %v3050
        %v3052 = vmul.f32 %v2450, 1.442695
        %v3053 = vpow.pop %v3052
        %v3054 = vmul.f32 %v2451, 1.442695
        %v3055 = vpow.pop %v3054
        %v3056 = vmul.f32 %v2452, 1.442695
        %v3057 = vpow.pop %v3056
        %v3058 = vmul.f32 %v2453, 1.442695
        %v3059 = vpow.pop %v3058
        %v3060 = vmul.f32 %v2454, 1.442695
        %v3061 = vpow.pop %v3060
        %v3062 = vmul.f32 %v2455, 1.442695
        %v3063 = vpow.pop %v3062
        %v3064 = vmul.f32 %v2456, 1.442695
        %v3065 = vpow.pop %v3064
        %v3066 = vmul.f32 %v2457, 1.442695
        %v3067 = vpow.pop %v3066
        %v3068 = vmul.f32 %v2458, 1.442695
        %v3069 = vpow.pop %v3068
        %v3070 = vmul.f32 %v2459, 1.442695
        %v3071 = vpow.pop %v3070
        %v3072 = vmul.f32 %v2460, 1.442695
        %v3073 = vpow.pop %v3072
        %v3074 = vmul.f32 %v2461, 1.442695
        %v3075 = vpow.pop %v3074
        %v3076 = vmul.f32 %v2462, 1.442695
        %v3077 = vpow.pop %v3076
        %v3078 = vmul.f32 %v2463, 1.442695
        %v3079 = vpow.pop %v3078
        %v3080 = vmul.f32 %v2464, 1.442695
        %v3081 = vpow.pop %v3080
        %v3082 = vmul.f32 %v2465, 1.442695
        %v3083 = vpow.pop %v3082
        %v3084 = vmul.f32 %v2466, 1.442695
        %v3085 = vpow.pop %v3084
        %v3086 = vmul.f32 %v2467, 1.442695
        %v3087 = vpow.pop %v3086
        %v3088 = vmul.f32 %v2468, 1.442695
        %v3089 = vpow.pop %v3088
        %v3090 = vmul.f32 %v2469, 1.442695
        %v3091 = vpow.pop %v3090
        %v3092 = vmul.f32 %v2470, 1.442695
        %v3093 = vpow.pop %v3092
        %v3094 = vmul.f32 %v2471, 1.442695
        %v3095 = vpow.pop %v3094
        %v3096 = vmul.f32 %v2472, 1.442695
        %v3097 = vpow.pop %v3096
        %v3098 = vmul.f32 %v2473, 1.442695
        %v3099 = vpow.pop %v3098
        %v3100 = vmul.f32 %v2474, 1.442695
        %v3101 = vpow.pop %v3100
        %v3102 = vmul.f32 %v2475, 1.442695
        %v3103 = vpow.pop %v3102
        %v3104 = vmul.f32 %v2476, 1.442695
        %v3105 = vpow.pop %v3104
        %v3106 = vmul.f32 %v2477, 1.442695
        %v3107 = vpow.pop %v3106
        %v3108 = vmul.f32 %v2478, 1.442695
        %v3109 = vpow.pop %v3108
        %v3110 = vmul.f32 %v2479, 1.442695
        %v3111 = vpow.pop %v3110
        %v3112 = vmul.f32 %v2480, 1.442695
        %v3113 = vpow.pop %v3112
        %v3114 = vmul.f32 %v2481, 1.442695
        %v3115 = vpow.pop %v3114
        %v3116 = vmul.f32 %v2482, 1.442695
        %v3117 = vpow.pop %v3116
        %v3118 = vmul.f32 %v2483, 1.442695
        %v3119 = vpow.pop %v3118
        %v3120 = vmul.f32 %v2484, 1.442695
        %v3121 = vpow.pop %v3120
        %v3122 = vmul.f32 %v2485, 1.442695
        %v3123 = vpow.pop %v3122
        %v3124 = vmul.f32 %v2486, 1.442695
        %v3125 = vpow.pop %v3124
        %v3126 = vmul.f32 %v2487, 1.442695
        %v3127 = vpow.pop %v3126
        %v3128 = vadd.f32 %v2489, 1.0
        %v3129 = vadd.f32 %v2491, 1.0
        %v3130 = vadd.f32 %v2493, 1.0
        %v3131 = vadd.f32 %v2495, 1.0
        %v3132 = vadd.f32 %v2497, 1.0
        %v3133 = vadd.f32 %v2499, 1.0
        %v3134 = vadd.f32 %v2501, 1.0
        %v3135 = vadd.f32 %v2503, 1.0
        %v3136 = vadd.f32 %v2505, 1.0
        %v3137 = vadd.f32 %v2507, 1.0
        %v3138 = vadd.f32 %v2509, 1.0
        %v3139 = vadd.f32 %v2511, 1.0
        %v3140 = vadd.f32 %v2513, 1.0
        %v3141 = vadd.f32 %v2515, 1.0
        %v3142 = vadd.f32 %v2517, 1.0
        %v3143 = vadd.f32 %v2519, 1.0
        %v3144 = vadd.f32 %v2521, 1.0
        %v3145 = vadd.f32 %v2523, 1.0
        %v3146 = vadd.f32 %v2525, 1.0
        %v3147 = vadd.f32 %v2527, 1.0
        %v3148 = vadd.f32 %v2529, 1.0
        %v3149 = vadd.f32 %v2531, 1.0
        %v3150 = vadd.f32 %v2533, 1.0
        %v3151 = vadd.f32 %v2535, 1.0
        %v3152 = vadd.f32 %v2537, 1.0
        %v3153 = vadd.f32 %v2539, 1.0
        %v3154 = vadd.f32 %v2541, 1.0
        %v3155 = vadd.f32 %v2543, 1.0
        %v3156 = vadd.f32 %v2545, 1.0
        %v3157 = vadd.f32 %v2547, 1.0
        %v3158 = vadd.f32 %v2549, 1.0
        %v3159 = vadd.f32 %v2551, 1.0
        %v3160 = vadd.f32 %v2553, 1.0
        %v3161 = vadd.f32 %v2555, 1.0
        %v3162 = vadd.f32 %v2557, 1.0
        %v3163 = vadd.f32 %v2559, 1.0
        %v3164 = vadd.f32 %v2561, 1.0
        %v3165 = vadd.f32 %v2563, 1.0
        %v3166 = vadd.f32 %v2565, 1.0
        %v3167 = vadd.f32 %v2567, 1.0
        %v3168 = vadd.f32 %v2569, 1.0
        %v3169 = vadd.f32 %v2571, 1.0
        %v3170 = vadd.f32 %v2573, 1.0
        %v3171 = vadd.f32 %v2575, 1.0
        %v3172 = vadd.f32 %v2577, 1.0
        %v3173 = vadd.f32 %v2579, 1.0
        %v3174 = vadd.f32 %v2581, 1.0
        %v3175 = vadd.f32 %v2583, 1.0
        %v3176 = vadd.f32 %v2585, 1.0
        %v3177 = vadd.f32 %v2587, 1.0
        %v3178 = vadd.f32 %v2589, 1.0
        %v3179 = vadd.f32 %v2591, 1.0
        %v3180 = vadd.f32 %v2593, 1.0
        %v3181 = vadd.f32 %v2595, 1.0
        %v3182 = vadd.f32 %v2597, 1.0
        %v3183 = vadd.f32 %v2599, 1.0
        %v3184 = vadd.f32 %v2601, 1.0
        %v3185 = vadd.f32 %v2603, 1.0
        %v3186 = vadd.f32 %v2605, 1.0
        %v3187 = vadd.f32 %v2607, 1.0
        %v3188 = vadd.f32 %v2609, 1.0
        %v3189 = vadd.f32 %v2611, 1.0
        %v3190 = vadd.f32 %v2613, 1.0
        %v3191 = vadd.f32 %v2615, 1.0
        %v3192 = vadd.f32 %v2617, 1.0
        %v3193 = vadd.f32 %v2619, 1.0
        %v3194 = vadd.f32 %v2621, 1.0
        %v3195 = vadd.f32 %v2623, 1.0
        %v3196 = vadd.f32 %v2625, 1.0
        %v3197 = vadd.f32 %v2627, 1.0
        %v3198 = vadd.f32 %v2629, 1.0
        %v3199 = vadd.f32 %v2631, 1.0
        %v3200 = vadd.f32 %v2633, 1.0
        %v3201 = vadd.f32 %v2635, 1.0
        %v3202 = vadd.f32 %v2637, 1.0
        %v3203 = vadd.f32 %v2639, 1.0
        %v3204 = vadd.f32 %v2641, 1.0
        %v3205 = vadd.f32 %v2643, 1.0
        %v3206 = vadd.f32 %v2645, 1.0
        %v3207 = vadd.f32 %v2647, 1.0
        %v3208 = vadd.f32 %v2649, 1.0
        %v3209 = vadd.f32 %v2651, 1.0
        %v3210 = vadd.f32 %v2653, 1.0
        %v3211 = vadd.f32 %v2655, 1.0
        %v3212 = vadd.f32 %v2657, 1.0
        %v3213 = vadd.f32 %v2659, 1.0
        %v3214 = vadd.f32 %v2661, 1.0
        %v3215 = vadd.f32 %v2663, 1.0
        %v3216 = vadd.f32 %v2665, 1.0
        %v3217 = vadd.f32 %v2667, 1.0
        %v3218 = vadd.f32 %v2669, 1.0
        %v3219 = vadd.f32 %v2671, 1.0
        %v3220 = vadd.f32 %v2673, 1.0
        %v3221 = vadd.f32 %v2675, 1.0
        %v3222 = vadd.f32 %v2677, 1.0
        %v3223 = vadd.f32 %v2679, 1.0
        %v3224 = vadd.f32 %v2681, 1.0
        %v3225 = vadd.f32 %v2683, 1.0
        %v3226 = vadd.f32 %v2685, 1.0
        %v3227 = vadd.f32 %v2687, 1.0
        %v3228 = vadd.f32 %v2689, 1.0
        %v3229 = vadd.f32 %v2691, 1.0
        %v3230 = vadd.f32 %v2693, 1.0
        %v3231 = vadd.f32 %v2695, 1.0
        %v3232 = vadd.f32 %v2697, 1.0
        %v3233 = vadd.f32 %v2699, 1.0
        %v3234 = vadd.f32 %v2701, 1.0
        %v3235 = vadd.f32 %v2703, 1.0
        %v3236 = vadd.f32 %v2705, 1.0
        %v3237 = vadd.f32 %v2707, 1.0
        %v3238 = vadd.f32 %v2709, 1.0
        %v3239 = vadd.f32 %v2711, 1.0
        %v3240 = vadd.f32 %v2713, 1.0
        %v3241 = vadd.f32 %v2715, 1.0
        %v3242 = vadd.f32 %v2717, 1.0
        %v3243 = vadd.f32 %v2719, 1.0
        %v3244 = vadd.f32 %v2721, 1.0
        %v3245 = vadd.f32 %v2723, 1.0
        %v3246 = vadd.f32 %v2725, 1.0
        %v3247 = vadd.f32 %v2727, 1.0
        %v3248 = vadd.f32 %v2729, 1.0
        %v3249 = vadd.f32 %v2731, 1.0
        %v3250 = vadd.f32 %v2733, 1.0
        %v3251 = vadd.f32 %v2735, 1.0
        %v3252 = vadd.f32 %v2737, 1.0
        %v3253 = vadd.f32 %v2739, 1.0
        %v3254 = vadd.f32 %v2741, 1.0
        %v3255 = vadd.f32 %v2743, 1.0
        %v3256 = vadd.f32 %v2745, 1.0
        %v3257 = vadd.f32 %v2747, 1.0
        %v3258 = vadd.f32 %v2749, 1.0
        %v3259 = vadd.f32 %v2751, 1.0
        %v3260 = vadd.f32 %v2753, 1.0
        %v3261 = vadd.f32 %v2755, 1.0
        %v3262 = vadd.f32 %v2757, 1.0
        %v3263 = vadd.f32 %v2759, 1.0
        %v3264 = vadd.f32 %v2761, 1.0
        %v3265 = vadd.f32 %v2763, 1.0
        %v3266 = vadd.f32 %v2765, 1.0
        %v3267 = vadd.f32 %v2767, 1.0
        %v3268 = vadd.f32 %v2769, 1.0
        %v3269 = vadd.f32 %v2771, 1.0
        %v3270 = vadd.f32 %v2773, 1.0
        %v3271 = vadd.f32 %v2775, 1.0
        %v3272 = vadd.f32 %v2777, 1.0
        %v3273 = vadd.f32 %v2779, 1.0
        %v3274 = vadd.f32 %v2781, 1.0
        %v3275 = vadd.f32 %v2783, 1.0
        %v3276 = vadd.f32 %v2785, 1.0
        %v3277 = vadd.f32 %v2787, 1.0
        %v3278 = vadd.f32 %v2789, 1.0
        %v3279 = vadd.f32 %v2791, 1.0
        %v3280 = vadd.f32 %v2793, 1.0
        %v3281 = vadd.f32 %v2795, 1.0
        %v3282 = vadd.f32 %v2797, 1.0
        %v3283 = vadd.f32 %v2799, 1.0
        %v3284 = vadd.f32 %v2801, 1.0
        %v3285 = vadd.f32 %v2803, 1.0
        %v3286 = vadd.f32 %v2805, 1.0
        %v3287 = vadd.f32 %v2807, 1.0
        %v3288 = vadd.f32 %v2809, 1.0
        %v3289 = vadd.f32 %v2811, 1.0
        %v3290 = vadd.f32 %v2813, 1.0
        %v3291 = vadd.f32 %v2815, 1.0
        %v3292 = vadd.f32 %v2817, 1.0
        %v3293 = vadd.f32 %v2819, 1.0
        %v3294 = vadd.f32 %v2821, 1.0
        %v3295 = vadd.f32 %v2823, 1.0
        %v3296 = vadd.f32 %v2825, 1.0
        %v3297 = vadd.f32 %v2827, 1.0
        %v3298 = vadd.f32 %v2829, 1.0
        %v3299 = vadd.f32 %v2831, 1.0
        %v3300 = vadd.f32 %v2833, 1.0
        %v3301 = vadd.f32 %v2835, 1.0
        %v3302 = vadd.f32 %v2837, 1.0
        %v3303 = vadd.f32 %v2839, 1.0
        %v3304 = vadd.f32 %v2841, 1.0
        %v3305 = vadd.f32 %v2843, 1.0
        %v3306 = vadd.f32 %v2845, 1.0
        %v3307 = vadd.f32 %v2847, 1.0
        %v3308 = vadd.f32 %v2849, 1.0
        %v3309 = vadd.f32 %v2851, 1.0
        %v3310 = vadd.f32 %v2853, 1.0
        %v3311 = vadd.f32 %v2855, 1.0
        %v3312 = vadd.f32 %v2857, 1.0
        %v3313 = vadd.f32 %v2859, 1.0
        %v3314 = vadd.f32 %v2861, 1.0
        %v3315 = vadd.f32 %v2863, 1.0
        %v3316 = vadd.f32 %v2865, 1.0
        %v3317 = vadd.f32 %v2867, 1.0
        %v3318 = vadd.f32 %v2869, 1.0
        %v3319 = vadd.f32 %v2871, 1.0
        %v3320 = vadd.f32 %v2873, 1.0
        %v3321 = vadd.f32 %v2875, 1.0
        %v3322 = vadd.f32 %v2877, 1.0
        %v3323 = vadd.f32 %v2879, 1.0
        %v3324 = vadd.f32 %v2881, 1.0
        %v3325 = vadd.f32 %v2883, 1.0
        %v3326 = vadd.f32 %v2885, 1.0
        %v3327 = vadd.f32 %v2887, 1.0
        %v3328 = vadd.f32 %v2889, 1.0
        %v3329 = vadd.f32 %v2891, 1.0
        %v3330 = vadd.f32 %v2893, 1.0
        %v3331 = vadd.f32 %v2895, 1.0
        %v3332 = vadd.f32 %v2897, 1.0
        %v3333 = vadd.f32 %v2899, 1.0
        %v3334 = vadd.f32 %v2901, 1.0
        %v3335 = vadd.f32 %v2903, 1.0
        %v3336 = vadd.f32 %v2905, 1.0
        %v3337 = vadd.f32 %v2907, 1.0
        %v3338 = vadd.f32 %v2909, 1.0
        %v3339 = vadd.f32 %v2911, 1.0
        %v3340 = vadd.f32 %v2913, 1.0
        %v3341 = vadd.f32 %v2915, 1.0
        %v3342 = vadd.f32 %v2917, 1.0
        %v3343 = vadd.f32 %v2919, 1.0
        %v3344 = vadd.f32 %v2921, 1.0
        %v3345 = vadd.f32 %v2923, 1.0
        %v3346 = vadd.f32 %v2925, 1.0
        %v3347 = vadd.f32 %v2927, 1.0
        %v3348 = vadd.f32 %v2929, 1.0
        %v3349 = vadd.f32 %v2931, 1.0
        %v3350 = vadd.f32 %v2933, 1.0
        %v3351 = vadd.f32 %v2935, 1.0
        %v3352 = vadd.f32 %v2937, 1.0
        %v3353 = vadd.f32 %v2939, 1.0
        %v3354 = vadd.f32 %v2941, 1.0
        %v3355 = vadd.f32 %v2943, 1.0
        %v3356 = vadd.f32 %v2945, 1.0
        %v3357 = vadd.f32 %v2947, 1.0
        %v3358 = vadd.f32 %v2949, 1.0
        %v3359 = vadd.f32 %v2951, 1.0
        %v3360 = vadd.f32 %v2953, 1.0
        %v3361 = vadd.f32 %v2955, 1.0
        %v3362 = vadd.f32 %v2957, 1.0
        %v3363 = vadd.f32 %v2959, 1.0
        %v3364 = vadd.f32 %v2961, 1.0
        %v3365 = vadd.f32 %v2963, 1.0
        %v3366 = vadd.f32 %v2965, 1.0
        %v3367 = vadd.f32 %v2967, 1.0
        %v3368 = vadd.f32 %v2969, 1.0
        %v3369 = vadd.f32 %v2971, 1.0
        %v3370 = vadd.f32 %v2973, 1.0
        %v3371 = vadd.f32 %v2975, 1.0
        %v3372 = vadd.f32 %v2977, 1.0
        %v3373 = vadd.f32 %v2979, 1.0
        %v3374 = vadd.f32 %v2981, 1.0
        %v3375 = vadd.f32 %v2983, 1.0
        %v3376 = vadd.f32 %v2985, 1.0
        %v3377 = vadd.f32 %v2987, 1.0
        %v3378 = vadd.f32 %v2989, 1.0
        %v3379 = vadd.f32 %v2991, 1.0
        %v3380 = vadd.f32 %v2993, 1.0
        %v3381 = vadd.f32 %v2995, 1.0
        %v3382 = vadd.f32 %v2997, 1.0
        %v3383 = vadd.f32 %v2999, 1.0
        %v3384 = vadd.f32 %v3001, 1.0
        %v3385 = vadd.f32 %v3003, 1.0
        %v3386 = vadd.f32 %v3005, 1.0
        %v3387 = vadd.f32 %v3007, 1.0
        %v3388 = vadd.f32 %v3009, 1.0
        %v3389 = vadd.f32 %v3011, 1.0
        %v3390 = vadd.f32 %v3013, 1.0
        %v3391 = vadd.f32 %v3015, 1.0
        %v3392 = vadd.f32 %v3017, 1.0
        %v3393 = vadd.f32 %v3019, 1.0
        %v3394 = vadd.f32 %v3021, 1.0
        %v3395 = vadd.f32 %v3023, 1.0
        %v3396 = vadd.f32 %v3025, 1.0
        %v3397 = vadd.f32 %v3027, 1.0
        %v3398 = vadd.f32 %v3029, 1.0
        %v3399 = vadd.f32 %v3031, 1.0
        %v3400 = vadd.f32 %v3033, 1.0
        %v3401 = vadd.f32 %v3035, 1.0
        %v3402 = vadd.f32 %v3037, 1.0
        %v3403 = vadd.f32 %v3039, 1.0
        %v3404 = vadd.f32 %v3041, 1.0
        %v3405 = vadd.f32 %v3043, 1.0
        %v3406 = vadd.f32 %v3045, 1.0
        %v3407 = vadd.f32 %v3047, 1.0
        %v3408 = vadd.f32 %v3049, 1.0
        %v3409 = vadd.f32 %v3051, 1.0
        %v3410 = vadd.f32 %v3053, 1.0
        %v3411 = vadd.f32 %v3055, 1.0
        %v3412 = vadd.f32 %v3057, 1.0
        %v3413 = vadd.f32 %v3059, 1.0
        %v3414 = vadd.f32 %v3061, 1.0
        %v3415 = vadd.f32 %v3063, 1.0
        %v3416 = vadd.f32 %v3065, 1.0
        %v3417 = vadd.f32 %v3067, 1.0
        %v3418 = vadd.f32 %v3069, 1.0
        %v3419 = vadd.f32 %v3071, 1.0
        %v3420 = vadd.f32 %v3073, 1.0
        %v3421 = vadd.f32 %v3075, 1.0
        %v3422 = vadd.f32 %v3077, 1.0
        %v3423 = vadd.f32 %v3079, 1.0
        %v3424 = vadd.f32 %v3081, 1.0
        %v3425 = vadd.f32 %v3083, 1.0
        %v3426 = vadd.f32 %v3085, 1.0
        %v3427 = vadd.f32 %v3087, 1.0
        %v3428 = vadd.f32 %v3089, 1.0
        %v3429 = vadd.f32 %v3091, 1.0
        %v3430 = vadd.f32 %v3093, 1.0
        %v3431 = vadd.f32 %v3095, 1.0
        %v3432 = vadd.f32 %v3097, 1.0
        %v3433 = vadd.f32 %v3099, 1.0
        %v3434 = vadd.f32 %v3101, 1.0
        %v3435 = vadd.f32 %v3103, 1.0
        %v3436 = vadd.f32 %v3105, 1.0
        %v3437 = vadd.f32 %v3107, 1.0
        %v3438 = vadd.f32 %v3109, 1.0
        %v3439 = vadd.f32 %v3111, 1.0
        %v3440 = vadd.f32 %v3113, 1.0
        %v3441 = vadd.f32 %v3115, 1.0
        %v3442 = vadd.f32 %v3117, 1.0
        %v3443 = vadd.f32 %v3119, 1.0
        %v3444 = vadd.f32 %v3121, 1.0
        %v3445 = vadd.f32 %v3123, 1.0
        %v3446 = vadd.f32 %v3125, 1.0
        %v3447 = vadd.f32 %v3127, 1.0
        %v3448 = vrcp.pop %v3128
        %v3449 = vrcp.pop %v3129
        %v3450 = vrcp.pop %v3130
        %v3451 = vrcp.pop %v3131
        %v3452 = vrcp.pop %v3132
        %v3453 = vrcp.pop %v3133
        %v3454 = vrcp.pop %v3134
        %v3455 = vrcp.pop %v3135
        %v3456 = vrcp.pop %v3136
        %v3457 = vrcp.pop %v3137
        %v3458 = vrcp.pop %v3138
        %v3459 = vrcp.pop %v3139
        %v3460 = vrcp.pop %v3140
        %v3461 = vrcp.pop %v3141
        %v3462 = vrcp.pop %v3142
        %v3463 = vrcp.pop %v3143
        %v3464 = vrcp.pop %v3144
        %v3465 = vrcp.pop %v3145
        %v3466 = vrcp.pop %v3146
        %v3467 = vrcp.pop %v3147
        %v3468 = vrcp.pop %v3148
        %v3469 = vrcp.pop %v3149
        %v3470 = vrcp.pop %v3150
        %v3471 = vrcp.pop %v3151
        %v3472 = vrcp.pop %v3152
        %v3473 = vrcp.pop %v3153
        %v3474 = vrcp.pop %v3154
        %v3475 = vrcp.pop %v3155
        %v3476 = vrcp.pop %v3156
        %v3477 = vrcp.pop %v3157
        %v3478 = vrcp.pop %v3158
        %v3479 = vrcp.pop %v3159
        %v3480 = vrcp.pop %v3160
        %v3481 = vrcp.pop %v3161
        %v3482 = vrcp.pop %v3162
        %v3483 = vrcp.pop %v3163
        %v3484 = vrcp.pop %v3164
        %v3485 = vrcp.pop %v3165
        %v3486 = vrcp.pop %v3166
        %v3487 = vrcp.pop %v3167
        %v3488 = vrcp.pop %v3168
        %v3489 = vrcp.pop %v3169
        %v3490 = vrcp.pop %v3170
        %v3491 = vrcp.pop %v3171
        %v3492 = vrcp.pop %v3172
        %v3493 = vrcp.pop %v3173
        %v3494 = vrcp.pop %v3174
        %v3495 = vrcp.pop %v3175
        %v3496 = vrcp.pop %v3176
        %v3497 = vrcp.pop %v3177
        %v3498 = vrcp.pop %v3178
        %v3499 = vrcp.pop %v3179
        %v3500 = vrcp.pop %v3180
        %v3501 = vrcp.pop %v3181
        %v3502 = vrcp.pop %v3182
        %v3503 = vrcp.pop %v3183
        %v3504 = vrcp.pop %v3184
        %v3505 = vrcp.pop %v3185
        %v3506 = vrcp.pop %v3186
        %v3507 = vrcp.pop %v3187
        %v3508 = vrcp.pop %v3188
        %v3509 = vrcp.pop %v3189
        %v3510 = vrcp.pop %v3190
        %v3511 = vrcp.pop %v3191
        %v3512 = vrcp.pop %v3192
        %v3513 = vrcp.pop %v3193
        %v3514 = vrcp.pop %v3194
        %v3515 = vrcp.pop %v3195
        %v3516 = vrcp.pop %v3196
        %v3517 = vrcp.pop %v3197
        %v3518 = vrcp.pop %v3198
        %v3519 = vrcp.pop %v3199
        %v3520 = vrcp.pop %v3200
        %v3521 = vrcp.pop %v3201
        %v3522 = vrcp.pop %v3202
        %v3523 = vrcp.pop %v3203
        %v3524 = vrcp.pop %v3204
        %v3525 = vrcp.pop %v3205
        %v3526 = vrcp.pop %v3206
        %v3527 = vrcp.pop %v3207
        %v3528 = vrcp.pop %v3208
        %v3529 = vrcp.pop %v3209
        %v3530 = vrcp.pop %v3210
        %v3531 = vrcp.pop %v3211
        %v3532 = vrcp.pop %v3212
        %v3533 = vrcp.pop %v3213
        %v3534 = vrcp.pop %v3214
        %v3535 = vrcp.pop %v3215
        %v3536 = vrcp.pop %v3216
        %v3537 = vrcp.pop %v3217
        %v3538 = vrcp.pop %v3218
        %v3539 = vrcp.pop %v3219
        %v3540 = vrcp.pop %v3220
        %v3541 = vrcp.pop %v3221
        %v3542 = vrcp.pop %v3222
        %v3543 = vrcp.pop %v3223
        %v3544 = vrcp.pop %v3224
        %v3545 = vrcp.pop %v3225
        %v3546 = vrcp.pop %v3226
        %v3547 = vrcp.pop %v3227
        %v3548 = vrcp.pop %v3228
        %v3549 = vrcp.pop %v3229
        %v3550 = vrcp.pop %v3230
        %v3551 = vrcp.pop %v3231
        %v3552 = vrcp.pop %v3232
        %v3553 = vrcp.pop %v3233
        %v3554 = vrcp.pop %v3234
        %v3555 = vrcp.pop %v3235
        %v3556 = vrcp.pop %v3236
        %v3557 = vrcp.pop %v3237
        %v3558 = vrcp.pop %v3238
        %v3559 = vrcp.pop %v3239
        %v3560 = vrcp.pop %v3240
        %v3561 = vrcp.pop %v3241
        %v3562 = vrcp.pop %v3242
        %v3563 = vrcp.pop %v3243
        %v3564 = vrcp.pop %v3244
        %v3565 = vrcp.pop %v3245
        %v3566 = vrcp.pop %v3246
        %v3567 = vrcp.pop %v3247
        %v3568 = vrcp.pop %v3248
        %v3569 = vrcp.pop %v3249
        %v3570 = vrcp.pop %v3250
        %v3571 = vrcp.pop %v3251
        %v3572 = vrcp.pop %v3252
        %v3573 = vrcp.pop %v3253
        %v3574 = vrcp.pop %v3254
        %v3575 = vrcp.pop %v3255
        %v3576 = vrcp.pop %v3256
        %v3577 = vrcp.pop %v3257
        %v3578 = vrcp.pop %v3258
        %v3579 = vrcp.pop %v3259
        %v3580 = vrcp.pop %v3260
        %v3581 = vrcp.pop %v3261
        %v3582 = vrcp.pop %v3262
        %v3583 = vrcp.pop %v3263
        %v3584 = vrcp.pop %v3264
        %v3585 = vrcp.pop %v3265
        %v3586 = vrcp.pop %v3266
        %v3587 = vrcp.pop %v3267
        %v3588 = vrcp.pop %v3268
        %v3589 = vrcp.pop %v3269
        %v3590 = vrcp.pop %v3270
        %v3591 = vrcp.pop %v3271
        %v3592 = vrcp.pop %v3272
        %v3593 = vrcp.pop %v3273
        %v3594 = vrcp.pop %v3274
        %v3595 = vrcp.pop %v3275
        %v3596 = vrcp.pop %v3276
        %v3597 = vrcp.pop %v3277
        %v3598 = vrcp.pop %v3278
        %v3599 = vrcp.pop %v3279
        %v3600 = vrcp.pop %v3280
        %v3601 = vrcp.pop %v3281
        %v3602 = vrcp.pop %v3282
        %v3603 = vrcp.pop %v3283
        %v3604 = vrcp.pop %v3284
        %v3605 = vrcp.pop %v3285
        %v3606 = vrcp.pop %v3286
        %v3607 = vrcp.pop %v3287
        %v3608 = vrcp.pop %v3288
        %v3609 = vrcp.pop %v3289
        %v3610 = vrcp.pop %v3290
        %v3611 = vrcp.pop %v3291
        %v3612 = vrcp.pop %v3292
        %v3613 = vrcp.pop %v3293
        %v3614 = vrcp.pop %v3294
        %v3615 = vrcp.pop %v3295
        %v3616 = vrcp.pop %v3296
        %v3617 = vrcp.pop %v3297
        %v3618 = vrcp.pop %v3298
        %v3619 = vrcp.pop %v3299
        %v3620 = vrcp.pop %v3300
        %v3621 = vrcp.pop %v3301
        %v3622 = vrcp.pop %v3302
        %v3623 = vrcp.pop %v3303
        %v3624 = vrcp.pop %v3304
        %v3625 = vrcp.pop %v3305
        %v3626 = vrcp.pop %v3306
        %v3627 = vrcp.pop %v3307
        %v3628 = vrcp.pop %v3308
        %v3629 = vrcp.pop %v3309
        %v3630 = vrcp.pop %v3310
        %v3631 = vrcp.pop %v3311
        %v3632 = vrcp.pop %v3312
        %v3633 = vrcp.pop %v3313
        %v3634 = vrcp.pop %v3314
        %v3635 = vrcp.pop %v3315
        %v3636 = vrcp.pop %v3316
        %v3637 = vrcp.pop %v3317
        %v3638 = vrcp.pop %v3318
        %v3639 = vrcp.pop %v3319
        %v3640 = vrcp.pop %v3320
        %v3641 = vrcp.pop %v3321
        %v3642 = vrcp.pop %v3322
        %v3643 = vrcp.pop %v3323
        %v3644 = vrcp.pop %v3324
        %v3645 = vrcp.pop %v3325
        %v3646 = vrcp.pop %v3326
        %v3647 = vrcp.pop %v3327
        %v3648 = vrcp.pop %v3328
        %v3649 = vrcp.pop %v3329
        %v3650 = vrcp.pop %v3330
        %v3651 = vrcp.pop %v3331
        %v3652 = vrcp.pop %v3332
        %v3653 = vrcp.pop %v3333
        %v3654 = vrcp.pop %v3334
        %v3655 = vrcp.pop %v3335
        %v3656 = vrcp.pop %v3336
        %v3657 = vrcp.pop %v3337
        %v3658 = vrcp.pop %v3338
        %v3659 = vrcp.pop %v3339
        %v3660 = vrcp.pop %v3340
        %v3661 = vrcp.pop %v3341
        %v3662 = vrcp.pop %v3342
        %v3663 = vrcp.pop %v3343
        %v3664 = vrcp.pop %v3344
        %v3665 = vrcp.pop %v3345
        %v3666 = vrcp.pop %v3346
        %v3667 = vrcp.pop %v3347
        %v3668 = vrcp.pop %v3348
        %v3669 = vrcp.pop %v3349
        %v3670 = vrcp.pop %v3350
        %v3671 = vrcp.pop %v3351
        %v3672 = vrcp.pop %v3352
        %v3673 = vrcp.pop %v3353
        %v3674 = vrcp.pop %v3354
        %v3675 = vrcp.pop %v3355
        %v3676 = vrcp.pop %v3356
        %v3677 = vrcp.pop %v3357
        %v3678 = vrcp.pop %v3358
        %v3679 = vrcp.pop %v3359
        %v3680 = vrcp.pop %v3360
        %v3681 = vrcp.pop %v3361
        %v3682 = vrcp.pop %v3362
        %v3683 = vrcp.pop %v3363
        %v3684 = vrcp.pop %v3364
        %v3685 = vrcp.pop %v3365
        %v3686 = vrcp.pop %v3366
        %v3687 = vrcp.pop %v3367
        %v3688 = vrcp.pop %v3368
        %v3689 = vrcp.pop %v3369
        %v3690 = vrcp.pop %v3370
        %v3691 = vrcp.pop %v3371
        %v3692 = vrcp.pop %v3372
        %v3693 = vrcp.pop %v3373
        %v3694 = vrcp.pop %v3374
        %v3695 = vrcp.pop %v3375
        %v3696 = vrcp.pop %v3376
        %v3697 = vrcp.pop %v3377
        %v3698 = vrcp.pop %v3378
        %v3699 = vrcp.pop %v3379
        %v3700 = vrcp.pop %v3380
        %v3701 = vrcp.pop %v3381
        %v3702 = vrcp.pop %v3382
        %v3703 = vrcp.pop %v3383
        %v3704 = vrcp.pop %v3384
        %v3705 = vrcp.pop %v3385
        %v3706 = vrcp.pop %v3386
        %v3707 = vrcp.pop %v3387
        %v3708 = vrcp.pop %v3388
        %v3709 = vrcp.pop %v3389
        %v3710 = vrcp.pop %v3390
        %v3711 = vrcp.pop %v3391
        %v3712 = vrcp.pop %v3392
        %v3713 = vrcp.pop %v3393
        %v3714 = vrcp.pop %v3394
        %v3715 = vrcp.pop %v3395
        %v3716 = vrcp.pop %v3396
        %v3717 = vrcp.pop %v3397
        %v3718 = vrcp.pop %v3398
        %v3719 = vrcp.pop %v3399
        %v3720 = vrcp.pop %v3400
        %v3721 = vrcp.pop %v3401
        %v3722 = vrcp.pop %v3402
        %v3723 = vrcp.pop %v3403
        %v3724 = vrcp.pop %v3404
        %v3725 = vrcp.pop %v3405
        %v3726 = vrcp.pop %v3406
        %v3727 = vrcp.pop %v3407
        %v3728 = vrcp.pop %v3408
        %v3729 = vrcp.pop %v3409
        %v3730 = vrcp.pop %v3410
        %v3731 = vrcp.pop %v3411
        %v3732 = vrcp.pop %v3412
        %v3733 = vrcp.pop %v3413
        %v3734 = vrcp.pop %v3414
        %v3735 = vrcp.pop %v3415
        %v3736 = vrcp.pop %v3416
        %v3737 = vrcp.pop %v3417
        %v3738 = vrcp.pop %v3418
        %v3739 = vrcp.pop %v3419
        %v3740 = vrcp.pop %v3420
        %v3741 = vrcp.pop %v3421
        %v3742 = vrcp.pop %v3422
        %v3743 = vrcp.pop %v3423
        %v3744 = vrcp.pop %v3424
        %v3745 = vrcp.pop %v3425
        %v3746 = vrcp.pop %v3426
        %v3747 = vrcp.pop %v3427
        %v3748 = vrcp.pop %v3428
        %v3749 = vrcp.pop %v3429
        %v3750 = vrcp.pop %v3430
        %v3751 = vrcp.pop %v3431
        %v3752 = vrcp.pop %v3432
        %v3753 = vrcp.pop %v3433
        %v3754 = vrcp.pop %v3434
        %v3755 = vrcp.pop %v3435
        %v3756 = vrcp.pop %v3436
        %v3757 = vrcp.pop %v3437
        %v3758 = vrcp.pop %v3438
        %v3759 = vrcp.pop %v3439
        %v3760 = vrcp.pop %v3440
        %v3761 = vrcp.pop %v3441
        %v3762 = vrcp.pop %v3442
        %v3763 = vrcp.pop %v3443
        %v3764 = vrcp.pop %v3444
        %v3765 = vrcp.pop %v3445
        %v3766 = vrcp.pop %v3446
        %v3767 = vrcp.pop %v3447
        %v3768 = vmul.f32 %v1238, %v3448
        %v3769 = vmul.f32 %v1240, %v3449
        %v3770 = vmul.f32 %v1431, %v3450
        %v3771 = vmul.f32 %v1433, %v3451
        %v3772 = vmul.f32 %v1624, %v3452
        %v3773 = vmul.f32 %v1626, %v3453
        %v3774 = vmul.f32 %v1817, %v3454
        %v3775 = vmul.f32 %v1819, %v3455
        %v3776 = vmul.f32 %v2010, %v3456
        %v3777 = vmul.f32 %v2012, %v3457
        %v3778 = vmul.f32 %v1242, %v3458
        %v3779 = vmul.f32 %v1244, %v3459
        %v3780 = vmul.f32 %v1435, %v3460
        %v3781 = vmul.f32 %v1437, %v3461
        %v3782 = vmul.f32 %v1628, %v3462
        %v3783 = vmul.f32 %v1630, %v3463
        %v3784 = vmul.f32 %v1821, %v3464
        %v3785 = vmul.f32 %v1823, %v3465
        %v3786 = vmul.f32 %v2014, %v3466
        %v3787 = vmul.f32 %v2016, %v3467
        %v3788 = vmul.f32 %v1248, %v3468
        %v3789 = vmul.f32 %v1250, %v3469
        %v3790 = vmul.f32 %v1441, %v3470
        %v3791 = vmul.f32 %v1443, %v3471
        %v3792 = vmul.f32 %v1634, %v3472
        %v3793 = vmul.f32 %v1636, %v3473
        %v3794 = vmul.f32 %v1827, %v3474
        %v3795 = vmul.f32 %v1829, %v3475
        %v3796 = vmul.f32 %v2020, %v3476
        %v3797 = vmul.f32 %v2022, %v3477
        %v3798 = vmul.f32 %v1252, %v3478
        %v3799 = vmul.f32 %v1254, %v3479
        %v3800 = vmul.f32 %v1445, %v3480
        %v3801 = vmul.f32 %v1447, %v3481
        %v3802 = vmul.f32 %v1638, %v3482
        %v3803 = vmul.f32 %v1640, %v3483
        %v3804 = vmul.f32 %v1831, %v3484
        %v3805 = vmul.f32 %v1833, %v3485
        %v3806 = vmul.f32 %v2024, %v3486
        %v3807 = vmul.f32 %v2026, %v3487
        %v3808 = vmul.f32 %v1258, %v3488
        %v3809 = vmul.f32 %v1260, %v3489
        %v3810 = vmul.f32 %v1451, %v3490
        %v3811 = vmul.f32 %v1453, %v3491
        %v3812 = vmul.f32 %v1644, %v3492
        %v3813 = vmul.f32 %v1646, %v3493
        %v3814 = vmul.f32 %v1837, %v3494
        %v3815 = vmul.f32 %v1839, %v3495
        %v3816 = vmul.f32 %v2030, %v3496
        %v3817 = vmul.f32 %v2032, %v3497
        %v3818 = vmul.f32 %v1262, %v3498
        %v3819 = vmul.f32 %v1264, %v3499
        %v3820 = vmul.f32 %v1455, %v3500
        %v3821 = vmul.f32 %v1457, %v3501
        %v3822 = vmul.f32 %v1648, %v3502
        %v3823 = vmul.f32 %v1650, %v3503
        %v3824 = vmul.f32 %v1841, %v3504
        %v3825 = vmul.f32 %v1843, %v3505
        %v3826 = vmul.f32 %v2034, %v3506
        %v3827 = vmul.f32 %v2036, %v3507
        %v3828 = vmul.f32 %v1268, %v3508
        %v3829 = vmul.f32 %v1270, %v3509
        %v3830 = vmul.f32 %v1461, %v3510
        %v3831 = vmul.f32 %v1463, %v3511
        %v3832 = vmul.f32 %v1654, %v3512
        %v3833 = vmul.f32 %v1656, %v3513
        %v3834 = vmul.f32 %v1847, %v3514
        %v3835 = vmul.f32 %v1849, %v3515
        %v3836 = vmul.f32 %v2040, %v3516
        %v3837 = vmul.f32 %v2042, %v3517
        %v3838 = vmul.f32 %v1272, %v3518
        %v3839 = vmul.f32 %v1274, %v3519
        %v3840 = vmul.f32 %v1465, %v3520
        %v3841 = vmul.f32 %v1467, %v3521
        %v3842 = vmul.f32 %v1658, %v3522
        %v3843 = vmul.f32 %v1660, %v3523
        %v3844 = vmul.f32 %v1851, %v3524
        %v3845 = vmul.f32 %v1853, %v3525
        %v3846 = vmul.f32 %v2044, %v3526
        %v3847 = vmul.f32 %v2046, %v3527
        %v3848 = vmul.f32 %v1278, %v3528
        %v3849 = vmul.f32 %v1280, %v3529
        %v3850 = vmul.f32 %v1471, %v3530
        %v3851 = vmul.f32 %v1473, %v3531
        %v3852 = vmul.f32 %v1664, %v3532
        %v3853 = vmul.f32 %v1666, %v3533
        %v3854 = vmul.f32 %v1857, %v3534
        %v3855 = vmul.f32 %v1859, %v3535
        %v3856 = vmul.f32 %v2050, %v3536
        %v3857 = vmul.f32 %v2052, %v3537
        %v3858 = vmul.f32 %v1282, %v3538
        %v3859 = vmul.f32 %v1284, %v3539
        %v3860 = vmul.f32 %v1475, %v3540
        %v3861 = vmul.f32 %v1477, %v3541
        %v3862 = vmul.f32 %v1668, %v3542
        %v3863 = vmul.f32 %v1670, %v3543
        %v3864 = vmul.f32 %v1861, %v3544
        %v3865 = vmul.f32 %v1863, %v3545
        %v3866 = vmul.f32 %v2054, %v3546
        %v3867 = vmul.f32 %v2056, %v3547
        %v3868 = vmul.f32 %v1288, %v3548
        %v3869 = vmul.f32 %v1290, %v3549
        %v3870 = vmul.f32 %v1481, %v3550
        %v3871 = vmul.f32 %v1483, %v3551
        %v3872 = vmul.f32 %v1674, %v3552
        %v3873 = vmul.f32 %v1676, %v3553
        %v3874 = vmul.f32 %v1867, %v3554
        %v3875 = vmul.f32 %v1869, %v3555
        %v3876 = vmul.f32 %v2060, %v3556
        %v3877 = vmul.f32 %v2062, %v3557
        %v3878 = vmul.f32 %v1292, %v3558
        %v3879 = vmul.f32 %v1294, %v3559
        %v3880 = vmul.f32 %v1485, %v3560
        %v3881 = vmul.f32 %v1487, %v3561
        %v3882 = vmul.f32 %v1678, %v3562
        %v3883 = vmul.f32 %v1680, %v3563
        %v3884 = vmul.f32 %v1871, %v3564
        %v3885 = vmul.f32 %v1873, %v3565
        %v3886 = vmul.f32 %v2064, %v3566
        %v3887 = vmul.f32 %v2066, %v3567
        %v3888 = vmul.f32 %v1298, %v3568
        %v3889 = vmul.f32 %v1300, %v3569
        %v3890 = vmul.f32 %v1491, %v3570
        %v3891 = vmul.f32 %v1493, %v3571
        %v3892 = vmul.f32 %v1684, %v3572
        %v3893 = vmul.f32 %v1686, %v3573
        %v3894 = vmul.f32 %v1877, %v3574
        %v3895 = vmul.f32 %v1879, %v3575
        %v3896 = vmul.f32 %v2070, %v3576
        %v3897 = vmul.f32 %v2072, %v3577
        %v3898 = vmul.f32 %v1302, %v3578
        %v3899 = vmul.f32 %v1304, %v3579
        %v3900 = vmul.f32 %v1495, %v3580
        %v3901 = vmul.f32 %v1497, %v3581
        %v3902 = vmul.f32 %v1688, %v3582
        %v3903 = vmul.f32 %v1690, %v3583
        %v3904 = vmul.f32 %v1881, %v3584
        %v3905 = vmul.f32 %v1883, %v3585
        %v3906 = vmul.f32 %v2074, %v3586
        %v3907 = vmul.f32 %v2076, %v3587
        %v3908 = vmul.f32 %v1308, %v3588
        %v3909 = vmul.f32 %v1310, %v3589
        %v3910 = vmul.f32 %v1501, %v3590
        %v3911 = vmul.f32 %v1503, %v3591
        %v3912 = vmul.f32 %v1694, %v3592
        %v3913 = vmul.f32 %v1696, %v3593
        %v3914 = vmul.f32 %v1887, %v3594
        %v3915 = vmul.f32 %v1889, %v3595
        %v3916 = vmul.f32 %v2080, %v3596
        %v3917 = vmul.f32 %v2082, %v3597
        %v3918 = vmul.f32 %v1312, %v3598
        %v3919 = vmul.f32 %v1314, %v3599
        %v3920 = vmul.f32 %v1505, %v3600
        %v3921 = vmul.f32 %v1507, %v3601
        %v3922 = vmul.f32 %v1698, %v3602
        %v3923 = vmul.f32 %v1700, %v3603
        %v3924 = vmul.f32 %v1891, %v3604
        %v3925 = vmul.f32 %v1893, %v3605
        %v3926 = vmul.f32 %v2084, %v3606
        %v3927 = vmul.f32 %v2086, %v3607
        %v3928 = vmul.f32 %v1318, %v3608
        %v3929 = vmul.f32 %v1320, %v3609
        %v3930 = vmul.f32 %v1511, %v3610
        %v3931 = vmul.f32 %v1513, %v3611
        %v3932 = vmul.f32 %v1704, %v3612
        %v3933 = vmul.f32 %v1706, %v3613
        %v3934 = vmul.f32 %v1897, %v3614
        %v3935 = vmul.f32 %v1899, %v3615
        %v3936 = vmul.f32 %v2090, %v3616
        %v3937 = vmul.f32 %v2092, %v3617
        %v3938 = vmul.f32 %v1322, %v3618
        %v3939 = vmul.f32 %v1324, %v3619
        %v3940 = vmul.f32 %v1515, %v3620
        %v3941 = vmul.f32 %v1517, %v3621
        %v3942 = vmul.f32 %v1708, %v3622
        %v3943 = vmul.f32 %v1710, %v3623
        %v3944 = vmul.f32 %v1901, %v3624
        %v3945 = vmul.f32 %v1903, %v3625
        %v3946 = vmul.f32 %v2094, %v3626
        %v3947 = vmul.f32 %v2096, %v3627
        %v3948 = vmul.f32 %v1328, %v3628
        %v3949 = vmul.f32 %v1330, %v3629
        %v3950 = vmul.f32 %v1521, %v3630
        %v3951 = vmul.f32 %v1523, %v3631
        %v3952 = vmul.f32 %v1714, %v3632
        %v3953 = vmul.f32 %v1716, %v3633
        %v3954 = vmul.f32 %v1907, %v3634
        %v3955 = vmul.f32 %v1909, %v3635
        %v3956 = vmul.f32 %v2100, %v3636
        %v3957 = vmul.f32 %v2102, %v3637
        %v3958 = vmul.f32 %v1332, %v3638
        %v3959 = vmul.f32 %v1334, %v3639
        %v3960 = vmul.f32 %v1525, %v3640
        %v3961 = vmul.f32 %v1527, %v3641
        %v3962 = vmul.f32 %v1718, %v3642
        %v3963 = vmul.f32 %v1720, %v3643
        %v3964 = vmul.f32 %v1911, %v3644
        %v3965 = vmul.f32 %v1913, %v3645
        %v3966 = vmul.f32 %v2104, %v3646
        %v3967 = vmul.f32 %v2106, %v3647
        %v3968 = vmul.f32 %v1338, %v3648
        %v3969 = vmul.f32 %v1340, %v3649
        %v3970 = vmul.f32 %v1531, %v3650
        %v3971 = vmul.f32 %v1533, %v3651
        %v3972 = vmul.f32 %v1724, %v3652
        %v3973 = vmul.f32 %v1726, %v3653
        %v3974 = vmul.f32 %v1917, %v3654
        %v3975 = vmul.f32 %v1919, %v3655
        %v3976 = vmul.f32 %v2110, %v3656
        %v3977 = vmul.f32 %v2112, %v3657
        %v3978 = vmul.f32 %v1342, %v3658
        %v3979 = vmul.f32 %v1344, %v3659
        %v3980 = vmul.f32 %v1535, %v3660
        %v3981 = vmul.f32 %v1537, %v3661
        %v3982 = vmul.f32 %v1728, %v3662
        %v3983 = vmul.f32 %v1730, %v3663
        %v3984 = vmul.f32 %v1921, %v3664
        %v3985 = vmul.f32 %v1923, %v3665
        %v3986 = vmul.f32 %v2114, %v3666
        %v3987 = vmul.f32 %v2116, %v3667
        %v3988 = vmul.f32 %v1348, %v3668
        %v3989 = vmul.f32 %v1350, %v3669
        %v3990 = vmul.f32 %v1541, %v3670
        %v3991 = vmul.f32 %v1543, %v3671
        %v3992 = vmul.f32 %v1734, %v3672
        %v3993 = vmul.f32 %v1736, %v3673
        %v3994 = vmul.f32 %v1927, %v3674
        %v3995 = vmul.f32 %v1929, %v3675
        %v3996 = vmul.f32 %v2120, %v3676
        %v3997 = vmul.f32 %v2122, %v3677
        %v3998 = vmul.f32 %v1352, %v3678
        %v3999 = vmul.f32 %v1354, %v3679
        %v4000 = vmul.f32 %v1545, %v3680
        %v4001 = vmul.f32 %v1547, %v3681
        %v4002 = vmul.f32 %v1738, %v3682
        %v4003 = vmul.f32 %v1740, %v3683
        %v4004 = vmul.f32 %v1931, %v3684
        %v4005 = vmul.f32 %v1933, %v3685
        %v4006 = vmul.f32 %v2124, %v3686
        %v4007 = vmul.f32 %v2126, %v3687
        %v4008 = vmul.f32 %v1358, %v3688
        %v4009 = vmul.f32 %v1360, %v3689
        %v4010 = vmul.f32 %v1551, %v3690
        %v4011 = vmul.f32 %v1553, %v3691
        %v4012 = vmul.f32 %v1744, %v3692
        %v4013 = vmul.f32 %v1746, %v3693
        %v4014 = vmul.f32 %v1937, %v3694
        %v4015 = vmul.f32 %v1939, %v3695
        %v4016 = vmul.f32 %v2130, %v3696
        %v4017 = vmul.f32 %v2132, %v3697
        %v4018 = vmul.f32 %v1362, %v3698
        %v4019 = vmul.f32 %v1364, %v3699
        %v4020 = vmul.f32 %v1555, %v3700
        %v4021 = vmul.f32 %v1557, %v3701
        %v4022 = vmul.f32 %v1748, %v3702
        %v4023 = vmul.f32 %v1750, %v3703
        %v4024 = vmul.f32 %v1941, %v3704
        %v4025 = vmul.f32 %v1943, %v3705
        %v4026 = vmul.f32 %v2134, %v3706
        %v4027 = vmul.f32 %v2136, %v3707
        %v4028 = vmul.f32 %v1368, %v3708
        %v4029 = vmul.f32 %v1370, %v3709
        %v4030 = vmul.f32 %v1561, %v3710
        %v4031 = vmul.f32 %v1563, %v3711
        %v4032 = vmul.f32 %v1754, %v3712
        %v4033 = vmul.f32 %v1756, %v3713
        %v4034 = vmul.f32 %v1947, %v3714
        %v4035 = vmul.f32 %v1949, %v3715
        %v4036 = vmul.f32 %v2140, %v3716
        %v4037 = vmul.f32 %v2142, %v3717
        %v4038 = vmul.f32 %v1372, %v3718
        %v4039 = vmul.f32 %v1374, %v3719
        %v4040 = vmul.f32 %v1565, %v3720
        %v4041 = vmul.f32 %v1567, %v3721
        %v4042 = vmul.f32 %v1758, %v3722
        %v4043 = vmul.f32 %v1760, %v3723
        %v4044 = vmul.f32 %v1951, %v3724
        %v4045 = vmul.f32 %v1953, %v3725
        %v4046 = vmul.f32 %v2144, %v3726
        %v4047 = vmul.f32 %v2146, %v3727
        %v4048 = vmul.f32 %v1378, %v3728
        %v4049 = vmul.f32 %v1380, %v3729
        %v4050 = vmul.f32 %v1571, %v3730
        %v4051 = vmul.f32 %v1573, %v3731
        %v4052 = vmul.f32 %v1764, %v3732
        %v4053 = vmul.f32 %v1766, %v3733
        %v4054 = vmul.f32 %v1957, %v3734
        %v4055 = vmul.f32 %v1959, %v3735
        %v4056 = vmul.f32 %v2150, %v3736
        %v4057 = vmul.f32 %v2152, %v3737
        %v4058 = vmul.f32 %v1382, %v3738
        %v4059 = vmul.f32 %v1384, %v3739
        %v4060 = vmul.f32 %v1575, %v3740
        %v4061 = vmul.f32 %v1577, %v3741
        %v4062 = vmul.f32 %v1768, %v3742
        %v4063 = vmul.f32 %v1770, %v3743
        %v4064 = vmul.f32 %v1961, %v3744
        %v4065 = vmul.f32 %v1963, %v3745
        %v4066 = vmul.f32 %v2154, %v3746
        %v4067 = vmul.f32 %v2156, %v3747
        %v4068 = vmul.f32 %v1388, %v3748
        %v4069 = vmul.f32 %v1390, %v3749
        %v4070 = vmul.f32 %v1581, %v3750
        %v4071 = vmul.f32 %v1583, %v3751
        %v4072 = vmul.f32 %v1774, %v3752
        %v4073 = vmul.f32 %v1776, %v3753
        %v4074 = vmul.f32 %v1967, %v3754
        %v4075 = vmul.f32 %v1969, %v3755
        %v4076 = vmul.f32 %v2160, %v3756
        %v4077 = vmul.f32 %v2162, %v3757
        %v4078 = vmul.f32 %v1392, %v3758
        %v4079 = vmul.f32 %v1394, %v3759
        %v4080 = vmul.f32 %v1585, %v3760
        %v4081 = vmul.f32 %v1587, %v3761
        %v4082 = vmul.f32 %v1778, %v3762
        %v4083 = vmul.f32 %v1780, %v3763
        %v4084 = vmul.f32 %v1971, %v3764
        %v4085 = vmul.f32 %v1973, %v3765
        %v4086 = vmul.f32 %v2164, %v3766
        %v4087 = vmul.f32 %v2166, %v3767
        %v4088 = vld [vmem:[#allocation2] sm:$0xff]
        %v4089 = vld [vmem:[#allocation2 + $0x8] sm:$0xff]
        %v4090 = vld [vmem:[#allocation2 + $0x10] sm:$0xff]
        %v4091 = vld [vmem:[#allocation2 + $0x18] sm:$0xff]
        %v4092 = vld [vmem:[#allocation2 + $0x20] sm:$0xff]
        %v4093 = vld [vmem:[#allocation2 + $0x28] sm:$0xff]
        %v4094 = vld [vmem:[#allocation2 + $0x30] sm:$0xff]
        %v4095 = vld [vmem:[#allocation2 + $0x38] sm:$0xff]
        %v4096 = vld [vmem:[#allocation2 + $0x40] sm:$0xff]
        %v4097 = vld [vmem:[#allocation2 + $0x48] sm:$0xff]
        %v4098 = vadd.f32 %v3768, %v3778
        %v4099 = vadd.f32 %v4098, %v3788
        %v4100 = vadd.f32 %v4099, %v3798
        %v4101 = vadd.f32 %v4100, %v3808
        %v4102 = vadd.f32 %v4101, %v3818
        %v4103 = vadd.f32 %v4102, %v3828
        %v4104 = vadd.f32 %v4103, %v3838
        %v4105 = vadd.f32 %v4104, %v3848
        %v4106 = vadd.f32 %v4105, %v3858
        %v4107 = vadd.f32 %v4106, %v3868
        %v4108 = vadd.f32 %v4107, %v3878
        %v4109 = vadd.f32 %v4108, %v3888
        %v4110 = vadd.f32 %v4109, %v3898
        %v4111 = vadd.f32 %v4110, %v3908
        %v4112 = vadd.f32 %v4111, %v3918
        %v4113 = vadd.f32 %v4112, %v3928
        %v4114 = vadd.f32 %v4113, %v3938
        %v4115 = vadd.f32 %v4114, %v3948
        %v4116 = vadd.f32 %v4115, %v3958
        %v4117 = vadd.f32 %v4116, %v3968
        %v4118 = vadd.f32 %v4117, %v3978
        %v4119 = vadd.f32 %v4118, %v3988
        %v4120 = vadd.f32 %v4119, %v3998
        %v4121 = vadd.f32 %v4120, %v4008
        %v4122 = vadd.f32 %v4121, %v4018
        %v4123 = vadd.f32 %v4122, %v4028
        %v4124 = vadd.f32 %v4123, %v4038
        %v4125 = vadd.f32 %v4124, %v4048
        %v4126 = vadd.f32 %v4125, %v4058
        %v4127 = vadd.f32 %v4126, %v4068
        %v4128 = vadd.f32 %v4127, %v4078
        %v4129 = vadd.f32 %v3769, %v3779
        %v4130 = vadd.f32 %v4129, %v3789
        %v4131 = vadd.f32 %v4130, %v3799
        %v4132 = vadd.f32 %v4131, %v3809
        %v4133 = vadd.f32 %v4132, %v3819
        %v4134 = vadd.f32 %v4133, %v3829
        %v4135 = vadd.f32 %v4134, %v3839
        %v4136 = vadd.f32 %v4135, %v3849
        %v4137 = vadd.f32 %v4136, %v3859
        %v4138 = vadd.f32 %v4137, %v3869
        %v4139 = vadd.f32 %v4138, %v3879
        %v4140 = vadd.f32 %v4139, %v3889
        %v4141 = vadd.f32 %v4140, %v3899
        %v4142 = vadd.f32 %v4141, %v3909
        %v4143 = vadd.f32 %v4142, %v3919
        %v4144 = vadd.f32 %v4143, %v3929
        %v4145 = vadd.f32 %v4144, %v3939
        %v4146 = vadd.f32 %v4145, %v3949
        %v4147 = vadd.f32 %v4146, %v3959
        %v4148 = vadd.f32 %v4147, %v3969
        %v4149 = vadd.f32 %v4148, %v3979
        %v4150 = vadd.f32 %v4149, %v3989
        %v4151 = vadd.f32 %v4150, %v3999
        %v4152 = vadd.f32 %v4151, %v4009
        %v4153 = vadd.f32 %v4152, %v4019
        %v4154 = vadd.f32 %v4153, %v4029
        %v4155 = vadd.f32 %v4154, %v4039
        %v4156 = vadd.f32 %v4155, %v4049
        %v4157 = vadd.f32 %v4156, %v4059
        %v4158 = vadd.f32 %v4157, %v4069
        %v4159 = vadd.f32 %v4158, %v4079
        %v4160 = vadd.f32 %v3770, %v3780
        %v4161 = vadd.f32 %v4160, %v3790
        %v4162 = vadd.f32 %v4161, %v3800
        %v4163 = vadd.f32 %v4162, %v3810
        %v4164 = vadd.f32 %v4163, %v3820
        %v4165 = vadd.f32 %v4164, %v3830
        %v4166 = vadd.f32 %v4165, %v3840
        %v4167 = vadd.f32 %v4166, %v3850
        %v4168 = vadd.f32 %v4167, %v3860
        %v4169 = vadd.f32 %v4168, %v3870
        %v4170 = vadd.f32 %v4169, %v3880
        %v4171 = vadd.f32 %v4170, %v3890
        %v4172 = vadd.f32 %v4171, %v3900
        %v4173 = vadd.f32 %v4172, %v3910
        %v4174 = vadd.f32 %v4173, %v3920
        %v4175 = vadd.f32 %v4174, %v3930
        %v4176 = vadd.f32 %v4175, %v3940
        %v4177 = vadd.f32 %v4176, %v3950
        %v4178 = vadd.f32 %v4177, %v3960
        %v4179 = vadd.f32 %v4178, %v3970
        %v4180 = vadd.f32 %v4179, %v3980
        %v4181 = vadd.f32 %v4180, %v3990
        %v4182 = vadd.f32 %v4181, %v4000
        %v4183 = vadd.f32 %v4182, %v4010
        %v4184 = vadd.f32 %v4183, %v4020
        %v4185 = vadd.f32 %v4184, %v4030
        %v4186 = vadd.f32 %v4185, %v4040
        %v4187 = vadd.f32 %v4186, %v4050
        %v4188 = vadd.f32 %v4187, %v4060
        %v4189 = vadd.f32 %v4188, %v4070
        %v4190 = vadd.f32 %v4189, %v4080
        %v4191 = vadd.f32 %v3771, %v3781
        %v4192 = vadd.f32 %v4191, %v3791
        %v4193 = vadd.f32 %v4192, %v3801
        %v4194 = vadd.f32 %v4193, %v3811
        %v4195 = vadd.f32 %v4194, %v3821
        %v4196 = vadd.f32 %v4195, %v3831
        %v4197 = vadd.f32 %v4196, %v3841
        %v4198 = vadd.f32 %v4197, %v3851
        %v4199 = vadd.f32 %v4198, %v3861
        %v4200 = vadd.f32 %v4199, %v3871
        %v4201 = vadd.f32 %v4200, %v3881
        %v4202 = vadd.f32 %v4201, %v3891
        %v4203 = vadd.f32 %v4202, %v3901
        %v4204 = vadd.f32 %v4203, %v3911
        %v4205 = vadd.f32 %v4204, %v3921
        %v4206 = vadd.f32 %v4205, %v3931
        %v4207 = vadd.f32 %v4206, %v3941
        %v4208 = vadd.f32 %v4207, %v3951
        %v4209 = vadd.f32 %v4208, %v3961
        %v4210 = vadd.f32 %v4209, %v3971
        %v4211 = vadd.f32 %v4210, %v3981
        %v4212 = vadd.f32 %v4211, %v3991
        %v4213 = vadd.f32 %v4212, %v4001
        %v4214 = vadd.f32 %v4213, %v4011
        %v4215 = vadd.f32 %v4214, %v4021
        %v4216 = vadd.f32 %v4215, %v4031
        %v4217 = vadd.f32 %v4216, %v4041
        %v4218 = vadd.f32 %v4217, %v4051
        %v4219 = vadd.f32 %v4218, %v4061
        %v4220 = vadd.f32 %v4219, %v4071
        %v4221 = vadd.f32 %v4220, %v4081
        %v4222 = vadd.f32 %v3772, %v3782
        %v4223 = vadd.f32 %v4222, %v3792
        %v4224 = vadd.f32 %v4223, %v3802
        %v4225 = vadd.f32 %v4224, %v3812
        %v4226 = vadd.f32 %v4225, %v3822
        %v4227 = vadd.f32 %v4226, %v3832
        %v4228 = vadd.f32 %v4227, %v3842
        %v4229 = vadd.f32 %v4228, %v3852
        %v4230 = vadd.f32 %v4229, %v3862
        %v4231 = vadd.f32 %v4230, %v3872
        %v4232 = vadd.f32 %v4231, %v3882
        %v4233 = vadd.f32 %v4232, %v3892
        %v4234 = vadd.f32 %v4233, %v3902
        %v4235 = vadd.f32 %v4234, %v3912
        %v4236 = vadd.f32 %v4235, %v3922
        %v4237 = vadd.f32 %v4236, %v3932
        %v4238 = vadd.f32 %v4237, %v3942
        %v4239 = vadd.f32 %v4238, %v3952
        %v4240 = vadd.f32 %v4239, %v3962
        %v4241 = vadd.f32 %v4240, %v3972
        %v4242 = vadd.f32 %v4241, %v3982
        %v4243 = vadd.f32 %v4242, %v3992
        %v4244 = vadd.f32 %v4243, %v4002
        %v4245 = vadd.f32 %v4244, %v4012
        %v4246 = vadd.f32 %v4245, %v4022
        %v4247 = vadd.f32 %v4246, %v4032
        %v4248 = vadd.f32 %v4247, %v4042
        %v4249 = vadd.f32 %v4248, %v4052
        %v4250 = vadd.f32 %v4249, %v4062
        %v4251 = vadd.f32 %v4250, %v4072
        %v4252 = vadd.f32 %v4251, %v4082
        %v4253 = vadd.f32 %v3773, %v3783
        %v4254 = vadd.f32 %v4253, %v3793
        %v4255 = vadd.f32 %v4254, %v3803
        %v4256 = vadd.f32 %v4255, %v3813
        %v4257 = vadd.f32 %v4256, %v3823
        %v4258 = vadd.f32 %v4257, %v3833
        %v4259 = vadd.f32 %v4258, %v3843
        %v4260 = vadd.f32 %v4259, %v3853
        %v4261 = vadd.f32 %v4260, %v3863
        %v4262 = vadd.f32 %v4261, %v3873
        %v4263 = vadd.f32 %v4262, %v3883
        %v4264 = vadd.f32 %v4263, %v3893
        %v4265 = vadd.f32 %v4264, %v3903
        %v4266 = vadd.f32 %v4265, %v3913
        %v4267 = vadd.f32 %v4266, %v3923
        %v4268 = vadd.f32 %v4267, %v3933
        %v4269 = vadd.f32 %v4268, %v3943
        %v4270 = vadd.f32 %v4269, %v3953
        %v4271 = vadd.f32 %v4270, %v3963
        %v4272 = vadd.f32 %v4271, %v3973
        %v4273 = vadd.f32 %v4272, %v3983
        %v4274 = vadd.f32 %v4273, %v3993
        %v4275 = vadd.f32 %v4274, %v4003
        %v4276 = vadd.f32 %v4275, %v4013
        %v4277 = vadd.f32 %v4276, %v4023
        %v4278 = vadd.f32 %v4277, %v4033
        %v4279 = vadd.f32 %v4278, %v4043
        %v4280 = vadd.f32 %v4279, %v4053
        %v4281 = vadd.f32 %v4280, %v4063
        %v4282 = vadd.f32 %v4281, %v4073
        %v4283 = vadd.f32 %v4282, %v4083
        %v4284 = vadd.f32 %v3774, %v3784
        %v4285 = vadd.f32 %v4284, %v3794
        %v4286 = vadd.f32 %v4285, %v3804
        %v4287 = vadd.f32 %v4286, %v3814
        %v4288 = vadd.f32 %v4287, %v3824
        %v4289 = vadd.f32 %v4288, %v3834
        %v4290 = vadd.f32 %v4289, %v3844
        %v4291 = vadd.f32 %v4290, %v3854
        %v4292 = vadd.f32 %v4291, %v3864
        %v4293 = vadd.f32 %v4292, %v3874
        %v4294 = vadd.f32 %v4293, %v3884
        %v4295 = vadd.f32 %v4294, %v3894
        %v4296 = vadd.f32 %v4295, %v3904
        %v4297 = vadd.f32 %v4296, %v3914
        %v4298 = vadd.f32 %v4297, %v3924
        %v4299 = vadd.f32 %v4298, %v3934
        %v4300 = vadd.f32 %v4299, %v3944
        %v4301 = vadd.f32 %v4300, %v3954
        %v4302 = vadd.f32 %v4301, %v3964
        %v4303 = vadd.f32 %v4302, %v3974
        %v4304 = vadd.f32 %v4303, %v3984
        %v4305 = vadd.f32 %v4304, %v3994
        %v4306 = vadd.f32 %v4305, %v4004
        %v4307 = vadd.f32 %v4306, %v4014
        %v4308 = vadd.f32 %v4307, %v4024
        %v4309 = vadd.f32 %v4308, %v4034
        %v4310 = vadd.f32 %v4309, %v4044
        %v4311 = vadd.f32 %v4310, %v4054
        %v4312 = vadd.f32 %v4311, %v4064
        %v4313 = vadd.f32 %v4312, %v4074
        %v4314 = vadd.f32 %v4313, %v4084
        %v4315 = vadd.f32 %v3775, %v3785
        %v4316 = vadd.f32 %v4315, %v3795
        %v4317 = vadd.f32 %v4316, %v3805
        %v4318 = vadd.f32 %v4317, %v3815
        %v4319 = vadd.f32 %v4318, %v3825
        %v4320 = vadd.f32 %v4319, %v3835
        %v4321 = vadd.f32 %v4320, %v3845
        %v4322 = vadd.f32 %v4321, %v3855
        %v4323 = vadd.f32 %v4322, %v3865
        %v4324 = vadd.f32 %v4323, %v3875
        %v4325 = vadd.f32 %v4324, %v3885
        %v4326 = vadd.f32 %v4325, %v3895
        %v4327 = vadd.f32 %v4326, %v3905
        %v4328 = vadd.f32 %v4327, %v3915
        %v4329 = vadd.f32 %v4328, %v3925
        %v4330 = vadd.f32 %v4329, %v3935
        %v4331 = vadd.f32 %v4330, %v3945
        %v4332 = vadd.f32 %v4331, %v3955
        %v4333 = vadd.f32 %v4332, %v3965
        %v4334 = vadd.f32 %v4333, %v3975
        %v4335 = vadd.f32 %v4334, %v3985
        %v4336 = vadd.f32 %v4335, %v3995
        %v4337 = vadd.f32 %v4336, %v4005
        %v4338 = vadd.f32 %v4337, %v4015
        %v4339 = vadd.f32 %v4338, %v4025
        %v4340 = vadd.f32 %v4339, %v4035
        %v4341 = vadd.f32 %v4340, %v4045
        %v4342 = vadd.f32 %v4341, %v4055
        %v4343 = vadd.f32 %v4342, %v4065
        %v4344 = vadd.f32 %v4343, %v4075
        %v4345 = vadd.f32 %v4344, %v4085
        %v4346 = vadd.f32 %v3776, %v3786
        %v4347 = vadd.f32 %v4346, %v3796
        %v4348 = vadd.f32 %v4347, %v3806
        %v4349 = vadd.f32 %v4348, %v3816
        %v4350 = vadd.f32 %v4349, %v3826
        %v4351 = vadd.f32 %v4350, %v3836
        %v4352 = vadd.f32 %v4351, %v3846
        %v4353 = vadd.f32 %v4352, %v3856
        %v4354 = vadd.f32 %v4353, %v3866
        %v4355 = vadd.f32 %v4354, %v3876
        %v4356 = vadd.f32 %v4355, %v3886
        %v4357 = vadd.f32 %v4356, %v3896
        %v4358 = vadd.f32 %v4357, %v3906
        %v4359 = vadd.f32 %v4358, %v3916
        %v4360 = vadd.f32 %v4359, %v3926
        %v4361 = vadd.f32 %v4360, %v3936
        %v4362 = vadd.f32 %v4361, %v3946
        %v4363 = vadd.f32 %v4362, %v3956
        %v4364 = vadd.f32 %v4363, %v3966
        %v4365 = vadd.f32 %v4364, %v3976
        %v4366 = vadd.f32 %v4365, %v3986
        %v4367 = vadd.f32 %v4366, %v3996
        %v4368 = vadd.f32 %v4367, %v4006
        %v4369 = vadd.f32 %v4368, %v4016
        %v4370 = vadd.f32 %v4369, %v4026
        %v4371 = vadd.f32 %v4370, %v4036
        %v4372 = vadd.f32 %v4371, %v4046
        %v4373 = vadd.f32 %v4372, %v4056
        %v4374 = vadd.f32 %v4373, %v4066
        %v4375 = vadd.f32 %v4374, %v4076
        %v4376 = vadd.f32 %v4375, %v4086
        %v4377 = vadd.f32 %v3777, %v3787
        %v4378 = vadd.f32 %v4377, %v3797
        %v4379 = vadd.f32 %v4378, %v3807
        %v4380 = vadd.f32 %v4379, %v3817
        %v4381 = vadd.f32 %v4380, %v3827
        %v4382 = vadd.f32 %v4381, %v3837
        %v4383 = vadd.f32 %v4382, %v3847
        %v4384 = vadd.f32 %v4383, %v3857
        %v4385 = vadd.f32 %v4384, %v3867
        %v4386 = vadd.f32 %v4385, %v3877
        %v4387 = vadd.f32 %v4386, %v3887
        %v4388 = vadd.f32 %v4387, %v3897
        %v4389 = vadd.f32 %v4388, %v3907
        %v4390 = vadd.f32 %v4389, %v3917
        %v4391 = vadd.f32 %v4390, %v3927
        %v4392 = vadd.f32 %v4391, %v3937
        %v4393 = vadd.f32 %v4392, %v3947
        %v4394 = vadd.f32 %v4393, %v3957
        %v4395 = vadd.f32 %v4394, %v3967
        %v4396 = vadd.f32 %v4395, %v3977
        %v4397 = vadd.f32 %v4396, %v3987
        %v4398 = vadd.f32 %v4397, %v3997
        %v4399 = vadd.f32 %v4398, %v4007
        %v4400 = vadd.f32 %v4399, %v4017
        %v4401 = vadd.f32 %v4400, %v4027
        %v4402 = vadd.f32 %v4401, %v4037
        %v4403 = vadd.f32 %v4402, %v4047
        %v4404 = vadd.f32 %v4403, %v4057
        %v4405 = vadd.f32 %v4404, %v4067
        %v4406 = vadd.f32 %v4405, %v4077
        %v4407 = vadd.f32 %v4406, %v4087
        %v4408 = vadd.f32 %v4088, %v4128
        %v4409 = vadd.f32 %v4089, %v4159
        %v4410 = vadd.f32 %v4090, %v4190
        %v4411 = vadd.f32 %v4091, %v4221
        %v4412 = vadd.f32 %v4092, %v4252
        %v4413 = vadd.f32 %v4093, %v4283
        %v4414 = vadd.f32 %v4094, %v4314
        %v4415 = vadd.f32 %v4095, %v4345
        %v4416 = vadd.f32 %v4096, %v4376
        %v4417 = vadd.f32 %v4097, %v4407
        %4418 = vst [vmem:[#allocation2] sm:$0xff] %v4408
        %4419 = vst [vmem:[#allocation2 + $0x8] sm:$0xff] %v4409
        %4420 = vst [vmem:[#allocation2 + $0x10] sm:$0xff] %v4410
        %4421 = vst [vmem:[#allocation2 + $0x18] sm:$0xff] %v4411
        %4422 = vst [vmem:[#allocation2 + $0x20] sm:$0xff] %v4412
        %4423 = vst [vmem:[#allocation2 + $0x28] sm:$0xff] %v4413
        %4424 = vst [vmem:[#allocation2 + $0x30] sm:$0xff] %v4414
        %4425 = vst [vmem:[#allocation2 + $0x38] sm:$0xff] %v4415
        %4426 = vst [vmem:[#allocation2 + $0x40] sm:$0xff] %v4416
        %4427 = vst [vmem:[#allocation2 + $0x48] sm:$0xff] %v4417
        // Predicated region
        $region69: #{policy_forward.1} parent=63 // pred_check
          %p4428 = pneg %p413
        $region70: #{policy_forward.1} parent=63 // pred_check_branch
          %4430 = sbr.rel (%p4428) target = $region72
        $region71: #{policy_forward.1} parent=63 // pred_region
          %v4431 = vld [vmem:[#allocation2] sm:$0xff]
          %v4432 = vld [vmem:[#allocation2 + $0x8] sm:$0xff]
          %v4433 = vld [vmem:[#allocation2 + $0x10] sm:$0xff]
          %v4434 = vld [vmem:[#allocation2 + $0x18] sm:$0xff]
          %v4435 = vld [vmem:[#allocation2 + $0x20] sm:$0xff]
          %v4436 = vld [vmem:[#allocation2 + $0x28] sm:$0xff]
          %v4437 = vld [vmem:[#allocation2 + $0x30] sm:$0xff]
          %v4438 = vld [vmem:[#allocation2 + $0x38] sm:$0xff]
          %v4439 = vld [vmem:[#allocation2 + $0x40] sm:$0xff]
          %v4440 = vld [vmem:[#allocation2 + $0x48] sm:$0xff]
          %v4441 = vrot.slane %v4431, 4
          %v4442 = vadd.f32 %v4431, %v4441
          %v4443 = vrot.slane %v4442, 2
          %v4444 = vadd.f32 %v4442, %v4443
          %v4445 = vrot.slane %v4444, 1
          %v4446 = vadd.f32 %v4444, %v4445
          %v4447 = vrot.slane %v4432, 4
          %v4448 = vadd.f32 %v4432, %v4447
          %v4449 = vrot.slane %v4448, 2
          %v4450 = vadd.f32 %v4448, %v4449
          %v4451 = vrot.slane %v4450, 1
          %v4452 = vadd.f32 %v4450, %v4451
          %v4453 = vrot.slane %v4433, 4
          %v4454 = vadd.f32 %v4433, %v4453
          %v4455 = vrot.slane %v4454, 2
          %v4456 = vadd.f32 %v4454, %v4455
          %v4457 = vrot.slane %v4456, 1
          %v4458 = vadd.f32 %v4456, %v4457
          %v4459 = vrot.slane %v4434, 4
          %v4460 = vadd.f32 %v4434, %v4459
          %v4461 = vrot.slane %v4460, 2
          %v4462 = vadd.f32 %v4460, %v4461
          %v4463 = vrot.slane %v4462, 1
          %v4464 = vadd.f32 %v4462, %v4463
          %v4465 = vrot.slane %v4435, 4
          %v4466 = vadd.f32 %v4435, %v4465
          %v4467 = vrot.slane %v4466, 2
          %v4468 = vadd.f32 %v4466, %v4467
          %v4469 = vrot.slane %v4468, 1
          %v4470 = vadd.f32 %v4468, %v4469
          %v4471 = vrot.slane %v4436, 4
          %v4472 = vadd.f32 %v4436, %v4471
          %v4473 = vrot.slane %v4472, 2
          %v4474 = vadd.f32 %v4472, %v4473
          %v4475 = vrot.slane %v4474, 1
          %v4476 = vadd.f32 %v4474, %v4475
          %v4477 = vrot.slane %v4437, 4
          %v4478 = vadd.f32 %v4437, %v4477
          %v4479 = vrot.slane %v4478, 2
          %v4480 = vadd.f32 %v4478, %v4479
          %v4481 = vrot.slane %v4480, 1
          %v4482 = vadd.f32 %v4480, %v4481
          %v4483 = vrot.slane %v4438, 4
          %v4484 = vadd.f32 %v4438, %v4483
          %v4485 = vrot.slane %v4484, 2
          %v4486 = vadd.f32 %v4484, %v4485
          %v4487 = vrot.slane %v4486, 1
          %v4488 = vadd.f32 %v4486, %v4487
          %v4489 = vrot.slane %v4439, 4
          %v4490 = vadd.f32 %v4439, %v4489
          %v4491 = vrot.slane %v4490, 2
          %v4492 = vadd.f32 %v4490, %v4491
          %v4493 = vrot.slane %v4492, 1
          %v4494 = vadd.f32 %v4492, %v4493
          %v4495 = vrot.slane %v4440, 4
          %v4496 = vadd.f32 %v4440, %v4495
          %v4497 = vrot.slane %v4496, 2
          %v4498 = vadd.f32 %v4496, %v4497
          %v4499 = vrot.slane %v4498, 1
          %v4500 = vadd.f32 %v4498, %v4499
          %v4501 = vmul.f32 %v4446, 0.00390625
          %v4502 = vmul.f32 %v4452, 0.00390625
          %v4503 = vmul.f32 %v4458, 0.00390625
          %v4504 = vmul.f32 %v4464, 0.00390625
          %v4505 = vmul.f32 %v4470, 0.00390625
          %v4506 = vmul.f32 %v4476, 0.00390625
          %v4507 = vmul.f32 %v4482, 0.00390625
          %v4508 = vmul.f32 %v4488, 0.00390625
          %v4509 = vmul.f32 %v4494, 0.00390625
          %v4510 = vmul.f32 %v4500, 0.00390625
          %v4511 = vpack.c.bf16 %v4501, %v4501
          %v4512 = vpack.c.bf16 %v4502, %v4502
          %v4513 = vpack.c.bf16 %v4503, %v4503
          %v4514 = vpack.c.bf16 %v4504, %v4504
          %v4515 = vpack.c.bf16 %v4505, %v4505
          %v4516 = vpack.c.bf16 %v4506, %v4506
          %v4517 = vpack.c.bf16 %v4507, %v4507
          %v4518 = vpack.c.bf16 %v4508, %v4508
          %v4519 = vpack.c.bf16 %v4509, %v4509
          %v4520 = vpack.c.bf16 %v4510, %v4510
          %v4521 = vld [vmem:[%s5] sm:$0xff]
          %v4522 = vld [vmem:[%s5 + $0x8] sm:$0xff]
          %v4523 = vld [vmem:[%s5 + $0x10] sm:$0xff]
          %v4524 = vld [vmem:[%s5 + $0x18] sm:$0xff]
          %v4525 = vld [vmem:[%s5 + $0x20] sm:$0xff]
          %v4526 = vld [vmem:[%s5 + $0x28] sm:$0xff]
          %v4527 = vld [vmem:[%s5 + $0x30] sm:$0xff]
          %v4528 = vld [vmem:[%s5 + $0x38] sm:$0xff]
          %v4529 = vld [vmem:[%s5 + $0x40] sm:$0xff]
          %v4530 = vld [vmem:[%s5 + $0x48] sm:$0xff]
          %v4531 = vld [vmem:[%s5 + $0x50] sm:$0xff]
          %v4532 = vld [vmem:[%s5 + $0x58] sm:$0xff]
          %v4533 = vld [vmem:[%s5 + $0x60] sm:$0xff]
          %v4534 = vld [vmem:[%s5 + $0x68] sm:$0xff]
          %v4535 = vld [vmem:[%s5 + $0x70] sm:$0xff]
          %v4536 = vld [vmem:[%s5 + $0x78] sm:$0xff]
          %v4537 = vld [vmem:[%s5 + $0x80] sm:$0xff]
          %v4538 = vld [vmem:[%s5 + $0x88] sm:$0xff]
          %v4539 = vld [vmem:[%s5 + $0x90] sm:$0xff]
          %v4540 = vld [vmem:[%s5 + $0x98] sm:$0xff]
          %v4541 = vld [vmem:[%s5 + $0xa0] sm:$0xff]
          %v4542 = vld [vmem:[%s5 + $0xa8] sm:$0xff]
          %v4543 = vld [vmem:[%s5 + $0xb0] sm:$0xff]
          %v4544 = vld [vmem:[%s5 + $0xb8] sm:$0xff]
          %v4545 = vld [vmem:[%s5 + $0xc0] sm:$0xff]
          %v4546 = vld [vmem:[%s5 + $0xc8] sm:$0xff]
          %v4547 = vld [vmem:[%s5 + $0xd0] sm:$0xff]
          %v4548 = vld [vmem:[%s5 + $0xd8] sm:$0xff]
          %v4549 = vld [vmem:[%s5 + $0xe0] sm:$0xff]
          %v4550 = vld [vmem:[%s5 + $0xe8] sm:$0xff]
          %v4551 = vld [vmem:[%s5 + $0xf0] sm:$0xff]
          %v4552 = vld [vmem:[%s5 + $0xf8] sm:$0xff]
          %v4553 = vld [vmem:[%s5 + $0x100] sm:$0xff]
          %v4554 = vld [vmem:[%s5 + $0x108] sm:$0xff]
          %v4555 = vld [vmem:[%s5 + $0x110] sm:$0xff]
          %v4556 = vld [vmem:[%s5 + $0x118] sm:$0xff]
          %v4557 = vld [vmem:[%s5 + $0x120] sm:$0xff]
          %v4558 = vld [vmem:[%s5 + $0x128] sm:$0xff]
          %v4559 = vld [vmem:[%s5 + $0x130] sm:$0xff]
          %v4560 = vld [vmem:[%s5 + $0x138] sm:$0xff]
          %v4561 = vld [vmem:[%s5 + $0x140] sm:$0xff]
          %v4562 = vld [vmem:[%s5 + $0x148] sm:$0xff]
          %v4563 = vld [vmem:[%s5 + $0x150] sm:$0xff]
          %v4564 = vld [vmem:[%s5 + $0x158] sm:$0xff]
          %v4565 = vld [vmem:[%s5 + $0x160] sm:$0xff]
          %v4566 = vld [vmem:[%s5 + $0x168] sm:$0xff]
          %v4567 = vld [vmem:[%s5 + $0x170] sm:$0xff]
          %v4568 = vld [vmem:[%s5 + $0x178] sm:$0xff]
          %v4569 = vld [vmem:[%s5 + $0x180] sm:$0xff]
          %v4570 = vld [vmem:[%s5 + $0x188] sm:$0xff]
          %v4571 = vld [vmem:[%s5 + $0x190] sm:$0xff]
          %v4572 = vld [vmem:[%s5 + $0x198] sm:$0xff]
          %v4573 = vld [vmem:[%s5 + $0x1a0] sm:$0xff]
          %v4574 = vld [vmem:[%s5 + $0x1a8] sm:$0xff]
          %v4575 = vld [vmem:[%s5 + $0x1b0] sm:$0xff]
          %v4576 = vld [vmem:[%s5 + $0x1b8] sm:$0xff]
          %v4577 = vld [vmem:[%s5 + $0x1c0] sm:$0xff]
          %v4578 = vld [vmem:[%s5 + $0x1c8] sm:$0xff]
          %v4579 = vld [vmem:[%s5 + $0x1d0] sm:$0xff]
          %v4580 = vld [vmem:[%s5 + $0x1d8] sm:$0xff]
          %v4581 = vld [vmem:[%s5 + $0x1e0] sm:$0xff]
          %v4582 = vld [vmem:[%s5 + $0x1e8] sm:$0xff]
          %v4583 = vld [vmem:[%s5 + $0x1f0] sm:$0xff]
          %v4584 = vld [vmem:[%s5 + $0x1f8] sm:$0xff]
          %v4585 = vld [vmem:[%s5 + $0x200] sm:$0xff]
          %v4586 = vld [vmem:[%s5 + $0x208] sm:$0xff]
          %v4587 = vld [vmem:[%s5 + $0x210] sm:$0xff]
          %v4588 = vld [vmem:[%s5 + $0x218] sm:$0xff]
          %v4589 = vld [vmem:[%s5 + $0x220] sm:$0xff]
          %v4590 = vld [vmem:[%s5 + $0x228] sm:$0xff]
          %v4591 = vld [vmem:[%s5 + $0x230] sm:$0xff]
          %v4592 = vld [vmem:[%s5 + $0x238] sm:$0xff]
          %v4593 = vld [vmem:[%s5 + $0x240] sm:$0xff]
          %v4594 = vld [vmem:[%s5 + $0x248] sm:$0xff]
          %v4595 = vld [vmem:[%s5 + $0x250] sm:$0xff]
          %v4596 = vld [vmem:[%s5 + $0x258] sm:$0xff]
          %v4597 = vld [vmem:[%s5 + $0x260] sm:$0xff]
          %v4598 = vld [vmem:[%s5 + $0x268] sm:$0xff]
          %v4599 = vld [vmem:[%s5 + $0x270] sm:$0xff]
          %v4600 = vld [vmem:[%s5 + $0x278] sm:$0xff]
          %v4601 = vld [vmem:[%s5 + $0x280] sm:$0xff]
          %v4602 = vld [vmem:[%s5 + $0x288] sm:$0xff]
          %v4603 = vld [vmem:[%s5 + $0x290] sm:$0xff]
          %v4604 = vld [vmem:[%s5 + $0x298] sm:$0xff]
          %v4605 = vld [vmem:[%s5 + $0x2a0] sm:$0xff]
          %v4606 = vld [vmem:[%s5 + $0x2a8] sm:$0xff]
          %v4607 = vld [vmem:[%s5 + $0x2b0] sm:$0xff]
          %v4608 = vld [vmem:[%s5 + $0x2b8] sm:$0xff]
          %v4609 = vld [vmem:[%s5 + $0x2c0] sm:$0xff]
          %v4610 = vld [vmem:[%s5 + $0x2c8] sm:$0xff]
          %v4611 = vld [vmem:[%s5 + $0x2d0] sm:$0xff]
          %v4612 = vld [vmem:[%s5 + $0x2d8] sm:$0xff]
          %v4613 = vld [vmem:[%s5 + $0x2e0] sm:$0xff]
          %v4614 = vld [vmem:[%s5 + $0x2e8] sm:$0xff]
          %v4615 = vld [vmem:[%s5 + $0x2f0] sm:$0xff]
          %v4616 = vld [vmem:[%s5 + $0x2f8] sm:$0xff]
          %v4617 = vld [vmem:[%s5 + $0x300] sm:$0xff]
          %v4618 = vld [vmem:[%s5 + $0x308] sm:$0xff]
          %v4619 = vld [vmem:[%s5 + $0x310] sm:$0xff]
          %v4620 = vld [vmem:[%s5 + $0x318] sm:$0xff]
          %v4621 = vld [vmem:[%s5 + $0x320] sm:$0xff]
          %v4622 = vld [vmem:[%s5 + $0x328] sm:$0xff]
          %v4623 = vld [vmem:[%s5 + $0x330] sm:$0xff]
          %v4624 = vld [vmem:[%s5 + $0x338] sm:$0xff]
          %v4625 = vld [vmem:[%s5 + $0x340] sm:$0xff]
          %v4626 = vld [vmem:[%s5 + $0x348] sm:$0xff]
          %v4627 = vld [vmem:[%s5 + $0x350] sm:$0xff]
          %v4628 = vld [vmem:[%s5 + $0x358] sm:$0xff]
          %v4629 = vld [vmem:[%s5 + $0x360] sm:$0xff]
          %v4630 = vld [vmem:[%s5 + $0x368] sm:$0xff]
          %v4631 = vld [vmem:[%s5 + $0x370] sm:$0xff]
          %v4632 = vld [vmem:[%s5 + $0x378] sm:$0xff]
          %v4633 = vld [vmem:[%s5 + $0x380] sm:$0xff]
          %v4634 = vld [vmem:[%s5 + $0x388] sm:$0xff]
          %v4635 = vld [vmem:[%s5 + $0x390] sm:$0xff]
          %v4636 = vld [vmem:[%s5 + $0x398] sm:$0xff]
          %v4637 = vld [vmem:[%s5 + $0x3a0] sm:$0xff]
          %v4638 = vld [vmem:[%s5 + $0x3a8] sm:$0xff]
          %v4639 = vld [vmem:[%s5 + $0x3b0] sm:$0xff]
          %v4640 = vld [vmem:[%s5 + $0x3b8] sm:$0xff]
          %v4641 = vld [vmem:[%s5 + $0x3c0] sm:$0xff]
          %v4642 = vld [vmem:[%s5 + $0x3c8] sm:$0xff]
          %v4643 = vld [vmem:[%s5 + $0x3d0] sm:$0xff]
          %v4644 = vld [vmem:[%s5 + $0x3d8] sm:$0xff]
          %v4645 = vld [vmem:[%s5 + $0x3e0] sm:$0xff]
          %v4646 = vld [vmem:[%s5 + $0x3e8] sm:$0xff]
          %v4647 = vld [vmem:[%s5 + $0x3f0] sm:$0xff]
          %v4648 = vld [vmem:[%s5 + $0x3f8] sm:$0xff]
          %v4649 = vld [vmem:[%s5 + $0x400] sm:$0xff]
          %v4650 = vld [vmem:[%s5 + $0x408] sm:$0xff]
          %v4651 = vld [vmem:[%s5 + $0x410] sm:$0xff]
          %v4652 = vld [vmem:[%s5 + $0x418] sm:$0xff]
          %v4653 = vld [vmem:[%s5 + $0x420] sm:$0xff]
          %v4654 = vld [vmem:[%s5 + $0x428] sm:$0xff]
          %v4655 = vld [vmem:[%s5 + $0x430] sm:$0xff]
          %v4656 = vld [vmem:[%s5 + $0x438] sm:$0xff]
          %v4657 = vld [vmem:[%s5 + $0x440] sm:$0xff]
          %v4658 = vld [vmem:[%s5 + $0x448] sm:$0xff]
          %v4659 = vld [vmem:[%s5 + $0x450] sm:$0xff]
          %v4660 = vld [vmem:[%s5 + $0x458] sm:$0xff]
          %v4661 = vld [vmem:[%s5 + $0x460] sm:$0xff]
          %v4662 = vld [vmem:[%s5 + $0x468] sm:$0xff]
          %v4663 = vld [vmem:[%s5 + $0x470] sm:$0xff]
          %v4664 = vld [vmem:[%s5 + $0x478] sm:$0xff]
          %v4665 = vld [vmem:[%s5 + $0x480] sm:$0xff]
          %v4666 = vld [vmem:[%s5 + $0x488] sm:$0xff]
          %v4667 = vld [vmem:[%s5 + $0x490] sm:$0xff]
          %v4668 = vld [vmem:[%s5 + $0x498] sm:$0xff]
          %v4669 = vld [vmem:[%s5 + $0x4a0] sm:$0xff]
          %v4670 = vld [vmem:[%s5 + $0x4a8] sm:$0xff]
          %v4671 = vld [vmem:[%s5 + $0x4b0] sm:$0xff]
          %v4672 = vld [vmem:[%s5 + $0x4b8] sm:$0xff]
          %v4673 = vld [vmem:[%s5 + $0x4c0] sm:$0xff]
          %v4674 = vld [vmem:[%s5 + $0x4c8] sm:$0xff]
          %v4675 = vld [vmem:[%s5 + $0x4d0] sm:$0xff]
          %v4676 = vld [vmem:[%s5 + $0x4d8] sm:$0xff]
          %v4677 = vld [vmem:[%s5 + $0x4e0] sm:$0xff]
          %v4678 = vld [vmem:[%s5 + $0x4e8] sm:$0xff]
          %v4679 = vld [vmem:[%s5 + $0x4f0] sm:$0xff]
          %v4680 = vld [vmem:[%s5 + $0x4f8] sm:$0xff]
          %v4681 = vld [vmem:[%s5 + $0x500] sm:$0xff]
          %v4682 = vld [vmem:[%s5 + $0x508] sm:$0xff]
          %v4683 = vld [vmem:[%s5 + $0x510] sm:$0xff]
          %v4684 = vld [vmem:[%s5 + $0x518] sm:$0xff]
          %v4685 = vld [vmem:[%s5 + $0x520] sm:$0xff]
          %v4686 = vld [vmem:[%s5 + $0x528] sm:$0xff]
          %v4687 = vld [vmem:[%s5 + $0x530] sm:$0xff]
          %v4688 = vld [vmem:[%s5 + $0x538] sm:$0xff]
          %v4689 = vld [vmem:[%s5 + $0x540] sm:$0xff]
          %v4690 = vld [vmem:[%s5 + $0x548] sm:$0xff]
          %v4691 = vld [vmem:[%s5 + $0x550] sm:$0xff]
          %v4692 = vld [vmem:[%s5 + $0x558] sm:$0xff]
          %v4693 = vld [vmem:[%s5 + $0x560] sm:$0xff]
          %v4694 = vld [vmem:[%s5 + $0x568] sm:$0xff]
          %v4695 = vld [vmem:[%s5 + $0x570] sm:$0xff]
          %v4696 = vld [vmem:[%s5 + $0x578] sm:$0xff]
          %v4697 = vld [vmem:[%s5 + $0x580] sm:$0xff]
          %v4698 = vld [vmem:[%s5 + $0x588] sm:$0xff]
          %v4699 = vld [vmem:[%s5 + $0x590] sm:$0xff]
          %v4700 = vld [vmem:[%s5 + $0x598] sm:$0xff]
          %v4701 = vld [vmem:[%s5 + $0x5a0] sm:$0xff]
          %v4702 = vld [vmem:[%s5 + $0x5a8] sm:$0xff]
          %v4703 = vld [vmem:[%s5 + $0x5b0] sm:$0xff]
          %v4704 = vld [vmem:[%s5 + $0x5b8] sm:$0xff]
          %v4705 = vld [vmem:[%s5 + $0x5c0] sm:$0xff]
          %v4706 = vld [vmem:[%s5 + $0x5c8] sm:$0xff]
          %v4707 = vld [vmem:[%s5 + $0x5d0] sm:$0xff]
          %v4708 = vld [vmem:[%s5 + $0x5d8] sm:$0xff]
          %v4709 = vld [vmem:[%s5 + $0x5e0] sm:$0xff]
          %v4710 = vld [vmem:[%s5 + $0x5e8] sm:$0xff]
          %v4711 = vld [vmem:[%s5 + $0x5f0] sm:$0xff]
          %v4712 = vld [vmem:[%s5 + $0x5f8] sm:$0xff]
          %v4713 = vld [vmem:[%s5 + $0x600] sm:$0xff]
          %v4714 = vld [vmem:[%s5 + $0x608] sm:$0xff]
          %v4715 = vld [vmem:[%s5 + $0x610] sm:$0xff]
          %v4716 = vld [vmem:[%s5 + $0x618] sm:$0xff]
          %v4717 = vld [vmem:[%s5 + $0x620] sm:$0xff]
          %v4718 = vld [vmem:[%s5 + $0x628] sm:$0xff]
          %v4719 = vld [vmem:[%s5 + $0x630] sm:$0xff]
          %v4720 = vld [vmem:[%s5 + $0x638] sm:$0xff]
          %v4721 = vld [vmem:[%s5 + $0x640] sm:$0xff]
          %v4722 = vld [vmem:[%s5 + $0x648] sm:$0xff]
          %v4723 = vld [vmem:[%s5 + $0x650] sm:$0xff]
          %v4724 = vld [vmem:[%s5 + $0x658] sm:$0xff]
          %v4725 = vld [vmem:[%s5 + $0x660] sm:$0xff]
          %v4726 = vld [vmem:[%s5 + $0x668] sm:$0xff]
          %v4727 = vld [vmem:[%s5 + $0x670] sm:$0xff]
          %v4728 = vld [vmem:[%s5 + $0x678] sm:$0xff]
          %v4729 = vld [vmem:[%s5 + $0x680] sm:$0xff]
          %v4730 = vld [vmem:[%s5 + $0x688] sm:$0xff]
          %v4731 = vld [vmem:[%s5 + $0x690] sm:$0xff]
          %v4732 = vld [vmem:[%s5 + $0x698] sm:$0xff]
          %v4733 = vld [vmem:[%s5 + $0x6a0] sm:$0xff]
          %v4734 = vld [vmem:[%s5 + $0x6a8] sm:$0xff]
          %v4735 = vld [vmem:[%s5 + $0x6b0] sm:$0xff]
          %v4736 = vld [vmem:[%s5 + $0x6b8] sm:$0xff]
          %v4737 = vld [vmem:[%s5 + $0x6c0] sm:$0xff]
          %v4738 = vld [vmem:[%s5 + $0x6c8] sm:$0xff]
          %v4739 = vld [vmem:[%s5 + $0x6d0] sm:$0xff]
          %v4740 = vld [vmem:[%s5 + $0x6d8] sm:$0xff]
          %v4741 = vld [vmem:[%s5 + $0x6e0] sm:$0xff]
          %v4742 = vld [vmem:[%s5 + $0x6e8] sm:$0xff]
          %v4743 = vld [vmem:[%s5 + $0x6f0] sm:$0xff]
          %v4744 = vld [vmem:[%s5 + $0x6f8] sm:$0xff]
          %v4745 = vld [vmem:[%s5 + $0x700] sm:$0xff]
          %v4746 = vld [vmem:[%s5 + $0x708] sm:$0xff]
          %v4747 = vld [vmem:[%s5 + $0x710] sm:$0xff]
          %v4748 = vld [vmem:[%s5 + $0x718] sm:$0xff]
          %v4749 = vld [vmem:[%s5 + $0x720] sm:$0xff]
          %v4750 = vld [vmem:[%s5 + $0x728] sm:$0xff]
          %v4751 = vld [vmem:[%s5 + $0x730] sm:$0xff]
          %v4752 = vld [vmem:[%s5 + $0x738] sm:$0xff]
          %v4753 = vld [vmem:[%s5 + $0x740] sm:$0xff]
          %v4754 = vld [vmem:[%s5 + $0x748] sm:$0xff]
          %v4755 = vld [vmem:[%s5 + $0x750] sm:$0xff]
          %v4756 = vld [vmem:[%s5 + $0x758] sm:$0xff]
          %v4757 = vld [vmem:[%s5 + $0x760] sm:$0xff]
          %v4758 = vld [vmem:[%s5 + $0x768] sm:$0xff]
          %v4759 = vld [vmem:[%s5 + $0x770] sm:$0xff]
          %v4760 = vld [vmem:[%s5 + $0x778] sm:$0xff]
          %v4761 = vld [vmem:[%s5 + $0x780] sm:$0xff]
          %v4762 = vld [vmem:[%s5 + $0x788] sm:$0xff]
          %v4763 = vld [vmem:[%s5 + $0x790] sm:$0xff]
          %v4764 = vld [vmem:[%s5 + $0x798] sm:$0xff]
          %v4765 = vld [vmem:[%s5 + $0x7a0] sm:$0xff]
          %v4766 = vld [vmem:[%s5 + $0x7a8] sm:$0xff]
          %v4767 = vld [vmem:[%s5 + $0x7b0] sm:$0xff]
          %v4768 = vld [vmem:[%s5 + $0x7b8] sm:$0xff]
          %v4769 = vld [vmem:[%s5 + $0x7c0] sm:$0xff]
          %v4770 = vld [vmem:[%s5 + $0x7c8] sm:$0xff]
          %v4771 = vld [vmem:[%s5 + $0x7d0] sm:$0xff]
          %v4772 = vld [vmem:[%s5 + $0x7d8] sm:$0xff]
          %v4773 = vld [vmem:[%s5 + $0x7e0] sm:$0xff]
          %v4774 = vld [vmem:[%s5 + $0x7e8] sm:$0xff]
          %v4775 = vld [vmem:[%s5 + $0x7f0] sm:$0xff]
          %v4776 = vld [vmem:[%s5 + $0x7f8] sm:$0xff]
          %v4777 = vld [vmem:[%s5 + $0x800] sm:$0xff]
          %v4778 = vld [vmem:[%s5 + $0x808] sm:$0xff]
          %v4779 = vld [vmem:[%s5 + $0x810] sm:$0xff]
          %v4780 = vld [vmem:[%s5 + $0x818] sm:$0xff]
          %v4781 = vld [vmem:[%s5 + $0x820] sm:$0xff]
          %v4782 = vld [vmem:[%s5 + $0x828] sm:$0xff]
          %v4783 = vld [vmem:[%s5 + $0x830] sm:$0xff]
          %v4784 = vld [vmem:[%s5 + $0x838] sm:$0xff]
          %v4785 = vld [vmem:[%s5 + $0x840] sm:$0xff]
          %v4786 = vld [vmem:[%s5 + $0x848] sm:$0xff]
          %v4787 = vld [vmem:[%s5 + $0x850] sm:$0xff]
          %v4788 = vld [vmem:[%s5 + $0x858] sm:$0xff]
          %v4789 = vld [vmem:[%s5 + $0x860] sm:$0xff]
          %v4790 = vld [vmem:[%s5 + $0x868] sm:$0xff]
          %v4791 = vld [vmem:[%s5 + $0x870] sm:$0xff]
          %v4792 = vld [vmem:[%s5 + $0x878] sm:$0xff]
          %v4793 = vld [vmem:[%s5 + $0x880] sm:$0xff]
          %v4794 = vld [vmem:[%s5 + $0x888] sm:$0xff]
          %v4795 = vld [vmem:[%s5 + $0x890] sm:$0xff]
          %v4796 = vld [vmem:[%s5 + $0x898] sm:$0xff]
          %v4797 = vld [vmem:[%s5 + $0x8a0] sm:$0xff]
          %v4798 = vld [vmem:[%s5 + $0x8a8] sm:$0xff]
          %v4799 = vld [vmem:[%s5 + $0x8b0] sm:$0xff]
          %v4800 = vld [vmem:[%s5 + $0x8b8] sm:$0xff]
          %v4801 = vld [vmem:[%s5 + $0x8c0] sm:$0xff]
          %v4802 = vld [vmem:[%s5 + $0x8c8] sm:$0xff]
          %v4803 = vld [vmem:[%s5 + $0x8d0] sm:$0xff]
          %v4804 = vld [vmem:[%s5 + $0x8d8] sm:$0xff]
          %v4805 = vld [vmem:[%s5 + $0x8e0] sm:$0xff]
          %v4806 = vld [vmem:[%s5 + $0x8e8] sm:$0xff]
          %v4807 = vld [vmem:[%s5 + $0x8f0] sm:$0xff]
          %v4808 = vld [vmem:[%s5 + $0x8f8] sm:$0xff]
          %v4809 = vld [vmem:[%s5 + $0x900] sm:$0xff]
          %v4810 = vld [vmem:[%s5 + $0x908] sm:$0xff]
          %v4811 = vld [vmem:[%s5 + $0x910] sm:$0xff]
          %v4812 = vld [vmem:[%s5 + $0x918] sm:$0xff]
          %v4813 = vld [vmem:[%s5 + $0x920] sm:$0xff]
          %v4814 = vld [vmem:[%s5 + $0x928] sm:$0xff]
          %v4815 = vld [vmem:[%s5 + $0x930] sm:$0xff]
          %v4816 = vld [vmem:[%s5 + $0x938] sm:$0xff]
          %v4817 = vld [vmem:[%s5 + $0x940] sm:$0xff]
          %v4818 = vld [vmem:[%s5 + $0x948] sm:$0xff]
          %v4819 = vld [vmem:[%s5 + $0x950] sm:$0xff]
          %v4820 = vld [vmem:[%s5 + $0x958] sm:$0xff]
          %v4821 = vld [vmem:[%s5 + $0x960] sm:$0xff]
          %v4822 = vld [vmem:[%s5 + $0x968] sm:$0xff]
          %v4823 = vld [vmem:[%s5 + $0x970] sm:$0xff]
          %v4824 = vld [vmem:[%s5 + $0x978] sm:$0xff]
          %v4825 = vld [vmem:[%s5 + $0x980] sm:$0xff]
          %v4826 = vld [vmem:[%s5 + $0x988] sm:$0xff]
          %v4827 = vld [vmem:[%s5 + $0x990] sm:$0xff]
          %v4828 = vld [vmem:[%s5 + $0x998] sm:$0xff]
          %v4829 = vld [vmem:[%s5 + $0x9a0] sm:$0xff]
          %v4830 = vld [vmem:[%s5 + $0x9a8] sm:$0xff]
          %v4831 = vld [vmem:[%s5 + $0x9b0] sm:$0xff]
          %v4832 = vld [vmem:[%s5 + $0x9b8] sm:$0xff]
          %v4833 = vld [vmem:[%s5 + $0x9c0] sm:$0xff]
          %v4834 = vld [vmem:[%s5 + $0x9c8] sm:$0xff]
          %v4835 = vld [vmem:[%s5 + $0x9d0] sm:$0xff]
          %v4836 = vld [vmem:[%s5 + $0x9d8] sm:$0xff]
          %v4837 = vld [vmem:[%s5 + $0x9e0] sm:$0xff]
          %v4838 = vld [vmem:[%s5 + $0x9e8] sm:$0xff]
          %v4839 = vld [vmem:[%s5 + $0x9f0] sm:$0xff]
          %v4840 = vld [vmem:[%s5 + $0x9f8] sm:$0xff]
          %v4841 = vld [vmem:[%s6] sm:$0xf]
          %v5162 = vunpack.c.l.b16 %v4521
          %v5163 = vunpack.c.h.b16 %v4521
          %v5164 = vunpack.c.l.b16 %v4522
          %v5165 = vunpack.c.h.b16 %v4522
          %v5166 = vunpack.c.l.b16 %v4523
          %v5167 = vunpack.c.h.b16 %v4523
          %v5168 = vunpack.c.l.b16 %v4524
          %v5169 = vunpack.c.h.b16 %v4524
          %v5170 = vunpack.c.l.b16 %v4525
          %v5171 = vunpack.c.h.b16 %v4525
          %v5172 = vunpack.c.l.b16 %v4526
          %v5173 = vunpack.c.h.b16 %v4526
          %v5174 = vunpack.c.l.b16 %v4527
          %v5175 = vunpack.c.h.b16 %v4527
          %v5176 = vunpack.c.l.b16 %v4528
          %v5177 = vunpack.c.h.b16 %v4528
          %v5178 = vunpack.c.l.b16 %v4529
          %v5179 = vunpack.c.h.b16 %v4529
          %v5180 = vunpack.c.l.b16 %v4530
          %v5181 = vunpack.c.h.b16 %v4530
          %v5182 = vunpack.c.l.b16 %v4531
          %v5183 = vunpack.c.h.b16 %v4531
          %v5184 = vunpack.c.l.b16 %v4532
          %v5185 = vunpack.c.h.b16 %v4532
          %v5186 = vunpack.c.l.b16 %v4533
          %v5187 = vunpack.c.h.b16 %v4533
          %v5188 = vunpack.c.l.b16 %v4534
          %v5189 = vunpack.c.h.b16 %v4534
          %v5190 = vunpack.c.l.b16 %v4535
          %v5191 = vunpack.c.h.b16 %v4535
          %v5192 = vunpack.c.l.b16 %v4536
          %v5193 = vunpack.c.h.b16 %v4536
          %v5194 = vunpack.c.l.b16 %v4537
          %v5195 = vunpack.c.h.b16 %v4537
          %v5196 = vunpack.c.l.b16 %v4538
          %v5197 = vunpack.c.h.b16 %v4538
          %v5198 = vunpack.c.l.b16 %v4539
          %v5199 = vunpack.c.h.b16 %v4539
          %v5200 = vunpack.c.l.b16 %v4540
          %v5201 = vunpack.c.h.b16 %v4540
          %v5202 = vunpack.c.l.b16 %v4541
          %v5203 = vunpack.c.h.b16 %v4541
          %v5204 = vunpack.c.l.b16 %v4542
          %v5205 = vunpack.c.h.b16 %v4542
          %v5206 = vunpack.c.l.b16 %v4543
          %v5207 = vunpack.c.h.b16 %v4543
          %v5208 = vunpack.c.l.b16 %v4544
          %v5209 = vunpack.c.h.b16 %v4544
          %v5210 = vunpack.c.l.b16 %v4545
          %v5211 = vunpack.c.h.b16 %v4545
          %v5212 = vunpack.c.l.b16 %v4546
          %v5213 = vunpack.c.h.b16 %v4546
          %v5214 = vunpack.c.l.b16 %v4547
          %v5215 = vunpack.c.h.b16 %v4547
          %v5216 = vunpack.c.l.b16 %v4548
          %v5217 = vunpack.c.h.b16 %v4548
          %v5218 = vunpack.c.l.b16 %v4549
          %v5219 = vunpack.c.h.b16 %v4549
          %v5220 = vunpack.c.l.b16 %v4550
          %v5221 = vunpack.c.h.b16 %v4550
          %v5222 = vunpack.c.l.b16 %v4551
          %v5223 = vunpack.c.h.b16 %v4551
          %v5224 = vunpack.c.l.b16 %v4552
          %v5225 = vunpack.c.h.b16 %v4552
          %v5226 = vunpack.c.l.b16 %v4553
          %v5227 = vunpack.c.h.b16 %v4553
          %v5228 = vunpack.c.l.b16 %v4554
          %v5229 = vunpack.c.h.b16 %v4554
          %v5230 = vunpack.c.l.b16 %v4555
          %v5231 = vunpack.c.h.b16 %v4555
          %v5232 = vunpack.c.l.b16 %v4556
          %v5233 = vunpack.c.h.b16 %v4556
          %v5234 = vunpack.c.l.b16 %v4557
          %v5235 = vunpack.c.h.b16 %v4557
          %v5236 = vunpack.c.l.b16 %v4558
          %v5237 = vunpack.c.h.b16 %v4558
          %v5238 = vunpack.c.l.b16 %v4559
          %v5239 = vunpack.c.h.b16 %v4559
          %v5240 = vunpack.c.l.b16 %v4560
          %v5241 = vunpack.c.h.b16 %v4560
          %v5242 = vunpack.c.l.b16 %v4561
          %v5243 = vunpack.c.h.b16 %v4561
          %v5244 = vunpack.c.l.b16 %v4562
          %v5245 = vunpack.c.h.b16 %v4562
          %v5246 = vunpack.c.l.b16 %v4563
          %v5247 = vunpack.c.h.b16 %v4563
          %v5248 = vunpack.c.l.b16 %v4564
          %v5249 = vunpack.c.h.b16 %v4564
          %v5250 = vunpack.c.l.b16 %v4565
          %v5251 = vunpack.c.h.b16 %v4565
          %v5252 = vunpack.c.l.b16 %v4566
          %v5253 = vunpack.c.h.b16 %v4566
          %v5254 = vunpack.c.l.b16 %v4567
          %v5255 = vunpack.c.h.b16 %v4567
          %v5256 = vunpack.c.l.b16 %v4568
          %v5257 = vunpack.c.h.b16 %v4568
          %v5258 = vunpack.c.l.b16 %v4569
          %v5259 = vunpack.c.h.b16 %v4569
          %v5260 = vunpack.c.l.b16 %v4570
          %v5261 = vunpack.c.h.b16 %v4570
          %v5262 = vunpack.c.l.b16 %v4571
          %v5263 = vunpack.c.h.b16 %v4571
          %v5264 = vunpack.c.l.b16 %v4572
          %v5265 = vunpack.c.h.b16 %v4572
          %v5266 = vunpack.c.l.b16 %v4573
          %v5267 = vunpack.c.h.b16 %v4573
          %v5268 = vunpack.c.l.b16 %v4574
          %v5269 = vunpack.c.h.b16 %v4574
          %v5270 = vunpack.c.l.b16 %v4575
          %v5271 = vunpack.c.h.b16 %v4575
          %v5272 = vunpack.c.l.b16 %v4576
          %v5273 = vunpack.c.h.b16 %v4576
          %v5274 = vunpack.c.l.b16 %v4577
          %v5275 = vunpack.c.h.b16 %v4577
          %v5276 = vunpack.c.l.b16 %v4578
          %v5277 = vunpack.c.h.b16 %v4578
          %v5278 = vunpack.c.l.b16 %v4579
          %v5279 = vunpack.c.h.b16 %v4579
          %v5280 = vunpack.c.l.b16 %v4580
          %v5281 = vunpack.c.h.b16 %v4580
          %v5282 = vunpack.c.l.b16 %v4581
          %v5283 = vunpack.c.h.b16 %v4581
          %v5284 = vunpack.c.l.b16 %v4582
          %v5285 = vunpack.c.h.b16 %v4582
          %v5286 = vunpack.c.l.b16 %v4583
          %v5287 = vunpack.c.h.b16 %v4583
          %v5288 = vunpack.c.l.b16 %v4584
          %v5289 = vunpack.c.h.b16 %v4584
          %v5290 = vunpack.c.l.b16 %v4585
          %v5291 = vunpack.c.h.b16 %v4585
          %v5292 = vunpack.c.l.b16 %v4586
          %v5293 = vunpack.c.h.b16 %v4586
          %v5294 = vunpack.c.l.b16 %v4587
          %v5295 = vunpack.c.h.b16 %v4587
          %v5296 = vunpack.c.l.b16 %v4588
          %v5297 = vunpack.c.h.b16 %v4588
          %v5298 = vunpack.c.l.b16 %v4589
          %v5299 = vunpack.c.h.b16 %v4589
          %v5300 = vunpack.c.l.b16 %v4590
          %v5301 = vunpack.c.h.b16 %v4590
          %v5302 = vunpack.c.l.b16 %v4591
          %v5303 = vunpack.c.h.b16 %v4591
          %v5304 = vunpack.c.l.b16 %v4592
          %v5305 = vunpack.c.h.b16 %v4592
          %v5306 = vunpack.c.l.b16 %v4593
          %v5307 = vunpack.c.h.b16 %v4593
          %v5308 = vunpack.c.l.b16 %v4594
          %v5309 = vunpack.c.h.b16 %v4594
          %v5310 = vunpack.c.l.b16 %v4595
          %v5311 = vunpack.c.h.b16 %v4595
          %v5312 = vunpack.c.l.b16 %v4596
          %v5313 = vunpack.c.h.b16 %v4596
          %v5314 = vunpack.c.l.b16 %v4597
          %v5315 = vunpack.c.h.b16 %v4597
          %v5316 = vunpack.c.l.b16 %v4598
          %v5317 = vunpack.c.h.b16 %v4598
          %v5318 = vunpack.c.l.b16 %v4599
          %v5319 = vunpack.c.h.b16 %v4599
          %v5320 = vunpack.c.l.b16 %v4600
          %v5321 = vunpack.c.h.b16 %v4600
          %v5322 = vunpack.c.l.b16 %v4601
          %v5323 = vunpack.c.h.b16 %v4601
          %v5324 = vunpack.c.l.b16 %v4602
          %v5325 = vunpack.c.h.b16 %v4602
          %v5326 = vunpack.c.l.b16 %v4603
          %v5327 = vunpack.c.h.b16 %v4603
          %v5328 = vunpack.c.l.b16 %v4604
          %v5329 = vunpack.c.h.b16 %v4604
          %v5330 = vunpack.c.l.b16 %v4605
          %v5331 = vunpack.c.h.b16 %v4605
          %v5332 = vunpack.c.l.b16 %v4606
          %v5333 = vunpack.c.h.b16 %v4606
          %v5334 = vunpack.c.l.b16 %v4607
          %v5335 = vunpack.c.h.b16 %v4607
          %v5336 = vunpack.c.l.b16 %v4608
          %v5337 = vunpack.c.h.b16 %v4608
          %v5338 = vunpack.c.l.b16 %v4609
          %v5339 = vunpack.c.h.b16 %v4609
          %v5340 = vunpack.c.l.b16 %v4610
          %v5341 = vunpack.c.h.b16 %v4610
          %v5342 = vunpack.c.l.b16 %v4611
          %v5343 = vunpack.c.h.b16 %v4611
          %v5344 = vunpack.c.l.b16 %v4612
          %v5345 = vunpack.c.h.b16 %v4612
          %v5346 = vunpack.c.l.b16 %v4613
          %v5347 = vunpack.c.h.b16 %v4613
          %v5348 = vunpack.c.l.b16 %v4614
          %v5349 = vunpack.c.h.b16 %v4614
          %v5350 = vunpack.c.l.b16 %v4615
          %v5351 = vunpack.c.h.b16 %v4615
          %v5352 = vunpack.c.l.b16 %v4616
          %v5353 = vunpack.c.h.b16 %v4616
          %v5354 = vunpack.c.l.b16 %v4617
          %v5355 = vunpack.c.h.b16 %v4617
          %v5356 = vunpack.c.l.b16 %v4618
          %v5357 = vunpack.c.h.b16 %v4618
          %v5358 = vunpack.c.l.b16 %v4619
          %v5359 = vunpack.c.h.b16 %v4619
          %v5360 = vunpack.c.l.b16 %v4620
          %v5361 = vunpack.c.h.b16 %v4620
          %v5362 = vunpack.c.l.b16 %v4621
          %v5363 = vunpack.c.h.b16 %v4621
          %v5364 = vunpack.c.l.b16 %v4622
          %v5365 = vunpack.c.h.b16 %v4622
          %v5366 = vunpack.c.l.b16 %v4623
          %v5367 = vunpack.c.h.b16 %v4623
          %v5368 = vunpack.c.l.b16 %v4624
          %v5369 = vunpack.c.h.b16 %v4624
          %v5370 = vunpack.c.l.b16 %v4625
          %v5371 = vunpack.c.h.b16 %v4625
          %v5372 = vunpack.c.l.b16 %v4626
          %v5373 = vunpack.c.h.b16 %v4626
          %v5374 = vunpack.c.l.b16 %v4627
          %v5375 = vunpack.c.h.b16 %v4627
          %v5376 = vunpack.c.l.b16 %v4628
          %v5377 = vunpack.c.h.b16 %v4628
          %v5378 = vunpack.c.l.b16 %v4629
          %v5379 = vunpack.c.h.b16 %v4629
          %v5380 = vunpack.c.l.b16 %v4630
          %v5381 = vunpack.c.h.b16 %v4630
          %v5382 = vunpack.c.l.b16 %v4631
          %v5383 = vunpack.c.h.b16 %v4631
          %v5384 = vunpack.c.l.b16 %v4632
          %v5385 = vunpack.c.h.b16 %v4632
          %v5386 = vunpack.c.l.b16 %v4633
          %v5387 = vunpack.c.h.b16 %v4633
          %v5388 = vunpack.c.l.b16 %v4634
          %v5389 = vunpack.c.h.b16 %v4634
          %v5390 = vunpack.c.l.b16 %v4635
          %v5391 = vunpack.c.h.b16 %v4635
          %v5392 = vunpack.c.l.b16 %v4636
          %v5393 = vunpack.c.h.b16 %v4636
          %v5394 = vunpack.c.l.b16 %v4637
          %v5395 = vunpack.c.h.b16 %v4637
          %v5396 = vunpack.c.l.b16 %v4638
          %v5397 = vunpack.c.h.b16 %v4638
          %v5398 = vunpack.c.l.b16 %v4639
          %v5399 = vunpack.c.h.b16 %v4639
          %v5400 = vunpack.c.l.b16 %v4640
          %v5401 = vunpack.c.h.b16 %v4640
          %v5402 = vunpack.c.l.b16 %v4641
          %v5403 = vunpack.c.h.b16 %v4641
          %v5404 = vunpack.c.l.b16 %v4642
          %v5405 = vunpack.c.h.b16 %v4642
          %v5406 = vunpack.c.l.b16 %v4643
          %v5407 = vunpack.c.h.b16 %v4643
          %v5408 = vunpack.c.l.b16 %v4644
          %v5409 = vunpack.c.h.b16 %v4644
          %v5410 = vunpack.c.l.b16 %v4645
          %v5411 = vunpack.c.h.b16 %v4645
          %v5412 = vunpack.c.l.b16 %v4646
          %v5413 = vunpack.c.h.b16 %v4646
          %v5414 = vunpack.c.l.b16 %v4647
          %v5415 = vunpack.c.h.b16 %v4647
          %v5416 = vunpack.c.l.b16 %v4648
          %v5417 = vunpack.c.h.b16 %v4648
          %v5418 = vunpack.c.l.b16 %v4649
          %v5419 = vunpack.c.h.b16 %v4649
          %v5420 = vunpack.c.l.b16 %v4650
          %v5421 = vunpack.c.h.b16 %v4650
          %v5422 = vunpack.c.l.b16 %v4651
          %v5423 = vunpack.c.h.b16 %v4651
          %v5424 = vunpack.c.l.b16 %v4652
          %v5425 = vunpack.c.h.b16 %v4652
          %v5426 = vunpack.c.l.b16 %v4653
          %v5427 = vunpack.c.h.b16 %v4653
          %v5428 = vunpack.c.l.b16 %v4654
          %v5429 = vunpack.c.h.b16 %v4654
          %v5430 = vunpack.c.l.b16 %v4655
          %v5431 = vunpack.c.h.b16 %v4655
          %v5432 = vunpack.c.l.b16 %v4656
          %v5433 = vunpack.c.h.b16 %v4656
          %v5434 = vunpack.c.l.b16 %v4657
          %v5435 = vunpack.c.h.b16 %v4657
          %v5436 = vunpack.c.l.b16 %v4658
          %v5437 = vunpack.c.h.b16 %v4658
          %v5438 = vunpack.c.l.b16 %v4659
          %v5439 = vunpack.c.h.b16 %v4659
          %v5440 = vunpack.c.l.b16 %v4660
          %v5441 = vunpack.c.h.b16 %v4660
          %v5442 = vunpack.c.l.b16 %v4661
          %v5443 = vunpack.c.h.b16 %v4661
          %v5444 = vunpack.c.l.b16 %v4662
          %v5445 = vunpack.c.h.b16 %v4662
          %v5446 = vunpack.c.l.b16 %v4663
          %v5447 = vunpack.c.h.b16 %v4663
          %v5448 = vunpack.c.l.b16 %v4664
          %v5449 = vunpack.c.h.b16 %v4664
          %v5450 = vunpack.c.l.b16 %v4665
          %v5451 = vunpack.c.h.b16 %v4665
          %v5452 = vunpack.c.l.b16 %v4666
          %v5453 = vunpack.c.h.b16 %v4666
          %v5454 = vunpack.c.l.b16 %v4667
          %v5455 = vunpack.c.h.b16 %v4667
          %v5456 = vunpack.c.l.b16 %v4668
          %v5457 = vunpack.c.h.b16 %v4668
          %v5458 = vunpack.c.l.b16 %v4669
          %v5459 = vunpack.c.h.b16 %v4669
          %v5460 = vunpack.c.l.b16 %v4670
          %v5461 = vunpack.c.h.b16 %v4670
          %v5462 = vunpack.c.l.b16 %v4671
          %v5463 = vunpack.c.h.b16 %v4671
          %v5464 = vunpack.c.l.b16 %v4672
          %v5465 = vunpack.c.h.b16 %v4672
          %v5466 = vunpack.c.l.b16 %v4673
          %v5467 = vunpack.c.h.b16 %v4673
          %v5468 = vunpack.c.l.b16 %v4674
          %v5469 = vunpack.c.h.b16 %v4674
          %v5470 = vunpack.c.l.b16 %v4675
          %v5471 = vunpack.c.h.b16 %v4675
          %v5472 = vunpack.c.l.b16 %v4676
          %v5473 = vunpack.c.h.b16 %v4676
          %v5474 = vunpack.c.l.b16 %v4677
          %v5475 = vunpack.c.h.b16 %v4677
          %v5476 = vunpack.c.l.b16 %v4678
          %v5477 = vunpack.c.h.b16 %v4678
          %v5478 = vunpack.c.l.b16 %v4679
          %v5479 = vunpack.c.h.b16 %v4679
          %v5480 = vunpack.c.l.b16 %v4680
          %v5481 = vunpack.c.h.b16 %v4680
          %v5482 = vunpack.c.l.b16 %v4681
          %v5483 = vunpack.c.h.b16 %v4681
          %v5484 = vunpack.c.l.b16 %v4682
          %v5485 = vunpack.c.h.b16 %v4682
          %v5486 = vunpack.c.l.b16 %v4683
          %v5487 = vunpack.c.h.b16 %v4683
          %v5488 = vunpack.c.l.b16 %v4684
          %v5489 = vunpack.c.h.b16 %v4684
          %v5490 = vunpack.c.l.b16 %v4685
          %v5491 = vunpack.c.h.b16 %v4685
          %v5492 = vunpack.c.l.b16 %v4686
          %v5493 = vunpack.c.h.b16 %v4686
          %v5494 = vunpack.c.l.b16 %v4687
          %v5495 = vunpack.c.h.b16 %v4687
          %v5496 = vunpack.c.l.b16 %v4688
          %v5497 = vunpack.c.h.b16 %v4688
          %v5498 = vunpack.c.l.b16 %v4689
          %v5499 = vunpack.c.h.b16 %v4689
          %v5500 = vunpack.c.l.b16 %v4690
          %v5501 = vunpack.c.h.b16 %v4690
          %v5502 = vunpack.c.l.b16 %v4691
          %v5503 = vunpack.c.h.b16 %v4691
          %v5504 = vunpack.c.l.b16 %v4692
          %v5505 = vunpack.c.h.b16 %v4692
          %v5506 = vunpack.c.l.b16 %v4693
          %v5507 = vunpack.c.h.b16 %v4693
          %v5508 = vunpack.c.l.b16 %v4694
          %v5509 = vunpack.c.h.b16 %v4694
          %v5510 = vunpack.c.l.b16 %v4695
          %v5511 = vunpack.c.h.b16 %v4695
          %v5512 = vunpack.c.l.b16 %v4696
          %v5513 = vunpack.c.h.b16 %v4696
          %v5514 = vunpack.c.l.b16 %v4697
          %v5515 = vunpack.c.h.b16 %v4697
          %v5516 = vunpack.c.l.b16 %v4698
          %v5517 = vunpack.c.h.b16 %v4698
          %v5518 = vunpack.c.l.b16 %v4699
          %v5519 = vunpack.c.h.b16 %v4699
          %v5520 = vunpack.c.l.b16 %v4700
          %v5521 = vunpack.c.h.b16 %v4700
          %v5522 = vunpack.c.l.b16 %v4701
          %v5523 = vunpack.c.h.b16 %v4701
          %v5524 = vunpack.c.l.b16 %v4702
          %v5525 = vunpack.c.h.b16 %v4702
          %v5526 = vunpack.c.l.b16 %v4703
          %v5527 = vunpack.c.h.b16 %v4703
          %v5528 = vunpack.c.l.b16 %v4704
          %v5529 = vunpack.c.h.b16 %v4704
          %v5530 = vunpack.c.l.b16 %v4705
          %v5531 = vunpack.c.h.b16 %v4705
          %v5532 = vunpack.c.l.b16 %v4706
          %v5533 = vunpack.c.h.b16 %v4706
          %v5534 = vunpack.c.l.b16 %v4707
          %v5535 = vunpack.c.h.b16 %v4707
          %v5536 = vunpack.c.l.b16 %v4708
          %v5537 = vunpack.c.h.b16 %v4708
          %v5538 = vunpack.c.l.b16 %v4709
          %v5539 = vunpack.c.h.b16 %v4709
          %v5540 = vunpack.c.l.b16 %v4710
          %v5541 = vunpack.c.h.b16 %v4710
          %v5542 = vunpack.c.l.b16 %v4711
          %v5543 = vunpack.c.h.b16 %v4711
          %v5544 = vunpack.c.l.b16 %v4712
          %v5545 = vunpack.c.h.b16 %v4712
          %v5546 = vunpack.c.l.b16 %v4713
          %v5547 = vunpack.c.h.b16 %v4713
          %v5548 = vunpack.c.l.b16 %v4714
          %v5549 = vunpack.c.h.b16 %v4714
          %v5550 = vunpack.c.l.b16 %v4715
          %v5551 = vunpack.c.h.b16 %v4715
          %v5552 = vunpack.c.l.b16 %v4716
          %v5553 = vunpack.c.h.b16 %v4716
          %v5554 = vunpack.c.l.b16 %v4717
          %v5555 = vunpack.c.h.b16 %v4717
          %v5556 = vunpack.c.l.b16 %v4718
          %v5557 = vunpack.c.h.b16 %v4718
          %v5558 = vunpack.c.l.b16 %v4719
          %v5559 = vunpack.c.h.b16 %v4719
          %v5560 = vunpack.c.l.b16 %v4720
          %v5561 = vunpack.c.h.b16 %v4720
          %v5562 = vunpack.c.l.b16 %v4721
          %v5563 = vunpack.c.h.b16 %v4721
          %v5564 = vunpack.c.l.b16 %v4722
          %v5565 = vunpack.c.h.b16 %v4722
          %v5566 = vunpack.c.l.b16 %v4723
          %v5567 = vunpack.c.h.b16 %v4723
          %v5568 = vunpack.c.l.b16 %v4724
          %v5569 = vunpack.c.h.b16 %v4724
          %v5570 = vunpack.c.l.b16 %v4725
          %v5571 = vunpack.c.h.b16 %v4725
          %v5572 = vunpack.c.l.b16 %v4726
          %v5573 = vunpack.c.h.b16 %v4726
          %v5574 = vunpack.c.l.b16 %v4727
          %v5575 = vunpack.c.h.b16 %v4727
          %v5576 = vunpack.c.l.b16 %v4728
          %v5577 = vunpack.c.h.b16 %v4728
          %v5578 = vunpack.c.l.b16 %v4729
          %v5579 = vunpack.c.h.b16 %v4729
          %v5580 = vunpack.c.l.b16 %v4730
          %v5581 = vunpack.c.h.b16 %v4730
          %v5582 = vunpack.c.l.b16 %v4731
          %v5583 = vunpack.c.h.b16 %v4731
          %v5584 = vunpack.c.l.b16 %v4732
          %v5585 = vunpack.c.h.b16 %v4732
          %v5586 = vunpack.c.l.b16 %v4733
          %v5587 = vunpack.c.h.b16 %v4733
          %v5588 = vunpack.c.l.b16 %v4734
          %v5589 = vunpack.c.h.b16 %v4734
          %v5590 = vunpack.c.l.b16 %v4735
          %v5591 = vunpack.c.h.b16 %v4735
          %v5592 = vunpack.c.l.b16 %v4736
          %v5593 = vunpack.c.h.b16 %v4736
          %v5594 = vunpack.c.l.b16 %v4737
          %v5595 = vunpack.c.h.b16 %v4737
          %v5596 = vunpack.c.l.b16 %v4738
          %v5597 = vunpack.c.h.b16 %v4738
          %v5598 = vunpack.c.l.b16 %v4739
          %v5599 = vunpack.c.h.b16 %v4739
          %v5600 = vunpack.c.l.b16 %v4740
          %v5601 = vunpack.c.h.b16 %v4740
          %v5602 = vunpack.c.l.b16 %v4741
          %v5603 = vunpack.c.h.b16 %v4741
          %v5604 = vunpack.c.l.b16 %v4742
          %v5605 = vunpack.c.h.b16 %v4742
          %v5606 = vunpack.c.l.b16 %v4743
          %v5607 = vunpack.c.h.b16 %v4743
          %v5608 = vunpack.c.l.b16 %v4744
          %v5609 = vunpack.c.h.b16 %v4744
          %v5610 = vunpack.c.l.b16 %v4745
          %v5611 = vunpack.c.h.b16 %v4745
          %v5612 = vunpack.c.l.b16 %v4746
          %v5613 = vunpack.c.h.b16 %v4746
          %v5614 = vunpack.c.l.b16 %v4747
          %v5615 = vunpack.c.h.b16 %v4747
          %v5616 = vunpack.c.l.b16 %v4748
          %v5617 = vunpack.c.h.b16 %v4748
          %v5618 = vunpack.c.l.b16 %v4749
          %v5619 = vunpack.c.h.b16 %v4749
          %v5620 = vunpack.c.l.b16 %v4750
          %v5621 = vunpack.c.h.b16 %v4750
          %v5622 = vunpack.c.l.b16 %v4751
          %v5623 = vunpack.c.h.b16 %v4751
          %v5624 = vunpack.c.l.b16 %v4752
          %v5625 = vunpack.c.h.b16 %v4752
          %v5626 = vunpack.c.l.b16 %v4753
          %v5627 = vunpack.c.h.b16 %v4753
          %v5628 = vunpack.c.l.b16 %v4754
          %v5629 = vunpack.c.h.b16 %v4754
          %v5630 = vunpack.c.l.b16 %v4755
          %v5631 = vunpack.c.h.b16 %v4755
          %v5632 = vunpack.c.l.b16 %v4756
          %v5633 = vunpack.c.h.b16 %v4756
          %v5634 = vunpack.c.l.b16 %v4757
          %v5635 = vunpack.c.h.b16 %v4757
          %v5636 = vunpack.c.l.b16 %v4758
          %v5637 = vunpack.c.h.b16 %v4758
          %v5638 = vunpack.c.l.b16 %v4759
          %v5639 = vunpack.c.h.b16 %v4759
          %v5640 = vunpack.c.l.b16 %v4760
          %v5641 = vunpack.c.h.b16 %v4760
          %v5642 = vunpack.c.l.b16 %v4761
          %v5643 = vunpack.c.h.b16 %v4761
          %v5644 = vunpack.c.l.b16 %v4762
          %v5645 = vunpack.c.h.b16 %v4762
          %v5646 = vunpack.c.l.b16 %v4763
          %v5647 = vunpack.c.h.b16 %v4763
          %v5648 = vunpack.c.l.b16 %v4764
          %v5649 = vunpack.c.h.b16 %v4764
          %v5650 = vunpack.c.l.b16 %v4765
          %v5651 = vunpack.c.h.b16 %v4765
          %v5652 = vunpack.c.l.b16 %v4766
          %v5653 = vunpack.c.h.b16 %v4766
          %v5654 = vunpack.c.l.b16 %v4767
          %v5655 = vunpack.c.h.b16 %v4767
          %v5656 = vunpack.c.l.b16 %v4768
          %v5657 = vunpack.c.h.b16 %v4768
          %v5658 = vunpack.c.l.b16 %v4769
          %v5659 = vunpack.c.h.b16 %v4769
          %v5660 = vunpack.c.l.b16 %v4770
          %v5661 = vunpack.c.h.b16 %v4770
          %v5662 = vunpack.c.l.b16 %v4771
          %v5663 = vunpack.c.h.b16 %v4771
          %v5664 = vunpack.c.l.b16 %v4772
          %v5665 = vunpack.c.h.b16 %v4772
          %v5666 = vunpack.c.l.b16 %v4773
          %v5667 = vunpack.c.h.b16 %v4773
          %v5668 = vunpack.c.l.b16 %v4774
          %v5669 = vunpack.c.h.b16 %v4774
          %v5670 = vunpack.c.l.b16 %v4775
          %v5671 = vunpack.c.h.b16 %v4775
          %v5672 = vunpack.c.l.b16 %v4776
          %v5673 = vunpack.c.h.b16 %v4776
          %v5674 = vunpack.c.l.b16 %v4777
          %v5675 = vunpack.c.h.b16 %v4777
          %v5676 = vunpack.c.l.b16 %v4778
          %v5677 = vunpack.c.h.b16 %v4778
          %v5678 = vunpack.c.l.b16 %v4779
          %v5679 = vunpack.c.h.b16 %v4779
          %v5680 = vunpack.c.l.b16 %v4780
          %v5681 = vunpack.c.h.b16 %v4780
          %v5682 = vunpack.c.l.b16 %v4781
          %v5683 = vunpack.c.h.b16 %v4781
          %v5684 = vunpack.c.l.b16 %v4782
          %v5685 = vunpack.c.h.b16 %v4782
          %v5686 = vunpack.c.l.b16 %v4783
          %v5687 = vunpack.c.h.b16 %v4783
          %v5688 = vunpack.c.l.b16 %v4784
          %v5689 = vunpack.c.h.b16 %v4784
          %v5690 = vunpack.c.l.b16 %v4785
          %v5691 = vunpack.c.h.b16 %v4785
          %v5692 = vunpack.c.l.b16 %v4786
          %v5693 = vunpack.c.h.b16 %v4786
          %v5694 = vunpack.c.l.b16 %v4787
          %v5695 = vunpack.c.h.b16 %v4787
          %v5696 = vunpack.c.l.b16 %v4788
          %v5697 = vunpack.c.h.b16 %v4788
          %v5698 = vunpack.c.l.b16 %v4789
          %v5699 = vunpack.c.h.b16 %v4789
          %v5700 = vunpack.c.l.b16 %v4790
          %v5701 = vunpack.c.h.b16 %v4790
          %v5702 = vunpack.c.l.b16 %v4791
          %v5703 = vunpack.c.h.b16 %v4791
          %v5704 = vunpack.c.l.b16 %v4792
          %v5705 = vunpack.c.h.b16 %v4792
          %v5706 = vunpack.c.l.b16 %v4793
          %v5707 = vunpack.c.h.b16 %v4793
          %v5708 = vunpack.c.l.b16 %v4794
          %v5709 = vunpack.c.h.b16 %v4794
          %v5710 = vunpack.c.l.b16 %v4795
          %v5711 = vunpack.c.h.b16 %v4795
          %v5712 = vunpack.c.l.b16 %v4796
          %v5713 = vunpack.c.h.b16 %v4796
          %v5714 = vunpack.c.l.b16 %v4797
          %v5715 = vunpack.c.h.b16 %v4797
          %v5716 = vunpack.c.l.b16 %v4798
          %v5717 = vunpack.c.h.b16 %v4798
          %v5718 = vunpack.c.l.b16 %v4799
          %v5719 = vunpack.c.h.b16 %v4799
          %v5720 = vunpack.c.l.b16 %v4800
          %v5721 = vunpack.c.h.b16 %v4800
          %v5722 = vunpack.c.l.b16 %v4801
          %v5723 = vunpack.c.h.b16 %v4801
          %v5724 = vunpack.c.l.b16 %v4802
          %v5725 = vunpack.c.h.b16 %v4802
          %v5726 = vunpack.c.l.b16 %v4803
          %v5727 = vunpack.c.h.b16 %v4803
          %v5728 = vunpack.c.l.b16 %v4804
          %v5729 = vunpack.c.h.b16 %v4804
          %v5730 = vunpack.c.l.b16 %v4805
          %v5731 = vunpack.c.h.b16 %v4805
          %v5732 = vunpack.c.l.b16 %v4806
          %v5733 = vunpack.c.h.b16 %v4806
          %v5734 = vunpack.c.l.b16 %v4807
          %v5735 = vunpack.c.h.b16 %v4807
          %v5736 = vunpack.c.l.b16 %v4808
          %v5737 = vunpack.c.h.b16 %v4808
          %v5738 = vunpack.c.l.b16 %v4809
          %v5739 = vunpack.c.h.b16 %v4809
          %v5740 = vunpack.c.l.b16 %v4810
          %v5741 = vunpack.c.h.b16 %v4810
          %v5742 = vunpack.c.l.b16 %v4811
          %v5743 = vunpack.c.h.b16 %v4811
          %v5744 = vunpack.c.l.b16 %v4812
          %v5745 = vunpack.c.h.b16 %v4812
          %v5746 = vunpack.c.l.b16 %v4813
          %v5747 = vunpack.c.h.b16 %v4813
          %v5748 = vunpack.c.l.b16 %v4814
          %v5749 = vunpack.c.h.b16 %v4814
          %v5750 = vunpack.c.l.b16 %v4815
          %v5751 = vunpack.c.h.b16 %v4815
          %v5752 = vunpack.c.l.b16 %v4816
          %v5753 = vunpack.c.h.b16 %v4816
          %v5754 = vunpack.c.l.b16 %v4817
          %v5755 = vunpack.c.h.b16 %v4817
          %v5756 = vunpack.c.l.b16 %v4818
          %v5757 = vunpack.c.h.b16 %v4818
          %v5758 = vunpack.c.l.b16 %v4819
          %v5759 = vunpack.c.h.b16 %v4819
          %v5760 = vunpack.c.l.b16 %v4820
          %v5761 = vunpack.c.h.b16 %v4820
          %v5762 = vunpack.c.l.b16 %v4821
          %v5763 = vunpack.c.h.b16 %v4821
          %v5764 = vunpack.c.l.b16 %v4822
          %v5765 = vunpack.c.h.b16 %v4822
          %v5766 = vunpack.c.l.b16 %v4823
          %v5767 = vunpack.c.h.b16 %v4823
          %v5768 = vunpack.c.l.b16 %v4824
          %v5769 = vunpack.c.h.b16 %v4824
          %v5770 = vunpack.c.l.b16 %v4825
          %v5771 = vunpack.c.h.b16 %v4825
          %v5772 = vunpack.c.l.b16 %v4826
          %v5773 = vunpack.c.h.b16 %v4826
          %v5774 = vunpack.c.l.b16 %v4827
          %v5775 = vunpack.c.h.b16 %v4827
          %v5776 = vunpack.c.l.b16 %v4828
          %v5777 = vunpack.c.h.b16 %v4828
          %v5778 = vunpack.c.l.b16 %v4829
          %v5779 = vunpack.c.h.b16 %v4829
          %v5780 = vunpack.c.l.b16 %v4830
          %v5781 = vunpack.c.h.b16 %v4830
          %v5782 = vunpack.c.l.b16 %v4831
          %v5783 = vunpack.c.h.b16 %v4831
          %v5784 = vunpack.c.l.b16 %v4832
          %v5785 = vunpack.c.h.b16 %v4832
          %v5786 = vunpack.c.l.b16 %v4833
          %v5787 = vunpack.c.h.b16 %v4833
          %v5788 = vunpack.c.l.b16 %v4834
          %v5789 = vunpack.c.h.b16 %v4834
          %v5790 = vunpack.c.l.b16 %v4835
          %v5791 = vunpack.c.h.b16 %v4835
          %v5792 = vunpack.c.l.b16 %v4836
          %v5793 = vunpack.c.h.b16 %v4836
          %v5794 = vunpack.c.l.b16 %v4837
          %v5795 = vunpack.c.h.b16 %v4837
          %v5796 = vunpack.c.l.b16 %v4838
          %v5797 = vunpack.c.h.b16 %v4838
          %v5798 = vunpack.c.l.b16 %v4839
          %v5799 = vunpack.c.h.b16 %v4839
          %v5800 = vunpack.c.l.b16 %v4840
          %v5801 = vunpack.c.h.b16 %v4840
          %v5802 = vpack.c.b16 %v5166, %v5162
          %v5803 = vpack.c.b16 %v5167, %v5163
          %v5804 = vpack.c.b16 %v5168, %v5164
          %v5805 = vpack.c.b16 %v5169, %v5165
          %v5806 = vpack.c.b16 %v5174, %v5170
          %v5807 = vpack.c.b16 %v5175, %v5171
          %v5808 = vpack.c.b16 %v5176, %v5172
          %v5809 = vpack.c.b16 %v5177, %v5173
          %v5810 = vpack.c.b16 %v5182, %v5178
          %v5811 = vpack.c.b16 %v5183, %v5179
          %v5812 = vpack.c.b16 %v5184, %v5180
          %v5813 = vpack.c.b16 %v5185, %v5181
          %v5814 = vpack.c.b16 %v5190, %v5186
          %v5815 = vpack.c.b16 %v5191, %v5187
          %v5816 = vpack.c.b16 %v5192, %v5188
          %v5817 = vpack.c.b16 %v5193, %v5189
          %v5818 = vpack.c.b16 %v5198, %v5194
          %v5819 = vpack.c.b16 %v5199, %v5195
          %v5820 = vpack.c.b16 %v5200, %v5196
          %v5821 = vpack.c.b16 %v5201, %v5197
          %v5822 = vpack.c.b16 %v5206, %v5202
          %v5823 = vpack.c.b16 %v5207, %v5203
          %v5824 = vpack.c.b16 %v5208, %v5204
          %v5825 = vpack.c.b16 %v5209, %v5205
          %v5826 = vpack.c.b16 %v5214, %v5210
          %v5827 = vpack.c.b16 %v5215, %v5211
          %v5828 = vpack.c.b16 %v5216, %v5212
          %v5829 = vpack.c.b16 %v5217, %v5213
          %v5830 = vpack.c.b16 %v5222, %v5218
          %v5831 = vpack.c.b16 %v5223, %v5219
          %v5832 = vpack.c.b16 %v5224, %v5220
          %v5833 = vpack.c.b16 %v5225, %v5221
          %v5834 = vpack.c.b16 %v5230, %v5226
          %v5835 = vpack.c.b16 %v5231, %v5227
          %v5836 = vpack.c.b16 %v5232, %v5228
          %v5837 = vpack.c.b16 %v5233, %v5229
          %v5838 = vpack.c.b16 %v5238, %v5234
          %v5839 = vpack.c.b16 %v5239, %v5235
          %v5840 = vpack.c.b16 %v5240, %v5236
          %v5841 = vpack.c.b16 %v5241, %v5237
          %v5842 = vpack.c.b16 %v5246, %v5242
          %v5843 = vpack.c.b16 %v5247, %v5243
          %v5844 = vpack.c.b16 %v5248, %v5244
          %v5845 = vpack.c.b16 %v5249, %v5245
          %v5846 = vpack.c.b16 %v5254, %v5250
          %v5847 = vpack.c.b16 %v5255, %v5251
          %v5848 = vpack.c.b16 %v5256, %v5252
          %v5849 = vpack.c.b16 %v5257, %v5253
          %v5850 = vpack.c.b16 %v5262, %v5258
          %v5851 = vpack.c.b16 %v5263, %v5259
          %v5852 = vpack.c.b16 %v5264, %v5260
          %v5853 = vpack.c.b16 %v5265, %v5261
          %v5854 = vpack.c.b16 %v5270, %v5266
          %v5855 = vpack.c.b16 %v5271, %v5267
          %v5856 = vpack.c.b16 %v5272, %v5268
          %v5857 = vpack.c.b16 %v5273, %v5269
          %v5858 = vpack.c.b16 %v5278, %v5274
          %v5859 = vpack.c.b16 %v5279, %v5275
          %v5860 = vpack.c.b16 %v5280, %v5276
          %v5861 = vpack.c.b16 %v5281, %v5277
          %v5862 = vpack.c.b16 %v5286, %v5282
          %v5863 = vpack.c.b16 %v5287, %v5283
          %v5864 = vpack.c.b16 %v5288, %v5284
          %v5865 = vpack.c.b16 %v5289, %v5285
          %v5866 = vpack.c.b16 %v5294, %v5290
          %v5867 = vpack.c.b16 %v5295, %v5291
          %v5868 = vpack.c.b16 %v5296, %v5292
          %v5869 = vpack.c.b16 %v5297, %v5293
          %v5870 = vpack.c.b16 %v5302, %v5298
          %v5871 = vpack.c.b16 %v5303, %v5299
          %v5872 = vpack.c.b16 %v5304, %v5300
          %v5873 = vpack.c.b16 %v5305, %v5301
          %v5874 = vpack.c.b16 %v5310, %v5306
          %v5875 = vpack.c.b16 %v5311, %v5307
          %v5876 = vpack.c.b16 %v5312, %v5308
          %v5877 = vpack.c.b16 %v5313, %v5309
          %v5878 = vpack.c.b16 %v5318, %v5314
          %v5879 = vpack.c.b16 %v5319, %v5315
          %v5880 = vpack.c.b16 %v5320, %v5316
          %v5881 = vpack.c.b16 %v5321, %v5317
          %v5882 = vpack.c.b16 %v5326, %v5322
          %v5883 = vpack.c.b16 %v5327, %v5323
          %v5884 = vpack.c.b16 %v5328, %v5324
          %v5885 = vpack.c.b16 %v5329, %v5325
          %v5886 = vpack.c.b16 %v5334, %v5330
          %v5887 = vpack.c.b16 %v5335, %v5331
          %v5888 = vpack.c.b16 %v5336, %v5332
          %v5889 = vpack.c.b16 %v5337, %v5333
          %v5890 = vpack.c.b16 %v5342, %v5338
          %v5891 = vpack.c.b16 %v5343, %v5339
          %v5892 = vpack.c.b16 %v5344, %v5340
          %v5893 = vpack.c.b16 %v5345, %v5341
          %v5894 = vpack.c.b16 %v5350, %v5346
          %v5895 = vpack.c.b16 %v5351, %v5347
          %v5896 = vpack.c.b16 %v5352, %v5348
          %v5897 = vpack.c.b16 %v5353, %v5349
          %v5898 = vpack.c.b16 %v5358, %v5354
          %v5899 = vpack.c.b16 %v5359, %v5355
          %v5900 = vpack.c.b16 %v5360, %v5356
          %v5901 = vpack.c.b16 %v5361, %v5357
          %v5902 = vpack.c.b16 %v5366, %v5362
          %v5903 = vpack.c.b16 %v5367, %v5363
          %v5904 = vpack.c.b16 %v5368, %v5364
          %v5905 = vpack.c.b16 %v5369, %v5365
          %v5906 = vpack.c.b16 %v5374, %v5370
          %v5907 = vpack.c.b16 %v5375, %v5371
          %v5908 = vpack.c.b16 %v5376, %v5372
          %v5909 = vpack.c.b16 %v5377, %v5373
          %v5910 = vpack.c.b16 %v5382, %v5378
          %v5911 = vpack.c.b16 %v5383, %v5379
          %v5912 = vpack.c.b16 %v5384, %v5380
          %v5913 = vpack.c.b16 %v5385, %v5381
          %v5914 = vpack.c.b16 %v5390, %v5386
          %v5915 = vpack.c.b16 %v5391, %v5387
          %v5916 = vpack.c.b16 %v5392, %v5388
          %v5917 = vpack.c.b16 %v5393, %v5389
          %v5918 = vpack.c.b16 %v5398, %v5394
          %v5919 = vpack.c.b16 %v5399, %v5395
          %v5920 = vpack.c.b16 %v5400, %v5396
          %v5921 = vpack.c.b16 %v5401, %v5397
          %v5922 = vpack.c.b16 %v5406, %v5402
          %v5923 = vpack.c.b16 %v5407, %v5403
          %v5924 = vpack.c.b16 %v5408, %v5404
          %v5925 = vpack.c.b16 %v5409, %v5405
          %v5926 = vpack.c.b16 %v5414, %v5410
          %v5927 = vpack.c.b16 %v5415, %v5411
          %v5928 = vpack.c.b16 %v5416, %v5412
          %v5929 = vpack.c.b16 %v5417, %v5413
          %v5930 = vpack.c.b16 %v5422, %v5418
          %v5931 = vpack.c.b16 %v5423, %v5419
          %v5932 = vpack.c.b16 %v5424, %v5420
          %v5933 = vpack.c.b16 %v5425, %v5421
          %v5934 = vpack.c.b16 %v5430, %v5426
          %v5935 = vpack.c.b16 %v5431, %v5427
          %v5936 = vpack.c.b16 %v5432, %v5428
          %v5937 = vpack.c.b16 %v5433, %v5429
          %v5938 = vpack.c.b16 %v5438, %v5434
          %v5939 = vpack.c.b16 %v5439, %v5435
          %v5940 = vpack.c.b16 %v5440, %v5436
          %v5941 = vpack.c.b16 %v5441, %v5437
          %v5942 = vpack.c.b16 %v5446, %v5442
          %v5943 = vpack.c.b16 %v5447, %v5443
          %v5944 = vpack.c.b16 %v5448, %v5444
          %v5945 = vpack.c.b16 %v5449, %v5445
          %v5946 = vpack.c.b16 %v5454, %v5450
          %v5947 = vpack.c.b16 %v5455, %v5451
          %v5948 = vpack.c.b16 %v5456, %v5452
          %v5949 = vpack.c.b16 %v5457, %v5453
          %v5950 = vpack.c.b16 %v5462, %v5458
          %v5951 = vpack.c.b16 %v5463, %v5459
          %v5952 = vpack.c.b16 %v5464, %v5460
          %v5953 = vpack.c.b16 %v5465, %v5461
          %v5954 = vpack.c.b16 %v5470, %v5466
          %v5955 = vpack.c.b16 %v5471, %v5467
          %v5956 = vpack.c.b16 %v5472, %v5468
          %v5957 = vpack.c.b16 %v5473, %v5469
          %v5958 = vpack.c.b16 %v5478, %v5474
          %v5959 = vpack.c.b16 %v5479, %v5475
          %v5960 = vpack.c.b16 %v5480, %v5476
          %v5961 = vpack.c.b16 %v5481, %v5477
          %v5962 = vpack.c.b16 %v5486, %v5482
          %v5963 = vpack.c.b16 %v5487, %v5483
          %v5964 = vpack.c.b16 %v5488, %v5484
          %v5965 = vpack.c.b16 %v5489, %v5485
          %v5966 = vpack.c.b16 %v5494, %v5490
          %v5967 = vpack.c.b16 %v5495, %v5491
          %v5968 = vpack.c.b16 %v5496, %v5492
          %v5969 = vpack.c.b16 %v5497, %v5493
          %v5970 = vpack.c.b16 %v5502, %v5498
          %v5971 = vpack.c.b16 %v5503, %v5499
          %v5972 = vpack.c.b16 %v5504, %v5500
          %v5973 = vpack.c.b16 %v5505, %v5501
          %v5974 = vpack.c.b16 %v5510, %v5506
          %v5975 = vpack.c.b16 %v5511, %v5507
          %v5976 = vpack.c.b16 %v5512, %v5508
          %v5977 = vpack.c.b16 %v5513, %v5509
          %v5978 = vpack.c.b16 %v5518, %v5514
          %v5979 = vpack.c.b16 %v5519, %v5515
          %v5980 = vpack.c.b16 %v5520, %v5516
          %v5981 = vpack.c.b16 %v5521, %v5517
          %v5982 = vpack.c.b16 %v5526, %v5522
          %v5983 = vpack.c.b16 %v5527, %v5523
          %v5984 = vpack.c.b16 %v5528, %v5524
          %v5985 = vpack.c.b16 %v5529, %v5525
          %v5986 = vpack.c.b16 %v5534, %v5530
          %v5987 = vpack.c.b16 %v5535, %v5531
          %v5988 = vpack.c.b16 %v5536, %v5532
          %v5989 = vpack.c.b16 %v5537, %v5533
          %v5990 = vpack.c.b16 %v5542, %v5538
          %v5991 = vpack.c.b16 %v5543, %v5539
          %v5992 = vpack.c.b16 %v5544, %v5540
          %v5993 = vpack.c.b16 %v5545, %v5541
          %v5994 = vpack.c.b16 %v5550, %v5546
          %v5995 = vpack.c.b16 %v5551, %v5547
          %v5996 = vpack.c.b16 %v5552, %v5548
          %v5997 = vpack.c.b16 %v5553, %v5549
          %v5998 = vpack.c.b16 %v5558, %v5554
          %v5999 = vpack.c.b16 %v5559, %v5555
          %v6000 = vpack.c.b16 %v5560, %v5556
          %v6001 = vpack.c.b16 %v5561, %v5557
          %v6002 = vpack.c.b16 %v5566, %v5562
          %v6003 = vpack.c.b16 %v5567, %v5563
          %v6004 = vpack.c.b16 %v5568, %v5564
          %v6005 = vpack.c.b16 %v5569, %v5565
          %v6006 = vpack.c.b16 %v5574, %v5570
          %v6007 = vpack.c.b16 %v5575, %v5571
          %v6008 = vpack.c.b16 %v5576, %v5572
          %v6009 = vpack.c.b16 %v5577, %v5573
          %v6010 = vpack.c.b16 %v5582, %v5578
          %v6011 = vpack.c.b16 %v5583, %v5579
          %v6012 = vpack.c.b16 %v5584, %v5580
          %v6013 = vpack.c.b16 %v5585, %v5581
          %v6014 = vpack.c.b16 %v5590, %v5586
          %v6015 = vpack.c.b16 %v5591, %v5587
          %v6016 = vpack.c.b16 %v5592, %v5588
          %v6017 = vpack.c.b16 %v5593, %v5589
          %v6018 = vpack.c.b16 %v5598, %v5594
          %v6019 = vpack.c.b16 %v5599, %v5595
          %v6020 = vpack.c.b16 %v5600, %v5596
          %v6021 = vpack.c.b16 %v5601, %v5597
          %v6022 = vpack.c.b16 %v5606, %v5602
          %v6023 = vpack.c.b16 %v5607, %v5603
          %v6024 = vpack.c.b16 %v5608, %v5604
          %v6025 = vpack.c.b16 %v5609, %v5605
          %v6026 = vpack.c.b16 %v5614, %v5610
          %v6027 = vpack.c.b16 %v5615, %v5611
          %v6028 = vpack.c.b16 %v5616, %v5612
          %v6029 = vpack.c.b16 %v5617, %v5613
          %v6030 = vpack.c.b16 %v5622, %v5618
          %v6031 = vpack.c.b16 %v5623, %v5619
          %v6032 = vpack.c.b16 %v5624, %v5620
          %v6033 = vpack.c.b16 %v5625, %v5621
          %v6034 = vpack.c.b16 %v5630, %v5626
          %v6035 = vpack.c.b16 %v5631, %v5627
          %v6036 = vpack.c.b16 %v5632, %v5628
          %v6037 = vpack.c.b16 %v5633, %v5629
          %v6038 = vpack.c.b16 %v5638, %v5634
          %v6039 = vpack.c.b16 %v5639, %v5635
          %v6040 = vpack.c.b16 %v5640, %v5636
          %v6041 = vpack.c.b16 %v5641, %v5637
          %v6042 = vpack.c.b16 %v5646, %v5642
          %v6043 = vpack.c.b16 %v5647, %v5643
          %v6044 = vpack.c.b16 %v5648, %v5644
          %v6045 = vpack.c.b16 %v5649, %v5645
          %v6046 = vpack.c.b16 %v5654, %v5650
          %v6047 = vpack.c.b16 %v5655, %v5651
          %v6048 = vpack.c.b16 %v5656, %v5652
          %v6049 = vpack.c.b16 %v5657, %v5653
          %v6050 = vpack.c.b16 %v5662, %v5658
          %v6051 = vpack.c.b16 %v5663, %v5659
          %v6052 = vpack.c.b16 %v5664, %v5660
          %v6053 = vpack.c.b16 %v5665, %v5661
          %v6054 = vpack.c.b16 %v5670, %v5666
          %v6055 = vpack.c.b16 %v5671, %v5667
          %v6056 = vpack.c.b16 %v5672, %v5668
          %v6057 = vpack.c.b16 %v5673, %v5669
          %v6058 = vpack.c.b16 %v5678, %v5674
          %v6059 = vpack.c.b16 %v5679, %v5675
          %v6060 = vpack.c.b16 %v5680, %v5676
          %v6061 = vpack.c.b16 %v5681, %v5677
          %v6062 = vpack.c.b16 %v5686, %v5682
          %v6063 = vpack.c.b16 %v5687, %v5683
          %v6064 = vpack.c.b16 %v5688, %v5684
          %v6065 = vpack.c.b16 %v5689, %v5685
          %v6066 = vpack.c.b16 %v5694, %v5690
          %v6067 = vpack.c.b16 %v5695, %v5691
          %v6068 = vpack.c.b16 %v5696, %v5692
          %v6069 = vpack.c.b16 %v5697, %v5693
          %v6070 = vpack.c.b16 %v5702, %v5698
          %v6071 = vpack.c.b16 %v5703, %v5699
          %v6072 = vpack.c.b16 %v5704, %v5700
          %v6073 = vpack.c.b16 %v5705, %v5701
          %v6074 = vpack.c.b16 %v5710, %v5706
          %v6075 = vpack.c.b16 %v5711, %v5707
          %v6076 = vpack.c.b16 %v5712, %v5708
          %v6077 = vpack.c.b16 %v5713, %v5709
          %v6078 = vpack.c.b16 %v5718, %v5714
          %v6079 = vpack.c.b16 %v5719, %v5715
          %v6080 = vpack.c.b16 %v5720, %v5716
          %v6081 = vpack.c.b16 %v5721, %v5717
          %v6082 = vpack.c.b16 %v5726, %v5722
          %v6083 = vpack.c.b16 %v5727, %v5723
          %v6084 = vpack.c.b16 %v5728, %v5724
          %v6085 = vpack.c.b16 %v5729, %v5725
          %v6086 = vpack.c.b16 %v5734, %v5730
          %v6087 = vpack.c.b16 %v5735, %v5731
          %v6088 = vpack.c.b16 %v5736, %v5732
          %v6089 = vpack.c.b16 %v5737, %v5733
          %v6090 = vpack.c.b16 %v5742, %v5738
          %v6091 = vpack.c.b16 %v5743, %v5739
          %v6092 = vpack.c.b16 %v5744, %v5740
          %v6093 = vpack.c.b16 %v5745, %v5741
          %v6094 = vpack.c.b16 %v5750, %v5746
          %v6095 = vpack.c.b16 %v5751, %v5747
          %v6096 = vpack.c.b16 %v5752, %v5748
          %v6097 = vpack.c.b16 %v5753, %v5749
          %v6098 = vpack.c.b16 %v5758, %v5754
          %v6099 = vpack.c.b16 %v5759, %v5755
          %v6100 = vpack.c.b16 %v5760, %v5756
          %v6101 = vpack.c.b16 %v5761, %v5757
          %v6102 = vpack.c.b16 %v5766, %v5762
          %v6103 = vpack.c.b16 %v5767, %v5763
          %v6104 = vpack.c.b16 %v5768, %v5764
          %v6105 = vpack.c.b16 %v5769, %v5765
          %v6106 = vpack.c.b16 %v5774, %v5770
          %v6107 = vpack.c.b16 %v5775, %v5771
          %v6108 = vpack.c.b16 %v5776, %v5772
          %v6109 = vpack.c.b16 %v5777, %v5773
          %v6110 = vpack.c.b16 %v5782, %v5778
          %v6111 = vpack.c.b16 %v5783, %v5779
          %v6112 = vpack.c.b16 %v5784, %v5780
          %v6113 = vpack.c.b16 %v5785, %v5781
          %v6114 = vpack.c.b16 %v5790, %v5786
          %v6115 = vpack.c.b16 %v5791, %v5787
          %v6116 = vpack.c.b16 %v5792, %v5788
          %v6117 = vpack.c.b16 %v5793, %v5789
          %v6118 = vpack.c.b16 %v5798, %v5794
          %v6119 = vpack.c.b16 %v5799, %v5795
          %v6120 = vpack.c.b16 %v5800, %v5796
          %v6121 = vpack.c.b16 %v5801, %v5797
          %v6443 = vlaneseq
          %v6444 = vshrl.u32 %v6443, 7
          %v6445 = vsub.s32 0, %v6444
          %v6446 = vrot.slane %v4841, %v6445
          %v6447 = vlaneseq
          %v6448 = vshrl.u32 %v6447, 7
          %v6449 = vsub.s32 1, %v6448
          %v6450 = vrot.slane %v4841, %v6449
          %v6451 = vlaneseq
          %v6452 = vshrl.u32 %v6451, 7
          %v6453 = vsub.s32 2, %v6452
          %v6454 = vrot.slane %v4841, %v6453
          %v6455 = vlaneseq
          %v6456 = vshrl.u32 %v6455, 7
          %v6457 = vsub.s32 3, %v6456
          %v6458 = vrot.slane %v4841, %v6457
          %6463 = vmatprep.subr.bf16.mxu0 %v5803
          %6464 = vmatpush1.bf16.msra.mxu0 %v5802
          %6465 = vmatprep.subr.bf16.mxu0 %v5807
          %6466 = vmatpush1.bf16.msra.mxu0 %v5806
          %6467 = vmatprep.subr.bf16.mxu0 %v5811
          %6468 = vmatpush1.bf16.msra.mxu0 %v5810
          %6469 = vmatprep.subr.bf16.mxu0 %v5815
          %6470 = vmatpush1.bf16.msra.mxu0 %v5814
          %6471 = vmatprep.subr.bf16.mxu0 %v5819
          %6472 = vmatpush1.bf16.msra.mxu0 %v5818
          %6473 = vmatprep.subr.bf16.mxu0 %v5823
          %6474 = vmatpush1.bf16.msra.mxu0 %v5822
          %6475 = vmatprep.subr.bf16.mxu0 %v5827
          %6476 = vmatpush1.bf16.msra.mxu0 %v5826
          %6477 = vmatprep.subr.bf16.mxu0 %v5831
          %6478 = vmatpush1.bf16.msra.mxu0 %v5830
          %6479 = vmatprep.subr.bf16.mxu0 %v5835
          %6480 = vmatpush1.bf16.msra.mxu0 %v5834
          %6481 = vmatprep.subr.bf16.mxu0 %v5839
          %6482 = vmatpush1.bf16.msra.mxu0 %v5838
          %6483 = vmatprep.subr.bf16.mxu0 %v5843
          %6484 = vmatpush1.bf16.msra.mxu0 %v5842
          %6485 = vmatprep.subr.bf16.mxu0 %v5847
          %6486 = vmatpush1.bf16.msra.mxu0 %v5846
          %6487 = vmatprep.subr.bf16.mxu0 %v5851
          %6488 = vmatpush1.bf16.msra.mxu0 %v5850
          %6489 = vmatprep.subr.bf16.mxu0 %v5855
          %6490 = vmatpush1.bf16.msra.mxu0 %v5854
          %6491 = vmatprep.subr.bf16.mxu0 %v5859
          %6492 = vmatpush1.bf16.msra.mxu0 %v5858
          %6493 = vmatprep.subr.bf16.mxu0 %v5863
          %6494 = vmatpush1.bf16.msra.mxu0 %v5862
          %6495 = vmatprep.mubr.bf16.mxu0 %v4512
          %6496 = vmatmul.mubr.bf16.gmra.mrb[0].mxu0 %v4511
          %v6497 = vpop.f32.mrb[0].mxu0
          %v6498 = vadd.f32 %v6446, %v6497
          %v6499 = vpop.f32.mrb[0].mxu0
          %v6500 = vadd.f32 %v6450, %v6499
          %v6501 = vpop.f32.mrb[0].mxu0
          %v6502 = vpop.f32.mrb[0].mxu0
          %6503 = vdwg.mxu0
          %6504 = vmatprep.subr.bf16.mxu0 %v5867
          %6505 = vmatpush1.bf16.msra.mxu0 %v5866
          %6506 = vmatprep.subr.bf16.mxu0 %v5871
          %6507 = vmatpush1.bf16.msra.mxu0 %v5870
          %6508 = vmatprep.subr.bf16.mxu0 %v5875
          %6509 = vmatpush1.bf16.msra.mxu0 %v5874
          %6510 = vmatprep.subr.bf16.mxu0 %v5879
          %6511 = vmatpush1.bf16.msra.mxu0 %v5878
          %6512 = vmatprep.subr.bf16.mxu0 %v5883
          %6513 = vmatpush1.bf16.msra.mxu0 %v5882
          %6514 = vmatprep.subr.bf16.mxu0 %v5887
          %6515 = vmatpush1.bf16.msra.mxu0 %v5886
          %6516 = vmatprep.subr.bf16.mxu0 %v5891
          %6517 = vmatpush1.bf16.msra.mxu0 %v5890
          %6518 = vmatprep.subr.bf16.mxu0 %v5895
          %6519 = vmatpush1.bf16.msra.mxu0 %v5894
          %6520 = vmatprep.subr.bf16.mxu0 %v5899
          %6521 = vmatpush1.bf16.msra.mxu0 %v5898
          %6522 = vmatprep.subr.bf16.mxu0 %v5903
          %6523 = vmatpush1.bf16.msra.mxu0 %v5902
          %6524 = vmatprep.subr.bf16.mxu0 %v5907
          %6525 = vmatpush1.bf16.msra.mxu0 %v5906
          %6526 = vmatprep.subr.bf16.mxu0 %v5911
          %6527 = vmatpush1.bf16.msra.mxu0 %v5910
          %6528 = vmatprep.subr.bf16.mxu0 %v5915
          %6529 = vmatpush1.bf16.msra.mxu0 %v5914
          %6530 = vmatprep.subr.bf16.mxu0 %v5919
          %6531 = vmatpush1.bf16.msra.mxu0 %v5918
          %6532 = vmatprep.subr.bf16.mxu0 %v5923
          %6533 = vmatpush1.bf16.msra.mxu0 %v5922
          %6534 = vmatprep.subr.bf16.mxu0 %v5927
          %6535 = vmatpush1.bf16.msra.mxu0 %v5926
          %6536 = vmatprep.mubr.bf16.mxu0 %v4514
          %6537 = vmatmul.mubr.bf16.gmra.mrb[0].mxu0 %v4513
          %v6538 = vpop.f32.mrb[0].mxu0
          %v6539 = vadd.f32 %v6498, %v6538
          %v6540 = vpop.f32.mrb[0].mxu0
          %v6541 = vadd.f32 %v6500, %v6540
          %v6542 = vpop.f32.mrb[0].mxu0
          %v6543 = vpop.f32.mrb[0].mxu0
          %6544 = vdwg.mxu0
          %6545 = vmatprep.subr.bf16.mxu0 %v5931
          %6546 = vmatpush1.bf16.msra.mxu0 %v5930
          %6547 = vmatprep.subr.bf16.mxu0 %v5935
          %6548 = vmatpush1.bf16.msra.mxu0 %v5934
          %6549 = vmatprep.subr.bf16.mxu0 %v5939
          %6550 = vmatpush1.bf16.msra.mxu0 %v5938
          %6551 = vmatprep.subr.bf16.mxu0 %v5943
          %6552 = vmatpush1.bf16.msra.mxu0 %v5942
          %6553 = vmatprep.subr.bf16.mxu0 %v5947
          %6554 = vmatpush1.bf16.msra.mxu0 %v5946
          %6555 = vmatprep.subr.bf16.mxu0 %v5951
          %6556 = vmatpush1.bf16.msra.mxu0 %v5950
          %6557 = vmatprep.subr.bf16.mxu0 %v5955
          %6558 = vmatpush1.bf16.msra.mxu0 %v5954
          %6559 = vmatprep.subr.bf16.mxu0 %v5959
          %6560 = vmatpush1.bf16.msra.mxu0 %v5958
          %6561 = vmatprep.subr.bf16.mxu0 %v5963
          %6562 = vmatpush1.bf16.msra.mxu0 %v5962
          %6563 = vmatprep.subr.bf16.mxu0 %v5967
          %6564 = vmatpush1.bf16.msra.mxu0 %v5966
          %6565 = vmatprep.subr.bf16.mxu0 %v5971
          %6566 = vmatpush1.bf16.msra.mxu0 %v5970
          %6567 = vmatprep.subr.bf16.mxu0 %v5975
          %6568 = vmatpush1.bf16.msra.mxu0 %v5974
          %6569 = vmatprep.subr.bf16.mxu0 %v5979
          %6570 = vmatpush1.bf16.msra.mxu0 %v5978
          %6571 = vmatprep.subr.bf16.mxu0 %v5983
          %6572 = vmatpush1.bf16.msra.mxu0 %v5982
          %6573 = vmatprep.subr.bf16.mxu0 %v5987
          %6574 = vmatpush1.bf16.msra.mxu0 %v5986
          %6575 = vmatprep.subr.bf16.mxu0 %v5991
          %6576 = vmatpush1.bf16.msra.mxu0 %v5990
          %6577 = vmatprep.mubr.bf16.mxu0 %v4516
          %6578 = vmatmul.mubr.bf16.gmra.mrb[0].mxu0 %v4515
          %v6579 = vpop.f32.mrb[0].mxu0
          %v6580 = vadd.f32 %v6539, %v6579
          %v6581 = vpop.f32.mrb[0].mxu0
          %v6582 = vadd.f32 %v6541, %v6581
          %v6583 = vpop.f32.mrb[0].mxu0
          %v6584 = vpop.f32.mrb[0].mxu0
          %6585 = vdwg.mxu0
          %6586 = vmatprep.subr.bf16.mxu0 %v5995
          %6587 = vmatpush1.bf16.msra.mxu0 %v5994
          %6588 = vmatprep.subr.bf16.mxu0 %v5999
          %6589 = vmatpush1.bf16.msra.mxu0 %v5998
          %6590 = vmatprep.subr.bf16.mxu0 %v6003
          %6591 = vmatpush1.bf16.msra.mxu0 %v6002
          %6592 = vmatprep.subr.bf16.mxu0 %v6007
          %6593 = vmatpush1.bf16.msra.mxu0 %v6006
          %6594 = vmatprep.subr.bf16.mxu0 %v6011
          %6595 = vmatpush1.bf16.msra.mxu0 %v6010
          %6596 = vmatprep.subr.bf16.mxu0 %v6015
          %6597 = vmatpush1.bf16.msra.mxu0 %v6014
          %6598 = vmatprep.subr.bf16.mxu0 %v6019
          %6599 = vmatpush1.bf16.msra.mxu0 %v6018
          %6600 = vmatprep.subr.bf16.mxu0 %v6023
          %6601 = vmatpush1.bf16.msra.mxu0 %v6022
          %6602 = vmatprep.subr.bf16.mxu0 %v6027
          %6603 = vmatpush1.bf16.msra.mxu0 %v6026
          %6604 = vmatprep.subr.bf16.mxu0 %v6031
          %6605 = vmatpush1.bf16.msra.mxu0 %v6030
          %6606 = vmatprep.subr.bf16.mxu0 %v6035
          %6607 = vmatpush1.bf16.msra.mxu0 %v6034
          %6608 = vmatprep.subr.bf16.mxu0 %v6039
          %6609 = vmatpush1.bf16.msra.mxu0 %v6038
          %6610 = vmatprep.subr.bf16.mxu0 %v6043
          %6611 = vmatpush1.bf16.msra.mxu0 %v6042
          %6612 = vmatprep.subr.bf16.mxu0 %v6047
          %6613 = vmatpush1.bf16.msra.mxu0 %v6046
          %6614 = vmatprep.subr.bf16.mxu0 %v6051
          %6615 = vmatpush1.bf16.msra.mxu0 %v6050
          %6616 = vmatprep.subr.bf16.mxu0 %v6055
          %6617 = vmatpush1.bf16.msra.mxu0 %v6054
          %6618 = vmatprep.mubr.bf16.mxu0 %v4518
          %6619 = vmatmul.mubr.bf16.gmra.mrb[0].mxu0 %v4517
          %v6620 = vpop.f32.mrb[0].mxu0
          %v6621 = vadd.f32 %v6580, %v6620
          %v6622 = vpop.f32.mrb[0].mxu0
          %v6623 = vadd.f32 %v6582, %v6622
          %v6624 = vpop.f32.mrb[0].mxu0
          %v6625 = vpop.f32.mrb[0].mxu0
          %6626 = vdwg.mxu0
          %6627 = vmatprep.subr.bf16.mxu0 %v6059
          %6628 = vmatpush1.bf16.msra.mxu0 %v6058
          %6629 = vmatprep.subr.bf16.mxu0 %v6063
          %6630 = vmatpush1.bf16.msra.mxu0 %v6062
          %6631 = vmatprep.subr.bf16.mxu0 %v6067
          %6632 = vmatpush1.bf16.msra.mxu0 %v6066
          %6633 = vmatprep.subr.bf16.mxu0 %v6071
          %6634 = vmatpush1.bf16.msra.mxu0 %v6070
          %6635 = vmatprep.subr.bf16.mxu0 %v6075
          %6636 = vmatpush1.bf16.msra.mxu0 %v6074
          %6637 = vmatprep.subr.bf16.mxu0 %v6079
          %6638 = vmatpush1.bf16.msra.mxu0 %v6078
          %6639 = vmatprep.subr.bf16.mxu0 %v6083
          %6640 = vmatpush1.bf16.msra.mxu0 %v6082
          %6641 = vmatprep.subr.bf16.mxu0 %v6087
          %6642 = vmatpush1.bf16.msra.mxu0 %v6086
          %6643 = vmatprep.subr.bf16.mxu0 %v6091
          %6644 = vmatpush1.bf16.msra.mxu0 %v6090
          %6645 = vmatprep.subr.bf16.mxu0 %v6095
          %6646 = vmatpush1.bf16.msra.mxu0 %v6094
          %6647 = vmatprep.subr.bf16.mxu0 %v6099
          %6648 = vmatpush1.bf16.msra.mxu0 %v6098
          %6649 = vmatprep.subr.bf16.mxu0 %v6103
          %6650 = vmatpush1.bf16.msra.mxu0 %v6102
          %6651 = vmatprep.subr.bf16.mxu0 %v6107
          %6652 = vmatpush1.bf16.msra.mxu0 %v6106
          %6653 = vmatprep.subr.bf16.mxu0 %v6111
          %6654 = vmatpush1.bf16.msra.mxu0 %v6110
          %6655 = vmatprep.subr.bf16.mxu0 %v6115
          %6656 = vmatpush1.bf16.msra.mxu0 %v6114
          %6657 = vmatprep.subr.bf16.mxu0 %v6119
          %6658 = vmatpush1.bf16.msra.mxu0 %v6118
          %6659 = vmatprep.mubr.bf16.mxu0 %v4520
          %6660 = vmatmul.mubr.bf16.gmra.mrb[0].mxu0 %v4519
          %v6661 = vpop.f32.mrb[0].mxu0
          %v6662 = vadd.f32 %v6621, %v6661
          %v6663 = vpop.f32.mrb[0].mxu0
          %v6664 = vadd.f32 %v6623, %v6663
          %v6665 = vpop.f32.mrb[0].mxu0
          %v6666 = vpop.f32.mrb[0].mxu0
          %6667 = vdwg.mxu0
          %6668 = vmatprep.subr.bf16.mxu0 %v5805
          %6669 = vmatpush1.bf16.msra.mxu0 %v5804
          %6670 = vmatprep.subr.bf16.mxu0 %v5809
          %6671 = vmatpush1.bf16.msra.mxu0 %v5808
          %6672 = vmatprep.subr.bf16.mxu0 %v5813
          %6673 = vmatpush1.bf16.msra.mxu0 %v5812
          %6674 = vmatprep.subr.bf16.mxu0 %v5817
          %6675 = vmatpush1.bf16.msra.mxu0 %v5816
          %6676 = vmatprep.subr.bf16.mxu0 %v5821
          %6677 = vmatpush1.bf16.msra.mxu0 %v5820
          %6678 = vmatprep.subr.bf16.mxu0 %v5825
          %6679 = vmatpush1.bf16.msra.mxu0 %v5824
          %6680 = vmatprep.subr.bf16.mxu0 %v5829
          %6681 = vmatpush1.bf16.msra.mxu0 %v5828
          %6682 = vmatprep.subr.bf16.mxu0 %v5833
          %6683 = vmatpush1.bf16.msra.mxu0 %v5832
          %6684 = vmatprep.subr.bf16.mxu0 %v5837
          %6685 = vmatpush1.bf16.msra.mxu0 %v5836
          %6686 = vmatprep.subr.bf16.mxu0 %v5841
          %6687 = vmatpush1.bf16.msra.mxu0 %v5840
          %6688 = vmatprep.subr.bf16.mxu0 %v5845
          %6689 = vmatpush1.bf16.msra.mxu0 %v5844
          %6690 = vmatprep.subr.bf16.mxu0 %v5849
          %6691 = vmatpush1.bf16.msra.mxu0 %v5848
          %6692 = vmatprep.subr.bf16.mxu0 %v5853
          %6693 = vmatpush1.bf16.msra.mxu0 %v5852
          %6694 = vmatprep.subr.bf16.mxu0 %v5857
          %6695 = vmatpush1.bf16.msra.mxu0 %v5856
          %6696 = vmatprep.subr.bf16.mxu0 %v5861
          %6697 = vmatpush1.bf16.msra.mxu0 %v5860
          %6698 = vmatprep.subr.bf16.mxu0 %v5865
          %6699 = vmatpush1.bf16.msra.mxu0 %v5864
          %6700 = vmatprep.mubr.bf16.mxu0 %v4512
          %6701 = vmatmul.mubr.bf16.gmra.mrb[0].mxu0 %v4511
          %v6702 = vpop.f32.mrb[0].mxu0
          %v6703 = vadd.f32 %v6454, %v6702
          %v6704 = vpop.f32.mrb[0].mxu0
          %v6705 = vadd.f32 %v6458, %v6704
          %v6706 = vpop.f32.mrb[0].mxu0
          %v6707 = vpop.f32.mrb[0].mxu0
          %6708 = vdwg.mxu0
          %6709 = vmatprep.subr.bf16.mxu0 %v5869
          %6710 = vmatpush1.bf16.msra.mxu0 %v5868
          %6711 = vmatprep.subr.bf16.mxu0 %v5873
          %6712 = vmatpush1.bf16.msra.mxu0 %v5872
          %6713 = vmatprep.subr.bf16.mxu0 %v5877
          %6714 = vmatpush1.bf16.msra.mxu0 %v5876
          %6715 = vmatprep.subr.bf16.mxu0 %v5881
          %6716 = vmatpush1.bf16.msra.mxu0 %v5880
          %6717 = vmatprep.subr.bf16.mxu0 %v5885
          %6718 = vmatpush1.bf16.msra.mxu0 %v5884
          %6719 = vmatprep.subr.bf16.mxu0 %v5889
          %6720 = vmatpush1.bf16.msra.mxu0 %v5888
          %6721 = vmatprep.subr.bf16.mxu0 %v5893
          %6722 = vmatpush1.bf16.msra.mxu0 %v5892
          %6723 = vmatprep.subr.bf16.mxu0 %v5897
          %6724 = vmatpush1.bf16.msra.mxu0 %v5896
          %6725 = vmatprep.subr.bf16.mxu0 %v5901
          %6726 = vmatpush1.bf16.msra.mxu0 %v5900
          %6727 = vmatprep.subr.bf16.mxu0 %v5905
          %6728 = vmatpush1.bf16.msra.mxu0 %v5904
          %6729 = vmatprep.subr.bf16.mxu0 %v5909
          %6730 = vmatpush1.bf16.msra.mxu0 %v5908
          %6731 = vmatprep.subr.bf16.mxu0 %v5913
          %6732 = vmatpush1.bf16.msra.mxu0 %v5912
          %6733 = vmatprep.subr.bf16.mxu0 %v5917
          %6734 = vmatpush1.bf16.msra.mxu0 %v5916
          %6735 = vmatprep.subr.bf16.mxu0 %v5921
          %6736 = vmatpush1.bf16.msra.mxu0 %v5920
          %6737 = vmatprep.subr.bf16.mxu0 %v5925
          %6738 = vmatpush1.bf16.msra.mxu0 %v5924
          %6739 = vmatprep.subr.bf16.mxu0 %v5929
          %6740 = vmatpush1.bf16.msra.mxu0 %v5928
          %6741 = vmatprep.mubr.bf16.mxu0 %v4514
          %6742 = vmatmul.mubr.bf16.gmra.mrb[0].mxu0 %v4513
          %v6743 = vpop.f32.mrb[0].mxu0
          %v6744 = vadd.f32 %v6703, %v6743
          %v6745 = vpop.f32.mrb[0].mxu0
          %v6746 = vadd.f32 %v6705, %v6745
          %v6747 = vpop.f32.mrb[0].mxu0
          %v6748 = vpop.f32.mrb[0].mxu0
          %6749 = vdwg.mxu0
          %6750 = vmatprep.subr.bf16.mxu0 %v5933
          %6751 = vmatpush1.bf16.msra.mxu0 %v5932
          %6752 = vmatprep.subr.bf16.mxu0 %v5937
          %6753 = vmatpush1.bf16.msra.mxu0 %v5936
          %6754 = vmatprep.subr.bf16.mxu0 %v5941
          %6755 = vmatpush1.bf16.msra.mxu0 %v5940
          %6756 = vmatprep.subr.bf16.mxu0 %v5945
          %6757 = vmatpush1.bf16.msra.mxu0 %v5944
          %6758 = vmatprep.subr.bf16.mxu0 %v5949
          %6759 = vmatpush1.bf16.msra.mxu0 %v5948
          %6760 = vmatprep.subr.bf16.mxu0 %v5953
          %6761 = vmatpush1.bf16.msra.mxu0 %v5952
          %6762 = vmatprep.subr.bf16.mxu0 %v5957
          %6763 = vmatpush1.bf16.msra.mxu0 %v5956
          %6764 = vmatprep.subr.bf16.mxu0 %v5961
          %6765 = vmatpush1.bf16.msra.mxu0 %v5960
          %6766 = vmatprep.subr.bf16.mxu0 %v5965
          %6767 = vmatpush1.bf16.msra.mxu0 %v5964
          %6768 = vmatprep.subr.bf16.mxu0 %v5969
          %6769 = vmatpush1.bf16.msra.mxu0 %v5968
          %6770 = vmatprep.subr.bf16.mxu0 %v5973
          %6771 = vmatpush1.bf16.msra.mxu0 %v5972
          %6772 = vmatprep.subr.bf16.mxu0 %v5977
          %6773 = vmatpush1.bf16.msra.mxu0 %v5976
          %6774 = vmatprep.subr.bf16.mxu0 %v5981
          %6775 = vmatpush1.bf16.msra.mxu0 %v5980
          %6776 = vmatprep.subr.bf16.mxu0 %v5985
          %6777 = vmatpush1.bf16.msra.mxu0 %v5984
          %6778 = vmatprep.subr.bf16.mxu0 %v5989
          %6779 = vmatpush1.bf16.msra.mxu0 %v5988
          %6780 = vmatprep.subr.bf16.mxu0 %v5993
          %6781 = vmatpush1.bf16.msra.mxu0 %v5992
          %6782 = vmatprep.mubr.bf16.mxu0 %v4516
          %6783 = vmatmul.mubr.bf16.gmra.mrb[0].mxu0 %v4515
          %v6784 = vpop.f32.mrb[0].mxu0
          %v6785 = vadd.f32 %v6744, %v6784
          %v6786 = vpop.f32.mrb[0].mxu0
          %v6787 = vadd.f32 %v6746, %v6786
          %v6788 = vpop.f32.mrb[0].mxu0
          %v6789 = vpop.f32.mrb[0].mxu0
          %6790 = vdwg.mxu0
          %6791 = vmatprep.subr.bf16.mxu0 %v5997
          %6792 = vmatpush1.bf16.msra.mxu0 %v5996
          %6793 = vmatprep.subr.bf16.mxu0 %v6001
          %6794 = vmatpush1.bf16.msra.mxu0 %v6000
          %6795 = vmatprep.subr.bf16.mxu0 %v6005
          %6796 = vmatpush1.bf16.msra.mxu0 %v6004
          %6797 = vmatprep.subr.bf16.mxu0 %v6009
          %6798 = vmatpush1.bf16.msra.mxu0 %v6008
          %6799 = vmatprep.subr.bf16.mxu0 %v6013
          %6800 = vmatpush1.bf16.msra.mxu0 %v6012
          %6801 = vmatprep.subr.bf16.mxu0 %v6017
          %6802 = vmatpush1.bf16.msra.mxu0 %v6016
          %6803 = vmatprep.subr.bf16.mxu0 %v6021
          %6804 = vmatpush1.bf16.msra.mxu0 %v6020
          %6805 = vmatprep.subr.bf16.mxu0 %v6025
          %6806 = vmatpush1.bf16.msra.mxu0 %v6024
          %6807 = vmatprep.subr.bf16.mxu0 %v6029
          %6808 = vmatpush1.bf16.msra.mxu0 %v6028
          %6809 = vmatprep.subr.bf16.mxu0 %v6033
          %6810 = vmatpush1.bf16.msra.mxu0 %v6032
          %6811 = vmatprep.subr.bf16.mxu0 %v6037
          %6812 = vmatpush1.bf16.msra.mxu0 %v6036
          %6813 = vmatprep.subr.bf16.mxu0 %v6041
          %6814 = vmatpush1.bf16.msra.mxu0 %v6040
          %6815 = vmatprep.subr.bf16.mxu0 %v6045
          %6816 = vmatpush1.bf16.msra.mxu0 %v6044
          %6817 = vmatprep.subr.bf16.mxu0 %v6049
          %6818 = vmatpush1.bf16.msra.mxu0 %v6048
          %6819 = vmatprep.subr.bf16.mxu0 %v6053
          %6820 = vmatpush1.bf16.msra.mxu0 %v6052
          %6821 = vmatprep.subr.bf16.mxu0 %v6057
          %6822 = vmatpush1.bf16.msra.mxu0 %v6056
          %6823 = vmatprep.mubr.bf16.mxu0 %v4518
          %6824 = vmatmul.mubr.bf16.gmra.mrb[0].mxu0 %v4517
          %v6825 = vpop.f32.mrb[0].mxu0
          %v6826 = vadd.f32 %v6785, %v6825
          %v6827 = vpop.f32.mrb[0].mxu0
          %v6828 = vadd.f32 %v6787, %v6827
          %v6829 = vpop.f32.mrb[0].mxu0
          %v6830 = vpop.f32.mrb[0].mxu0
          %6831 = vdwg.mxu0
          %6832 = vmatprep.subr.bf16.mxu0 %v6061
          %6833 = vmatpush1.bf16.msra.mxu0 %v6060
          %6834 = vmatprep.subr.bf16.mxu0 %v6065
          %6835 = vmatpush1.bf16.msra.mxu0 %v6064
          %6836 = vmatprep.subr.bf16.mxu0 %v6069
          %6837 = vmatpush1.bf16.msra.mxu0 %v6068
          %6838 = vmatprep.subr.bf16.mxu0 %v6073
          %6839 = vmatpush1.bf16.msra.mxu0 %v6072
          %6840 = vmatprep.subr.bf16.mxu0 %v6077
          %6841 = vmatpush1.bf16.msra.mxu0 %v6076
          %6842 = vmatprep.subr.bf16.mxu0 %v6081
          %6843 = vmatpush1.bf16.msra.mxu0 %v6080
          %6844 = vmatprep.subr.bf16.mxu0 %v6085
          %6845 = vmatpush1.bf16.msra.mxu0 %v6084
          %6846 = vmatprep.subr.bf16.mxu0 %v6089
          %6847 = vmatpush1.bf16.msra.mxu0 %v6088
          %6848 = vmatprep.subr.bf16.mxu0 %v6093
          %6849 = vmatpush1.bf16.msra.mxu0 %v6092
          %6850 = vmatprep.subr.bf16.mxu0 %v6097
          %6851 = vmatpush1.bf16.msra.mxu0 %v6096
          %6852 = vmatprep.subr.bf16.mxu0 %v6101
          %6853 = vmatpush1.bf16.msra.mxu0 %v6100
          %6854 = vmatprep.subr.bf16.mxu0 %v6105
          %6855 = vmatpush1.bf16.msra.mxu0 %v6104
          %6856 = vmatprep.subr.bf16.mxu0 %v6109
          %6857 = vmatpush1.bf16.msra.mxu0 %v6108
          %6858 = vmatprep.subr.bf16.mxu0 %v6113
          %6859 = vmatpush1.bf16.msra.mxu0 %v6112
          %6860 = vmatprep.subr.bf16.mxu0 %v6117
          %6861 = vmatpush1.bf16.msra.mxu0 %v6116
          %6862 = vmatprep.subr.bf16.mxu0 %v6121
          %6863 = vmatpush1.bf16.msra.mxu0 %v6120
          %6864 = vmatprep.mubr.bf16.mxu0 %v4520
          %6865 = vmatmul.mubr.bf16.gmra.mrb[0].mxu0 %v4519
          %v6866 = vpop.f32.mrb[0].mxu0
          %v6867 = vadd.f32 %v6826, %v6866
          %v6868 = vpop.f32.mrb[0].mxu0
          %v6869 = vadd.f32 %v6828, %v6868
          %v6870 = vpop.f32.mrb[0].mxu0
          %v6871 = vpop.f32.mrb[0].mxu0
          %6872 = vdwg.mxu0
          %v6873 = vmax.f32 %v6662, 0.0
          %v6874 = vmax.f32 %v6664, 0.0
          %v6875 = vmax.f32 %v6867, 0.0
          %v6876 = vmax.f32 %v6869, 0.0
          %v6877 = vpack.c.bf16 %v6873, %v6873
          %v6878 = vpack.c.bf16 %v6874, %v6874
          %v6879 = vpack.c.bf16 %v6875, %v6875
          %v6880 = vpack.c.bf16 %v6876, %v6876
          %v6881 = vld [vmem:[%s7] sm:$0xff]
          %v6882 = vld [vmem:[%s7 + $0x8] sm:$0xff]
          %v6883 = vld [vmem:[%s7 + $0x10] sm:$0xff]
          %v6884 = vld [vmem:[%s7 + $0x18] sm:$0xff]
          %v6885 = vld [vmem:[%s7 + $0x20] sm:$0xff]
          %v6886 = vld [vmem:[%s7 + $0x28] sm:$0xff]
          %v6887 = vld [vmem:[%s7 + $0x30] sm:$0xff]
          %v6888 = vld [vmem:[%s7 + $0x38] sm:$0xff]
          %v6889 = vld [vmem:[%s7 + $0x40] sm:$0xff]
          %v6890 = vld [vmem:[%s7 + $0x48] sm:$0xff]
          %v6891 = vld [vmem:[%s7 + $0x50] sm:$0xff]
          %v6892 = vld [vmem:[%s7 + $0x58] sm:$0xff]
          %v6893 = vld [vmem:[%s7 + $0x60] sm:$0xff]
          %v6894 = vld [vmem:[%s7 + $0x68] sm:$0xff]
          %v6895 = vld [vmem:[%s7 + $0x70] sm:$0xff]
          %v6896 = vld [vmem:[%s7 + $0x78] sm:$0xff]
          %v6897 = vld [vmem:[%s7 + $0x80] sm:$0xff]
          %v6898 = vld [vmem:[%s7 + $0x88] sm:$0xff]
          %v6899 = vld [vmem:[%s7 + $0x90] sm:$0xff]
          %v6900 = vld [vmem:[%s7 + $0x98] sm:$0xff]
          %v6901 = vld [vmem:[%s7 + $0xa0] sm:$0xff]
          %v6902 = vld [vmem:[%s7 + $0xa8] sm:$0xff]
          %v6903 = vld [vmem:[%s7 + $0xb0] sm:$0xff]
          %v6904 = vld [vmem:[%s7 + $0xb8] sm:$0xff]
          %v6905 = vld [vmem:[%s7 + $0xc0] sm:$0xff]
          %v6906 = vld [vmem:[%s7 + $0xc8] sm:$0xff]
          %v6907 = vld [vmem:[%s7 + $0xd0] sm:$0xff]
          %v6908 = vld [vmem:[%s7 + $0xd8] sm:$0xff]
          %v6909 = vld [vmem:[%s7 + $0xe0] sm:$0xff]
          %v6910 = vld [vmem:[%s7 + $0xe8] sm:$0xff]
          %v6911 = vld [vmem:[%s7 + $0xf0] sm:$0xff]
          %v6912 = vld [vmem:[%s7 + $0xf8] sm:$0xff]
          %v6913 = vld [vmem:[%s7 + $0x100] sm:$0xff]
          %v6914 = vld [vmem:[%s7 + $0x108] sm:$0xff]
          %v6915 = vld [vmem:[%s7 + $0x110] sm:$0xff]
          %v6916 = vld [vmem:[%s7 + $0x118] sm:$0xff]
          %v6917 = vld [vmem:[%s7 + $0x120] sm:$0xff]
          %v6918 = vld [vmem:[%s7 + $0x128] sm:$0xff]
          %v6919 = vld [vmem:[%s7 + $0x130] sm:$0xff]
          %v6920 = vld [vmem:[%s7 + $0x138] sm:$0xff]
          %v6921 = vld [vmem:[%s7 + $0x140] sm:$0xff]
          %v6922 = vld [vmem:[%s7 + $0x148] sm:$0xff]
          %v6923 = vld [vmem:[%s7 + $0x150] sm:$0xff]
          %v6924 = vld [vmem:[%s7 + $0x158] sm:$0xff]
          %v6925 = vld [vmem:[%s7 + $0x160] sm:$0xff]
          %v6926 = vld [vmem:[%s7 + $0x168] sm:$0xff]
          %v6927 = vld [vmem:[%s7 + $0x170] sm:$0xff]
          %v6928 = vld [vmem:[%s7 + $0x178] sm:$0xff]
          %v6929 = vld [vmem:[%s7 + $0x180] sm:$0xff]
          %v6930 = vld [vmem:[%s7 + $0x188] sm:$0xff]
          %v6931 = vld [vmem:[%s7 + $0x190] sm:$0xff]
          %v6932 = vld [vmem:[%s7 + $0x198] sm:$0xff]
          %v6933 = vld [vmem:[%s7 + $0x1a0] sm:$0xff]
          %v6934 = vld [vmem:[%s7 + $0x1a8] sm:$0xff]
          %v6935 = vld [vmem:[%s7 + $0x1b0] sm:$0xff]
          %v6936 = vld [vmem:[%s7 + $0x1b8] sm:$0xff]
          %v6937 = vld [vmem:[%s7 + $0x1c0] sm:$0xff]
          %v6938 = vld [vmem:[%s7 + $0x1c8] sm:$0xff]
          %v6939 = vld [vmem:[%s7 + $0x1d0] sm:$0xff]
          %v6940 = vld [vmem:[%s7 + $0x1d8] sm:$0xff]
          %v6941 = vld [vmem:[%s7 + $0x1e0] sm:$0xff]
          %v6942 = vld [vmem:[%s7 + $0x1e8] sm:$0xff]
          %v6943 = vld [vmem:[%s7 + $0x1f0] sm:$0xff]
          %v6944 = vld [vmem:[%s7 + $0x1f8] sm:$0xff]
          %v6945 = vld [vmem:[%s8] sm:$0x3]
          %v7010 = vunpack.c.l.b16 %v6881
          %v7011 = vunpack.c.h.b16 %v6881
          %v7012 = vunpack.c.l.b16 %v6882
          %v7013 = vunpack.c.h.b16 %v6882
          %v7014 = vunpack.c.l.b16 %v6883
          %v7015 = vunpack.c.h.b16 %v6883
          %v7016 = vunpack.c.l.b16 %v6884
          %v7017 = vunpack.c.h.b16 %v6884
          %v7018 = vunpack.c.l.b16 %v6885
          %v7019 = vunpack.c.h.b16 %v6885
          %v7020 = vunpack.c.l.b16 %v6886
          %v7021 = vunpack.c.h.b16 %v6886
          %v7022 = vunpack.c.l.b16 %v6887
          %v7023 = vunpack.c.h.b16 %v6887
          %v7024 = vunpack.c.l.b16 %v6888
          %v7025 = vunpack.c.h.b16 %v6888
          %v7026 = vunpack.c.l.b16 %v6889
          %v7027 = vunpack.c.h.b16 %v6889
          %v7028 = vunpack.c.l.b16 %v6890
          %v7029 = vunpack.c.h.b16 %v6890
          %v7030 = vunpack.c.l.b16 %v6891
          %v7031 = vunpack.c.h.b16 %v6891
          %v7032 = vunpack.c.l.b16 %v6892
          %v7033 = vunpack.c.h.b16 %v6892
          %v7034 = vunpack.c.l.b16 %v6893
          %v7035 = vunpack.c.h.b16 %v6893
          %v7036 = vunpack.c.l.b16 %v6894
          %v7037 = vunpack.c.h.b16 %v6894
          %v7038 = vunpack.c.l.b16 %v6895
          %v7039 = vunpack.c.h.b16 %v6895
          %v7040 = vunpack.c.l.b16 %v6896
          %v7041 = vunpack.c.h.b16 %v6896
          %v7042 = vunpack.c.l.b16 %v6897
          %v7043 = vunpack.c.h.b16 %v6897
          %v7044 = vunpack.c.l.b16 %v6898
          %v7045 = vunpack.c.h.b16 %v6898
          %v7046 = vunpack.c.l.b16 %v6899
          %v7047 = vunpack.c.h.b16 %v6899
          %v7048 = vunpack.c.l.b16 %v6900
          %v7049 = vunpack.c.h.b16 %v6900
          %v7050 = vunpack.c.l.b16 %v6901
          %v7051 = vunpack.c.h.b16 %v6901
          %v7052 = vunpack.c.l.b16 %v6902
          %v7053 = vunpack.c.h.b16 %v6902
          %v7054 = vunpack.c.l.b16 %v6903
          %v7055 = vunpack.c.h.b16 %v6903
          %v7056 = vunpack.c.l.b16 %v6904
          %v7057 = vunpack.c.h.b16 %v6904
          %v7058 = vunpack.c.l.b16 %v6905
          %v7059 = vunpack.c.h.b16 %v6905
          %v7060 = vunpack.c.l.b16 %v6906
          %v7061 = vunpack.c.h.b16 %v6906
          %v7062 = vunpack.c.l.b16 %v6907
          %v7063 = vunpack.c.h.b16 %v6907
          %v7064 = vunpack.c.l.b16 %v6908
          %v7065 = vunpack.c.h.b16 %v6908
          %v7066 = vunpack.c.l.b16 %v6909
          %v7067 = vunpack.c.h.b16 %v6909
          %v7068 = vunpack.c.l.b16 %v6910
          %v7069 = vunpack.c.h.b16 %v6910
          %v7070 = vunpack.c.l.b16 %v6911
          %v7071 = vunpack.c.h.b16 %v6911
          %v7072 = vunpack.c.l.b16 %v6912
          %v7073 = vunpack.c.h.b16 %v6912
          %v7074 = vunpack.c.l.b16 %v6913
          %v7075 = vunpack.c.h.b16 %v6913
          %v7076 = vunpack.c.l.b16 %v6914
          %v7077 = vunpack.c.h.b16 %v6914
          %v7078 = vunpack.c.l.b16 %v6915
          %v7079 = vunpack.c.h.b16 %v6915
          %v7080 = vunpack.c.l.b16 %v6916
          %v7081 = vunpack.c.h.b16 %v6916
          %v7082 = vunpack.c.l.b16 %v6917
          %v7083 = vunpack.c.h.b16 %v6917
          %v7084 = vunpack.c.l.b16 %v6918
          %v7085 = vunpack.c.h.b16 %v6918
          %v7086 = vunpack.c.l.b16 %v6919
          %v7087 = vunpack.c.h.b16 %v6919
          %v7088 = vunpack.c.l.b16 %v6920
          %v7089 = vunpack.c.h.b16 %v6920
          %v7090 = vunpack.c.l.b16 %v6921
          %v7091 = vunpack.c.h.b16 %v6921
          %v7092 = vunpack.c.l.b16 %v6922
          %v7093 = vunpack.c.h.b16 %v6922
          %v7094 = vunpack.c.l.b16 %v6923
          %v7095 = vunpack.c.h.b16 %v6923
          %v7096 = vunpack.c.l.b16 %v6924
          %v7097 = vunpack.c.h.b16 %v6924
          %v7098 = vunpack.c.l.b16 %v6925
          %v7099 = vunpack.c.h.b16 %v6925
          %v7100 = vunpack.c.l.b16 %v6926
          %v7101 = vunpack.c.h.b16 %v6926
          %v7102 = vunpack.c.l.b16 %v6927
          %v7103 = vunpack.c.h.b16 %v6927
          %v7104 = vunpack.c.l.b16 %v6928
          %v7105 = vunpack.c.h.b16 %v6928
          %v7106 = vunpack.c.l.b16 %v6929
          %v7107 = vunpack.c.h.b16 %v6929
          %v7108 = vunpack.c.l.b16 %v6930
          %v7109 = vunpack.c.h.b16 %v6930
          %v7110 = vunpack.c.l.b16 %v6931
          %v7111 = vunpack.c.h.b16 %v6931
          %v7112 = vunpack.c.l.b16 %v6932
          %v7113 = vunpack.c.h.b16 %v6932
          %v7114 = vunpack.c.l.b16 %v6933
          %v7115 = vunpack.c.h.b16 %v6933
          %v7116 = vunpack.c.l.b16 %v6934
          %v7117 = vunpack.c.h.b16 %v6934
          %v7118 = vunpack.c.l.b16 %v6935
          %v7119 = vunpack.c.h.b16 %v6935
          %v7120 = vunpack.c.l.b16 %v6936
          %v7121 = vunpack.c.h.b16 %v6936
          %v7122 = vunpack.c.l.b16 %v6937
          %v7123 = vunpack.c.h.b16 %v6937
          %v7124 = vunpack.c.l.b16 %v6938
          %v7125 = vunpack.c.h.b16 %v6938
          %v7126 = vunpack.c.l.b16 %v6939
          %v7127 = vunpack.c.h.b16 %v6939
          %v7128 = vunpack.c.l.b16 %v6940
          %v7129 = vunpack.c.h.b16 %v6940
          %v7130 = vunpack.c.l.b16 %v6941
          %v7131 = vunpack.c.h.b16 %v6941
          %v7132 = vunpack.c.l.b16 %v6942
          %v7133 = vunpack.c.h.b16 %v6942
          %v7134 = vunpack.c.l.b16 %v6943
          %v7135 = vunpack.c.h.b16 %v6943
          %v7136 = vunpack.c.l.b16 %v6944
          %v7137 = vunpack.c.h.b16 %v6944
          %v7138 = vpack.c.b16 %v7012, %v7010
          %v7139 = vpack.c.b16 %v7013, %v7011
          %v7140 = vpack.c.b16 %v7016, %v7014
          %v7141 = vpack.c.b16 %v7017, %v7015
          %v7142 = vpack.c.b16 %v7020, %v7018
          %v7143 = vpack.c.b16 %v7021, %v7019
          %v7144 = vpack.c.b16 %v7024, %v7022
          %v7145 = vpack.c.b16 %v7025, %v7023
          %v7146 = vpack.c.b16 %v7028, %v7026
          %v7147 = vpack.c.b16 %v7029, %v7027
          %v7148 = vpack.c.b16 %v7032, %v7030
          %v7149 = vpack.c.b16 %v7033, %v7031
          %v7150 = vpack.c.b16 %v7036, %v7034
          %v7151 = vpack.c.b16 %v7037, %v7035
          %v7152 = vpack.c.b16 %v7040, %v7038
          %v7153 = vpack.c.b16 %v7041, %v7039
          %v7154 = vpack.c.b16 %v7044, %v7042
          %v7155 = vpack.c.b16 %v7045, %v7043
          %v7156 = vpack.c.b16 %v7048, %v7046
          %v7157 = vpack.c.b16 %v7049, %v7047
          %v7158 = vpack.c.b16 %v7052, %v7050
          %v7159 = vpack.c.b16 %v7053, %v7051
          %v7160 = vpack.c.b16 %v7056, %v7054
          %v7161 = vpack.c.b16 %v7057, %v7055
          %v7162 = vpack.c.b16 %v7060, %v7058
          %v7163 = vpack.c.b16 %v7061, %v7059
          %v7164 = vpack.c.b16 %v7064, %v7062
          %v7165 = vpack.c.b16 %v7065, %v7063
          %v7166 = vpack.c.b16 %v7068, %v7066
          %v7167 = vpack.c.b16 %v7069, %v7067
          %v7168 = vpack.c.b16 %v7072, %v7070
          %v7169 = vpack.c.b16 %v7073, %v7071
          %v7170 = vpack.c.b16 %v7076, %v7074
          %v7171 = vpack.c.b16 %v7077, %v7075
          %v7172 = vpack.c.b16 %v7080, %v7078
          %v7173 = vpack.c.b16 %v7081, %v7079
          %v7174 = vpack.c.b16 %v7084, %v7082
          %v7175 = vpack.c.b16 %v7085, %v7083
          %v7176 = vpack.c.b16 %v7088, %v7086
          %v7177 = vpack.c.b16 %v7089, %v7087
          %v7178 = vpack.c.b16 %v7092, %v7090
          %v7179 = vpack.c.b16 %v7093, %v7091
          %v7180 = vpack.c.b16 %v7096, %v7094
          %v7181 = vpack.c.b16 %v7097, %v7095
          %v7182 = vpack.c.b16 %v7100, %v7098
          %v7183 = vpack.c.b16 %v7101, %v7099
          %v7184 = vpack.c.b16 %v7104, %v7102
          %v7185 = vpack.c.b16 %v7105, %v7103
          %v7186 = vpack.c.b16 %v7108, %v7106
          %v7187 = vpack.c.b16 %v7109, %v7107
          %v7188 = vpack.c.b16 %v7112, %v7110
          %v7189 = vpack.c.b16 %v7113, %v7111
          %v7190 = vpack.c.b16 %v7116, %v7114
          %v7191 = vpack.c.b16 %v7117, %v7115
          %v7192 = vpack.c.b16 %v7120, %v7118
          %v7193 = vpack.c.b16 %v7121, %v7119
          %v7194 = vpack.c.b16 %v7124, %v7122
          %v7195 = vpack.c.b16 %v7125, %v7123
          %v7196 = vpack.c.b16 %v7128, %v7126
          %v7197 = vpack.c.b16 %v7129, %v7127
          %v7198 = vpack.c.b16 %v7132, %v7130
          %v7199 = vpack.c.b16 %v7133, %v7131
          %v7200 = vpack.c.b16 %v7136, %v7134
          %v7201 = vpack.c.b16 %v7137, %v7135
          %v7267 = vlaneseq
          %v7268 = vshrl.u32 %v7267, 7
          %v7269 = vsub.s32 0, %v7268
          %v7270 = vrot.slane %v6945, %v7269
          %v7271 = vlaneseq
          %v7272 = vshrl.u32 %v7271, 7
          %v7273 = vsub.s32 1, %v7272
          %v7274 = vrot.slane %v6945, %v7273
          %7277 = vmatprep.subr.bf16.mxu0 %v7139
          %7278 = vmatpush1.bf16.msra.mxu0 %v7138
          %7279 = vmatprep.subr.bf16.mxu0 %v7141
          %7280 = vmatpush1.bf16.msra.mxu0 %v7140
          %7281 = vmatprep.subr.bf16.mxu0 %v7143
          %7282 = vmatpush1.bf16.msra.mxu0 %v7142
          %7283 = vmatprep.subr.bf16.mxu0 %v7145
          %7284 = vmatpush1.bf16.msra.mxu0 %v7144
          %7285 = vmatprep.subr.bf16.mxu0 %v7147
          %7286 = vmatpush1.bf16.msra.mxu0 %v7146
          %7287 = vmatprep.subr.bf16.mxu0 %v7149
          %7288 = vmatpush1.bf16.msra.mxu0 %v7148
          %7289 = vmatprep.subr.bf16.mxu0 %v7151
          %7290 = vmatpush1.bf16.msra.mxu0 %v7150
          %7291 = vmatprep.subr.bf16.mxu0 %v7153
          %7292 = vmatpush1.bf16.msra.mxu0 %v7152
          %7293 = vmatprep.subr.bf16.mxu0 %v7155
          %7294 = vmatpush1.bf16.msra.mxu0 %v7154
          %7295 = vmatprep.subr.bf16.mxu0 %v7157
          %7296 = vmatpush1.bf16.msra.mxu0 %v7156
          %7297 = vmatprep.subr.bf16.mxu0 %v7159
          %7298 = vmatpush1.bf16.msra.mxu0 %v7158
          %7299 = vmatprep.subr.bf16.mxu0 %v7161
          %7300 = vmatpush1.bf16.msra.mxu0 %v7160
          %7301 = vmatprep.subr.bf16.mxu0 %v7163
          %7302 = vmatpush1.bf16.msra.mxu0 %v7162
          %7303 = vmatprep.subr.bf16.mxu0 %v7165
          %7304 = vmatpush1.bf16.msra.mxu0 %v7164
          %7305 = vmatprep.subr.bf16.mxu0 %v7167
          %7306 = vmatpush1.bf16.msra.mxu0 %v7166
          %7307 = vmatprep.subr.bf16.mxu0 %v7169
          %7308 = vmatpush1.bf16.msra.mxu0 %v7168
          %7309 = vmatprep.mubr.bf16.mxu0 %v6878
          %7310 = vmatmul.mubr.bf16.gmra.mrb[0].mxu0 %v6877
          %v7311 = vpop.f32.mrb[0].mxu0
          %v7312 = vadd.f32 %v7270, %v7311
          %v7313 = vpop.f32.mrb[0].mxu0
          %v7314 = vadd.f32 %v7274, %v7313
          %v7315 = vpop.f32.mrb[0].mxu0
          %v7316 = vpop.f32.mrb[0].mxu0
          %7317 = vdwg.mxu0
          %7318 = vmatprep.subr.bf16.mxu0 %v7171
          %7319 = vmatpush1.bf16.msra.mxu0 %v7170
          %7320 = vmatprep.subr.bf16.mxu0 %v7173
          %7321 = vmatpush1.bf16.msra.mxu0 %v7172
          %7322 = vmatprep.subr.bf16.mxu0 %v7175
          %7323 = vmatpush1.bf16.msra.mxu0 %v7174
          %7324 = vmatprep.subr.bf16.mxu0 %v7177
          %7325 = vmatpush1.bf16.msra.mxu0 %v7176
          %7326 = vmatprep.subr.bf16.mxu0 %v7179
          %7327 = vmatpush1.bf16.msra.mxu0 %v7178
          %7328 = vmatprep.subr.bf16.mxu0 %v7181
          %7329 = vmatpush1.bf16.msra.mxu0 %v7180
          %7330 = vmatprep.subr.bf16.mxu0 %v7183
          %7331 = vmatpush1.bf16.msra.mxu0 %v7182
          %7332 = vmatprep.subr.bf16.mxu0 %v7185
          %7333 = vmatpush1.bf16.msra.mxu0 %v7184
          %7334 = vmatprep.subr.bf16.mxu0 %v7187
          %7335 = vmatpush1.bf16.msra.mxu0 %v7186
          %7336 = vmatprep.subr.bf16.mxu0 %v7189
          %7337 = vmatpush1.bf16.msra.mxu0 %v7188
          %7338 = vmatprep.subr.bf16.mxu0 %v7191
          %7339 = vmatpush1.bf16.msra.mxu0 %v7190
          %7340 = vmatprep.subr.bf16.mxu0 %v7193
          %7341 = vmatpush1.bf16.msra.mxu0 %v7192
          %7342 = vmatprep.subr.bf16.mxu0 %v7195
          %7343 = vmatpush1.bf16.msra.mxu0 %v7194
          %7344 = vmatprep.subr.bf16.mxu0 %v7197
          %7345 = vmatpush1.bf16.msra.mxu0 %v7196
          %7346 = vmatprep.subr.bf16.mxu0 %v7199
          %7347 = vmatpush1.bf16.msra.mxu0 %v7198
          %7348 = vmatprep.subr.bf16.mxu0 %v7201
          %7349 = vmatpush1.bf16.msra.mxu0 %v7200
          %7350 = vmatprep.mubr.bf16.mxu0 %v6880
          %7351 = vmatmul.mubr.bf16.gmra.mrb[0].mxu0 %v6879
          %v7352 = vpop.f32.mrb[0].mxu0
          %v7353 = vadd.f32 %v7312, %v7352
          %v7354 = vpop.f32.mrb[0].mxu0
          %v7355 = vadd.f32 %v7314, %v7354
          %v7356 = vpop.f32.mrb[0].mxu0
          %v7357 = vpop.f32.mrb[0].mxu0
          %7358 = vdwg.mxu0
          %v7359 = vmax.f32 %v7353, 0.0
          %v7360 = vmax.f32 %v7355, 0.0
          %v7361 = vpack.c.bf16 %v7359, %v7359
          %v7362 = vpack.c.bf16 %v7360, %v7360
          %v7363 = vld [vmem:[%s9] sm:$0xf]
          %v7364 = vld [vmem:[%s9 + $0x4] sm:$0xf]
          %v7365 = vld [vmem:[%s9 + $0x8] sm:$0xf]
          %v7366 = vld [vmem:[%s9 + $0xc] sm:$0xf]
          %v7367 = vld [vmem:[%s9 + $0x10] sm:$0xf]
          %v7368 = vld [vmem:[%s9 + $0x14] sm:$0xf]
          %v7369 = vld [vmem:[%s9 + $0x18] sm:$0xf]
          %v7370 = vld [vmem:[%s9 + $0x1c] sm:$0xf]
          %v7371 = vld [vmem:[%s9 + $0x20] sm:$0xf]
          %v7372 = vld [vmem:[%s9 + $0x24] sm:$0xf]
          %v7373 = vld [vmem:[%s9 + $0x28] sm:$0xf]
          %v7374 = vld [vmem:[%s9 + $0x2c] sm:$0xf]
          %v7375 = vld [vmem:[%s9 + $0x30] sm:$0xf]
          %v7376 = vld [vmem:[%s9 + $0x34] sm:$0xf]
          %v7377 = vld [vmem:[%s9 + $0x38] sm:$0xf]
          %v7378 = vld [vmem:[%s9 + $0x3c] sm:$0xf]
          %v7379 = vld [vmem:[%s9 + $0x40] sm:$0xf]
          %v7380 = vld [vmem:[%s9 + $0x44] sm:$0xf]
          %v7381 = vld [vmem:[%s9 + $0x48] sm:$0xf]
          %v7382 = vld [vmem:[%s9 + $0x4c] sm:$0xf]
          %v7383 = vld [vmem:[%s9 + $0x50] sm:$0xf]
          %v7384 = vld [vmem:[%s9 + $0x54] sm:$0xf]
          %v7385 = vld [vmem:[%s9 + $0x58] sm:$0xf]
          %v7386 = vld [vmem:[%s9 + $0x5c] sm:$0xf]
          %v7387 = vld [vmem:[%s9 + $0x60] sm:$0xf]
          %v7388 = vld [vmem:[%s9 + $0x64] sm:$0xf]
          %v7389 = vld [vmem:[%s9 + $0x68] sm:$0xf]
          %v7390 = vld [vmem:[%s9 + $0x6c] sm:$0xf]
          %v7391 = vld [vmem:[%s9 + $0x70] sm:$0xf]
          %v7392 = vld [vmem:[%s9 + $0x74] sm:$0xf]
          %v7393 = vld [vmem:[%s9 + $0x78] sm:$0xf]
          %v7394 = vld [vmem:[%s9 + $0x7c] sm:$0xf]
          %v7395 = vld [vmem:[%s10] sm:$0x1]
          %v7428 = vunpack.c.l.b16 %v7363
          %v7429 = vunpack.c.l.b16 %v7364
          %v7430 = vunpack.c.l.b16 %v7365
          %v7431 = vunpack.c.l.b16 %v7366
          %v7432 = vunpack.c.l.b16 %v7367
          %v7433 = vunpack.c.l.b16 %v7368
          %v7434 = vunpack.c.l.b16 %v7369
          %v7435 = vunpack.c.l.b16 %v7370
          %v7436 = vunpack.c.l.b16 %v7371
          %v7437 = vunpack.c.l.b16 %v7372
          %v7438 = vunpack.c.l.b16 %v7373
          %v7439 = vunpack.c.l.b16 %v7374
          %v7440 = vunpack.c.l.b16 %v7375
          %v7441 = vunpack.c.l.b16 %v7376
          %v7442 = vunpack.c.l.b16 %v7377
          %v7443 = vunpack.c.l.b16 %v7378
          %v7444 = vunpack.c.l.b16 %v7379
          %v7445 = vunpack.c.l.b16 %v7380
          %v7446 = vunpack.c.l.b16 %v7381
          %v7447 = vunpack.c.l.b16 %v7382
          %v7448 = vunpack.c.l.b16 %v7383
          %v7449 = vunpack.c.l.b16 %v7384
          %v7450 = vunpack.c.l.b16 %v7385
          %v7451 = vunpack.c.l.b16 %v7386
          %v7452 = vunpack.c.l.b16 %v7387
          %v7453 = vunpack.c.l.b16 %v7388
          %v7454 = vunpack.c.l.b16 %v7389
          %v7455 = vunpack.c.l.b16 %v7390
          %v7456 = vunpack.c.l.b16 %v7391
          %v7457 = vunpack.c.l.b16 %v7392
          %v7458 = vunpack.c.l.b16 %v7393
          %v7459 = vunpack.c.l.b16 %v7394
          %v7460 = vpack.c.b16 %v7429, %v7428
          %v7461 = vpack.c.b16 %v7431, %v7430
          %v7462 = vpack.c.b16 %v7433, %v7432
          %v7463 = vpack.c.b16 %v7435, %v7434
          %v7464 = vpack.c.b16 %v7437, %v7436
          %v7465 = vpack.c.b16 %v7439, %v7438
          %v7466 = vpack.c.b16 %v7441, %v7440
          %v7467 = vpack.c.b16 %v7443, %v7442
          %v7468 = vpack.c.b16 %v7445, %v7444
          %v7469 = vpack.c.b16 %v7447, %v7446
          %v7470 = vpack.c.b16 %v7449, %v7448
          %v7471 = vpack.c.b16 %v7451, %v7450
          %v7472 = vpack.c.b16 %v7453, %v7452
          %v7473 = vpack.c.b16 %v7455, %v7454
          %v7474 = vpack.c.b16 %v7457, %v7456
          %v7475 = vpack.c.b16 %v7459, %v7458
          %7492 = vmatprep.subr.bf16.mxu0 0
          %7493 = vmatpush1.bf16.msra.mxu0 %v7460
          %7494 = vmatprep.subr.bf16.mxu0 0
          %7495 = vmatpush1.bf16.msra.mxu0 %v7461
          %7496 = vmatprep.subr.bf16.mxu0 0
          %7497 = vmatpush1.bf16.msra.mxu0 %v7462
          %7498 = vmatprep.subr.bf16.mxu0 0
          %7499 = vmatpush1.bf16.msra.mxu0 %v7463
          %7500 = vmatprep.subr.bf16.mxu0 0
          %7501 = vmatpush1.bf16.msra.mxu0 %v7464
          %7502 = vmatprep.subr.bf16.mxu0 0
          %7503 = vmatpush1.bf16.msra.mxu0 %v7465
          %7504 = vmatprep.subr.bf16.mxu0 0
          %7505 = vmatpush1.bf16.msra.mxu0 %v7466
          %7506 = vmatprep.subr.bf16.mxu0 0
          %7507 = vmatpush1.bf16.msra.mxu0 %v7467
          %7508 = vmatprep.subr.bf16.mxu0 0
          %7509 = vmatpush1.bf16.msra.mxu0 %v7468
          %7510 = vmatprep.subr.bf16.mxu0 0
          %7511 = vmatpush1.bf16.msra.mxu0 %v7469
          %7512 = vmatprep.subr.bf16.mxu0 0
          %7513 = vmatpush1.bf16.msra.mxu0 %v7470
          %7514 = vmatprep.subr.bf16.mxu0 0
          %7515 = vmatpush1.bf16.msra.mxu0 %v7471
          %7516 = vmatprep.subr.bf16.mxu0 0
          %7517 = vmatpush1.bf16.msra.mxu0 %v7472
          %7518 = vmatprep.subr.bf16.mxu0 0
          %7519 = vmatpush1.bf16.msra.mxu0 %v7473
          %7520 = vmatprep.subr.bf16.mxu0 0
          %7521 = vmatpush1.bf16.msra.mxu0 %v7474
          %7522 = vmatprep.subr.bf16.mxu0 0
          %7523 = vmatpush1.bf16.msra.mxu0 %v7475
          %7524 = vmatprep.mubr.bf16.mxu0 %v7362
          %7525 = vmatmul.mubr.bf16.gmra.mrb[0].mxu0 %v7361
          %v7526 = vpop.f32.mrb[0].mxu0
          %v7527 = vadd.f32 %v7395, %v7526
          %v7528 = vpop.f32.mrb[0].mxu0
          %v7529 = vpop.f32.mrb[0].mxu0
          %v7530 = vpop.f32.mrb[0].mxu0
          %7531 = vdwg.mxu0
          %v7532 = vtanh.pop %v7527
          %7533 = vst [vmem:[%s401] sm:$0x1] %v7532
        $region72: #{policy_forward.1} parent=63 // pred_fallthru
          _
        %s7534 = sand.u32 %s283, 1
        %s7535 = scalar_lea.sflag [#allocation4], %s7534
        %s7536 = sand.u32 %s283, 1
        %s7537 = scalar_lea.vmem [#allocation3], %s7536
        // Predicated region
        $region73: #{policy_forward.1} parent=63 // pred_check
          %p7538 = pneg %p293
        $region74: #{policy_forward.1} parent=63 // pred_check_branch
          %7540 = sbr.rel (%p7538) target = $region76
        $region75: #{policy_forward.1} parent=63 // pred_region
          %s7542 = ssub.s32 16, 16
          %7543 = vsyncadd %s7535, %s7542
          %s7544 = smul.addr %s29, 16
          %s7545 = scalar_lea.hbm %s11, %s7544
          %s7547 = sshll.u32 %s7537, 4
          %s7548 = int_to_ptr.vmem [resolvable:$true] %s7547
          %7550 = dma.vmem_to_hbm [thread:$0]  %s7548, 16, %s7545, %s7535
        $region76: #{policy_forward.1} parent=63 // pred_fallthru
          _
      $region64: #{policy_forward.1} parent=5 // pred_fallthru
        _
      %p7551 = scmp.le.s32.totalorder 2, %s20
      // Predicated region
      $region77: #{policy_forward.1} parent=5 // pred_check
        %p7552 = pneg %p7551
      $region78: #{policy_forward.1} parent=5 // pred_check_branch
        %7554 = sbr.rel (%p7552) target = $region80
      $region79: #{policy_forward.1} parent=5 // pred_region
        %s7555 = ssub.s32 %s20, 2
        // Predicated region
        $region81: #{policy_forward.1} parent=79 // pred_check
          %p7556 = pneg %p299
        $region82: #{policy_forward.1} parent=79 // pred_check_branch
          %7558 = sbr.rel (%p7556) target = $region84
        $region83: #{policy_forward.1} parent=79 // pred_region
          %s7559 = sand.u32 %s284, 1
          %s7560 = scalar_lea.sflag [#allocation4], %s7559
          %s7561 = sand.u32 %s284, 1
          %s7562 = scalar_lea.vmem [#allocation3], %s7561
          %7563 = dma.done %s7560, 16
        $region84: #{policy_forward.1} parent=79 // pred_fallthru
          _
      $region80: #{policy_forward.1} parent=5 // pred_fallthru
        _
    $region6: #{policy_forward.1} parent=1 // loop_footer
      %s24 = sadd.s32 1, %s20
    $region7: #{policy_forward.1} parent=1 // loop_footer_branch
      %19 = sbr.rel target = $region3
    $region8: #{policy_forward.1} parent=1 // loop_exit
      _
    %7564 = vsyncpa [#allocation4], 1
    %s7565 = scalar_lea.sflag [#allocation4], 1
    %7566 = vsyncpa %s7565, 1

</llo_original>
